<compile_context>
chip_gen: v6e
topology: v6e:2x2x1
jax: 0.10.0
libtpu: 0.0.40
codegen_flags: <defaults>
</compile_context>

<pallas_src>
import functools
import math

import jax
import jax.numpy as jnp
from jax.experimental import pallas as pl
from jax.experimental.pallas import tpu as pltpu

CLASSIFIER_HIDDEN = 128
CLASSES = 2


# ---------------------------------------------------------------------------
# In-kernel helpers (operate on values already resident in VMEM / vregs)
# ---------------------------------------------------------------------------

def _conv_same(x, w_flat, K, scale, shift, act):
    """'same'-padded Conv1d (odd K) as a single im2col matmul, fused affine + act.

    x: (L, Cin) f32, w_flat: (K*Cin, Cout), scale/shift: (1, Cout).
    """
    L, Cin = x.shape
    pad = K // 2
    if pad > 0:
        z = jnp.zeros((pad, Cin), x.dtype)
        xp = jnp.concatenate([z, x, z], axis=0)        # halo built in-kernel (no HBM pad)
    else:
        xp = x
    if K == 1:
        slab = xp
    else:
        slab = jnp.concatenate([xp[k:k + L, :] for k in range(K)], axis=-1)  # (L, K*Cin)
    y = jnp.dot(slab, w_flat, preferred_element_type=jnp.float32)
    y = y * scale + shift
    if act == "leaky":
        y = jnp.where(y >= 0.0, y, 0.01 * y)           # LeakyReLU(0.01)
    elif act == "sigmoid":
        y = jax.nn.sigmoid(y)
    return y


def _maxpool(x, s):
    """MaxPool1d(kernel=s, stride=s) on (L, C) -> (L//s, C), fully in-register."""
    L, C = x.shape
    Lo = L // s
    rows = [jnp.max(x[j * s:(j + 1) * s, :], axis=0, keepdims=True) for j in range(Lo)]
    return rows[0] if Lo == 1 else jnp.concatenate(rows, axis=0)


# ---------------------------------------------------------------------------
# Kernel 1: whole BVPFeatrueExtraction trunk (one grid step per batch element)
# ---------------------------------------------------------------------------

_BVP_DEFS = [
    # (K, Cin, Cout, has_bn)
    (3, 1, 16, True),     # 0  conv_peak
    (3, 16, 8, True),     # 1  peak_main[0]
    (3, 8, 4, True),      # 2  peak_main[1]
    (3, 16, 4, True),     # 3  peak_residual
    (3, 4, 1, False),     # 4  peak_out (+ sigmoid)
    (3, 16, 1, False),    # 5  MixA v_w
    (9, 16, 32, True),    # 6  conv_1[0]
    (9, 32, 32, True),    # 7  conv_1[1]
    (7, 32, 64, True),    # 8  conv_2[0]
    (7, 64, 64, True),    # 9  conv_2[1]
    (3, 64, 128, True),   # 10 conv_3[0]
    (3, 128, 128, True),  # 11 conv_3[1]
]


def _bvp_kernel(*refs):
    x_ref = refs[0]
    wr = refs[1:1 + 2 * len(_BVP_DEFS)]
    x32_ref, x64_ref, x128_ref, peak_ref = refs[1 + 2 * len(_BVP_DEFS):]

    def conv(x, idx, act):
        K = _BVP_DEFS[idx][0]
        w = wr[2 * idx][...]
        aff = wr[2 * idx + 1][...]
        return _conv_same(x, w, K, aff[0:1, :], aff[1:2, :], act)

    x = x_ref[0]                                              # (L, 1)
    x16 = conv(x, 0, "leaky")                                 # (L, 16)
    pm = conv(conv(x16, 1, "leaky"), 2, "leaky")              # (L, 4)
    pr = conv(x16, 3, "leaky")                                # (L, 4)
    peak = conv(pm + pr, 4, "sigmoid")                        # (L, 1)
    v = conv(x16, 5, "linear")                                # (L, 1)

    # MixA: softmax over L of sigmoid(v) + peak, residual attention scale.
    s = jax.nn.sigmoid(v) + peak
    e = jnp.exp(s - jnp.max(s, axis=0, keepdims=True))
    att = e / jnp.sum(e, axis=0, keepdims=True)
    x16sa = x16 * att + x16                                   # (L, 16)

    x32 = conv(conv(x16sa, 6, "leaky"), 7, "leaky")           # (L, 32)
    x64 = conv(conv(_maxpool(x32, 5), 8, "leaky"), 9, "leaky")      # (L/5, 64)
    x128 = conv(conv(_maxpool(x64, 5), 10, "leaky"), 11, "leaky")   # (L/25, 128)

    x32_ref[0] = x32
    x64_ref[0] = x64
    x128_ref[0] = x128
    peak_ref[0] = peak


def bvp_forward(x, bvp_params):
    B, L, _ = x.shape
    L5, L25 = L // 5, L // 25
    flat = []
    for w, aff in bvp_params:
        flat += [w, aff]
    in_specs = [pl.BlockSpec((1, L, 1), lambda b: (b, 0, 0))]
    for arr in flat:
        in_specs.append(pl.BlockSpec(arr.shape, lambda b: (0, 0)))
    out_shape = (
        jax.ShapeDtypeStruct((B, L, 32), jnp.float32),
        jax.ShapeDtypeStruct((B, L5, 64), jnp.float32),
        jax.ShapeDtypeStruct((B, L25, 128), jnp.float32),
        jax.ShapeDtypeStruct((B, L, 1), jnp.float32),
    )
    out_specs = (
        pl.BlockSpec((1, L, 32), lambda b: (b, 0, 0)),
        pl.BlockSpec((1, L5, 64), lambda b: (b, 0, 0)),
        pl.BlockSpec((1, L25, 128), lambda b: (b, 0, 0)),
        pl.BlockSpec((1, L, 1), lambda b: (b, 0, 0)),
    )
    return pl.pallas_call(
        _bvp_kernel,
        out_shape=out_shape,
        grid=(B,),
        in_specs=in_specs,
        out_specs=out_specs,
        compiler_params=pltpu.CompilerParams(dimension_semantics=("parallel",)),
    )(x, *flat)


# ---------------------------------------------------------------------------
# Kernel 2: Task branch (state & hr batched as a parallel grid axis)
# ---------------------------------------------------------------------------

def _task_kernel(x32_ref, x64_ref, x128_ref,
                 att2_ref, w2_ref, b2_ref,
                 att3_ref, w3_ref, b3_ref,
                 att4_ref, w4_ref, b4_ref,
                 out_ref):
    def block(y, att_ref, w_ref, b_ref, pool):
        # ECAM: gap -> ks-tap channel conv (as band-matrix matmul) -> sigmoid -> a*Y+Y
        g = jnp.mean(y, axis=0, keepdims=True)                                   # (1, C)
        a = jax.nn.sigmoid(jnp.dot(g, att_ref[0], preferred_element_type=jnp.float32))
        y = y * a + y
        # 1x1 Conv1d projection (+ bias), then MaxPool1d(pool, pool)
        z = jnp.dot(y, w_ref[0], preferred_element_type=jnp.float32) + b_ref[0]
        return _maxpool(z, pool)

    x64a = block(x32_ref[0], att2_ref, w2_ref, b2_ref, 5) + x64_ref[0]     # (L/5, 64)
    x128a = block(x64a, att3_ref, w3_ref, b3_ref, 5) + x128_ref[0]         # (L/25, 128)
    out_ref[0, 0] = block(x128a, att4_ref, w4_ref, b4_ref, 2)              # (L/50, 256)


def task_forward(x32, x64, x128, tp):
    B, L, _ = x32.shape
    L5, L25, L50 = L // 5, L // 25, L // 50
    att2, w2, b2, att3, w3, b3, att4, w4, b4 = tp
    in_specs = [
        pl.BlockSpec((1, L, 32), lambda t, b: (b, 0, 0)),
        pl.BlockSpec((1, L5, 64), lambda t, b: (b, 0, 0)),
        pl.BlockSpec((1, L25, 128), lambda t, b: (b, 0, 0)),
        pl.BlockSpec((1, 32, 32), lambda t, b: (t, 0, 0)),
        pl.BlockSpec((1, 32, 64), lambda t, b: (t, 0, 0)),
        pl.BlockSpec((1, 1, 64), lambda t, b: (t, 0, 0)),
        pl.BlockSpec((1, 64, 64), lambda t, b: (t, 0, 0)),
        pl.BlockSpec((1, 64, 128), lambda t, b: (t, 0, 0)),
        pl.BlockSpec((1, 1, 128), lambda t, b: (t, 0, 0)),
        pl.BlockSpec((1, 128, 128), lambda t, b: (t, 0, 0)),
        pl.BlockSpec((1, 128, 256), lambda t, b: (t, 0, 0)),
        pl.BlockSpec((1, 1, 256), lambda t, b: (t, 0, 0)),
    ]
    return pl.pallas_call(
        _task_kernel,
        out_shape=jax.ShapeDtypeStruct((2, B, L50, 256), jnp.float32),
        grid=(2, B),
        in_specs=in_specs,
        out_specs=pl.BlockSpec((1, 1, L50, 256), lambda t, b: (t, b, 0, 0)),
        compiler_params=pltpu.CompilerParams(
            dimension_semantics=("parallel", "parallel")),
    )(x32, x64, x128, att2, w2, b2, att3, w3, b3, att4, w4, b4)


# ---------------------------------------------------------------------------
# Kernel 3: heads (gap + concat + classifier + hr estimator)
# ---------------------------------------------------------------------------

def _heads_kernel(task_ref, w1_ref, b1_ref, w2_ref, b2_ref, wh_ref, bh_ref,
                  out_ref, hr_ref):
    state = task_ref[0]                              # (B, L50, 256)
    hr_br = task_ref[1]                              # (B, L50, 256)
    s_gap = jnp.mean(state, axis=1)                  # (B, 256)
    h_gap = jnp.mean(hr_br, axis=1)                  # (B, 256)
    feat = jnp.concatenate([s_gap, h_gap], axis=-1)  # (B, 512) == gap(cat(...))

    h = jnp.dot(feat, w1_ref[...], preferred_element_type=jnp.float32) + b1_ref[...]
    h = jnp.where(h >= 0.0, h, 0.01 * h)             # LeakyReLU
    out_ref[...] = jnp.dot(h, w2_ref[...], preferred_element_type=jnp.float32) + b2_ref[...]
    hr_ref[...] = jnp.dot(h_gap, wh_ref[...], preferred_element_type=jnp.float32) + bh_ref[...]


def heads_forward(task_out, hp):
    _, B, L50, _ = task_out.shape
    w1, b1, w2, b2, wh, bh = hp
    in_specs = [pl.BlockSpec(task_out.shape, lambda i: (0, 0, 0, 0))]
    for arr in (w1, b1, w2, b2, wh, bh):
        in_specs.append(pl.BlockSpec(arr.shape, lambda i: (0, 0)))
    out_shape = (jax.ShapeDtypeStruct((B, CLASSES), jnp.float32),
                 jax.ShapeDtypeStruct((B, 1), jnp.float32))
    out_specs = (pl.BlockSpec((B, CLASSES), lambda i: (0, 0)),
                 pl.BlockSpec((B, 1), lambda i: (0, 0)))
    return pl.pallas_call(
        _heads_kernel,
        out_shape=out_shape,
        grid=(1,),
        in_specs=in_specs,
        out_specs=out_specs,
        compiler_params=pltpu.CompilerParams(dimension_semantics=("arbitrary",)),
    )(task_out, w1, b1, w2, b2, wh, bh)


# ---------------------------------------------------------------------------
# Parameters (deterministic synthetic init; BN folded in eval mode)
# ---------------------------------------------------------------------------

def ecam_kernel_size(C, b=1, gama=2):
    ks = int(abs((math.log(C, 2) + b) / gama))
    return ks if ks % 2 else ks + 1


def _conv_init(key, K, Cin, Cout, *, bn=True):
    k1, k2, k3, k4 = jax.random.split(key, 4)
    w = jax.random.normal(k1, (K * Cin, Cout), jnp.float32) / math.sqrt(K * Cin)
    b = 0.05 * jax.random.normal(k2, (Cout,), jnp.float32)       # Conv1d bias
    if bn:
        gamma = 1.0 + 0.1 * jax.random.normal(k3, (Cout,), jnp.float32)
        beta = 0.05 * jax.random.normal(k4, (Cout,), jnp.float32)
        scale = gamma / jnp.sqrt(1.0 + 1e-5)     # running_var=1, running_mean=0 (eval)
        shift = beta + b * scale
    else:
        scale = jnp.ones((Cout,), jnp.float32)
        shift = b
    return w, jnp.stack([scale, shift], axis=0)                  # (2, Cout)


def _ecam_band(key, C):
    """Dense (C, C) band matrix M^T so that a = gap @ M^T == Conv1d(1,1,ks,pad) over C."""
    ks = ecam_kernel_size(C)
    taps = jax.random.normal(key, (ks,), jnp.float32) / math.sqrt(ks)   # no bias (as in ECAM)
    pad = ks // 2
    M = jnp.zeros((C, C), jnp.float32)
    for t in range(ks):
        M = M + taps[t] * jnp.eye(C, k=t - pad, dtype=jnp.float32)
    return M.T


def init_params(key):
    keys = jax.random.split(key, 64)
    it = iter(keys)
    nk = lambda: next(it)

    bvp = [_conv_init(nk(), K, Ci, Co, bn=bn) for (K, Ci, Co, bn) in _BVP_DEFS]

    def task_block(Ci, Co):
        att = _ecam_band(nk(), Ci)                                           # (Ci, Ci)
        w = jax.random.normal(nk(), (Ci, Co), jnp.float32) / math.sqrt(Ci)   # 1x1 conv
        b = 0.05 * jax.random.normal(nk(), (1, Co), jnp.float32)
        return att, w, b

    state = [task_block(32, 64), task_block(64, 128), task_block(128, 256)]
    hrt = [task_block(32, 64), task_block(64, 128), task_block(128, 256)]
    task = []
    for bs, bh in zip(state, hrt):                    # stack the two tasks per weight
        for a_s, a_h in zip(bs, bh):
            task.append(jnp.stack([a_s, a_h], axis=0))
    # task order: att2, w2, b2, att3, w3, b3, att4, w4, b4   (each with leading task dim 2)

    w1 = jax.random.normal(nk(), (512, CLASSIFIER_HIDDEN), jnp.float32) / math.sqrt(512)
    b1 = 0.05 * jax.random.normal(nk(), (1, CLASSIFIER_HIDDEN), jnp.float32)
    w2 = jax.random.normal(nk(), (CLASSIFIER_HIDDEN, CLASSES), jnp.float32) / math.sqrt(CLASSIFIER_HIDDEN)
    b2 = 0.05 * jax.random.normal(nk(), (1, CLASSES), jnp.float32)
    wh = jax.random.normal(nk(), (256, 1), jnp.float32) / math.sqrt(256)
    bh = 0.05 * jax.random.normal(nk(), (1, 1), jnp.float32)

    return dict(bvp=bvp, task=task, heads=(w1, b1, w2, b2, wh, bh))


# ---------------------------------------------------------------------------
# MetaStress forward (net_type='both')
# ---------------------------------------------------------------------------

def metastress_forward(x, params):
    """x: (B, L, 1) channels-last (PyTorch input is (B, 1, L)); L divisible by 50."""
    x32, x64, x128, peak = bvp_forward(x, params["bvp"])
    task_out = task_forward(x32, x64, x128, params["task"])     # (2, B, L/50, 256)
    out, hr = heads_forward(task_out, params["heads"])
    return out, hr, peak[:, :, 0]


if __name__ == "__main__":
    B, L = 2, 50                                          # L must be divisible by 50
    key = jax.random.PRNGKey(0)
    x_ncl = jax.random.normal(key, (B, 1, L), jnp.float32)      # PyTorch layout (B, C=1, L)
    x = jnp.transpose(x_ncl, (0, 2, 1))                         # kernel layout (B, L, C)

    params = init_params(jax.random.PRNGKey(1))
    fwd = jax.jit(metastress_forward)
    out, hr, peak = fwd(x, params)
    jax.block_until_ready((out, hr, peak))

    assert out.shape == (B, CLASSES)
    assert hr.shape == (B, 1)
    assert peak.shape == (B, L)
    print("KERNEL_OK")
</pallas_src>

<mosaic_0001>
module attributes {stable_mosaic.version = 11 : i64} {
  func.func @_task_kernel(%arg0: i32, %arg1: i32, %arg2: memref<1x50x32xf32, #tpu.memory_space<vmem>>, %arg3: memref<1x10x64xf32, #tpu.memory_space<vmem>>, %arg4: memref<1x2x128xf32, #tpu.memory_space<vmem>>, %arg5: memref<1x32x32xf32, #tpu.memory_space<vmem>>, %arg6: memref<1x32x64xf32, #tpu.memory_space<vmem>>, %arg7: memref<1x1x64xf32, #tpu.memory_space<vmem>>, %arg8: memref<1x64x64xf32, #tpu.memory_space<vmem>>, %arg9: memref<1x64x128xf32, #tpu.memory_space<vmem>>, %arg10: memref<1x1x128xf32, #tpu.memory_space<vmem>>, %arg11: memref<1x128x128xf32, #tpu.memory_space<vmem>>, %arg12: memref<1x128x256xf32, #tpu.memory_space<vmem>>, %arg13: memref<1x1x256xf32, #tpu.memory_space<vmem>>, %arg14: memref<1x1x1x256xf32, #tpu.memory_space<vmem>>) attributes {dimension_semantics = [#tpu.dimension_semantics<parallel>, #tpu.dimension_semantics<parallel>], iteration_bounds = array<i64: 2, 2>, scalar_prefetch = 0 : i64, scratch_operands = 0 : i64, tpu.core_type = #tpu.core_type<tc>, window_params = [{transform_indices = @transform_0, window_bounds = array<i64: 1, 50, 32>}, {transform_indices = @transform_1, window_bounds = array<i64: 1, 10, 64>}, {transform_indices = @transform_2, window_bounds = array<i64: 1, 2, 128>}, {transform_indices = @transform_3, window_bounds = array<i64: 1, 32, 32>}, {transform_indices = @transform_4, window_bounds = array<i64: 1, 32, 64>}, {transform_indices = @transform_5, window_bounds = array<i64: 1, 1, 64>}, {transform_indices = @transform_6, window_bounds = array<i64: 1, 64, 64>}, {transform_indices = @transform_7, window_bounds = array<i64: 1, 64, 128>}, {transform_indices = @transform_8, window_bounds = array<i64: 1, 1, 128>}, {transform_indices = @transform_9, window_bounds = array<i64: 1, 128, 128>}, {transform_indices = @transform_10, window_bounds = array<i64: 1, 128, 256>}, {transform_indices = @transform_11, window_bounds = array<i64: 1, 1, 256>}, {transform_indices = @transform_12, window_bounds = array<i64: 1, 1, 1, 256>}]} {
    %c0 = arith.constant 0 : index
    %c0_0 = arith.constant 0 : index
    %c0_1 = arith.constant 0 : index
    %0 = vector.load %arg2[%c0, %c0_0, %c0_1] : memref<1x50x32xf32, #tpu.memory_space<vmem>>, vector<1x50x32xf32>
    %1 = vector.shape_cast %0 : vector<1x50x32xf32> to vector<50x32xf32>
    %cst = arith.constant dense<0.000000e+00> : vector<32xf32>
    %2 = vector.multi_reduction <add>, %1, %cst [0] : vector<50x32xf32> to vector<32xf32>
    %3 = vector.shape_cast %2 : vector<32xf32> to vector<1x32xf32>
    %cst_2 = arith.constant 5.000000e+01 : f32
    %4 = vector.broadcast %cst_2 : f32 to vector<1x32xf32>
    %5 = arith.divf %3, %4 : vector<1x32xf32>
    %c0_3 = arith.constant 0 : index
    %c0_4 = arith.constant 0 : index
    %c0_5 = arith.constant 0 : index
    %6 = vector.load %arg5[%c0_3, %c0_4, %c0_5] : memref<1x32x32xf32, #tpu.memory_space<vmem>>, vector<1x32x32xf32>
    %7 = vector.shape_cast %6 : vector<1x32x32xf32> to vector<32x32xf32>
    %cst_6 = arith.constant dense<0.000000e+00> : vector<1x32xf32>
    %8 = tpu.matmul %5, %7, %cst_6 {dimension_numbers = #tpu.dot_dimension_numbers<[1], [0], [0], [1], [0, 0, 1, 1], [], []>} : vector<1x32xf32>, vector<32x32xf32>, vector<1x32xf32> -> vector<1x32xf32>
    %9 = arith.negf %8 : vector<1x32xf32>
    %10 = math.exp %9 : vector<1x32xf32>
    %cst_7 = arith.constant 1.000000e+00 : f32
    %11 = vector.broadcast %cst_7 : f32 to vector<1x32xf32>
    %12 = arith.addf %11, %10 : vector<1x32xf32>
    %13 = arith.divf %11, %12 : vector<1x32xf32>
    %14 = vector.broadcast %13 : vector<1x32xf32> to vector<50x32xf32>
    %15 = arith.mulf %1, %14 : vector<50x32xf32>
    %16 = arith.addf %15, %1 : vector<50x32xf32>
    %c0_8 = arith.constant 0 : index
    %c0_9 = arith.constant 0 : index
    %c0_10 = arith.constant 0 : index
    %17 = vector.load %arg6[%c0_8, %c0_9, %c0_10] : memref<1x32x64xf32, #tpu.memory_space<vmem>>, vector<1x32x64xf32>
    %18 = vector.shape_cast %17 : vector<1x32x64xf32> to vector<32x64xf32>
    %cst_11 = arith.constant dense<0.000000e+00> : vector<50x64xf32>
    %19 = tpu.matmul %16, %18, %cst_11 {dimension_numbers = #tpu.dot_dimension_numbers<[1], [0], [0], [1], [0, 0, 1, 1], [], []>} : vector<50x32xf32>, vector<32x64xf32>, vector<50x64xf32> -> vector<50x64xf32>
    %c0_12 = arith.constant 0 : index
    %c0_13 = arith.constant 0 : index
    %c0_14 = arith.constant 0 : index
    %20 = vector.load %arg7[%c0_12, %c0_13, %c0_14] : memref<1x1x64xf32, #tpu.memory_space<vmem>>, vector<1x1x64xf32>
    %21 = vector.shape_cast %20 : vector<1x1x64xf32> to vector<1x64xf32>
    %22 = vector.broadcast %21 : vector<1x64xf32> to vector<50x64xf32>
    %23 = arith.addf %19, %22 : vector<50x64xf32>
    %24 = vector.extract_strided_slice %23 {offsets = [0, 0], sizes = [5, 64], strides = [1, 1]} : vector<50x64xf32> to vector<5x64xf32>
    %cst_15 = arith.constant dense<0xFF800000> : vector<64xf32>
    %25 = vector.multi_reduction <maximumf>, %24, %cst_15 [0] : vector<5x64xf32> to vector<64xf32>
    %26 = vector.shape_cast %25 : vector<64xf32> to vector<1x64xf32>
    %27 = vector.extract_strided_slice %23 {offsets = [5, 0], sizes = [5, 64], strides = [1, 1]} : vector<50x64xf32> to vector<5x64xf32>
    %cst_16 = arith.constant dense<0xFF800000> : vector<64xf32>
    %28 = vector.multi_reduction <maximumf>, %27, %cst_16 [0] : vector<5x64xf32> to vector<64xf32>
    %29 = vector.shape_cast %28 : vector<64xf32> to vector<1x64xf32>
    %30 = vector.extract_strided_slice %23 {offsets = [10, 0], sizes = [5, 64], strides = [1, 1]} : vector<50x64xf32> to vector<5x64xf32>
    %cst_17 = arith.constant dense<0xFF800000> : vector<64xf32>
    %31 = vector.multi_reduction <maximumf>, %30, %cst_17 [0] : vector<5x64xf32> to vector<64xf32>
    %32 = vector.shape_cast %31 : vector<64xf32> to vector<1x64xf32>
    %33 = vector.extract_strided_slice %23 {offsets = [15, 0], sizes = [5, 64], strides = [1, 1]} : vector<50x64xf32> to vector<5x64xf32>
    %cst_18 = arith.constant dense<0xFF800000> : vector<64xf32>
    %34 = vector.multi_reduction <maximumf>, %33, %cst_18 [0] : vector<5x64xf32> to vector<64xf32>
    %35 = vector.shape_cast %34 : vector<64xf32> to vector<1x64xf32>
    %36 = vector.extract_strided_slice %23 {offsets = [20, 0], sizes = [5, 64], strides = [1, 1]} : vector<50x64xf32> to vector<5x64xf32>
    %cst_19 = arith.constant dense<0xFF800000> : vector<64xf32>
    %37 = vector.multi_reduction <maximumf>, %36, %cst_19 [0] : vector<5x64xf32> to vector<64xf32>
    %38 = vector.shape_cast %37 : vector<64xf32> to vector<1x64xf32>
    %39 = vector.extract_strided_slice %23 {offsets = [25, 0], sizes = [5, 64], strides = [1, 1]} : vector<50x64xf32> to vector<5x64xf32>
    %cst_20 = arith.constant dense<0xFF800000> : vector<64xf32>
    %40 = vector.multi_reduction <maximumf>, %39, %cst_20 [0] : vector<5x64xf32> to vector<64xf32>
    %41 = vector.shape_cast %40 : vector<64xf32> to vector<1x64xf32>
    %42 = vector.extract_strided_slice %23 {offsets = [30, 0], sizes = [5, 64], strides = [1, 1]} : vector<50x64xf32> to vector<5x64xf32>
    %cst_21 = arith.constant dense<0xFF800000> : vector<64xf32>
    %43 = vector.multi_reduction <maximumf>, %42, %cst_21 [0] : vector<5x64xf32> to vector<64xf32>
    %44 = vector.shape_cast %43 : vector<64xf32> to vector<1x64xf32>
    %45 = vector.extract_strided_slice %23 {offsets = [35, 0], sizes = [5, 64], strides = [1, 1]} : vector<50x64xf32> to vector<5x64xf32>
    %cst_22 = arith.constant dense<0xFF800000> : vector<64xf32>
    %46 = vector.multi_reduction <maximumf>, %45, %cst_22 [0] : vector<5x64xf32> to vector<64xf32>
    %47 = vector.shape_cast %46 : vector<64xf32> to vector<1x64xf32>
    %48 = vector.extract_strided_slice %23 {offsets = [40, 0], sizes = [5, 64], strides = [1, 1]} : vector<50x64xf32> to vector<5x64xf32>
    %cst_23 = arith.constant dense<0xFF800000> : vector<64xf32>
    %49 = vector.multi_reduction <maximumf>, %48, %cst_23 [0] : vector<5x64xf32> to vector<64xf32>
    %50 = vector.shape_cast %49 : vector<64xf32> to vector<1x64xf32>
    %51 = vector.extract_strided_slice %23 {offsets = [45, 0], sizes = [5, 64], strides = [1, 1]} : vector<50x64xf32> to vector<5x64xf32>
    %cst_24 = arith.constant dense<0xFF800000> : vector<64xf32>
    %52 = vector.multi_reduction <maximumf>, %51, %cst_24 [0] : vector<5x64xf32> to vector<64xf32>
    %53 = vector.shape_cast %52 : vector<64xf32> to vector<1x64xf32>
    %54 = tpu.concatenate %26, %29, %32, %35, %38, %41, %44, %47, %50, %53 in 0 : vector<1x64xf32>, vector<1x64xf32>, vector<1x64xf32>, vector<1x64xf32>, vector<1x64xf32>, vector<1x64xf32>, vector<1x64xf32>, vector<1x64xf32>, vector<1x64xf32>, vector<1x64xf32> -> vector<10x64xf32>
    %c0_25 = arith.constant 0 : index
    %c0_26 = arith.constant 0 : index
    %c0_27 = arith.constant 0 : index
    %55 = vector.load %arg3[%c0_25, %c0_26, %c0_27] : memref<1x10x64xf32, #tpu.memory_space<vmem>>, vector<1x10x64xf32>
    %56 = vector.shape_cast %55 : vector<1x10x64xf32> to vector<10x64xf32>
    %57 = arith.addf %54, %56 : vector<10x64xf32>
    %cst_28 = arith.constant dense<0.000000e+00> : vector<64xf32>
    %58 = vector.multi_reduction <add>, %57, %cst_28 [0] : vector<10x64xf32> to vector<64xf32>
    %59 = vector.shape_cast %58 : vector<64xf32> to vector<1x64xf32>
    %cst_29 = arith.constant 1.000000e+01 : f32
    %60 = vector.broadcast %cst_29 : f32 to vector<1x64xf32>
    %61 = arith.divf %59, %60 : vector<1x64xf32>
    %c0_30 = arith.constant 0 : index
    %c0_31 = arith.constant 0 : index
    %c0_32 = arith.constant 0 : index
    %62 = vector.load %arg8[%c0_30, %c0_31, %c0_32] : memref<1x64x64xf32, #tpu.memory_space<vmem>>, vector<1x64x64xf32>
    %63 = vector.shape_cast %62 : vector<1x64x64xf32> to vector<64x64xf32>
    %cst_33 = arith.constant dense<0.000000e+00> : vector<1x64xf32>
    %64 = tpu.matmul %61, %63, %cst_33 {dimension_numbers = #tpu.dot_dimension_numbers<[1], [0], [0], [1], [0, 0, 1, 1], [], []>} : vector<1x64xf32>, vector<64x64xf32>, vector<1x64xf32> -> vector<1x64xf32>
    %65 = arith.negf %64 : vector<1x64xf32>
    %66 = math.exp %65 : vector<1x64xf32>
    %cst_34 = arith.constant 1.000000e+00 : f32
    %67 = vector.broadcast %cst_34 : f32 to vector<1x64xf32>
    %68 = arith.addf %67, %66 : vector<1x64xf32>
    %69 = arith.divf %67, %68 : vector<1x64xf32>
    %70 = vector.broadcast %69 : vector<1x64xf32> to vector<10x64xf32>
    %71 = arith.mulf %57, %70 : vector<10x64xf32>
    %72 = arith.addf %71, %57 : vector<10x64xf32>
    %c0_35 = arith.constant 0 : index
    %c0_36 = arith.constant 0 : index
    %c0_37 = arith.constant 0 : index
    %73 = vector.load %arg9[%c0_35, %c0_36, %c0_37] : memref<1x64x128xf32, #tpu.memory_space<vmem>>, vector<1x64x128xf32>
    %74 = vector.shape_cast %73 : vector<1x64x128xf32> to vector<64x128xf32>
    %cst_38 = arith.constant dense<0.000000e+00> : vector<10x128xf32>
    %75 = tpu.matmul %72, %74, %cst_38 {dimension_numbers = #tpu.dot_dimension_numbers<[1], [0], [0], [1], [0, 0, 1, 1], [], []>} : vector<10x64xf32>, vector<64x128xf32>, vector<10x128xf32> -> vector<10x128xf32>
    %c0_39 = arith.constant 0 : index
    %c0_40 = arith.constant 0 : index
    %c0_41 = arith.constant 0 : index
    %76 = vector.load %arg10[%c0_39, %c0_40, %c0_41] : memref<1x1x128xf32, #tpu.memory_space<vmem>>, vector<1x1x128xf32>
    %77 = vector.shape_cast %76 : vector<1x1x128xf32> to vector<1x128xf32>
    %78 = vector.broadcast %77 : vector<1x128xf32> to vector<10x128xf32>
    %79 = arith.addf %75, %78 : vector<10x128xf32>
    %80 = vector.extract_strided_slice %79 {offsets = [0, 0], sizes = [5, 128], strides = [1, 1]} : vector<10x128xf32> to vector<5x128xf32>
    %cst_42 = arith.constant dense<0xFF800000> : vector<128xf32>
    %81 = vector.multi_reduction <maximumf>, %80, %cst_42 [0] : vector<5x128xf32> to vector<128xf32>
    %82 = vector.shape_cast %81 : vector<128xf32> to vector<1x128xf32>
    %83 = vector.extract_strided_slice %79 {offsets = [5, 0], sizes = [5, 128], strides = [1, 1]} : vector<10x128xf32> to vector<5x128xf32>
    %cst_43 = arith.constant dense<0xFF800000> : vector<128xf32>
    %84 = vector.multi_reduction <maximumf>, %83, %cst_43 [0] : vector<5x128xf32> to vector<128xf32>
    %85 = vector.shape_cast %84 : vector<128xf32> to vector<1x128xf32>
    %86 = tpu.concatenate %82, %85 in 0 : vector<1x128xf32>, vector<1x128xf32> -> vector<2x128xf32>
    %c0_44 = arith.constant 0 : index
    %c0_45 = arith.constant 0 : index
    %c0_46 = arith.constant 0 : index
    %87 = vector.load %arg4[%c0_44, %c0_45, %c0_46] : memref<1x2x128xf32, #tpu.memory_space<vmem>>, vector<1x2x128xf32>
    %88 = vector.shape_cast %87 : vector<1x2x128xf32> to vector<2x128xf32>
    %89 = arith.addf %86, %88 : vector<2x128xf32>
    %cst_47 = arith.constant dense<0.000000e+00> : vector<128xf32>
    %90 = vector.multi_reduction <add>, %89, %cst_47 [0] : vector<2x128xf32> to vector<128xf32>
    %91 = vector.shape_cast %90 : vector<128xf32> to vector<1x128xf32>
    %cst_48 = arith.constant 2.000000e+00 : f32
    %92 = vector.broadcast %cst_48 : f32 to vector<1x128xf32>
    %93 = arith.divf %91, %92 : vector<1x128xf32>
    %c0_49 = arith.constant 0 : index
    %c0_50 = arith.constant 0 : index
    %c0_51 = arith.constant 0 : index
    %94 = vector.load %arg11[%c0_49, %c0_50, %c0_51] : memref<1x128x128xf32, #tpu.memory_space<vmem>>, vector<1x128x128xf32>
    %95 = vector.shape_cast %94 : vector<1x128x128xf32> to vector<128x128xf32>
    %cst_52 = arith.constant dense<0.000000e+00> : vector<1x128xf32>
    %96 = tpu.matmul %93, %95, %cst_52 {dimension_numbers = #tpu.dot_dimension_numbers<[1], [0], [0], [1], [0, 0, 1, 1], [], []>} : vector<1x128xf32>, vector<128x128xf32>, vector<1x128xf32> -> vector<1x128xf32>
    %97 = arith.negf %96 : vector<1x128xf32>
    %98 = math.exp %97 : vector<1x128xf32>
    %cst_53 = arith.constant 1.000000e+00 : f32
    %99 = vector.broadcast %cst_53 : f32 to vector<1x128xf32>
    %100 = arith.addf %99, %98 : vector<1x128xf32>
    %101 = arith.divf %99, %100 : vector<1x128xf32>
    %102 = vector.broadcast %101 : vector<1x128xf32> to vector<2x128xf32>
    %103 = arith.mulf %89, %102 : vector<2x128xf32>
    %104 = arith.addf %103, %89 : vector<2x128xf32>
    %c0_54 = arith.constant 0 : index
    %c0_55 = arith.constant 0 : index
    %c0_56 = arith.constant 0 : index
    %105 = vector.load %arg12[%c0_54, %c0_55, %c0_56] : memref<1x128x256xf32, #tpu.memory_space<vmem>>, vector<1x128x256xf32>
    %106 = vector.shape_cast %105 : vector<1x128x256xf32> to vector<128x256xf32>
    %cst_57 = arith.constant dense<0.000000e+00> : vector<2x256xf32>
    %107 = tpu.matmul %104, %106, %cst_57 {dimension_numbers = #tpu.dot_dimension_numbers<[1], [0], [0], [1], [0, 0, 1, 1], [], []>} : vector<2x128xf32>, vector<128x256xf32>, vector<2x256xf32> -> vector<2x256xf32>
    %c0_58 = arith.constant 0 : index
    %c0_59 = arith.constant 0 : index
    %c0_60 = arith.constant 0 : index
    %108 = vector.load %arg13[%c0_58, %c0_59, %c0_60] : memref<1x1x256xf32, #tpu.memory_space<vmem>>, vector<1x1x256xf32>
    %109 = vector.shape_cast %108 : vector<1x1x256xf32> to vector<1x256xf32>
    %110 = vector.broadcast %109 : vector<1x256xf32> to vector<2x256xf32>
    %111 = arith.addf %107, %110 : vector<2x256xf32>
    %cst_61 = arith.constant dense<0xFF800000> : vector<256xf32>
    %112 = vector.multi_reduction <maximumf>, %111, %cst_61 [0] : vector<2x256xf32> to vector<256xf32>
    %113 = vector.shape_cast %112 : vector<256xf32> to vector<1x256xf32>
    %c0_62 = arith.constant 0 : index
    %c0_63 = arith.constant 0 : index
    %c0_64 = arith.constant 0 : index
    %c0_65 = arith.constant 0 : index
    %114 = vector.load %arg14[%c0_62, %c0_63, %c0_64, %c0_65] : memref<1x1x1x256xf32, #tpu.memory_space<vmem>>, vector<1x1x1x256xf32>
    %115 = vector.shape_cast %114 : vector<1x1x1x256xf32> to vector<1x256xf32>
    %116 = vector.shape_cast %113 : vector<1x256xf32> to vector<1x1x1x256xf32>
    tpu.vector_store %arg14[%c0_62, %c0_63, %c0_64, %c0_65], %116 {strides = array<i32>} : memref<1x1x1x256xf32, #tpu.memory_space<vmem>>, vector<1x1x1x256xf32>,
    return
  }
  func.func @transform_0(%arg0: i32, %arg1: i32) -> (i32, i32, i32) {
    %c0_i32 = arith.constant 0 : i32
    %c0_i32_0 = arith.constant 0 : i32
    %c0_i32_1 = arith.constant 0 : i32
    return %arg1, %c0_i32, %c0_i32_0 : i32, i32, i32
  }
  func.func @transform_1(%arg0: i32, %arg1: i32) -> (i32, i32, i32) {
    %c0_i32 = arith.constant 0 : i32
    %c0_i32_0 = arith.constant 0 : i32
    %c0_i32_1 = arith.constant 0 : i32
    return %arg1, %c0_i32, %c0_i32_0 : i32, i32, i32
  }
  func.func @transform_2(%arg0: i32, %arg1: i32) -> (i32, i32, i32) {
    %c0_i32 = arith.constant 0 : i32
    %c0_i32_0 = arith.constant 0 : i32
    %c0_i32_1 = arith.constant 0 : i32
    return %arg1, %c0_i32, %c0_i32_0 : i32, i32, i32
  }
  func.func @transform_3(%arg0: i32, %arg1: i32) -> (i32, i32, i32) {
    %c0_i32 = arith.constant 0 : i32
    %c0_i32_0 = arith.constant 0 : i32
    %c0_i32_1 = arith.constant 0 : i32
    return %arg0, %c0_i32, %c0_i32_0 : i32, i32, i32
  }
  func.func @transform_4(%arg0: i32, %arg1: i32) -> (i32, i32, i32) {
    %c0_i32 = arith.constant 0 : i32
    %c0_i32_0 = arith.constant 0 : i32
    %c0_i32_1 = arith.constant 0 : i32
    return %arg0, %c0_i32, %c0_i32_0 : i32, i32, i32
  }
  func.func @transform_5(%arg0: i32, %arg1: i32) -> (i32, i32, i32) {
    %c0_i32 = arith.constant 0 : i32
    %c0_i32_0 = arith.constant 0 : i32
    %c0_i32_1 = arith.constant 0 : i32
    return %arg0, %c0_i32, %c0_i32_0 : i32, i32, i32
  }
  func.func @transform_6(%arg0: i32, %arg1: i32) -> (i32, i32, i32) {
    %c0_i32 = arith.constant 0 : i32
    %c0_i32_0 = arith.constant 0 : i32
    %c0_i32_1 = arith.constant 0 : i32
    return %arg0, %c0_i32, %c0_i32_0 : i32, i32, i32
  }
  func.func @transform_7(%arg0: i32, %arg1: i32) -> (i32, i32, i32) {
    %c0_i32 = arith.constant 0 : i32
    %c0_i32_0 = arith.constant 0 : i32
    %c0_i32_1 = arith.constant 0 : i32
    return %arg0, %c0_i32, %c0_i32_0 : i32, i32, i32
  }
  func.func @transform_8(%arg0: i32, %arg1: i32) -> (i32, i32, i32) {
    %c0_i32 = arith.constant 0 : i32
    %c0_i32_0 = arith.constant 0 : i32
    %c0_i32_1 = arith.constant 0 : i32
    return %arg0, %c0_i32, %c0_i32_0 : i32, i32, i32
  }
  func.func @transform_9(%arg0: i32, %arg1: i32) -> (i32, i32, i32) {
    %c0_i32 = arith.constant 0 : i32
    %c0_i32_0 = arith.constant 0 : i32
    %c0_i32_1 = arith.constant 0 : i32
    return %arg0, %c0_i32, %c0_i32_0 : i32, i32, i32
  }
  func.func @transform_10(%arg0: i32, %arg1: i32) -> (i32, i32, i32) {
    %c0_i32 = arith.constant 0 : i32
    %c0_i32_0 = arith.constant 0 : i32
    %c0_i32_1 = arith.constant 0 : i32
    return %arg0, %c0_i32, %c0_i32_0 : i32, i32, i32
  }
  func.func @transform_11(%arg0: i32, %arg1: i32) -> (i32, i32, i32) {
    %c0_i32 = arith.constant 0 : i32
    %c0_i32_0 = arith.constant 0 : i32
    %c0_i32_1 = arith.constant 0 : i32
    return %arg0, %c0_i32, %c0_i32_0 : i32, i32, i32
  }
  func.func @transform_12(%arg0: i32, %arg1: i32) -> (i32, i32, i32, i32) {
    %c0_i32 = arith.constant 0 : i32
    %c0_i32_0 = arith.constant 0 : i32
    %c0_i32_1 = arith.constant 0 : i32
    return %arg0, %arg1, %c0_i32, %c0_i32_0 : i32, i32, i32, i32
  }
}

module attributes {stable_mosaic.version = 11 : i64} {
  func.func @_bvp_kernel(%arg0: i32, %arg1: memref<1x50x1xf32, #tpu.memory_space<vmem>>, %arg2: memref<3x16xf32, #tpu.memory_space<vmem>>, %arg3: memref<2x16xf32, #tpu.memory_space<vmem>>, %arg4: memref<48x8xf32, #tpu.memory_space<vmem>>, %arg5: memref<2x8xf32, #tpu.memory_space<vmem>>, %arg6: memref<24x4xf32, #tpu.memory_space<vmem>>, %arg7: memref<2x4xf32, #tpu.memory_space<vmem>>, %arg8: memref<48x4xf32, #tpu.memory_space<vmem>>, %arg9: memref<2x4xf32, #tpu.memory_space<vmem>>, %arg10: memref<12x1xf32, #tpu.memory_space<vmem>>, %arg11: memref<2x1xf32, #tpu.memory_space<vmem>>, %arg12: memref<48x1xf32, #tpu.memory_space<vmem>>, %arg13: memref<2x1xf32, #tpu.memory_space<vmem>>, %arg14: memref<144x32xf32, #tpu.memory_space<vmem>>, %arg15: memref<2x32xf32, #tpu.memory_space<vmem>>, %arg16: memref<288x32xf32, #tpu.memory_space<vmem>>, %arg17: memref<2x32xf32, #tpu.memory_space<vmem>>, %arg18: memref<224x64xf32, #tpu.memory_space<vmem>>, %arg19: memref<2x64xf32, #tpu.memory_space<vmem>>, %arg20: memref<448x64xf32, #tpu.memory_space<vmem>>, %arg21: memref<2x64xf32, #tpu.memory_space<vmem>>, %arg22: memref<192x128xf32, #tpu.memory_space<vmem>>, %arg23: memref<2x128xf32, #tpu.memory_space<vmem>>, %arg24: memref<384x128xf32, #tpu.memory_space<vmem>>, %arg25: memref<2x128xf32, #tpu.memory_space<vmem>>, %arg26: memref<1x50x32xf32, #tpu.memory_space<vmem>>, %arg27: memref<1x10x64xf32, #tpu.memory_space<vmem>>, %arg28: memref<1x2x128xf32, #tpu.memory_space<vmem>>, %arg29: memref<1x50x1xf32, #tpu.memory_space<vmem>>) attributes {dimension_semantics = [#tpu.dimension_semantics<parallel>], iteration_bounds = array<i64: 2>, scalar_prefetch = 0 : i64, scratch_operands = 0 : i64, tpu.core_type = #tpu.core_type<tc>, window_params = [{transform_indices = @transform_0, window_bounds = array<i64: 1, 50, 1>}, {pipeline_mode = #tpu.pipeline_mode<synchronous>, transform_indices = @transform_1, window_bounds = array<i64: 3, 16>}, {pipeline_mode = #tpu.pipeline_mode<synchronous>, transform_indices = @transform_2, window_bounds = array<i64: 2, 16>}, {pipeline_mode = #tpu.pipeline_mode<synchronous>, transform_indices = @transform_3, window_bounds = array<i64: 48, 8>}, {pipeline_mode = #tpu.pipeline_mode<synchronous>, transform_indices = @transform_4, window_bounds = array<i64: 2, 8>}, {pipeline_mode = #tpu.pipeline_mode<synchronous>, transform_indices = @transform_5, window_bounds = array<i64: 24, 4>}, {pipeline_mode = #tpu.pipeline_mode<synchronous>, transform_indices = @transform_6, window_bounds = array<i64: 2, 4>}, {pipeline_mode = #tpu.pipeline_mode<synchronous>, transform_indices = @transform_7, window_bounds = array<i64: 48, 4>}, {pipeline_mode = #tpu.pipeline_mode<synchronous>, transform_indices = @transform_8, window_bounds = array<i64: 2, 4>}, {pipeline_mode = #tpu.pipeline_mode<synchronous>, transform_indices = @transform_9, window_bounds = array<i64: 12, 1>}, {pipeline_mode = #tpu.pipeline_mode<synchronous>, transform_indices = @transform_10, window_bounds = array<i64: 2, 1>}, {pipeline_mode = #tpu.pipeline_mode<synchronous>, transform_indices = @transform_11, window_bounds = array<i64: 48, 1>}, {pipeline_mode = #tpu.pipeline_mode<synchronous>, transform_indices = @transform_12, window_bounds = array<i64: 2, 1>}, {pipeline_mode = #tpu.pipeline_mode<synchronous>, transform_indices = @transform_13, window_bounds = array<i64: 144, 32>}, {pipeline_mode = #tpu.pipeline_mode<synchronous>, transform_indices = @transform_14, window_bounds = array<i64: 2, 32>}, {pipeline_mode = #tpu.pipeline_mode<synchronous>, transform_indices = @transform_15, window_bounds = array<i64: 288, 32>}, {pipeline_mode = #tpu.pipeline_mode<synchronous>, transform_indices = @transform_16, window_bounds = array<i64: 2, 32>}, {pipeline_mode = #tpu.pipeline_mode<synchronous>, transform_indices = @transform_17, window_bounds = array<i64: 224, 64>}, {pipeline_mode = #tpu.pipeline_mode<synchronous>, transform_indices = @transform_18, window_bounds = array<i64: 2, 64>}, {pipeline_mode = #tpu.pipeline_mode<synchronous>, transform_indices = @transform_19, window_bounds = array<i64: 448, 64>}, {pipeline_mode = #tpu.pipeline_mode<synchronous>, transform_indices = @transform_20, window_bounds = array<i64: 2, 64>}, {pipeline_mode = #tpu.pipeline_mode<synchronous>, transform_indices = @transform_21, window_bounds = array<i64: 192, 128>}, {pipeline_mode = #tpu.pipeline_mode<synchronous>, transform_indices = @transform_22, window_bounds = array<i64: 2, 128>}, {pipeline_mode = #tpu.pipeline_mode<synchronous>, transform_indices = @transform_23, window_bounds = array<i64: 384, 128>}, {pipeline_mode = #tpu.pipeline_mode<synchronous>, transform_indices = @transform_24, window_bounds = array<i64: 2, 128>}, {transform_indices = @transform_25, window_bounds = array<i64: 1, 50, 32>}, {transform_indices = @transform_26, window_bounds = array<i64: 1, 10, 64>}, {transform_indices = @transform_27, window_bounds = array<i64: 1, 2, 128>}, {transform_indices = @transform_28, window_bounds = array<i64: 1, 50, 1>}]} {
    %c0 = arith.constant 0 : index
    %c0_0 = arith.constant 0 : index
    %c0_1 = arith.constant 0 : index
    %0 = vector.load %arg1[%c0, %c0_0, %c0_1] : memref<1x50x1xf32, #tpu.memory_space<vmem>>, vector<1x50x1xf32>
    %1 = vector.shape_cast %0 : vector<1x50x1xf32> to vector<50x1xf32>
    %c0_2 = arith.constant 0 : index
    %c0_3 = arith.constant 0 : index
    %2 = vector.load %arg2[%c0_2, %c0_3] : memref<3x16xf32, #tpu.memory_space<vmem>>, vector<3x16xf32>
    %c0_4 = arith.constant 0 : index
    %c0_5 = arith.constant 0 : index
    %3 = vector.load %arg3[%c0_4, %c0_5] : memref<2x16xf32, #tpu.memory_space<vmem>>, vector<2x16xf32>
    %4 = vector.extract_strided_slice %3 {offsets = [0, 0], sizes = [1, 16], strides = [1, 1]} : vector<2x16xf32> to vector<1x16xf32>
    %5 = vector.extract_strided_slice %3 {offsets = [1, 0], sizes = [1, 16], strides = [1, 1]} : vector<2x16xf32> to vector<1x16xf32>
    %cst = arith.constant 0.000000e+00 : f32
    %6 = vector.broadcast %cst : f32 to vector<1x1xf32>
    %7 = tpu.concatenate %6, %1, %6 in 0 : vector<1x1xf32>, vector<50x1xf32>, vector<1x1xf32> -> vector<52x1xf32>
    %8 = vector.extract_strided_slice %7 {offsets = [0, 0], sizes = [50, 1], strides = [1, 1]} : vector<52x1xf32> to vector<50x1xf32>
    %9 = vector.extract_strided_slice %7 {offsets = [1, 0], sizes = [50, 1], strides = [1, 1]} : vector<52x1xf32> to vector<50x1xf32>
    %10 = vector.extract_strided_slice %7 {offsets = [2, 0], sizes = [50, 1], strides = [1, 1]} : vector<52x1xf32> to vector<50x1xf32>
    %11 = tpu.concatenate %8, %9, %10 in 1 : vector<50x1xf32>, vector<50x1xf32>, vector<50x1xf32> -> vector<50x3xf32>
    %cst_6 = arith.constant dense<0.000000e+00> : vector<50x16xf32>
    %12 = tpu.matmul %11, %2, %cst_6 {dimension_numbers = #tpu.dot_dimension_numbers<[1], [0], [0], [1], [0, 0, 1, 1], [], []>} : vector<50x3xf32>, vector<3x16xf32>, vector<50x16xf32> -> vector<50x16xf32>
    %13 = vector.broadcast %4 : vector<1x16xf32> to vector<50x16xf32>
    %14 = arith.mulf %12, %13 : vector<50x16xf32>
    %15 = vector.broadcast %5 : vector<1x16xf32> to vector<50x16xf32>
    %16 = arith.addf %14, %15 : vector<50x16xf32>
    %cst_7 = arith.constant 0.000000e+00 : f32
    %17 = vector.broadcast %cst_7 : f32 to vector<50x16xf32>
    %18 = arith.cmpf oge, %16, %17 : vector<50x16xf32>
    %cst_8 = arith.constant 0.00999999977 : f32
    %19 = vector.broadcast %cst_8 : f32 to vector<50x16xf32>
    %20 = arith.mulf %19, %16 : vector<50x16xf32>
    %21 = arith.select %18, %16, %20 : vector<50x16xi1>, vector<50x16xf32>
    %c0_9 = arith.constant 0 : index
    %c0_10 = arith.constant 0 : index
    %22 = vector.load %arg4[%c0_9, %c0_10] : memref<48x8xf32, #tpu.memory_space<vmem>>, vector<48x8xf32>
    %c0_11 = arith.constant 0 : index
    %c0_12 = arith.constant 0 : index
    %23 = vector.load %arg5[%c0_11, %c0_12] : memref<2x8xf32, #tpu.memory_space<vmem>>, vector<2x8xf32>
    %24 = vector.extract_strided_slice %23 {offsets = [0, 0], sizes = [1, 8], strides = [1, 1]} : vector<2x8xf32> to vector<1x8xf32>
    %25 = vector.extract_strided_slice %23 {offsets = [1, 0], sizes = [1, 8], strides = [1, 1]} : vector<2x8xf32> to vector<1x8xf32>
    %cst_13 = arith.constant 0.000000e+00 : f32
    %26 = vector.broadcast %cst_13 : f32 to vector<1x16xf32>
    %27 = tpu.concatenate %26, %21, %26 in 0 : vector<1x16xf32>, vector<50x16xf32>, vector<1x16xf32> -> vector<52x16xf32>
    %28 = vector.extract_strided_slice %27 {offsets = [0, 0], sizes = [50, 16], strides = [1, 1]} : vector<52x16xf32> to vector<50x16xf32>
    %29 = vector.extract_strided_slice %27 {offsets = [1, 0], sizes = [50, 16], strides = [1, 1]} : vector<52x16xf32> to vector<50x16xf32>
    %30 = vector.extract_strided_slice %27 {offsets = [2, 0], sizes = [50, 16], strides = [1, 1]} : vector<52x16xf32> to vector<50x16xf32>
    %31 = tpu.concatenate %28, %29, %30 in 1 : vector<50x16xf32>, vector<50x16xf32>, vector<50x16xf32> -> vector<50x48xf32>
    %cst_14 = arith.constant dense<0.000000e+00> : vector<50x8xf32>
    %32 = tpu.matmul %31, %22, %cst_14 {dimension_numbers = #tpu.dot_dimension_numbers<[1], [0], [0], [1], [0, 0, 1, 1], [], []>} : vector<50x48xf32>, vector<48x8xf32>, vector<50x8xf32> -> vector<50x8xf32>
    %33 = vector.broadcast %24 : vector<1x8xf32> to vector<50x8xf32>
    %34 = arith.mulf %32, %33 : vector<50x8xf32>
    %35 = vector.broadcast %25 : vector<1x8xf32> to vector<50x8xf32>
    %36 = arith.addf %34, %35 : vector<50x8xf32>
    %cst_15 = arith.constant 0.000000e+00 : f32
    %37 = vector.broadcast %cst_15 : f32 to vector<50x8xf32>
    %38 = arith.cmpf oge, %36, %37 : vector<50x8xf32>
    %cst_16 = arith.constant 0.00999999977 : f32
    %39 = vector.broadcast %cst_16 : f32 to vector<50x8xf32>
    %40 = arith.mulf %39, %36 : vector<50x8xf32>
    %41 = arith.select %38, %36, %40 : vector<50x8xi1>, vector<50x8xf32>
    %c0_17 = arith.constant 0 : index
    %c0_18 = arith.constant 0 : index
    %42 = vector.load %arg6[%c0_17, %c0_18] : memref<24x4xf32, #tpu.memory_space<vmem>>, vector<24x4xf32>
    %c0_19 = arith.constant 0 : index
    %c0_20 = arith.constant 0 : index
    %43 = vector.load %arg7[%c0_19, %c0_20] : memref<2x4xf32, #tpu.memory_space<vmem>>, vector<2x4xf32>
    %44 = vector.extract_strided_slice %43 {offsets = [0, 0], sizes = [1, 4], strides = [1, 1]} : vector<2x4xf32> to vector<1x4xf32>
    %45 = vector.extract_strided_slice %43 {offsets = [1, 0], sizes = [1, 4], strides = [1, 1]} : vector<2x4xf32> to vector<1x4xf32>
    %cst_21 = arith.constant 0.000000e+00 : f32
    %46 = vector.broadcast %cst_21 : f32 to vector<1x8xf32>
    %47 = tpu.concatenate %46, %41, %46 in 0 : vector<1x8xf32>, vector<50x8xf32>, vector<1x8xf32> -> vector<52x8xf32>
    %48 = vector.extract_strided_slice %47 {offsets = [0, 0], sizes = [50, 8], strides = [1, 1]} : vector<52x8xf32> to vector<50x8xf32>
    %49 = vector.extract_strided_slice %47 {offsets = [1, 0], sizes = [50, 8], strides = [1, 1]} : vector<52x8xf32> to vector<50x8xf32>
    %50 = vector.extract_strided_slice %47 {offsets = [2, 0], sizes = [50, 8], strides = [1, 1]} : vector<52x8xf32> to vector<50x8xf32>
    %51 = tpu.concatenate %48, %49, %50 in 1 : vector<50x8xf32>, vector<50x8xf32>, vector<50x8xf32> -> vector<50x24xf32>
    %cst_22 = arith.constant dense<0.000000e+00> : vector<50x4xf32>
    %52 = tpu.matmul %51, %42, %cst_22 {dimension_numbers = #tpu.dot_dimension_numbers<[1], [0], [0], [1], [0, 0, 1, 1], [], []>} : vector<50x24xf32>, vector<24x4xf32>, vector<50x4xf32> -> vector<50x4xf32>
    %53 = vector.broadcast %44 : vector<1x4xf32> to vector<50x4xf32>
    %54 = arith.mulf %52, %53 : vector<50x4xf32>
    %55 = vector.broadcast %45 : vector<1x4xf32> to vector<50x4xf32>
    %56 = arith.addf %54, %55 : vector<50x4xf32>
    %cst_23 = arith.constant 0.000000e+00 : f32
    %57 = vector.broadcast %cst_23 : f32 to vector<50x4xf32>
    %58 = arith.cmpf oge, %56, %57 : vector<50x4xf32>
    %cst_24 = arith.constant 0.00999999977 : f32
    %59 = vector.broadcast %cst_24 : f32 to vector<50x4xf32>
    %60 = arith.mulf %59, %56 : vector<50x4xf32>
    %61 = arith.select %58, %56, %60 : vector<50x4xi1>, vector<50x4xf32>
    %c0_25 = arith.constant 0 : index
    %c0_26 = arith.constant 0 : index
    %62 = vector.load %arg8[%c0_25, %c0_26] : memref<48x4xf32, #tpu.memory_space<vmem>>, vector<48x4xf32>
    %c0_27 = arith.constant 0 : index
    %c0_28 = arith.constant 0 : index
    %63 = vector.load %arg9[%c0_27, %c0_28] : memref<2x4xf32, #tpu.memory_space<vmem>>, vector<2x4xf32>
    %64 = vector.extract_strided_slice %63 {offsets = [0, 0], sizes = [1, 4], strides = [1, 1]} : vector<2x4xf32> to vector<1x4xf32>
    %65 = vector.extract_strided_slice %63 {offsets = [1, 0], sizes = [1, 4], strides = [1, 1]} : vector<2x4xf32> to vector<1x4xf32>
    %cst_29 = arith.constant 0.000000e+00 : f32
    %66 = vector.broadcast %cst_29 : f32 to vector<1x16xf32>
    %67 = tpu.concatenate %66, %21, %66 in 0 : vector<1x16xf32>, vector<50x16xf32>, vector<1x16xf32> -> vector<52x16xf32>
    %68 = vector.extract_strided_slice %67 {offsets = [0, 0], sizes = [50, 16], strides = [1, 1]} : vector<52x16xf32> to vector<50x16xf32>
    %69 = vector.extract_strided_slice %67 {offsets = [1, 0], sizes = [50, 16], strides = [1, 1]} : vector<52x16xf32> to vector<50x16xf32>
    %70 = vector.extract_strided_slice %67 {offsets = [2, 0], sizes = [50, 16], strides = [1, 1]} : vector<52x16xf32> to vector<50x16xf32>
    %71 = tpu.concatenate %68, %69, %70 in 1 : vector<50x16xf32>, vector<50x16xf32>, vector<50x16xf32> -> vector<50x48xf32>
    %cst_30 = arith.constant dense<0.000000e+00> : vector<50x4xf32>
    %72 = tpu.matmul %71, %62, %cst_30 {dimension_numbers = #tpu.dot_dimension_numbers<[1], [0], [0], [1], [0, 0, 1, 1], [], []>} : vector<50x48xf32>, vector<48x4xf32>, vector<50x4xf32> -> vector<50x4xf32>
    %73 = vector.broadcast %64 : vector<1x4xf32> to vector<50x4xf32>
    %74 = arith.mulf %72, %73 : vector<50x4xf32>
    %75 = vector.broadcast %65 : vector<1x4xf32> to vector<50x4xf32>
    %76 = arith.addf %74, %75 : vector<50x4xf32>
    %cst_31 = arith.constant 0.000000e+00 : f32
    %77 = vector.broadcast %cst_31 : f32 to vector<50x4xf32>
    %78 = arith.cmpf oge, %76, %77 : vector<50x4xf32>
    %cst_32 = arith.constant 0.00999999977 : f32
    %79 = vector.broadcast %cst_32 : f32 to vector<50x4xf32>
    %80 = arith.mulf %79, %76 : vector<50x4xf32>
    %81 = arith.select %78, %76, %80 : vector<50x4xi1>, vector<50x4xf32>
    %82 = arith.addf %61, %81 : vector<50x4xf32>
    %c0_33 = arith.constant 0 : index
    %c0_34 = arith.constant 0 : index
    %83 = vector.load %arg10[%c0_33, %c0_34] : memref<12x1xf32, #tpu.memory_space<vmem>>, vector<12x1xf32>
    %c0_35 = arith.constant 0 : index
    %c0_36 = arith.constant 0 : index
    %84 = vector.load %arg11[%c0_35, %c0_36] : memref<2x1xf32, #tpu.memory_space<vmem>>, vector<2x1xf32>
    %85 = vector.extract_strided_slice %84 {offsets = [0, 0], sizes = [1, 1], strides = [1, 1]} : vector<2x1xf32> to vector<1x1xf32>
    %86 = vector.extract_strided_slice %84 {offsets = [1, 0], sizes = [1, 1], strides = [1, 1]} : vector<2x1xf32> to vector<1x1xf32>
    %cst_37 = arith.constant 0.000000e+00 : f32
    %87 = vector.broadcast %cst_37 : f32 to vector<1x4xf32>
    %88 = tpu.concatenate %87, %82, %87 in 0 : vector<1x4xf32>, vector<50x4xf32>, vector<1x4xf32> -> vector<52x4xf32>
    %89 = vector.extract_strided_slice %88 {offsets = [0, 0], sizes = [50, 4], strides = [1, 1]} : vector<52x4xf32> to vector<50x4xf32>
    %90 = vector.extract_strided_slice %88 {offsets = [1, 0], sizes = [50, 4], strides = [1, 1]} : vector<52x4xf32> to vector<50x4xf32>
    %91 = vector.extract_strided_slice %88 {offsets = [2, 0], sizes = [50, 4], strides = [1, 1]} : vector<52x4xf32> to vector<50x4xf32>
    %92 = tpu.concatenate %89, %90, %91 in 1 : vector<50x4xf32>, vector<50x4xf32>, vector<50x4xf32> -> vector<50x12xf32>
    %cst_38 = arith.constant dense<0.000000e+00> : vector<50x1xf32>
    %93 = tpu.matmul %92, %83, %cst_38 {dimension_numbers = #tpu.dot_dimension_numbers<[1], [0], [0], [1], [0, 0, 1, 1], [], []>} : vector<50x12xf32>, vector<12x1xf32>, vector<50x1xf32> -> vector<50x1xf32>
    %94 = vector.broadcast %85 : vector<1x1xf32> to vector<50x1xf32>
    %95 = arith.mulf %93, %94 : vector<50x1xf32>
    %96 = vector.broadcast %86 : vector<1x1xf32> to vector<50x1xf32>
    %97 = arith.addf %95, %96 : vector<50x1xf32>
    %98 = arith.negf %97 : vector<50x1xf32>
    %99 = math.exp %98 : vector<50x1xf32>
    %cst_39 = arith.constant 1.000000e+00 : f32
    %100 = vector.broadcast %cst_39 : f32 to vector<50x1xf32>
    %101 = arith.addf %100, %99 : vector<50x1xf32>
    %102 = arith.divf %100, %101 : vector<50x1xf32>
    %c0_40 = arith.constant 0 : index
    %c0_41 = arith.constant 0 : index
    %103 = vector.load %arg12[%c0_40, %c0_41] : memref<48x1xf32, #tpu.memory_space<vmem>>, vector<48x1xf32>
    %c0_42 = arith.constant 0 : index
    %c0_43 = arith.constant 0 : index
    %104 = vector.load %arg13[%c0_42, %c0_43] : memref<2x1xf32, #tpu.memory_space<vmem>>, vector<2x1xf32>
    %105 = vector.extract_strided_slice %104 {offsets = [0, 0], sizes = [1, 1], strides = [1, 1]} : vector<2x1xf32> to vector<1x1xf32>
    %106 = vector.extract_strided_slice %104 {offsets = [1, 0], sizes = [1, 1], strides = [1, 1]} : vector<2x1xf32> to vector<1x1xf32>
    %cst_44 = arith.constant 0.000000e+00 : f32
    %107 = vector.broadcast %cst_44 : f32 to vector<1x16xf32>
    %108 = tpu.concatenate %107, %21, %107 in 0 : vector<1x16xf32>, vector<50x16xf32>, vector<1x16xf32> -> vector<52x16xf32>
    %109 = vector.extract_strided_slice %108 {offsets = [0, 0], sizes = [50, 16], strides = [1, 1]} : vector<52x16xf32> to vector<50x16xf32>
    %110 = vector.extract_strided_slice %108 {offsets = [1, 0], sizes = [50, 16], strides = [1, 1]} : vector<52x16xf32> to vector<50x16xf32>
    %111 = vector.extract_strided_slice %108 {offsets = [2, 0], sizes = [50, 16], strides = [1, 1]} : vector<52x16xf32> to vector<50x16xf32>
    %112 = tpu.concatenate %109, %110, %111 in 1 : vector<50x16xf32>, vector<50x16xf32>, vector<50x16xf32> -> vector<50x48xf32>
    %cst_45 = arith.constant dense<0.000000e+00> : vector<50x1xf32>
    %113 = tpu.matmul %112, %103, %cst_45 {dimension_numbers = #tpu.dot_dimension_numbers<[1], [0], [0], [1], [0, 0, 1, 1], [], []>} : vector<50x48xf32>, vector<48x1xf32>, vector<50x1xf32> -> vector<50x1xf32>
    %114 = vector.broadcast %105 : vector<1x1xf32> to vector<50x1xf32>
    %115 = arith.mulf %113, %114 : vector<50x1xf32>
    %116 = vector.broadcast %106 : vector<1x1xf32> to vector<50x1xf32>
    %117 = arith.addf %115, %116 : vector<50x1xf32>
    %118 = arith.negf %117 : vector<50x1xf32>
    %119 = math.exp %118 : vector<50x1xf32>
    %cst_46 = arith.constant 1.000000e+00 : f32
    %120 = vector.broadcast %cst_46 : f32 to vector<50x1xf32>
    %121 = arith.addf %120, %119 : vector<50x1xf32>
    %122 = arith.divf %120, %121 : vector<50x1xf32>
    %123 = arith.addf %122, %102 : vector<50x1xf32>
    %cst_47 = arith.constant dense<0xFF800000> : vector<1xf32>
    %124 = vector.multi_reduction <maximumf>, %123, %cst_47 [0] : vector<50x1xf32> to vector<1xf32>
    %125 = vector.shape_cast %124 : vector<1xf32> to vector<1x1xf32>
    %126 = vector.broadcast %125 : vector<1x1xf32> to vector<50x1xf32>
    %127 = arith.subf %123, %126 : vector<50x1xf32>
    %128 = math.exp %127 : vector<50x1xf32>
    %cst_48 = arith.constant dense<0.000000e+00> : vector<1xf32>
    %129 = vector.multi_reduction <add>, %128, %cst_48 [0] : vector<50x1xf32> to vector<1xf32>
    %130 = vector.shape_cast %129 : vector<1xf32> to vector<1x1xf32>
    %131 = vector.broadcast %130 : vector<1x1xf32> to vector<50x1xf32>
    %132 = arith.divf %128, %131 : vector<50x1xf32>
    %133 = vector.broadcast %132 : vector<50x1xf32> to vector<50x16xf32>
    %134 = arith.mulf %21, %133 : vector<50x16xf32>
    %135 = arith.addf %134, %21 : vector<50x16xf32>
    %c0_49 = arith.constant 0 : index
    %c0_50 = arith.constant 0 : index
    %136 = vector.load %arg14[%c0_49, %c0_50] : memref<144x32xf32, #tpu.memory_space<vmem>>, vector<144x32xf32>
    %c0_51 = arith.constant 0 : index
    %c0_52 = arith.constant 0 : index
    %137 = vector.load %arg15[%c0_51, %c0_52] : memref<2x32xf32, #tpu.memory_space<vmem>>, vector<2x32xf32>
    %138 = vector.extract_strided_slice %137 {offsets = [0, 0], sizes = [1, 32], strides = [1, 1]} : vector<2x32xf32> to vector<1x32xf32>
    %139 = vector.extract_strided_slice %137 {offsets = [1, 0], sizes = [1, 32], strides = [1, 1]} : vector<2x32xf32> to vector<1x32xf32>
    %cst_53 = arith.constant 0.000000e+00 : f32
    %140 = vector.broadcast %cst_53 : f32 to vector<4x16xf32>
    %141 = tpu.concatenate %140, %135, %140 in 0 : vector<4x16xf32>, vector<50x16xf32>, vector<4x16xf32> -> vector<58x16xf32>
    %142 = vector.extract_strided_slice %141 {offsets = [0, 0], sizes = [50, 16], strides = [1, 1]} : vector<58x16xf32> to vector<50x16xf32>
    %143 = vector.extract_strided_slice %141 {offsets = [1, 0], sizes = [50, 16], strides = [1, 1]} : vector<58x16xf32> to vector<50x16xf32>
    %144 = vector.extract_strided_slice %141 {offsets = [2, 0], sizes = [50, 16], strides = [1, 1]} : vector<58x16xf32> to vector<50x16xf32>
    %145 = vector.extract_strided_slice %141 {offsets = [3, 0], sizes = [50, 16], strides = [1, 1]} : vector<58x16xf32> to vector<50x16xf32>
    %146 = vector.extract_strided_slice %141 {offsets = [4, 0], sizes = [50, 16], strides = [1, 1]} : vector<58x16xf32> to vector<50x16xf32>
    %147 = vector.extract_strided_slice %141 {offsets = [5, 0], sizes = [50, 16], strides = [1, 1]} : vector<58x16xf32> to vector<50x16xf32>
    %148 = vector.extract_strided_slice %141 {offsets = [6, 0], sizes = [50, 16], strides = [1, 1]} : vector<58x16xf32> to vector<50x16xf32>
    %149 = vector.extract_strided_slice %141 {offsets = [7, 0], sizes = [50, 16], strides = [1, 1]} : vector<58x16xf32> to vector<50x16xf32>
    %150 = vector.extract_strided_slice %141 {offsets = [8, 0], sizes = [50, 16], strides = [1, 1]} : vector<58x16xf32> to vector<50x16xf32>
    %151 = tpu.concatenate %142, %143, %144, %145, %146, %147, %148, %149, %150 in 1 : vector<50x16xf32>, vector<50x16xf32>, vector<50x16xf32>, vector<50x16xf32>, vector<50x16xf32>, vector<50x16xf32>, vector<50x16xf32>, vector<50x16xf32>, vector<50x16xf32> -> vector<50x144xf32>
    %cst_54 = arith.constant dense<0.000000e+00> : vector<50x32xf32>
    %152 = tpu.matmul %151, %136, %cst_54 {dimension_numbers = #tpu.dot_dimension_numbers<[1], [0], [0], [1], [0, 0, 1, 1], [], []>} : vector<50x144xf32>, vector<144x32xf32>, vector<50x32xf32> -> vector<50x32xf32>
    %153 = vector.broadcast %138 : vector<1x32xf32> to vector<50x32xf32>
    %154 = arith.mulf %152, %153 : vector<50x32xf32>
    %155 = vector.broadcast %139 : vector<1x32xf32> to vector<50x32xf32>
    %156 = arith.addf %154, %155 : vector<50x32xf32>
    %cst_55 = arith.constant 0.000000e+00 : f32
    %157 = vector.broadcast %cst_55 : f32 to vector<50x32xf32>
    %158 = arith.cmpf oge, %156, %157 : vector<50x32xf32>
    %cst_56 = arith.constant 0.00999999977 : f32
    %159 = vector.broadcast %cst_56 : f32 to vector<50x32xf32>
    %160 = arith.mulf %159, %156 : vector<50x32xf32>
    %161 = arith.select %158, %156, %160 : vector<50x32xi1>, vector<50x32xf32>
    %c0_57 = arith.constant 0 : index
    %c0_58 = arith.constant 0 : index
    %162 = vector.load %arg16[%c0_57, %c0_58] : memref<288x32xf32, #tpu.memory_space<vmem>>, vector<288x32xf32>
    %c0_59 = arith.constant 0 : index
    %c0_60 = arith.constant 0 : index
    %163 = vector.load %arg17[%c0_59, %c0_60] : memref<2x32xf32, #tpu.memory_space<vmem>>, vector<2x32xf32>
    %164 = vector.extract_strided_slice %163 {offsets = [0, 0], sizes = [1, 32], strides = [1, 1]} : vector<2x32xf32> to vector<1x32xf32>
    %165 = vector.extract_strided_slice %163 {offsets = [1, 0], sizes = [1, 32], strides = [1, 1]} : vector<2x32xf32> to vector<1x32xf32>
    %cst_61 = arith.constant 0.000000e+00 : f32
    %166 = vector.broadcast %cst_61 : f32 to vector<4x32xf32>
    %167 = tpu.concatenate %166, %161, %166 in 0 : vector<4x32xf32>, vector<50x32xf32>, vector<4x32xf32> -> vector<58x32xf32>
    %168 = vector.extract_strided_slice %167 {offsets = [0, 0], sizes = [50, 32], strides = [1, 1]} : vector<58x32xf32> to vector<50x32xf32>
    %169 = vector.extract_strided_slice %167 {offsets = [1, 0], sizes = [50, 32], strides = [1, 1]} : vector<58x32xf32> to vector<50x32xf32>
    %170 = vector.extract_strided_slice %167 {offsets = [2, 0], sizes = [50, 32], strides = [1, 1]} : vector<58x32xf32> to vector<50x32xf32>
    %171 = vector.extract_strided_slice %167 {offsets = [3, 0], sizes = [50, 32], strides = [1, 1]} : vector<58x32xf32> to vector<50x32xf32>
    %172 = vector.extract_strided_slice %167 {offsets = [4, 0], sizes = [50, 32], strides = [1, 1]} : vector<58x32xf32> to vector<50x32xf32>
    %173 = vector.extract_strided_slice %167 {offsets = [5, 0], sizes = [50, 32], strides = [1, 1]} : vector<58x32xf32> to vector<50x32xf32>
    %174 = vector.extract_strided_slice %167 {offsets = [6, 0], sizes = [50, 32], strides = [1, 1]} : vector<58x32xf32> to vector<50x32xf32>
    %175 = vector.extract_strided_slice %167 {offsets = [7, 0], sizes = [50, 32], strides = [1, 1]} : vector<58x32xf32> to vector<50x32xf32>
    %176 = vector.extract_strided_slice %167 {offsets = [8, 0], sizes = [50, 32], strides = [1, 1]} : vector<58x32xf32> to vector<50x32xf32>
    %177 = tpu.concatenate %168, %169, %170, %171, %172, %173, %174, %175, %176 in 1 : vector<50x32xf32>, vector<50x32xf32>, vector<50x32xf32>, vector<50x32xf32>, vector<50x32xf32>, vector<50x32xf32>, vector<50x32xf32>, vector<50x32xf32>, vector<50x32xf32> -> vector<50x288xf32>
    %cst_62 = arith.constant dense<0.000000e+00> : vector<50x32xf32>
    %178 = tpu.matmul %177, %162, %cst_62 {dimension_numbers = #tpu.dot_dimension_numbers<[1], [0], [0], [1], [0, 0, 1, 1], [], []>} : vector<50x288xf32>, vector<288x32xf32>, vector<50x32xf32> -> vector<50x32xf32>
    %179 = vector.broadcast %164 : vector<1x32xf32> to vector<50x32xf32>
    %180 = arith.mulf %178, %179 : vector<50x32xf32>
    %181 = vector.broadcast %165 : vector<1x32xf32> to vector<50x32xf32>
    %182 = arith.addf %180, %181 : vector<50x32xf32>
    %cst_63 = arith.constant 0.000000e+00 : f32
    %183 = vector.broadcast %cst_63 : f32 to vector<50x32xf32>
    %184 = arith.cmpf oge, %182, %183 : vector<50x32xf32>
    %cst_64 = arith.constant 0.00999999977 : f32
    %185 = vector.broadcast %cst_64 : f32 to vector<50x32xf32>
    %186 = arith.mulf %185, %182 : vector<50x32xf32>
    %187 = arith.select %184, %182, %186 : vector<50x32xi1>, vector<50x32xf32>
    %188 = vector.extract_strided_slice %187 {offsets = [0, 0], sizes = [5, 32], strides = [1, 1]} : vector<50x32xf32> to vector<5x32xf32>
    %cst_65 = arith.constant dense<0xFF800000> : vector<32xf32>
    %189 = vector.multi_reduction <maximumf>, %188, %cst_65 [0] : vector<5x32xf32> to vector<32xf32>
    %190 = vector.shape_cast %189 : vector<32xf32> to vector<1x32xf32>
    %191 = vector.extract_strided_slice %187 {offsets = [5, 0], sizes = [5, 32], strides = [1, 1]} : vector<50x32xf32> to vector<5x32xf32>
    %cst_66 = arith.constant dense<0xFF800000> : vector<32xf32>
    %192 = vector.multi_reduction <maximumf>, %191, %cst_66 [0] : vector<5x32xf32> to vector<32xf32>
    %193 = vector.shape_cast %192 : vector<32xf32> to vector<1x32xf32>
    %194 = vector.extract_strided_slice %187 {offsets = [10, 0], sizes = [5, 32], strides = [1, 1]} : vector<50x32xf32> to vector<5x32xf32>
    %cst_67 = arith.constant dense<0xFF800000> : vector<32xf32>
    %195 = vector.multi_reduction <maximumf>, %194, %cst_67 [0] : vector<5x32xf32> to vector<32xf32>
    %196 = vector.shape_cast %195 : vector<32xf32> to vector<1x32xf32>
    %197 = vector.extract_strided_slice %187 {offsets = [15, 0], sizes = [5, 32], strides = [1, 1]} : vector<50x32xf32> to vector<5x32xf32>
    %cst_68 = arith.constant dense<0xFF800000> : vector<32xf32>
    %198 = vector.multi_reduction <maximumf>, %197, %cst_68 [0] : vector<5x32xf32> to vector<32xf32>
    %199 = vector.shape_cast %198 : vector<32xf32> to vector<1x32xf32>
    %200 = vector.extract_strided_slice %187 {offsets = [20, 0], sizes = [5, 32], strides = [1, 1]} : vector<50x32xf32> to vector<5x32xf32>
    %cst_69 = arith.constant dense<0xFF800000> : vector<32xf32>
    %201 = vector.multi_reduction <maximumf>, %200, %cst_69 [0] : vector<5x32xf32> to vector<32xf32>
    %202 = vector.shape_cast %201 : vector<32xf32> to vector<1x32xf32>
    %203 = vector.extract_strided_slice %187 {offsets = [25, 0], sizes = [5, 32], strides = [1, 1]} : vector<50x32xf32> to vector<5x32xf32>
    %cst_70 = arith.constant dense<0xFF800000> : vector<32xf32>
    %204 = vector.multi_reduction <maximumf>, %203, %cst_70 [0] : vector<5x32xf32> to vector<32xf32>
    %205 = vector.shape_cast %204 : vector<32xf32> to vector<1x32xf32>
    %206 = vector.extract_strided_slice %187 {offsets = [30, 0], sizes = [5, 32], strides = [1, 1]} : vector<50x32xf32> to vector<5x32xf32>
    %cst_71 = arith.constant dense<0xFF800000> : vector<32xf32>
    %207 = vector.multi_reduction <maximumf>, %206, %cst_71 [0] : vector<5x32xf32> to vector<32xf32>
    %208 = vector.shape_cast %207 : vector<32xf32> to vector<1x32xf32>
    %209 = vector.extract_strided_slice %187 {offsets = [35, 0], sizes = [5, 32], strides = [1, 1]} : vector<50x32xf32> to vector<5x32xf32>
    %cst_72 = arith.constant dense<0xFF800000> : vector<32xf32>
    %210 = vector.multi_reduction <maximumf>, %209, %cst_72 [0] : vector<5x32xf32> to vector<32xf32>
    %211 = vector.shape_cast %210 : vector<32xf32> to vector<1x32xf32>
    %212 = vector.extract_strided_slice %187 {offsets = [40, 0], sizes = [5, 32], strides = [1, 1]} : vector<50x32xf32> to vector<5x32xf32>
    %cst_73 = arith.constant dense<0xFF800000> : vector<32xf32>
    %213 = vector.multi_reduction <maximumf>, %212, %cst_73 [0] : vector<5x32xf32> to vector<32xf32>
    %214 = vector.shape_cast %213 : vector<32xf32> to vector<1x32xf32>
    %215 = vector.extract_strided_slice %187 {offsets = [45, 0], sizes = [5, 32], strides = [1, 1]} : vector<50x32xf32> to vector<5x32xf32>
    %cst_74 = arith.constant dense<0xFF800000> : vector<32xf32>
    %216 = vector.multi_reduction <maximumf>, %215, %cst_74 [0] : vector<5x32xf32> to vector<32xf32>
    %217 = vector.shape_cast %216 : vector<32xf32> to vector<1x32xf32>
    %218 = tpu.concatenate %190, %193, %196, %199, %202, %205, %208, %211, %214, %217 in 0 : vector<1x32xf32>, vector<1x32xf32>, vector<1x32xf32>, vector<1x32xf32>, vector<1x32xf32>, vector<1x32xf32>, vector<1x32xf32>, vector<1x32xf32>, vector<1x32xf32>, vector<1x32xf32> -> vector<10x32xf32>
    %c0_75 = arith.constant 0 : index
    %c0_76 = arith.constant 0 : index
    %219 = vector.load %arg18[%c0_75, %c0_76] : memref<224x64xf32, #tpu.memory_space<vmem>>, vector<224x64xf32>
    %c0_77 = arith.constant 0 : index
    %c0_78 = arith.constant 0 : index
    %220 = vector.load %arg19[%c0_77, %c0_78] : memref<2x64xf32, #tpu.memory_space<vmem>>, vector<2x64xf32>
    %221 = vector.extract_strided_slice %220 {offsets = [0, 0], sizes = [1, 64], strides = [1, 1]} : vector<2x64xf32> to vector<1x64xf32>
    %222 = vector.extract_strided_slice %220 {offsets = [1, 0], sizes = [1, 64], strides = [1, 1]} : vector<2x64xf32> to vector<1x64xf32>
    %cst_79 = arith.constant 0.000000e+00 : f32
    %223 = vector.broadcast %cst_79 : f32 to vector<3x32xf32>
    %224 = tpu.concatenate %223, %218, %223 in 0 : vector<3x32xf32>, vector<10x32xf32>, vector<3x32xf32> -> vector<16x32xf32>
    %225 = vector.extract_strided_slice %224 {offsets = [0, 0], sizes = [10, 32], strides = [1, 1]} : vector<16x32xf32> to vector<10x32xf32>
    %226 = vector.extract_strided_slice %224 {offsets = [1, 0], sizes = [10, 32], strides = [1, 1]} : vector<16x32xf32> to vector<10x32xf32>
    %227 = vector.extract_strided_slice %224 {offsets = [2, 0], sizes = [10, 32], strides = [1, 1]} : vector<16x32xf32> to vector<10x32xf32>
    %228 = vector.extract_strided_slice %224 {offsets = [3, 0], sizes = [10, 32], strides = [1, 1]} : vector<16x32xf32> to vector<10x32xf32>
    %229 = vector.extract_strided_slice %224 {offsets = [4, 0], sizes = [10, 32], strides = [1, 1]} : vector<16x32xf32> to vector<10x32xf32>
    %230 = vector.extract_strided_slice %224 {offsets = [5, 0], sizes = [10, 32], strides = [1, 1]} : vector<16x32xf32> to vector<10x32xf32>
    %231 = vector.extract_strided_slice %224 {offsets = [6, 0], sizes = [10, 32], strides = [1, 1]} : vector<16x32xf32> to vector<10x32xf32>
    %232 = tpu.concatenate %225, %226, %227, %228, %229, %230, %231 in 1 : vector<10x32xf32>, vector<10x32xf32>, vector<10x32xf32>, vector<10x32xf32>, vector<10x32xf32>, vector<10x32xf32>, vector<10x32xf32> -> vector<10x224xf32>
    %cst_80 = arith.constant dense<0.000000e+00> : vector<10x64xf32>
    %233 = tpu.matmul %232, %219, %cst_80 {dimension_numbers = #tpu.dot_dimension_numbers<[1], [0], [0], [1], [0, 0, 1, 1], [], []>} : vector<10x224xf32>, vector<224x64xf32>, vector<10x64xf32> -> vector<10x64xf32>
    %234 = vector.broadcast %221 : vector<1x64xf32> to vector<10x64xf32>
    %235 = arith.mulf %233, %234 : vector<10x64xf32>
    %236 = vector.broadcast %222 : vector<1x64xf32> to vector<10x64xf32>
    %237 = arith.addf %235, %236 : vector<10x64xf32>
    %cst_81 = arith.constant 0.000000e+00 : f32
    %238 = vector.broadcast %cst_81 : f32 to vector<10x64xf32>
    %239 = arith.cmpf oge, %237, %238 : vector<10x64xf32>
    %cst_82 = arith.constant 0.00999999977 : f32
    %240 = vector.broadcast %cst_82 : f32 to vector<10x64xf32>
    %241 = arith.mulf %240, %237 : vector<10x64xf32>
    %242 = arith.select %239, %237, %241 : vector<10x64xi1>, vector<10x64xf32>
    %c0_83 = arith.constant 0 : index
    %c0_84 = arith.constant 0 : index
    %243 = vector.load %arg20[%c0_83, %c0_84] : memref<448x64xf32, #tpu.memory_space<vmem>>, vector<448x64xf32>
    %c0_85 = arith.constant 0 : index
    %c0_86 = arith.constant 0 : index
    %244 = vector.load %arg21[%c0_85, %c0_86] : memref<2x64xf32, #tpu.memory_space<vmem>>, vector<2x64xf32>
    %245 = vector.extract_strided_slice %244 {offsets = [0, 0], sizes = [1, 64], strides = [1, 1]} : vector<2x64xf32> to vector<1x64xf32>
    %246 = vector.extract_strided_slice %244 {offsets = [1, 0], sizes = [1, 64], strides = [1, 1]} : vector<2x64xf32> to vector<1x64xf32>
    %cst_87 = arith.constant 0.000000e+00 : f32
    %247 = vector.broadcast %cst_87 : f32 to vector<3x64xf32>
    %248 = tpu.concatenate %247, %242, %247 in 0 : vector<3x64xf32>, vector<10x64xf32>, vector<3x64xf32> -> vector<16x64xf32>
    %249 = vector.extract_strided_slice %248 {offsets = [0, 0], sizes = [10, 64], strides = [1, 1]} : vector<16x64xf32> to vector<10x64xf32>
    %250 = vector.extract_strided_slice %248 {offsets = [1, 0], sizes = [10, 64], strides = [1, 1]} : vector<16x64xf32> to vector<10x64xf32>
    %251 = vector.extract_strided_slice %248 {offsets = [2, 0], sizes = [10, 64], strides = [1, 1]} : vector<16x64xf32> to vector<10x64xf32>
    %252 = vector.extract_strided_slice %248 {offsets = [3, 0], sizes = [10, 64], strides = [1, 1]} : vector<16x64xf32> to vector<10x64xf32>
    %253 = vector.extract_strided_slice %248 {offsets = [4, 0], sizes = [10, 64], strides = [1, 1]} : vector<16x64xf32> to vector<10x64xf32>
    %254 = vector.extract_strided_slice %248 {offsets = [5, 0], sizes = [10, 64], strides = [1, 1]} : vector<16x64xf32> to vector<10x64xf32>
    %255 = vector.extract_strided_slice %248 {offsets = [6, 0], sizes = [10, 64], strides = [1, 1]} : vector<16x64xf32> to vector<10x64xf32>
    %256 = tpu.concatenate %249, %250, %251, %252, %253, %254, %255 in 1 : vector<10x64xf32>, vector<10x64xf32>, vector<10x64xf32>, vector<10x64xf32>, vector<10x64xf32>, vector<10x64xf32>, vector<10x64xf32> -> vector<10x448xf32>
    %cst_88 = arith.constant dense<0.000000e+00> : vector<10x64xf32>
    %257 = tpu.matmul %256, %243, %cst_88 {dimension_numbers = #tpu.dot_dimension_numbers<[1], [0], [0], [1], [0, 0, 1, 1], [], []>} : vector<10x448xf32>, vector<448x64xf32>, vector<10x64xf32> -> vector<10x64xf32>
    %258 = vector.broadcast %245 : vector<1x64xf32> to vector<10x64xf32>
    %259 = arith.mulf %257, %258 : vector<10x64xf32>
    %260 = vector.broadcast %246 : vector<1x64xf32> to vector<10x64xf32>
    %261 = arith.addf %259, %260 : vector<10x64xf32>
    %cst_89 = arith.constant 0.000000e+00 : f32
    %262 = vector.broadcast %cst_89 : f32 to vector<10x64xf32>
    %263 = arith.cmpf oge, %261, %262 : vector<10x64xf32>
    %cst_90 = arith.constant 0.00999999977 : f32
    %264 = vector.broadcast %cst_90 : f32 to vector<10x64xf32>
    %265 = arith.mulf %264, %261 : vector<10x64xf32>
    %266 = arith.select %263, %261, %265 : vector<10x64xi1>, vector<10x64xf32>
    %267 = vector.extract_strided_slice %266 {offsets = [0, 0], sizes = [5, 64], strides = [1, 1]} : vector<10x64xf32> to vector<5x64xf32>
    %cst_91 = arith.constant dense<0xFF800000> : vector<64xf32>
    %268 = vector.multi_reduction <maximumf>, %267, %cst_91 [0] : vector<5x64xf32> to vector<64xf32>
    %269 = vector.shape_cast %268 : vector<64xf32> to vector<1x64xf32>
    %270 = vector.extract_strided_slice %266 {offsets = [5, 0], sizes = [5, 64], strides = [1, 1]} : vector<10x64xf32> to vector<5x64xf32>
    %cst_92 = arith.constant dense<0xFF800000> : vector<64xf32>
    %271 = vector.multi_reduction <maximumf>, %270, %cst_92 [0] : vector<5x64xf32> to vector<64xf32>
    %272 = vector.shape_cast %271 : vector<64xf32> to vector<1x64xf32>
    %273 = tpu.concatenate %269, %272 in 0 : vector<1x64xf32>, vector<1x64xf32> -> vector<2x64xf32>
    %c0_93 = arith.constant 0 : index
    %c0_94 = arith.constant 0 : index
    %274 = vector.load %arg22[%c0_93, %c0_94] : memref<192x128xf32, #tpu.memory_space<vmem>>, vector<192x128xf32>
    %c0_95 = arith.constant 0 : index
    %c0_96 = arith.constant 0 : index
    %275 = vector.load %arg23[%c0_95, %c0_96] : memref<2x128xf32, #tpu.memory_space<vmem>>, vector<2x128xf32>
    %276 = vector.extract_strided_slice %275 {offsets = [0, 0], sizes = [1, 128], strides = [1, 1]} : vector<2x128xf32> to vector<1x128xf32>
    %277 = vector.extract_strided_slice %275 {offsets = [1, 0], sizes = [1, 128], strides = [1, 1]} : vector<2x128xf32> to vector<1x128xf32>
    %cst_97 = arith.constant 0.000000e+00 : f32
    %278 = vector.broadcast %cst_97 : f32 to vector<1x64xf32>
    %279 = tpu.concatenate %278, %273, %278 in 0 : vector<1x64xf32>, vector<2x64xf32>, vector<1x64xf32> -> vector<4x64xf32>
    %280 = vector.extract_strided_slice %279 {offsets = [0, 0], sizes = [2, 64], strides = [1, 1]} : vector<4x64xf32> to vector<2x64xf32>
    %281 = vector.extract_strided_slice %279 {offsets = [1, 0], sizes = [2, 64], strides = [1, 1]} : vector<4x64xf32> to vector<2x64xf32>
    %282 = vector.extract_strided_slice %279 {offsets = [2, 0], sizes = [2, 64], strides = [1, 1]} : vector<4x64xf32> to vector<2x64xf32>
    %283 = tpu.concatenate %280, %281, %282 in 1 : vector<2x64xf32>, vector<2x64xf32>, vector<2x64xf32> -> vector<2x192xf32>
    %cst_98 = arith.constant dense<0.000000e+00> : vector<2x128xf32>
    %284 = tpu.matmul %283, %274, %cst_98 {dimension_numbers = #tpu.dot_dimension_numbers<[1], [0], [0], [1], [0, 0, 1, 1], [], []>} : vector<2x192xf32>, vector<192x128xf32>, vector<2x128xf32> -> vector<2x128xf32>
    %285 = vector.broadcast %276 : vector<1x128xf32> to vector<2x128xf32>
    %286 = arith.mulf %284, %285 : vector<2x128xf32>
    %287 = vector.broadcast %277 : vector<1x128xf32> to vector<2x128xf32>
    %288 = arith.addf %286, %287 : vector<2x128xf32>
    %cst_99 = arith.constant 0.000000e+00 : f32
    %289 = vector.broadcast %cst_99 : f32 to vector<2x128xf32>
    %290 = arith.cmpf oge, %288, %289 : vector<2x128xf32>
    %cst_100 = arith.constant 0.00999999977 : f32
    %291 = vector.broadcast %cst_100 : f32 to vector<2x128xf32>
    %292 = arith.mulf %291, %288 : vector<2x128xf32>
    %293 = arith.select %290, %288, %292 : vector<2x128xi1>, vector<2x128xf32>
    %c0_101 = arith.constant 0 : index
    %c0_102 = arith.constant 0 : index
    %294 = vector.load %arg24[%c0_101, %c0_102] : memref<384x128xf32, #tpu.memory_space<vmem>>, vector<384x128xf32>
    %c0_103 = arith.constant 0 : index
    %c0_104 = arith.constant 0 : index
    %295 = vector.load %arg25[%c0_103, %c0_104] : memref<2x128xf32, #tpu.memory_space<vmem>>, vector<2x128xf32>
    %296 = vector.extract_strided_slice %295 {offsets = [0, 0], sizes = [1, 128], strides = [1, 1]} : vector<2x128xf32> to vector<1x128xf32>
    %297 = vector.extract_strided_slice %295 {offsets = [1, 0], sizes = [1, 128], strides = [1, 1]} : vector<2x128xf32> to vector<1x128xf32>
    %cst_105 = arith.constant 0.000000e+00 : f32
    %298 = vector.broadcast %cst_105 : f32 to vector<1x128xf32>
    %299 = tpu.concatenate %298, %293, %298 in 0 : vector<1x128xf32>, vector<2x128xf32>, vector<1x128xf32> -> vector<4x128xf32>
    %300 = vector.extract_strided_slice %299 {offsets = [0, 0], sizes = [2, 128], strides = [1, 1]} : vector<4x128xf32> to vector<2x128xf32>
    %301 = vector.extract_strided_slice %299 {offsets = [1, 0], sizes = [2, 128], strides = [1, 1]} : vector<4x128xf32> to vector<2x128xf32>
    %302 = vector.extract_strided_slice %299 {offsets = [2, 0], sizes = [2, 128], strides = [1, 1]} : vector<4x128xf32> to vector<2x128xf32>
    %303 = tpu.concatenate %300, %301, %302 in 1 : vector<2x128xf32>, vector<2x128xf32>, vector<2x128xf32> -> vector<2x384xf32>
    %cst_106 = arith.constant dense<0.000000e+00> : vector<2x128xf32>
    %304 = tpu.matmul %303, %294, %cst_106 {dimension_numbers = #tpu.dot_dimension_numbers<[1], [0], [0], [1], [0, 0, 1, 1], [], []>} : vector<2x384xf32>, vector<384x128xf32>, vector<2x128xf32> -> vector<2x128xf32>
    %305 = vector.broadcast %296 : vector<1x128xf32> to vector<2x128xf32>
    %306 = arith.mulf %304, %305 : vector<2x128xf32>
    %307 = vector.broadcast %297 : vector<1x128xf32> to vector<2x128xf32>
    %308 = arith.addf %306, %307 : vector<2x128xf32>
    %cst_107 = arith.constant 0.000000e+00 : f32
    %309 = vector.broadcast %cst_107 : f32 to vector<2x128xf32>
    %310 = arith.cmpf oge, %308, %309 : vector<2x128xf32>
    %cst_108 = arith.constant 0.00999999977 : f32
    %311 = vector.broadcast %cst_108 : f32 to vector<2x128xf32>
    %312 = arith.mulf %311, %308 : vector<2x128xf32>
    %313 = arith.select %310, %308, %312 : vector<2x128xi1>, vector<2x128xf32>
    %c0_109 = arith.constant 0 : index
    %c0_110 = arith.constant 0 : index
    %c0_111 = arith.constant 0 : index
    %314 = vector.load %arg26[%c0_109, %c0_110, %c0_111] : memref<1x50x32xf32, #tpu.memory_space<vmem>>, vector<1x50x32xf32>
    %315 = vector.shape_cast %314 : vector<1x50x32xf32> to vector<50x32xf32>
    %316 = vector.shape_cast %187 : vector<50x32xf32> to vector<1x50x32xf32>
    tpu.vector_store %arg26[%c0_109, %c0_110, %c0_111], %316 {strides = array<i32>} : memref<1x50x32xf32, #tpu.memory_space<vmem>>, vector<1x50x32xf32>,
    %c0_112 = arith.constant 0 : index
    %c0_113 = arith.constant 0 : index
    %c0_114 = arith.constant 0 : index
    %317 = vector.load %arg27[%c0_112, %c0_113, %c0_114] : memref<1x10x64xf32, #tpu.memory_space<vmem>>, vector<1x10x64xf32>
    %318 = vector.shape_cast %317 : vector<1x10x64xf32> to vector<10x64xf32>
    %319 = vector.shape_cast %266 : vector<10x64xf32> to vector<1x10x64xf32>
    tpu.vector_store %arg27[%c0_112, %c0_113, %c0_114], %319 {strides = array<i32>} : memref<1x10x64xf32, #tpu.memory_space<vmem>>, vector<1x10x64xf32>,
    %c0_115 = arith.constant 0 : index
    %c0_116 = arith.constant 0 : index
    %c0_117 = arith.constant 0 : index
    %320 = vector.load %arg28[%c0_115, %c0_116, %c0_117] : memref<1x2x128xf32, #tpu.memory_space<vmem>>, vector<1x2x128xf32>
    %321 = vector.shape_cast %320 : vector<1x2x128xf32> to vector<2x128xf32>
    %322 = vector.shape_cast %313 : vector<2x128xf32> to vector<1x2x128xf32>
    tpu.vector_store %arg28[%c0_115, %c0_116, %c0_117], %322 {strides = array<i32>} : memref<1x2x128xf32, #tpu.memory_space<vmem>>, vector<1x2x128xf32>,
    %c0_118 = arith.constant 0 : index
    %c0_119 = arith.constant 0 : index
    %c0_120 = arith.constant 0 : index
    %323 = vector.load %arg29[%c0_118, %c0_119, %c0_120] : memref<1x50x1xf32, #tpu.memory_space<vmem>>, vector<1x50x1xf32>
    %324 = vector.shape_cast %323 : vector<1x50x1xf32> to vector<50x1xf32>
    %325 = vector.shape_cast %102 : vector<50x1xf32> to vector<1x50x1xf32>
    tpu.vector_store %arg29[%c0_118, %c0_119, %c0_120], %325 {strides = array<i32>} : memref<1x50x1xf32, #tpu.memory_space<vmem>>, vector<1x50x1xf32>,
    return
  }
  func.func @transform_0(%arg0: i32) -> (i32, i32, i32) {
    %c0_i32 = arith.constant 0 : i32
    %c0_i32_0 = arith.constant 0 : i32
    %c0_i32_1 = arith.constant 0 : i32
    return %arg0, %c0_i32, %c0_i32_0 : i32, i32, i32
  }
  func.func @transform_1(%arg0: i32) -> (i32, i32) {
    %c0_i32 = arith.constant 0 : i32
    %c0_i32_0 = arith.constant 0 : i32
    %c0_i32_1 = arith.constant 0 : i32
    return %c0_i32, %c0_i32_0 : i32, i32
  }
  func.func @transform_2(%arg0: i32) -> (i32, i32) {
    %c0_i32 = arith.constant 0 : i32
    %c0_i32_0 = arith.constant 0 : i32
    %c0_i32_1 = arith.constant 0 : i32
    return %c0_i32, %c0_i32_0 : i32, i32
  }
  func.func @transform_3(%arg0: i32) -> (i32, i32) {
    %c0_i32 = arith.constant 0 : i32
    %c0_i32_0 = arith.constant 0 : i32
    %c0_i32_1 = arith.constant 0 : i32
    return %c0_i32, %c0_i32_0 : i32, i32
  }
  func.func @transform_4(%arg0: i32) -> (i32, i32) {
    %c0_i32 = arith.constant 0 : i32
    %c0_i32_0 = arith.constant 0 : i32
    %c0_i32_1 = arith.constant 0 : i32
    return %c0_i32, %c0_i32_0 : i32, i32
  }
  func.func @transform_5(%arg0: i32) -> (i32, i32) {
    %c0_i32 = arith.constant 0 : i32
    %c0_i32_0 = arith.constant 0 : i32
    %c0_i32_1 = arith.constant 0 : i32
    return %c0_i32, %c0_i32_0 : i32, i32
  }
  func.func @transform_6(%arg0: i32) -> (i32, i32) {
    %c0_i32 = arith.constant 0 : i32
    %c0_i32_0 = arith.constant 0 : i32
    %c0_i32_1 = arith.constant 0 : i32
    return %c0_i32, %c0_i32_0 : i32, i32
  }
  func.func @transform_7(%arg0: i32) -> (i32, i32) {
    %c0_i32 = arith.constant 0 : i32
    %c0_i32_0 = arith.constant 0 : i32
    %c0_i32_1 = arith.constant 0 : i32
    return %c0_i32, %c0_i32_0 : i32, i32
  }
  func.func @transform_8(%arg0: i32) -> (i32, i32) {
    %c0_i32 = arith.constant 0 : i32
    %c0_i32_0 = arith.constant 0 : i32
    %c0_i32_1 = arith.constant 0 : i32
    return %c0_i32, %c0_i32_0 : i32, i32
  }
  func.func @transform_9(%arg0: i32) -> (i32, i32) {
    %c0_i32 = arith.constant 0 : i32
    %c0_i32_0 = arith.constant 0 : i32
    %c0_i32_1 = arith.constant 0 : i32
    return %c0_i32, %c0_i32_0 : i32, i32
  }
  func.func @transform_10(%arg0: i32) -> (i32, i32) {
    %c0_i32 = arith.constant 0 : i32
    %c0_i32_0 = arith.constant 0 : i32
    %c0_i32_1 = arith.constant 0 : i32
    return %c0_i32, %c0_i32_0 : i32, i32
  }
  func.func @transform_11(%arg0: i32) -> (i32, i32) {
    %c0_i32 = arith.constant 0 : i32
    %c0_i32_0 = arith.constant 0 : i32
    %c0_i32_1 = arith.constant 0 : i32
    return %c0_i32, %c0_i32_0 : i32, i32
  }
  func.func @transform_12(%arg0: i32) -> (i32, i32) {
    %c0_i32 = arith.constant 0 : i32
    %c0_i32_0 = arith.constant 0 : i32
    %c0_i32_1 = arith.constant 0 : i32
    return %c0_i32, %c0_i32_0 : i32, i32
  }
  func.func @transform_13(%arg0: i32) -> (i32, i32) {
    %c0_i32 = arith.constant 0 : i32
    %c0_i32_0 = arith.constant 0 : i32
    %c0_i32_1 = arith.constant 0 : i32
    return %c0_i32, %c0_i32_0 : i32, i32
  }
  func.func @transform_14(%arg0: i32) -> (i32, i32) {
    %c0_i32 = arith.constant 0 : i32
    %c0_i32_0 = arith.constant 0 : i32
    %c0_i32_1 = arith.constant 0 : i32
    return %c0_i32, %c0_i32_0 : i32, i32
  }
  func.func @transform_15(%arg0: i32) -> (i32, i32) {
    %c0_i32 = arith.constant 0 : i32
    %c0_i32_0 = arith.constant 0 : i32
    %c0_i32_1 = arith.constant 0 : i32
    return %c0_i32, %c0_i32_0 : i32, i32
  }
  func.func @transform_16(%arg0: i32) -> (i32, i32) {
    %c0_i32 = arith.constant 0 : i32
    %c0_i32_0 = arith.constant 0 : i32
    %c0_i32_1 = arith.constant 0 : i32
    return %c0_i32, %c0_i32_0 : i32, i32
  }
  func.func @transform_17(%arg0: i32) -> (i32, i32) {
    %c0_i32 = arith.constant 0 : i32
    %c0_i32_0 = arith.constant 0 : i32
    %c0_i32_1 = arith.constant 0 : i32
    return %c0_i32, %c0_i32_0 : i32, i32
  }
  func.func @transform_18(%arg0: i32) -> (i32, i32) {
    %c0_i32 = arith.constant 0 : i32
    %c0_i32_0 = arith.constant 0 : i32
    %c0_i32_1 = arith.constant 0 : i32
    return %c0_i32, %c0_i32_0 : i32, i32
  }
  func.func @transform_19(%arg0: i32) -> (i32, i32) {
    %c0_i32 = arith.constant 0 : i32
    %c0_i32_0 = arith.constant 0 : i32
    %c0_i32_1 = arith.constant 0 : i32
    return %c0_i32, %c0_i32_0 : i32, i32
  }
  func.func @transform_20(%arg0: i32) -> (i32, i32) {
    %c0_i32 = arith.constant 0 : i32
    %c0_i32_0 = arith.constant 0 : i32
    %c0_i32_1 = arith.constant 0 : i32
    return %c0_i32, %c0_i32_0 : i32, i32
  }
  func.func @transform_21(%arg0: i32) -> (i32, i32) {
    %c0_i32 = arith.constant 0 : i32
    %c0_i32_0 = arith.constant 0 : i32
    %c0_i32_1 = arith.constant 0 : i32
    return %c0_i32, %c0_i32_0 : i32, i32
  }
  func.func @transform_22(%arg0: i32) -> (i32, i32) {
    %c0_i32 = arith.constant 0 : i32
    %c0_i32_0 = arith.constant 0 : i32
    %c0_i32_1 = arith.constant 0 : i32
    return %c0_i32, %c0_i32_0 : i32, i32
  }
  func.func @transform_23(%arg0: i32) -> (i32, i32) {
    %c0_i32 = arith.constant 0 : i32
    %c0_i32_0 = arith.constant 0 : i32
    %c0_i32_1 = arith.constant 0 : i32
    return %c0_i32, %c0_i32_0 : i32, i32
  }
  func.func @transform_24(%arg0: i32) -> (i32, i32) {
    %c0_i32 = arith.constant 0 : i32
    %c0_i32_0 = arith.constant 0 : i32
    %c0_i32_1 = arith.constant 0 : i32
    return %c0_i32, %c0_i32_0 : i32, i32
  }
  func.func @transform_25(%arg0: i32) -> (i32, i32, i32) {
    %c0_i32 = arith.constant 0 : i32
    %c0_i32_0 = arith.constant 0 : i32
    %c0_i32_1 = arith.constant 0 : i32
    return %arg0, %c0_i32, %c0_i32_0 : i32, i32, i32
  }
  func.func @transform_26(%arg0: i32) -> (i32, i32, i32) {
    %c0_i32 = arith.constant 0 : i32
    %c0_i32_0 = arith.constant 0 : i32
    %c0_i32_1 = arith.constant 0 : i32
    return %arg0, %c0_i32, %c0_i32_0 : i32, i32, i32
  }
  func.func @transform_27(%arg0: i32) -> (i32, i32, i32) {
    %c0_i32 = arith.constant 0 : i32
    %c0_i32_0 = arith.constant 0 : i32
    %c0_i32_1 = arith.constant 0 : i32
    return %arg0, %c0_i32, %c0_i32_0 : i32, i32, i32
  }
  func.func @transform_28(%arg0: i32) -> (i32, i32, i32) {
    %c0_i32 = arith.constant 0 : i32
    %c0_i32_0 = arith.constant 0 : i32
    %c0_i32_1 = arith.constant 0 : i32
    return %arg0, %c0_i32, %c0_i32_0 : i32, i32, i32
  }
}

module attributes {stable_mosaic.version = 11 : i64} {
  func.func @_heads_kernel(%arg0: i32, %arg1: memref<2x2x1x256xf32, #tpu.memory_space<vmem>>, %arg2: memref<512x128xf32, #tpu.memory_space<vmem>>, %arg3: memref<1x128xf32, #tpu.memory_space<vmem>>, %arg4: memref<128x2xf32, #tpu.memory_space<vmem>>, %arg5: memref<1x2xf32, #tpu.memory_space<vmem>>, %arg6: memref<256x1xf32, #tpu.memory_space<vmem>>, %arg7: memref<1x1xf32, #tpu.memory_space<vmem>>, %arg8: memref<2x2xf32, #tpu.memory_space<vmem>>, %arg9: memref<2x1xf32, #tpu.memory_space<vmem>>) attributes {dimension_semantics = [#tpu.dimension_semantics<arbitrary>], iteration_bounds = array<i64: 1>, scalar_prefetch = 0 : i64, scratch_operands = 0 : i64, tpu.core_type = #tpu.core_type<tc>, window_params = [{pipeline_mode = #tpu.pipeline_mode<synchronous>, transform_indices = @transform_0, window_bounds = array<i64: 2, 2, 1, 256>}, {pipeline_mode = #tpu.pipeline_mode<synchronous>, transform_indices = @transform_1, window_bounds = array<i64: 512, 128>}, {pipeline_mode = #tpu.pipeline_mode<synchronous>, transform_indices = @transform_2, window_bounds = array<i64: 1, 128>}, {pipeline_mode = #tpu.pipeline_mode<synchronous>, transform_indices = @transform_3, window_bounds = array<i64: 128, 2>}, {pipeline_mode = #tpu.pipeline_mode<synchronous>, transform_indices = @transform_4, window_bounds = array<i64: 1, 2>}, {pipeline_mode = #tpu.pipeline_mode<synchronous>, transform_indices = @transform_5, window_bounds = array<i64: 256, 1>}, {pipeline_mode = #tpu.pipeline_mode<synchronous>, transform_indices = @transform_6, window_bounds = array<i64: 1, 1>}, {pipeline_mode = #tpu.pipeline_mode<synchronous>, transform_indices = @transform_7, window_bounds = array<i64: 2, 2>}, {pipeline_mode = #tpu.pipeline_mode<synchronous>, transform_indices = @transform_8, window_bounds = array<i64: 2, 1>}]} {
    %c0 = arith.constant 0 : index
    %c0_0 = arith.constant 0 : index
    %c0_1 = arith.constant 0 : index
    %c0_2 = arith.constant 0 : index
    %0 = vector.load %arg1[%c0, %c0_0, %c0_1, %c0_2] : memref<2x2x1x256xf32, #tpu.memory_space<vmem>>, vector<1x2x1x256xf32>
    %1 = vector.shape_cast %0 : vector<1x2x1x256xf32> to vector<2x1x256xf32>
    %c1 = arith.constant 1 : index
    %c0_3 = arith.constant 0 : index
    %c0_4 = arith.constant 0 : index
    %c0_5 = arith.constant 0 : index
    %2 = vector.load %arg1[%c1, %c0_3, %c0_4, %c0_5] : memref<2x2x1x256xf32, #tpu.memory_space<vmem>>, vector<1x2x1x256xf32>
    %3 = vector.shape_cast %2 : vector<1x2x1x256xf32> to vector<2x1x256xf32>
    %cst = arith.constant dense<0.000000e+00> : vector<2x256xf32>
    %4 = vector.multi_reduction <add>, %1, %cst [1] : vector<2x1x256xf32> to vector<2x256xf32>
    %cst_6 = arith.constant 1.000000e+00 : f32
    %5 = vector.broadcast %cst_6 : f32 to vector<2x256xf32>
    %6 = arith.divf %4, %5 : vector<2x256xf32>
    %cst_7 = arith.constant dense<0.000000e+00> : vector<2x256xf32>
    %7 = vector.multi_reduction <add>, %3, %cst_7 [1] : vector<2x1x256xf32> to vector<2x256xf32>
    %cst_8 = arith.constant 1.000000e+00 : f32
    %8 = vector.broadcast %cst_8 : f32 to vector<2x256xf32>
    %9 = arith.divf %7, %8 : vector<2x256xf32>
    %10 = tpu.concatenate %6, %9 in 1 : vector<2x256xf32>, vector<2x256xf32> -> vector<2x512xf32>
    %c0_9 = arith.constant 0 : index
    %c0_10 = arith.constant 0 : index
    %11 = vector.load %arg2[%c0_9, %c0_10] : memref<512x128xf32, #tpu.memory_space<vmem>>, vector<512x128xf32>
    %cst_11 = arith.constant dense<0.000000e+00> : vector<2x128xf32>
    %12 = tpu.matmul %10, %11, %cst_11 {dimension_numbers = #tpu.dot_dimension_numbers<[1], [0], [0], [1], [0, 0, 1, 1], [], []>} : vector<2x512xf32>, vector<512x128xf32>, vector<2x128xf32> -> vector<2x128xf32>
    %c0_12 = arith.constant 0 : index
    %c0_13 = arith.constant 0 : index
    %13 = vector.load %arg3[%c0_12, %c0_13] : memref<1x128xf32, #tpu.memory_space<vmem>>, vector<1x128xf32>
    %14 = vector.broadcast %13 : vector<1x128xf32> to vector<2x128xf32>
    %15 = arith.addf %12, %14 : vector<2x128xf32>
    %cst_14 = arith.constant 0.000000e+00 : f32
    %16 = vector.broadcast %cst_14 : f32 to vector<2x128xf32>
    %17 = arith.cmpf oge, %15, %16 : vector<2x128xf32>
    %cst_15 = arith.constant 0.00999999977 : f32
    %18 = vector.broadcast %cst_15 : f32 to vector<2x128xf32>
    %19 = arith.mulf %18, %15 : vector<2x128xf32>
    %20 = arith.select %17, %15, %19 : vector<2x128xi1>, vector<2x128xf32>
    %c0_16 = arith.constant 0 : index
    %c0_17 = arith.constant 0 : index
    %21 = vector.load %arg4[%c0_16, %c0_17] : memref<128x2xf32, #tpu.memory_space<vmem>>, vector<128x2xf32>
    %cst_18 = arith.constant dense<0.000000e+00> : vector<2x2xf32>
    %22 = tpu.matmul %20, %21, %cst_18 {dimension_numbers = #tpu.dot_dimension_numbers<[1], [0], [0], [1], [0, 0, 1, 1], [], []>} : vector<2x128xf32>, vector<128x2xf32>, vector<2x2xf32> -> vector<2x2xf32>
    %c0_19 = arith.constant 0 : index
    %c0_20 = arith.constant 0 : index
    %23 = vector.load %arg5[%c0_19, %c0_20] : memref<1x2xf32, #tpu.memory_space<vmem>>, vector<1x2xf32>
    %24 = vector.broadcast %23 : vector<1x2xf32> to vector<2x2xf32>
    %25 = arith.addf %22, %24 : vector<2x2xf32>
    %c0_21 = arith.constant 0 : index
    %c0_22 = arith.constant 0 : index
    %26 = vector.load %arg8[%c0_21, %c0_22] : memref<2x2xf32, #tpu.memory_space<vmem>>, vector<2x2xf32>
    tpu.vector_store %arg8[%c0_21, %c0_22], %25 {strides = array<i32>} : memref<2x2xf32, #tpu.memory_space<vmem>>, vector<2x2xf32>,
    %c0_23 = arith.constant 0 : index
    %c0_24 = arith.constant 0 : index
    %27 = vector.load %arg6[%c0_23, %c0_24] : memref<256x1xf32, #tpu.memory_space<vmem>>, vector<256x1xf32>
    %cst_25 = arith.constant dense<0.000000e+00> : vector<2x1xf32>
    %28 = tpu.matmul %9, %27, %cst_25 {dimension_numbers = #tpu.dot_dimension_numbers<[1], [0], [0], [1], [0, 0, 1, 1], [], []>} : vector<2x256xf32>, vector<256x1xf32>, vector<2x1xf32> -> vector<2x1xf32>
    %c0_26 = arith.constant 0 : index
    %c0_27 = arith.constant 0 : index
    %29 = vector.load %arg7[%c0_26, %c0_27] : memref<1x1xf32, #tpu.memory_space<vmem>>, vector<1x1xf32>
    %30 = vector.broadcast %29 : vector<1x1xf32> to vector<2x1xf32>
    %31 = arith.addf %28, %30 : vector<2x1xf32>
    %c0_28 = arith.constant 0 : index
    %c0_29 = arith.constant 0 : index
    %32 = vector.load %arg9[%c0_28, %c0_29] : memref<2x1xf32, #tpu.memory_space<vmem>>, vector<2x1xf32>
    tpu.vector_store %arg9[%c0_28, %c0_29], %31 {strides = array<i32>} : memref<2x1xf32, #tpu.memory_space<vmem>>, vector<2x1xf32>,
    return
  }
  func.func @transform_0(%arg0: i32) -> (i32, i32, i32, i32) {
    %c0_i32 = arith.constant 0 : i32
    %c0_i32_0 = arith.constant 0 : i32
    %c0_i32_1 = arith.constant 0 : i32
    %c0_i32_2 = arith.constant 0 : i32
    %c0_i32_3 = arith.constant 0 : i32
    return %c0_i32, %c0_i32_0, %c0_i32_1, %c0_i32_2 : i32, i32, i32, i32
  }
  func.func @transform_1(%arg0: i32) -> (i32, i32) {
    %c0_i32 = arith.constant 0 : i32
    %c0_i32_0 = arith.constant 0 : i32
    %c0_i32_1 = arith.constant 0 : i32
    return %c0_i32, %c0_i32_0 : i32, i32
  }
  func.func @transform_2(%arg0: i32) -> (i32, i32) {
    %c0_i32 = arith.constant 0 : i32
    %c0_i32_0 = arith.constant 0 : i32
    %c0_i32_1 = arith.constant 0 : i32
    return %c0_i32, %c0_i32_0 : i32, i32
  }
  func.func @transform_3(%arg0: i32) -> (i32, i32) {
    %c0_i32 = arith.constant 0 : i32
    %c0_i32_0 = arith.constant 0 : i32
    %c0_i32_1 = arith.constant 0 : i32
    return %c0_i32, %c0_i32_0 : i32, i32
  }
  func.func @transform_4(%arg0: i32) -> (i32, i32) {
    %c0_i32 = arith.constant 0 : i32
    %c0_i32_0 = arith.constant 0 : i32
    %c0_i32_1 = arith.constant 0 : i32
    return %c0_i32, %c0_i32_0 : i32, i32
  }
  func.func @transform_5(%arg0: i32) -> (i32, i32) {
    %c0_i32 = arith.constant 0 : i32
    %c0_i32_0 = arith.constant 0 : i32
    %c0_i32_1 = arith.constant 0 : i32
    return %c0_i32, %c0_i32_0 : i32, i32
  }
  func.func @transform_6(%arg0: i32) -> (i32, i32) {
    %c0_i32 = arith.constant 0 : i32
    %c0_i32_0 = arith.constant 0 : i32
    %c0_i32_1 = arith.constant 0 : i32
    return %c0_i32, %c0_i32_0 : i32, i32
  }
  func.func @transform_7(%arg0: i32) -> (i32, i32) {
    %c0_i32 = arith.constant 0 : i32
    %c0_i32_0 = arith.constant 0 : i32
    %c0_i32_1 = arith.constant 0 : i32
    return %c0_i32, %c0_i32_0 : i32, i32
  }
  func.func @transform_8(%arg0: i32) -> (i32, i32) {
    %c0_i32 = arith.constant 0 : i32
    %c0_i32_0 = arith.constant 0 : i32
    %c0_i32_1 = arith.constant 0 : i32
    return %c0_i32, %c0_i32_0 : i32, i32
  }
}

</mosaic_0001>

<llo_original>
// kernel: metastress_forward.5
$region0: #{metastress_forward.5}
  #allocation0 [shape = 'u32[]', space=smem, size = 0x4, offset = 0x4, fixed_abs, tag = 'smem constant byte address 0x4 - core index']
  #allocation1 [shape = 'u32[144,128]{1,0:T(1,128)}', space=vmem, size = 0x12000, scoped, tag = 'internal scratch']
  #allocation2 [shape = 'f32[1,1]{1,0:T(1,128)S(1)}', space=vmem, size = 0x200, scoped, tag = 'scoped memory for metastress_forward.5']
  %s0 = inlined_call_operand.vmem [shape: f32[2,2,1,256], index: 0, kind: input, shape index: {}]
  %s1 = inlined_call_operand.vmem [shape: f32[512,128], index: 1, kind: input, shape index: {}]
  %s2 = inlined_call_operand.vmem [shape: f32[1,128], index: 2, kind: input, shape index: {}]
  %s3 = inlined_call_operand.vmem [shape: f32[128,2], index: 3, kind: input, shape index: {}]
  %s4 = inlined_call_operand.vmem [shape: f32[1,2], index: 4, kind: input, shape index: {}]
  %s5 = inlined_call_operand.vmem [shape: f32[256,1], index: 5, kind: input, shape index: {}]
  %s6 = inlined_call_operand.<no memory space> [shape: f32[1,1], index: 6, kind: input, shape index: {}]
  %s7 = inlined_call_operand.hbm [shape: f32[2,2], index: 7, kind: output, shape index: {0}]
  %s8 = inlined_call_operand.vmem [shape: f32[2,1], index: 8, kind: output, shape index: {1}]
  %9 = xla_tuple %s7, %s8
  %s10 = sld [smem:[#allocation0]]
  $region46: #{metastress_forward.5} parent=0
    _
  %s12 = ssub.s32 1, %s10
  %s13 = scalar_select 0, %s12, %s10
  %v14 = vstv %s6
  %15 = vst [vmem:[#allocation2] sm:$0x1] %v14
  $region1: #{metastress_forward.5} parent=0
    #allocation3 [shape = 'u8[1024]{0}', space=vmem, size = 0x400, scoped, tag = 'output window, operand 0, single buffered']
    #allocation4 [shape = 's32[1]{0}', space=sflag, size = 0x4, scoped, tag = 'scoped memory for metastress_forward.5']
    %16 = vsyncpa [#allocation4], 0
    // Predicated region
    $region2: #{metastress_forward.5} parent=1 // pred_check
      _
    $region3: #{metastress_forward.5} parent=1 // pred_check_branch
      %18 = sbr.rel (0) target = $region5
    $region4: #{metastress_forward.5} parent=1 // pred_region
      _
    $region5: #{metastress_forward.5} parent=1 // pred_fallthru
      _
    // Predicated region
    $region6: #{metastress_forward.5} parent=1 // pred_check
      _
    $region7: #{metastress_forward.5} parent=1 // pred_check_branch
      %20 = sbr.rel (0) target = $region9
    $region8: #{metastress_forward.5} parent=1 // pred_region
      _
    $region9: #{metastress_forward.5} parent=1 // pred_fallthru
      _
    // Predicated region
    $region10: #{metastress_forward.5} parent=1 // pred_check
      _
    $region11: #{metastress_forward.5} parent=1 // pred_check_branch
      %22 = sbr.rel (0) target = $region13
    $region12: #{metastress_forward.5} parent=1 // pred_region
      _
    $region13: #{metastress_forward.5} parent=1 // pred_fallthru
      _
    // Predicated region
    $region14: #{metastress_forward.5} parent=1 // pred_check
      _
    $region15: #{metastress_forward.5} parent=1 // pred_check_branch
      %24 = sbr.rel (0) target = $region17
    $region16: #{metastress_forward.5} parent=1 // pred_region
      _
    $region17: #{metastress_forward.5} parent=1 // pred_fallthru
      _
    // Predicated region
    $region18: #{metastress_forward.5} parent=1 // pred_check
      _
    $region19: #{metastress_forward.5} parent=1 // pred_check_branch
      %26 = sbr.rel (0) target = $region21
    $region20: #{metastress_forward.5} parent=1 // pred_region
      _
    $region21: #{metastress_forward.5} parent=1 // pred_fallthru
      _
    // Predicated region
    $region22: #{metastress_forward.5} parent=1 // pred_check
      _
    $region23: #{metastress_forward.5} parent=1 // pred_check_branch
      %28 = sbr.rel (0) target = $region25
    $region24: #{metastress_forward.5} parent=1 // pred_region
      _
    $region25: #{metastress_forward.5} parent=1 // pred_fallthru
      _
    // Predicated region
    $region26: #{metastress_forward.5} parent=1 // pred_check
      _
    $region27: #{metastress_forward.5} parent=1 // pred_check_branch
      %30 = sbr.rel (0) target = $region29
    $region28: #{metastress_forward.5} parent=1 // pred_region
      _
    $region29: #{metastress_forward.5} parent=1 // pred_fallthru
      _
    %v31 = vld [vmem:[%s0] sm:$0x3]
    %v32 = vld [vmem:[%s0 + $0x2] sm:$0x3]
    %s33 = scalar_lea.vmem %s0, 4
    %v34 = vld [vmem:[%s33] sm:$0x3]
    %v35 = vld [vmem:[%s33 + $0x2] sm:$0x3]
    %v36 = vadd.f32 %v31, 0.0
    %v37 = vadd.f32 %v32, 0.0
    %v38 = vadd.f32 %v34, 0.0
    %v39 = vadd.f32 %v35, 0.0
    %v42 = vcombine.low %v36, %v37
    %v44 = vunpack.c.l.s4 1966171168
    %v45 = vunpack.c.0.s8 %v44
    %v46 = vlaneseq
    %v47 = vshrl.u32 %v46, 7
    %v48 = vsub.s32 %v45, %v47
    %v49 = vrot.slane %v42, %v48
    %v50 = vcombine.high %v49, %v49
    %v52 = vunpack.c.l.s4 1966171168
    %v53 = vunpack.c.0.s8 %v52
    %v54 = vlaneseq
    %v55 = vshrl.u32 %v54, 7
    %v56 = vsub.s32 %v53, %v55
    %v57 = vrot.slane %v49, %v56
    %v59 = vunpack.c.l.s4 1966171168
    %v60 = vunpack.c.0.s8 %v59
    %v61 = vlaneseq
    %v62 = vshrl.u32 %v61, 7
    %v63 = vsub.s32 %v60, %v62
    %v64 = vrot.slane %v50, %v63
    %v69 = vcombine.low %v38, %v39
    %v71 = vunpack.c.l.s4 1966171168
    %v72 = vunpack.c.0.s8 %v71
    %v73 = vlaneseq
    %v74 = vshrl.u32 %v73, 7
    %v75 = vsub.s32 %v72, %v74
    %v76 = vrot.slane %v69, %v75
    %v77 = vcombine.high %v76, %v76
    %v79 = vunpack.c.l.s4 1966171168
    %v80 = vunpack.c.0.s8 %v79
    %v81 = vlaneseq
    %v82 = vshrl.u32 %v81, 7
    %v83 = vsub.s32 %v80, %v82
    %v84 = vrot.slane %v76, %v83
    %v86 = vunpack.c.l.s4 1966171168
    %v87 = vunpack.c.0.s8 %v86
    %v88 = vlaneseq
    %v89 = vshrl.u32 %v88, 7
    %v90 = vsub.s32 %v87, %v89
    %v91 = vrot.slane %v77, %v90
    %v94 = vld [vmem:[%s1] sm:$0xff]
    %v95 = vld [vmem:[%s1 + $0x8] sm:$0xff]
    %v96 = vld [vmem:[%s1 + $0x10] sm:$0xff]
    %v97 = vld [vmem:[%s1 + $0x18] sm:$0xff]
    %v98 = vld [vmem:[%s1 + $0x20] sm:$0xff]
    %v99 = vld [vmem:[%s1 + $0x28] sm:$0xff]
    %v100 = vld [vmem:[%s1 + $0x30] sm:$0xff]
    %v101 = vld [vmem:[%s1 + $0x38] sm:$0xff]
    %v102 = vld [vmem:[%s1 + $0x40] sm:$0xff]
    %v103 = vld [vmem:[%s1 + $0x48] sm:$0xff]
    %v104 = vld [vmem:[%s1 + $0x50] sm:$0xff]
    %v105 = vld [vmem:[%s1 + $0x58] sm:$0xff]
    %v106 = vld [vmem:[%s1 + $0x60] sm:$0xff]
    %v107 = vld [vmem:[%s1 + $0x68] sm:$0xff]
    %v108 = vld [vmem:[%s1 + $0x70] sm:$0xff]
    %v109 = vld [vmem:[%s1 + $0x78] sm:$0xff]
    %v110 = vld [vmem:[%s1 + $0x80] sm:$0xff]
    %v111 = vld [vmem:[%s1 + $0x88] sm:$0xff]
    %v112 = vld [vmem:[%s1 + $0x90] sm:$0xff]
    %v113 = vld [vmem:[%s1 + $0x98] sm:$0xff]
    %v114 = vld [vmem:[%s1 + $0xa0] sm:$0xff]
    %v115 = vld [vmem:[%s1 + $0xa8] sm:$0xff]
    %v116 = vld [vmem:[%s1 + $0xb0] sm:$0xff]
    %v117 = vld [vmem:[%s1 + $0xb8] sm:$0xff]
    %v118 = vld [vmem:[%s1 + $0xc0] sm:$0xff]
    %v119 = vld [vmem:[%s1 + $0xc8] sm:$0xff]
    %v120 = vld [vmem:[%s1 + $0xd0] sm:$0xff]
    %v121 = vld [vmem:[%s1 + $0xd8] sm:$0xff]
    %v122 = vld [vmem:[%s1 + $0xe0] sm:$0xff]
    %v123 = vld [vmem:[%s1 + $0xe8] sm:$0xff]
    %v124 = vld [vmem:[%s1 + $0xf0] sm:$0xff]
    %v125 = vld [vmem:[%s1 + $0xf8] sm:$0xff]
    %v126 = vld [vmem:[%s1 + $0x100] sm:$0xff]
    %v127 = vld [vmem:[%s1 + $0x108] sm:$0xff]
    %v128 = vld [vmem:[%s1 + $0x110] sm:$0xff]
    %v129 = vld [vmem:[%s1 + $0x118] sm:$0xff]
    %v130 = vld [vmem:[%s1 + $0x120] sm:$0xff]
    %v131 = vld [vmem:[%s1 + $0x128] sm:$0xff]
    %v132 = vld [vmem:[%s1 + $0x130] sm:$0xff]
    %v133 = vld [vmem:[%s1 + $0x138] sm:$0xff]
    %v134 = vld [vmem:[%s1 + $0x140] sm:$0xff]
    %v135 = vld [vmem:[%s1 + $0x148] sm:$0xff]
    %v136 = vld [vmem:[%s1 + $0x150] sm:$0xff]
    %v137 = vld [vmem:[%s1 + $0x158] sm:$0xff]
    %v138 = vld [vmem:[%s1 + $0x160] sm:$0xff]
    %v139 = vld [vmem:[%s1 + $0x168] sm:$0xff]
    %v140 = vld [vmem:[%s1 + $0x170] sm:$0xff]
    %v141 = vld [vmem:[%s1 + $0x178] sm:$0xff]
    %v142 = vld [vmem:[%s1 + $0x180] sm:$0xff]
    %v143 = vld [vmem:[%s1 + $0x188] sm:$0xff]
    %v144 = vld [vmem:[%s1 + $0x190] sm:$0xff]
    %v145 = vld [vmem:[%s1 + $0x198] sm:$0xff]
    %v146 = vld [vmem:[%s1 + $0x1a0] sm:$0xff]
    %v147 = vld [vmem:[%s1 + $0x1a8] sm:$0xff]
    %v148 = vld [vmem:[%s1 + $0x1b0] sm:$0xff]
    %v149 = vld [vmem:[%s1 + $0x1b8] sm:$0xff]
    %v150 = vld [vmem:[%s1 + $0x1c0] sm:$0xff]
    %v151 = vld [vmem:[%s1 + $0x1c8] sm:$0xff]
    %v152 = vld [vmem:[%s1 + $0x1d0] sm:$0xff]
    %v153 = vld [vmem:[%s1 + $0x1d8] sm:$0xff]
    %v154 = vld [vmem:[%s1 + $0x1e0] sm:$0xff]
    %v155 = vld [vmem:[%s1 + $0x1e8] sm:$0xff]
    %v156 = vld [vmem:[%s1 + $0x1f0] sm:$0xff]
    %v157 = vld [vmem:[%s1 + $0x1f8] sm:$0xff]
    %v158 = vld [vmem:[%s2] sm:$0x1]
    %v160 = vlaneseq
    %v161 = vshrl.u32 %v160, 7
    %v162 = vsub.s32 0, %v161
    %v163 = vrot.slane %v158, %v162
    %165 = vmatprep.subr.mxu0 0.0
    %166 = vmatpush1.msra.mxu0 %v109
    %167 = vmatprep.subr.mxu0 0.0
    %168 = vmatpush1.msra.mxu0 %v108
    %169 = vmatprep.subr.mxu0 0.0
    %170 = vmatpush1.msra.mxu0 %v107
    %171 = vmatprep.subr.mxu0 0.0
    %172 = vmatpush1.msra.mxu0 %v106
    %173 = vmatprep.subr.mxu0 0.0
    %174 = vmatpush1.msra.mxu0 %v105
    %175 = vmatprep.subr.mxu0 0.0
    %176 = vmatpush1.msra.mxu0 %v104
    %177 = vmatprep.subr.mxu0 0.0
    %178 = vmatpush1.msra.mxu0 %v103
    %179 = vmatprep.subr.mxu0 0.0
    %180 = vmatpush1.msra.mxu0 %v102
    %181 = vmatprep.subr.mxu0 0.0
    %182 = vmatpush1.msra.mxu0 %v101
    %183 = vmatprep.subr.mxu0 0.0
    %184 = vmatpush1.msra.mxu0 %v100
    %185 = vmatprep.subr.mxu0 0.0
    %186 = vmatpush1.msra.mxu0 %v99
    %187 = vmatprep.subr.mxu0 0.0
    %188 = vmatpush1.msra.mxu0 %v98
    %189 = vmatprep.subr.mxu0 0.0
    %190 = vmatpush1.msra.mxu0 %v97
    %191 = vmatprep.subr.mxu0 0.0
    %192 = vmatpush1.msra.mxu0 %v96
    %193 = vmatprep.subr.mxu0 0.0
    %194 = vmatpush1.msra.mxu0 %v95
    %195 = vmatprep.subr.mxu0 0.0
    %196 = vmatpush1.msra.mxu0 %v94
    %197 = vmatprep.subr.mxu0 0.0
    %198 = vmatpush2.msra.mxu0 %v125
    %199 = vmatprep.subr.mxu0 0.0
    %200 = vmatpush2.msra.mxu0 %v124
    %201 = vmatprep.subr.mxu0 0.0
    %202 = vmatpush2.msra.mxu0 %v123
    %203 = vmatprep.subr.mxu0 0.0
    %204 = vmatpush2.msra.mxu0 %v122
    %205 = vmatprep.subr.mxu0 0.0
    %206 = vmatpush2.msra.mxu0 %v121
    %207 = vmatprep.subr.mxu0 0.0
    %208 = vmatpush2.msra.mxu0 %v120
    %209 = vmatprep.subr.mxu0 0.0
    %210 = vmatpush2.msra.mxu0 %v119
    %211 = vmatprep.subr.mxu0 0.0
    %212 = vmatpush2.msra.mxu0 %v118
    %213 = vmatprep.subr.mxu0 0.0
    %214 = vmatpush2.msra.mxu0 %v117
    %215 = vmatprep.subr.mxu0 0.0
    %216 = vmatpush2.msra.mxu0 %v116
    %217 = vmatprep.subr.mxu0 0.0
    %218 = vmatpush2.msra.mxu0 %v115
    %219 = vmatprep.subr.mxu0 0.0
    %220 = vmatpush2.msra.mxu0 %v114
    %221 = vmatprep.subr.mxu0 0.0
    %222 = vmatpush2.msra.mxu0 %v113
    %223 = vmatprep.subr.mxu0 0.0
    %224 = vmatpush2.msra.mxu0 %v112
    %225 = vmatprep.subr.mxu0 0.0
    %226 = vmatpush2.msra.mxu0 %v111
    %227 = vmatprep.subr.mxu0 0.0
    %228 = vmatpush2.msra.mxu0 %v110
    %229 = vmatprep.mubr.f32.mxu0 %v64
    %230 = vmatmul.mubr.f32.gmra.mxu0 %v57
    %v231 = vpop.f32.mrf.mxu0
    %v232 = vadd.f32 %v163, %v231
    %v233 = vpop.f32.mrf.mxu0
    %234 = vdwg.mxu0
    %235 = vmatprep.subr.mxu0 0.0
    %236 = vmatpush1.msra.mxu0 %v141
    %237 = vmatprep.subr.mxu0 0.0
    %238 = vmatpush1.msra.mxu0 %v140
    %239 = vmatprep.subr.mxu0 0.0
    %240 = vmatpush1.msra.mxu0 %v139
    %241 = vmatprep.subr.mxu0 0.0
    %242 = vmatpush1.msra.mxu0 %v138
    %243 = vmatprep.subr.mxu0 0.0
    %244 = vmatpush1.msra.mxu0 %v137
    %245 = vmatprep.subr.mxu0 0.0
    %246 = vmatpush1.msra.mxu0 %v136
    %247 = vmatprep.subr.mxu0 0.0
    %248 = vmatpush1.msra.mxu0 %v135
    %249 = vmatprep.subr.mxu0 0.0
    %250 = vmatpush1.msra.mxu0 %v134
    %251 = vmatprep.subr.mxu0 0.0
    %252 = vmatpush1.msra.mxu0 %v133
    %253 = vmatprep.subr.mxu0 0.0
    %254 = vmatpush1.msra.mxu0 %v132
    %255 = vmatprep.subr.mxu0 0.0
    %256 = vmatpush1.msra.mxu0 %v131
    %257 = vmatprep.subr.mxu0 0.0
    %258 = vmatpush1.msra.mxu0 %v130
    %259 = vmatprep.subr.mxu0 0.0
    %260 = vmatpush1.msra.mxu0 %v129
    %261 = vmatprep.subr.mxu0 0.0
    %262 = vmatpush1.msra.mxu0 %v128
    %263 = vmatprep.subr.mxu0 0.0
    %264 = vmatpush1.msra.mxu0 %v127
    %265 = vmatprep.subr.mxu0 0.0
    %266 = vmatpush1.msra.mxu0 %v126
    %267 = vmatprep.subr.mxu0 0.0
    %268 = vmatpush2.msra.mxu0 %v157
    %269 = vmatprep.subr.mxu0 0.0
    %270 = vmatpush2.msra.mxu0 %v156
    %271 = vmatprep.subr.mxu0 0.0
    %272 = vmatpush2.msra.mxu0 %v155
    %273 = vmatprep.subr.mxu0 0.0
    %274 = vmatpush2.msra.mxu0 %v154
    %275 = vmatprep.subr.mxu0 0.0
    %276 = vmatpush2.msra.mxu0 %v153
    %277 = vmatprep.subr.mxu0 0.0
    %278 = vmatpush2.msra.mxu0 %v152
    %279 = vmatprep.subr.mxu0 0.0
    %280 = vmatpush2.msra.mxu0 %v151
    %281 = vmatprep.subr.mxu0 0.0
    %282 = vmatpush2.msra.mxu0 %v150
    %283 = vmatprep.subr.mxu0 0.0
    %284 = vmatpush2.msra.mxu0 %v149
    %285 = vmatprep.subr.mxu0 0.0
    %286 = vmatpush2.msra.mxu0 %v148
    %287 = vmatprep.subr.mxu0 0.0
    %288 = vmatpush2.msra.mxu0 %v147
    %289 = vmatprep.subr.mxu0 0.0
    %290 = vmatpush2.msra.mxu0 %v146
    %291 = vmatprep.subr.mxu0 0.0
    %292 = vmatpush2.msra.mxu0 %v145
    %293 = vmatprep.subr.mxu0 0.0
    %294 = vmatpush2.msra.mxu0 %v144
    %295 = vmatprep.subr.mxu0 0.0
    %296 = vmatpush2.msra.mxu0 %v143
    %297 = vmatprep.subr.mxu0 0.0
    %298 = vmatpush2.msra.mxu0 %v142
    %299 = vmatprep.mubr.f32.mxu0 %v91
    %300 = vmatmul.mubr.f32.gmra.mxu0 %v84
    %v301 = vpop.f32.mrf.mxu0
    %v302 = vadd.f32 %v232, %v301
    %v303 = vpop.f32.mrf.mxu0
    %304 = vdwg.mxu0
    %vm305 = vcmp.ge.f32.partialorder %v302, 0.0
    %v306 = vmul.f32 %v302, 0.01
    %v307 = vsel %vm305, %v302, %v306
    %v308 = vld [vmem:[%s3] sm:$0xff]
    %v309 = vld [vmem:[%s3 + $0x8] sm:$0xff]
    %v310 = vld [vmem:[%s3 + $0x10] sm:$0xff]
    %v311 = vld [vmem:[%s3 + $0x18] sm:$0xff]
    %v312 = vld [vmem:[%s3 + $0x20] sm:$0xff]
    %v313 = vld [vmem:[%s3 + $0x28] sm:$0xff]
    %v314 = vld [vmem:[%s3 + $0x30] sm:$0xff]
    %v315 = vld [vmem:[%s3 + $0x38] sm:$0xff]
    %v316 = vld [vmem:[%s3 + $0x40] sm:$0xff]
    %v317 = vld [vmem:[%s3 + $0x48] sm:$0xff]
    %v318 = vld [vmem:[%s3 + $0x50] sm:$0xff]
    %v319 = vld [vmem:[%s3 + $0x58] sm:$0xff]
    %v320 = vld [vmem:[%s3 + $0x60] sm:$0xff]
    %v321 = vld [vmem:[%s3 + $0x68] sm:$0xff]
    %v322 = vld [vmem:[%s3 + $0x70] sm:$0xff]
    %v323 = vld [vmem:[%s3 + $0x78] sm:$0xff]
    %v324 = vld [vmem:[%s4] sm:$0x1]
    %v326 = vlaneseq
    %v327 = vshrl.u32 %v326, 7
    %v328 = vsub.s32 0, %v327
    %v329 = vrot.slane %v324, %v328
    %331 = vmatprep.subr.mxu0 0.0
    %332 = vmatpush1.msra.mxu0 %v323
    %333 = vmatprep.subr.mxu0 0.0
    %334 = vmatpush1.msra.mxu0 %v322
    %335 = vmatprep.subr.mxu0 0.0
    %336 = vmatpush1.msra.mxu0 %v321
    %337 = vmatprep.subr.mxu0 0.0
    %338 = vmatpush1.msra.mxu0 %v320
    %339 = vmatprep.subr.mxu0 0.0
    %340 = vmatpush1.msra.mxu0 %v319
    %341 = vmatprep.subr.mxu0 0.0
    %342 = vmatpush1.msra.mxu0 %v318
    %343 = vmatprep.subr.mxu0 0.0
    %344 = vmatpush1.msra.mxu0 %v317
    %345 = vmatprep.subr.mxu0 0.0
    %346 = vmatpush1.msra.mxu0 %v316
    %347 = vmatprep.subr.mxu0 0.0
    %348 = vmatpush1.msra.mxu0 %v315
    %349 = vmatprep.subr.mxu0 0.0
    %350 = vmatpush1.msra.mxu0 %v314
    %351 = vmatprep.subr.mxu0 0.0
    %352 = vmatpush1.msra.mxu0 %v313
    %353 = vmatprep.subr.mxu0 0.0
    %354 = vmatpush1.msra.mxu0 %v312
    %355 = vmatprep.subr.mxu0 0.0
    %356 = vmatpush1.msra.mxu0 %v311
    %357 = vmatprep.subr.mxu0 0.0
    %358 = vmatpush1.msra.mxu0 %v310
    %359 = vmatprep.subr.mxu0 0.0
    %360 = vmatpush1.msra.mxu0 %v309
    %361 = vmatprep.subr.mxu0 0.0
    %362 = vmatpush1.msra.mxu0 %v308
    %363 = vmatprep.subr.mxu0 0.0
    %364 = vmatpush2.msra.mxu0 0.0
    %365 = vmatprep.subr.mxu0 0.0
    %366 = vmatpush2.msra.mxu0 0.0
    %367 = vmatprep.subr.mxu0 0.0
    %368 = vmatpush2.msra.mxu0 0.0
    %369 = vmatprep.subr.mxu0 0.0
    %370 = vmatpush2.msra.mxu0 0.0
    %371 = vmatprep.subr.mxu0 0.0
    %372 = vmatpush2.msra.mxu0 0.0
    %373 = vmatprep.subr.mxu0 0.0
    %374 = vmatpush2.msra.mxu0 0.0
    %375 = vmatprep.subr.mxu0 0.0
    %376 = vmatpush2.msra.mxu0 0.0
    %377 = vmatprep.subr.mxu0 0.0
    %378 = vmatpush2.msra.mxu0 0.0
    %379 = vmatprep.subr.mxu0 0.0
    %380 = vmatpush2.msra.mxu0 0.0
    %381 = vmatprep.subr.mxu0 0.0
    %382 = vmatpush2.msra.mxu0 0.0
    %383 = vmatprep.subr.mxu0 0.0
    %384 = vmatpush2.msra.mxu0 0.0
    %385 = vmatprep.subr.mxu0 0.0
    %386 = vmatpush2.msra.mxu0 0.0
    %387 = vmatprep.subr.mxu0 0.0
    %388 = vmatpush2.msra.mxu0 0.0
    %389 = vmatprep.subr.mxu0 0.0
    %390 = vmatpush2.msra.mxu0 0.0
    %391 = vmatprep.subr.mxu0 0.0
    %392 = vmatpush2.msra.mxu0 0.0
    %393 = vmatprep.subr.mxu0 0.0
    %394 = vmatpush2.msra.mxu0 0.0
    %395 = vmatprep.mubr.f32.mxu0 0.0
    %396 = vmatmul.mubr.f32.gmra.mxu0 %v307
    %v397 = vpop.f32.mrf.mxu0
    %v398 = vadd.f32 %v329, %v397
    %v399 = vpop.f32.mrf.mxu0
    %400 = vdwg.mxu0
    %vm401 = vcmask 9216
    %402 = vst.msk [vmem:[#allocation3] sm:$0x3] %vm401, %v398
    %v403 = vld [vmem:[%s5] sm:$0xff]
    %v404 = vld [vmem:[%s5 + $0x8] sm:$0xff]
    %v405 = vld [vmem:[%s5 + $0x10] sm:$0xff]
    %v406 = vld [vmem:[%s5 + $0x18] sm:$0xff]
    %v407 = vld [vmem:[%s5 + $0x20] sm:$0xff]
    %v408 = vld [vmem:[%s5 + $0x28] sm:$0xff]
    %v409 = vld [vmem:[%s5 + $0x30] sm:$0xff]
    %v410 = vld [vmem:[%s5 + $0x38] sm:$0xff]
    %v411 = vld [vmem:[%s5 + $0x40] sm:$0xff]
    %v412 = vld [vmem:[%s5 + $0x48] sm:$0xff]
    %v413 = vld [vmem:[%s5 + $0x50] sm:$0xff]
    %v414 = vld [vmem:[%s5 + $0x58] sm:$0xff]
    %v415 = vld [vmem:[%s5 + $0x60] sm:$0xff]
    %v416 = vld [vmem:[%s5 + $0x68] sm:$0xff]
    %v417 = vld [vmem:[%s5 + $0x70] sm:$0xff]
    %v418 = vld [vmem:[%s5 + $0x78] sm:$0xff]
    %v419 = vld [vmem:[%s5 + $0x80] sm:$0xff]
    %v420 = vld [vmem:[%s5 + $0x88] sm:$0xff]
    %v421 = vld [vmem:[%s5 + $0x90] sm:$0xff]
    %v422 = vld [vmem:[%s5 + $0x98] sm:$0xff]
    %v423 = vld [vmem:[%s5 + $0xa0] sm:$0xff]
    %v424 = vld [vmem:[%s5 + $0xa8] sm:$0xff]
    %v425 = vld [vmem:[%s5 + $0xb0] sm:$0xff]
    %v426 = vld [vmem:[%s5 + $0xb8] sm:$0xff]
    %v427 = vld [vmem:[%s5 + $0xc0] sm:$0xff]
    %v428 = vld [vmem:[%s5 + $0xc8] sm:$0xff]
    %v429 = vld [vmem:[%s5 + $0xd0] sm:$0xff]
    %v430 = vld [vmem:[%s5 + $0xd8] sm:$0xff]
    %v431 = vld [vmem:[%s5 + $0xe0] sm:$0xff]
    %v432 = vld [vmem:[%s5 + $0xe8] sm:$0xff]
    %v433 = vld [vmem:[%s5 + $0xf0] sm:$0xff]
    %v434 = vld [vmem:[%s5 + $0xf8] sm:$0xff]
    %v435 = vld [vmem:[#allocation2] sm:$0x1]
    %v437 = vlaneseq
    %v438 = vshrl.u32 %v437, 7
    %v439 = vsub.s32 0, %v438
    %v440 = vrot.slane %v435, %v439
    %442 = vmatprep.subr.mxu0 0.0
    %443 = vmatpush1.msra.mxu0 %v418
    %444 = vmatprep.subr.mxu0 0.0
    %445 = vmatpush1.msra.mxu0 %v417
    %446 = vmatprep.subr.mxu0 0.0
    %447 = vmatpush1.msra.mxu0 %v416
    %448 = vmatprep.subr.mxu0 0.0
    %449 = vmatpush1.msra.mxu0 %v415
    %450 = vmatprep.subr.mxu0 0.0
    %451 = vmatpush1.msra.mxu0 %v414
    %452 = vmatprep.subr.mxu0 0.0
    %453 = vmatpush1.msra.mxu0 %v413
    %454 = vmatprep.subr.mxu0 0.0
    %455 = vmatpush1.msra.mxu0 %v412
    %456 = vmatprep.subr.mxu0 0.0
    %457 = vmatpush1.msra.mxu0 %v411
    %458 = vmatprep.subr.mxu0 0.0
    %459 = vmatpush1.msra.mxu0 %v410
    %460 = vmatprep.subr.mxu0 0.0
    %461 = vmatpush1.msra.mxu0 %v409
    %462 = vmatprep.subr.mxu0 0.0
    %463 = vmatpush1.msra.mxu0 %v408
    %464 = vmatprep.subr.mxu0 0.0
    %465 = vmatpush1.msra.mxu0 %v407
    %466 = vmatprep.subr.mxu0 0.0
    %467 = vmatpush1.msra.mxu0 %v406
    %468 = vmatprep.subr.mxu0 0.0
    %469 = vmatpush1.msra.mxu0 %v405
    %470 = vmatprep.subr.mxu0 0.0
    %471 = vmatpush1.msra.mxu0 %v404
    %472 = vmatprep.subr.mxu0 0.0
    %473 = vmatpush1.msra.mxu0 %v403
    %474 = vmatprep.subr.mxu0 0.0
    %475 = vmatpush2.msra.mxu0 %v434
    %476 = vmatprep.subr.mxu0 0.0
    %477 = vmatpush2.msra.mxu0 %v433
    %478 = vmatprep.subr.mxu0 0.0
    %479 = vmatpush2.msra.mxu0 %v432
    %480 = vmatprep.subr.mxu0 0.0
    %481 = vmatpush2.msra.mxu0 %v431
    %482 = vmatprep.subr.mxu0 0.0
    %483 = vmatpush2.msra.mxu0 %v430
    %484 = vmatprep.subr.mxu0 0.0
    %485 = vmatpush2.msra.mxu0 %v429
    %486 = vmatprep.subr.mxu0 0.0
    %487 = vmatpush2.msra.mxu0 %v428
    %488 = vmatprep.subr.mxu0 0.0
    %489 = vmatpush2.msra.mxu0 %v427
    %490 = vmatprep.subr.mxu0 0.0
    %491 = vmatpush2.msra.mxu0 %v426
    %492 = vmatprep.subr.mxu0 0.0
    %493 = vmatpush2.msra.mxu0 %v425
    %494 = vmatprep.subr.mxu0 0.0
    %495 = vmatpush2.msra.mxu0 %v424
    %496 = vmatprep.subr.mxu0 0.0
    %497 = vmatpush2.msra.mxu0 %v423
    %498 = vmatprep.subr.mxu0 0.0
    %499 = vmatpush2.msra.mxu0 %v422
    %500 = vmatprep.subr.mxu0 0.0
    %501 = vmatpush2.msra.mxu0 %v421
    %502 = vmatprep.subr.mxu0 0.0
    %503 = vmatpush2.msra.mxu0 %v420
    %504 = vmatprep.subr.mxu0 0.0
    %505 = vmatpush2.msra.mxu0 %v419
    %506 = vmatprep.mubr.f32.mxu0 %v91
    %507 = vmatmul.mubr.f32.gmra.mxu0 %v84
    %v508 = vpop.f32.mrf.mxu0
    %v509 = vadd.f32 %v440, %v508
    %v510 = vpop.f32.mrf.mxu0
    %511 = vdwg.mxu0
    %vm512 = vcmask 1024
    %513 = vst.msk [vmem:[%s8] sm:$0x3] %vm512, %v509
    // Predicated region
    $region30: #{metastress_forward.5} parent=1 // pred_check
      _
    $region31: #{metastress_forward.5} parent=1 // pred_check_branch
      %515 = sbr.rel (0) target = $region33
    $region32: #{metastress_forward.5} parent=1 // pred_region
      %s517 = ssub.s32 32, 32
      %518 = vsyncadd [#allocation4], %s517
      %s520 = sshll.u32 [#allocation3], 4
      %s521 = int_to_ptr.vmem [resolvable:$true] %s520
      %523 = dma.vmem_to_hbm [thread:$0]  %s521, 32, %s7, [#allocation4]
    $region33: #{metastress_forward.5} parent=1 // pred_fallthru
      _
    // Predicated region
    $region34: #{metastress_forward.5} parent=1 // pred_check
      _
    $region35: #{metastress_forward.5} parent=1 // pred_check_branch
      %525 = sbr.rel (0) target = $region37
    $region36: #{metastress_forward.5} parent=1 // pred_region
      _
    $region37: #{metastress_forward.5} parent=1 // pred_fallthru
      _
    // Predicated region
    $region38: #{metastress_forward.5} parent=1 // pred_check
      _
    $region39: #{metastress_forward.5} parent=1 // pred_check_branch
      %527 = sbr.rel (0) target = $region41
    $region40: #{metastress_forward.5} parent=1 // pred_region
      %528 = dma.done [#allocation4], 32
    $region41: #{metastress_forward.5} parent=1 // pred_fallthru
      _
    // Predicated region
    $region42: #{metastress_forward.5} parent=1 // pred_check
      _
    $region43: #{metastress_forward.5} parent=1 // pred_check_branch
      %530 = sbr.rel (0) target = $region45
    $region44: #{metastress_forward.5} parent=1 // pred_region
      _
    $region45: #{metastress_forward.5} parent=1 // pred_fallthru
      _
    %531 = vsyncpa [#allocation4], 1

// kernel: metastress_forward.4
$region0: #{metastress_forward.4}
  #allocation0 [shape = 'u32[]', space=smem, size = 0x4, offset = 0x4, fixed_abs, tag = 'smem constant byte address 0x4 - core index']
  #allocation1 [shape = 'u32[144,128]{1,0:T(1,128)}', space=vmem, size = 0x12000, scoped, tag = 'internal scratch']
  %s0 = inlined_call_operand.vmem [shape: f32[2,50,32], index: 0, kind: input, shape index: {}]
  %s1 = inlined_call_operand.vmem [shape: f32[2,10,64], index: 1, kind: input, shape index: {}]
  %s2 = inlined_call_operand.vmem [shape: f32[2,2,128], index: 2, kind: input, shape index: {}]
  %s3 = inlined_call_operand.vmem [shape: f32[2,32,32], index: 3, kind: input, shape index: {}]
  %s4 = inlined_call_operand.vmem [shape: f32[2,32,64], index: 4, kind: input, shape index: {}]
  %s5 = inlined_call_operand.vmem [shape: f32[2,1,64], index: 5, kind: input, shape index: {}]
  %s6 = inlined_call_operand.vmem [shape: f32[2,64,64], index: 6, kind: input, shape index: {}]
  %s7 = inlined_call_operand.vmem [shape: f32[2,64,128], index: 7, kind: input, shape index: {}]
  %s8 = inlined_call_operand.vmem [shape: f32[2,1,128], index: 8, kind: input, shape index: {}]
  %s9 = inlined_call_operand.vmem [shape: f32[2,128,128], index: 9, kind: input, shape index: {}]
  %s10 = inlined_call_operand.vmem [shape: f32[2,128,256], index: 10, kind: input, shape index: {}]
  %s11 = inlined_call_operand.vmem [shape: f32[2,1,256], index: 11, kind: input, shape index: {}]
  %s12 = inlined_call_operand.vmem [shape: f32[2,2,1,256], index: 12, kind: output, shape index: {}]
  %s13 = sld [smem:[#allocation0]]
  $region81: #{metastress_forward.4} parent=0
    _
  %s15 = ssub.s32 1, %s13
  %s16 = scalar_select 0, %s15, %s13
  loop: start=0, step=1, limit=6
  $region2: #{metastress_forward.4} parent=0 // loop_pre_header
    _
  $region3: #{metastress_forward.4} parent=0 // loop_header
    %s18 = sphi 0, %s22
    %p19 = scmp.ge.s32.totalorder %s18, 6
    %s25 = sphi 0, %s37
    %s26 = sphi 0, %s33
    %s27 = sphi 0, %s25
    %s28 = sphi 0, %s26
    %s29 = sphi 0, %s27
    %s30 = sphi 0, %s28
    %s40 = sphi 0, %s42
    %s43 = sphi 0, %s40
    %s44 = sphi 0, %s43
    %s60 = sphi 0, %s44
    %s66 = sphi 0, %s68
    %s69 = sphi 0, %s66
    %s70 = sphi 0, %s69
    %s86 = sphi 0, %s70
    %s92 = sphi 0, %s94
    %s95 = sphi 0, %s92
    %s96 = sphi 0, %s95
    %s112 = sphi 0, %s96
    %s118 = sphi 0, %s120
    %s121 = sphi 0, %s118
    %s122 = sphi 0, %s121
    %s138 = sphi 0, %s122
    %s144 = sphi 0, %s146
    %s147 = sphi 0, %s144
    %s148 = sphi 0, %s147
    %s164 = sphi 0, %s148
    %s170 = sphi 0, %s172
    %s173 = sphi 0, %s170
    %s174 = sphi 0, %s173
    %s190 = sphi 0, %s174
    %s196 = sphi 0, %s198
    %s199 = sphi 0, %s196
    %s200 = sphi 0, %s199
    %s216 = sphi 0, %s200
    %s222 = sphi 0, %s224
    %s225 = sphi 0, %s222
    %s226 = sphi 0, %s225
    %s242 = sphi 0, %s226
    %s248 = sphi 0, %s250
    %s251 = sphi 0, %s248
    %s252 = sphi 0, %s251
    %s268 = sphi 0, %s252
    %s274 = sphi 0, %s276
    %s277 = sphi 0, %s274
    %s278 = sphi 0, %s277
    %s294 = sphi 0, %s278
    %s300 = sphi 0, %s302
    %s303 = sphi 0, %s300
    %s304 = sphi 0, %s303
    %s320 = sphi 0, %s304
    %s326 = sphi 0, %s328
    %s329 = sphi 0, %s326
    %s330 = sphi 0, %s329
    %s346 = sphi 0, %s330
    %s354 = sphi 0, %s356
    %s357 = sphi 0, %s354
    %s358 = sphi 0, %s357
    %s374 = sphi 0, %s358
  $region4: #{metastress_forward.4} parent=0 // loop_header_branch
    %21 = sbr.rel (%p19) target = $region8
  $region5: #{metastress_forward.4} parent=0 // loop_body
    %s23 = ssub.s32 %s18, 1
    %s24 = ssub.s32 %s18, 2
    %s31 = sadd.s32 1, %s26
    %p32 = scmp.ge.s32.totalorder %s31, 2
    %s33 = scalar_select %p32, 0, %s31
    %s34 = sadd.s32 1, %s25
    %s35 = scalar_select %p32, %s34, %s25
    %p36 = scmp.ge.s32.totalorder %s35, 2
    %s37 = scalar_select %p36, 0, %s35
    %s38 = ssub.s32 %s26, %s33
    %p39 = scmp.eq.s32.totalorder %s38, 0
    %s41 = sadd.s32 %s40, 1
    %s42 = scalar_select %p39, %s40, %s41
    %p45 = pneg %p39
    %p46 = scmp.eq.s32.totalorder %s18, 3
    %p47 = por %p45, %p46
    %p48 = scmp.ne.s32.totalorder %s40, %s43
    %p49 = scmp.eq.s32.totalorder %s18, 0
    %p50 = por %p48, %p49
    %p51 = scmp.ne.s32.totalorder %s40, %s43
    %p52 = scmp.eq.s32.totalorder %s23, 3
    %p53 = por %p51, %p52
    %p54 = scmp.ne.s32.totalorder %s43, %s44
    %p55 = scmp.eq.s32.totalorder %s23, 0
    %p56 = por %p54, %p55
    %p57 = scmp.ne.s32.totalorder %s43, %s44
    %p58 = scmp.eq.s32.totalorder %s24, 3
    %p59 = por %p57, %p58
    %p61 = scmp.ne.s32.totalorder %s44, %s60
    %p62 = scmp.eq.s32.totalorder %s24, 0
    %p63 = por %p61, %p62
    %s64 = ssub.s32 %s26, %s33
    %p65 = scmp.eq.s32.totalorder %s64, 0
    %s67 = sadd.s32 %s66, 1
    %s68 = scalar_select %p65, %s66, %s67
    %p71 = pneg %p65
    %p72 = scmp.eq.s32.totalorder %s18, 3
    %p73 = por %p71, %p72
    %p74 = scmp.ne.s32.totalorder %s66, %s69
    %p75 = scmp.eq.s32.totalorder %s18, 0
    %p76 = por %p74, %p75
    %p77 = scmp.ne.s32.totalorder %s66, %s69
    %p78 = scmp.eq.s32.totalorder %s23, 3
    %p79 = por %p77, %p78
    %p80 = scmp.ne.s32.totalorder %s69, %s70
    %p81 = scmp.eq.s32.totalorder %s23, 0
    %p82 = por %p80, %p81
    %p83 = scmp.ne.s32.totalorder %s69, %s70
    %p84 = scmp.eq.s32.totalorder %s24, 3
    %p85 = por %p83, %p84
    %p87 = scmp.ne.s32.totalorder %s70, %s86
    %p88 = scmp.eq.s32.totalorder %s24, 0
    %p89 = por %p87, %p88
    %s90 = ssub.s32 %s26, %s33
    %p91 = scmp.eq.s32.totalorder %s90, 0
    %s93 = sadd.s32 %s92, 1
    %s94 = scalar_select %p91, %s92, %s93
    %p97 = pneg %p91
    %p98 = scmp.eq.s32.totalorder %s18, 3
    %p99 = por %p97, %p98
    %p100 = scmp.ne.s32.totalorder %s92, %s95
    %p101 = scmp.eq.s32.totalorder %s18, 0
    %p102 = por %p100, %p101
    %p103 = scmp.ne.s32.totalorder %s92, %s95
    %p104 = scmp.eq.s32.totalorder %s23, 3
    %p105 = por %p103, %p104
    %p106 = scmp.ne.s32.totalorder %s95, %s96
    %p107 = scmp.eq.s32.totalorder %s23, 0
    %p108 = por %p106, %p107
    %p109 = scmp.ne.s32.totalorder %s95, %s96
    %p110 = scmp.eq.s32.totalorder %s24, 3
    %p111 = por %p109, %p110
    %p113 = scmp.ne.s32.totalorder %s96, %s112
    %p114 = scmp.eq.s32.totalorder %s24, 0
    %p115 = por %p113, %p114
    %s116 = ssub.s32 %s25, %s37
    %p117 = scmp.eq.s32.totalorder %s116, 0
    %s119 = sadd.s32 %s118, 1
    %s120 = scalar_select %p117, %s118, %s119
    %p123 = pneg %p117
    %p124 = scmp.eq.s32.totalorder %s18, 3
    %p125 = por %p123, %p124
    %p126 = scmp.ne.s32.totalorder %s118, %s121
    %p127 = scmp.eq.s32.totalorder %s18, 0
    %p128 = por %p126, %p127
    %p129 = scmp.ne.s32.totalorder %s118, %s121
    %p130 = scmp.eq.s32.totalorder %s23, 3
    %p131 = por %p129, %p130
    %p132 = scmp.ne.s32.totalorder %s121, %s122
    %p133 = scmp.eq.s32.totalorder %s23, 0
    %p134 = por %p132, %p133
    %p135 = scmp.ne.s32.totalorder %s121, %s122
    %p136 = scmp.eq.s32.totalorder %s24, 3
    %p137 = por %p135, %p136
    %p139 = scmp.ne.s32.totalorder %s122, %s138
    %p140 = scmp.eq.s32.totalorder %s24, 0
    %p141 = por %p139, %p140
    %s142 = ssub.s32 %s25, %s37
    %p143 = scmp.eq.s32.totalorder %s142, 0
    %s145 = sadd.s32 %s144, 1
    %s146 = scalar_select %p143, %s144, %s145
    %p149 = pneg %p143
    %p150 = scmp.eq.s32.totalorder %s18, 3
    %p151 = por %p149, %p150
    %p152 = scmp.ne.s32.totalorder %s144, %s147
    %p153 = scmp.eq.s32.totalorder %s18, 0
    %p154 = por %p152, %p153
    %p155 = scmp.ne.s32.totalorder %s144, %s147
    %p156 = scmp.eq.s32.totalorder %s23, 3
    %p157 = por %p155, %p156
    %p158 = scmp.ne.s32.totalorder %s147, %s148
    %p159 = scmp.eq.s32.totalorder %s23, 0
    %p160 = por %p158, %p159
    %p161 = scmp.ne.s32.totalorder %s147, %s148
    %p162 = scmp.eq.s32.totalorder %s24, 3
    %p163 = por %p161, %p162
    %p165 = scmp.ne.s32.totalorder %s148, %s164
    %p166 = scmp.eq.s32.totalorder %s24, 0
    %p167 = por %p165, %p166
    %s168 = ssub.s32 %s25, %s37
    %p169 = scmp.eq.s32.totalorder %s168, 0
    %s171 = sadd.s32 %s170, 1
    %s172 = scalar_select %p169, %s170, %s171
    %p175 = pneg %p169
    %p176 = scmp.eq.s32.totalorder %s18, 3
    %p177 = por %p175, %p176
    %p178 = scmp.ne.s32.totalorder %s170, %s173
    %p179 = scmp.eq.s32.totalorder %s18, 0
    %p180 = por %p178, %p179
    %p181 = scmp.ne.s32.totalorder %s170, %s173
    %p182 = scmp.eq.s32.totalorder %s23, 3
    %p183 = por %p181, %p182
    %p184 = scmp.ne.s32.totalorder %s173, %s174
    %p185 = scmp.eq.s32.totalorder %s23, 0
    %p186 = por %p184, %p185
    %p187 = scmp.ne.s32.totalorder %s173, %s174
    %p188 = scmp.eq.s32.totalorder %s24, 3
    %p189 = por %p187, %p188
    %p191 = scmp.ne.s32.totalorder %s174, %s190
    %p192 = scmp.eq.s32.totalorder %s24, 0
    %p193 = por %p191, %p192
    %s194 = ssub.s32 %s25, %s37
    %p195 = scmp.eq.s32.totalorder %s194, 0
    %s197 = sadd.s32 %s196, 1
    %s198 = scalar_select %p195, %s196, %s197
    %p201 = pneg %p195
    %p202 = scmp.eq.s32.totalorder %s18, 3
    %p203 = por %p201, %p202
    %p204 = scmp.ne.s32.totalorder %s196, %s199
    %p205 = scmp.eq.s32.totalorder %s18, 0
    %p206 = por %p204, %p205
    %p207 = scmp.ne.s32.totalorder %s196, %s199
    %p208 = scmp.eq.s32.totalorder %s23, 3
    %p209 = por %p207, %p208
    %p210 = scmp.ne.s32.totalorder %s199, %s200
    %p211 = scmp.eq.s32.totalorder %s23, 0
    %p212 = por %p210, %p211
    %p213 = scmp.ne.s32.totalorder %s199, %s200
    %p214 = scmp.eq.s32.totalorder %s24, 3
    %p215 = por %p213, %p214
    %p217 = scmp.ne.s32.totalorder %s200, %s216
    %p218 = scmp.eq.s32.totalorder %s24, 0
    %p219 = por %p217, %p218
    %s220 = ssub.s32 %s25, %s37
    %p221 = scmp.eq.s32.totalorder %s220, 0
    %s223 = sadd.s32 %s222, 1
    %s224 = scalar_select %p221, %s222, %s223
    %p227 = pneg %p221
    %p228 = scmp.eq.s32.totalorder %s18, 3
    %p229 = por %p227, %p228
    %p230 = scmp.ne.s32.totalorder %s222, %s225
    %p231 = scmp.eq.s32.totalorder %s18, 0
    %p232 = por %p230, %p231
    %p233 = scmp.ne.s32.totalorder %s222, %s225
    %p234 = scmp.eq.s32.totalorder %s23, 3
    %p235 = por %p233, %p234
    %p236 = scmp.ne.s32.totalorder %s225, %s226
    %p237 = scmp.eq.s32.totalorder %s23, 0
    %p238 = por %p236, %p237
    %p239 = scmp.ne.s32.totalorder %s225, %s226
    %p240 = scmp.eq.s32.totalorder %s24, 3
    %p241 = por %p239, %p240
    %p243 = scmp.ne.s32.totalorder %s226, %s242
    %p244 = scmp.eq.s32.totalorder %s24, 0
    %p245 = por %p243, %p244
    %s246 = ssub.s32 %s25, %s37
    %p247 = scmp.eq.s32.totalorder %s246, 0
    %s249 = sadd.s32 %s248, 1
    %s250 = scalar_select %p247, %s248, %s249
    %p253 = pneg %p247
    %p254 = scmp.eq.s32.totalorder %s18, 3
    %p255 = por %p253, %p254
    %p256 = scmp.ne.s32.totalorder %s248, %s251
    %p257 = scmp.eq.s32.totalorder %s18, 0
    %p258 = por %p256, %p257
    %p259 = scmp.ne.s32.totalorder %s248, %s251
    %p260 = scmp.eq.s32.totalorder %s23, 3
    %p261 = por %p259, %p260
    %p262 = scmp.ne.s32.totalorder %s251, %s252
    %p263 = scmp.eq.s32.totalorder %s23, 0
    %p264 = por %p262, %p263
    %p265 = scmp.ne.s32.totalorder %s251, %s252
    %p266 = scmp.eq.s32.totalorder %s24, 3
    %p267 = por %p265, %p266
    %p269 = scmp.ne.s32.totalorder %s252, %s268
    %p270 = scmp.eq.s32.totalorder %s24, 0
    %p271 = por %p269, %p270
    %s272 = ssub.s32 %s25, %s37
    %p273 = scmp.eq.s32.totalorder %s272, 0
    %s275 = sadd.s32 %s274, 1
    %s276 = scalar_select %p273, %s274, %s275
    %p279 = pneg %p273
    %p280 = scmp.eq.s32.totalorder %s18, 3
    %p281 = por %p279, %p280
    %p282 = scmp.ne.s32.totalorder %s274, %s277
    %p283 = scmp.eq.s32.totalorder %s18, 0
    %p284 = por %p282, %p283
    %p285 = scmp.ne.s32.totalorder %s274, %s277
    %p286 = scmp.eq.s32.totalorder %s23, 3
    %p287 = por %p285, %p286
    %p288 = scmp.ne.s32.totalorder %s277, %s278
    %p289 = scmp.eq.s32.totalorder %s23, 0
    %p290 = por %p288, %p289
    %p291 = scmp.ne.s32.totalorder %s277, %s278
    %p292 = scmp.eq.s32.totalorder %s24, 3
    %p293 = por %p291, %p292
    %p295 = scmp.ne.s32.totalorder %s278, %s294
    %p296 = scmp.eq.s32.totalorder %s24, 0
    %p297 = por %p295, %p296
    %s298 = ssub.s32 %s25, %s37
    %p299 = scmp.eq.s32.totalorder %s298, 0
    %s301 = sadd.s32 %s300, 1
    %s302 = scalar_select %p299, %s300, %s301
    %p305 = pneg %p299
    %p306 = scmp.eq.s32.totalorder %s18, 3
    %p307 = por %p305, %p306
    %p308 = scmp.ne.s32.totalorder %s300, %s303
    %p309 = scmp.eq.s32.totalorder %s18, 0
    %p310 = por %p308, %p309
    %p311 = scmp.ne.s32.totalorder %s300, %s303
    %p312 = scmp.eq.s32.totalorder %s23, 3
    %p313 = por %p311, %p312
    %p314 = scmp.ne.s32.totalorder %s303, %s304
    %p315 = scmp.eq.s32.totalorder %s23, 0
    %p316 = por %p314, %p315
    %p317 = scmp.ne.s32.totalorder %s303, %s304
    %p318 = scmp.eq.s32.totalorder %s24, 3
    %p319 = por %p317, %p318
    %p321 = scmp.ne.s32.totalorder %s304, %s320
    %p322 = scmp.eq.s32.totalorder %s24, 0
    %p323 = por %p321, %p322
    %s324 = ssub.s32 %s25, %s37
    %p325 = scmp.eq.s32.totalorder %s324, 0
    %s327 = sadd.s32 %s326, 1
    %s328 = scalar_select %p325, %s326, %s327
    %p331 = pneg %p325
    %p332 = scmp.eq.s32.totalorder %s18, 3
    %p333 = por %p331, %p332
    %p334 = scmp.ne.s32.totalorder %s326, %s329
    %p335 = scmp.eq.s32.totalorder %s18, 0
    %p336 = por %p334, %p335
    %p337 = scmp.ne.s32.totalorder %s326, %s329
    %p338 = scmp.eq.s32.totalorder %s23, 3
    %p339 = por %p337, %p338
    %p340 = scmp.ne.s32.totalorder %s329, %s330
    %p341 = scmp.eq.s32.totalorder %s23, 0
    %p342 = por %p340, %p341
    %p343 = scmp.ne.s32.totalorder %s329, %s330
    %p344 = scmp.eq.s32.totalorder %s24, 3
    %p345 = por %p343, %p344
    %p347 = scmp.ne.s32.totalorder %s330, %s346
    %p348 = scmp.eq.s32.totalorder %s24, 0
    %p349 = por %p347, %p348
    %s350 = ssub.s32 %s25, %s37
    %s351 = ssub.s32 %s26, %s33
    %s352 = sor.u32 %s350, %s351
    %p353 = scmp.eq.s32.totalorder %s352, 0
    %s355 = sadd.s32 %s354, 1
    %s356 = scalar_select %p353, %s354, %s355
    %p359 = pneg %p353
    %p360 = scmp.eq.s32.totalorder %s18, 3
    %p361 = por %p359, %p360
    %p362 = scmp.ne.s32.totalorder %s354, %s357
    %p363 = scmp.eq.s32.totalorder %s18, 0
    %p364 = por %p362, %p363
    %p365 = scmp.ne.s32.totalorder %s354, %s357
    %p366 = scmp.eq.s32.totalorder %s23, 3
    %p367 = por %p365, %p366
    %p368 = scmp.ne.s32.totalorder %s357, %s358
    %p369 = scmp.eq.s32.totalorder %s23, 0
    %p370 = por %p368, %p369
    %p371 = scmp.ne.s32.totalorder %s357, %s358
    %p372 = scmp.eq.s32.totalorder %s24, 3
    %p373 = por %p371, %p372
    %p375 = scmp.ne.s32.totalorder %s358, %s374
    %p376 = scmp.eq.s32.totalorder %s24, 0
    %p377 = por %p375, %p376
    %p378 = scmp.le.s32.totalorder 1, %s18
    %p379 = scmp.lt.s32.totalorder %s18, 5
    %p380 = pnand %p378, %p379
    %p381 = pneg %p380
    // Predicated region
    $region9: #{metastress_forward.4} parent=5 // pred_check
      _
    $region10: #{metastress_forward.4} parent=5 // pred_check_branch
      %383 = sbr.rel (%p380) target = $region12
    $region11: #{metastress_forward.4} parent=5 // pred_region
      %s384 = ssub.s32 %s18, 1
    $region12: #{metastress_forward.4} parent=5 // pred_fallthru
      _
    %p385 = scmp.lt.s32.totalorder %s18, 4
    // Predicated region
    $region13: #{metastress_forward.4} parent=5 // pred_check
      %p386 = pneg %p385
    $region14: #{metastress_forward.4} parent=5 // pred_check_branch
      %388 = sbr.rel (%p386) target = $region16
    $region15: #{metastress_forward.4} parent=5 // pred_region
      // Predicated region
      $region17: #{metastress_forward.4} parent=15 // pred_check
        %p389 = pneg %p50
      $region18: #{metastress_forward.4} parent=15 // pred_check_branch
        %391 = sbr.rel (%p389) target = $region20
      $region19: #{metastress_forward.4} parent=15 // pred_region
        %p392 = scmp.lt.s32.totalorder %s26, 1
        %s393 = scalar_select %p392, %s26, 1
        %s394 = smul.addr %s393, 7
        %s395 = smul.addr %s394, 8
        %s396 = scalar_lea.vmem %s0, %s395
      $region20: #{metastress_forward.4} parent=15 // pred_fallthru
        _
      // Predicated region
      $region21: #{metastress_forward.4} parent=15 // pred_check
        %p397 = pneg %p76
      $region22: #{metastress_forward.4} parent=15 // pred_check_branch
        %399 = sbr.rel (%p397) target = $region24
      $region23: #{metastress_forward.4} parent=15 // pred_region
        %p400 = scmp.lt.s32.totalorder %s26, 1
        %s401 = scalar_select %p400, %s26, 1
        %s402 = smul.addr %s401, 2
        %s403 = smul.addr %s402, 8
        %s404 = scalar_lea.vmem %s1, %s403
      $region24: #{metastress_forward.4} parent=15 // pred_fallthru
        _
      // Predicated region
      $region25: #{metastress_forward.4} parent=15 // pred_check
        %p405 = pneg %p102
      $region26: #{metastress_forward.4} parent=15 // pred_check_branch
        %407 = sbr.rel (%p405) target = $region28
      $region27: #{metastress_forward.4} parent=15 // pred_region
        %p408 = scmp.lt.s32.totalorder %s26, 1
        %s409 = scalar_select %p408, %s26, 1
        %s410 = smul.addr %s409, 2
        %s411 = scalar_lea.vmem %s2, %s410
      $region28: #{metastress_forward.4} parent=15 // pred_fallthru
        _
      // Predicated region
      $region29: #{metastress_forward.4} parent=15 // pred_check
        %p412 = pneg %p128
      $region30: #{metastress_forward.4} parent=15 // pred_check_branch
        %414 = sbr.rel (%p412) target = $region32
      $region31: #{metastress_forward.4} parent=15 // pred_region
        %p415 = scmp.lt.s32.totalorder %s25, 1
        %s416 = scalar_select %p415, %s25, 1
        %s417 = smul.addr %s416, 4
        %s418 = smul.addr %s417, 8
        %s419 = scalar_lea.vmem %s3, %s418
      $region32: #{metastress_forward.4} parent=15 // pred_fallthru
        _
      // Predicated region
      $region33: #{metastress_forward.4} parent=15 // pred_check
        %p420 = pneg %p154
      $region34: #{metastress_forward.4} parent=15 // pred_check_branch
        %422 = sbr.rel (%p420) target = $region36
      $region35: #{metastress_forward.4} parent=15 // pred_region
        %p423 = scmp.lt.s32.totalorder %s25, 1
        %s424 = scalar_select %p423, %s25, 1
        %s425 = smul.addr %s424, 4
        %s426 = smul.addr %s425, 8
        %s427 = scalar_lea.vmem %s4, %s426
      $region36: #{metastress_forward.4} parent=15 // pred_fallthru
        _
      // Predicated region
      $region37: #{metastress_forward.4} parent=15 // pred_check
        %p428 = pneg %p180
      $region38: #{metastress_forward.4} parent=15 // pred_check_branch
        %430 = sbr.rel (%p428) target = $region40
      $region39: #{metastress_forward.4} parent=15 // pred_region
        %p431 = scmp.lt.s32.totalorder %s25, 1
        %s432 = scalar_select %p431, %s25, 1
        %s433 = scalar_lea.vmem %s5, %s432
      $region40: #{metastress_forward.4} parent=15 // pred_fallthru
        _
      // Predicated region
      $region41: #{metastress_forward.4} parent=15 // pred_check
        %p434 = pneg %p206
      $region42: #{metastress_forward.4} parent=15 // pred_check_branch
        %436 = sbr.rel (%p434) target = $region44
      $region43: #{metastress_forward.4} parent=15 // pred_region
        %p437 = scmp.lt.s32.totalorder %s25, 1
        %s438 = scalar_select %p437, %s25, 1
        %s439 = smul.addr %s438, 8
        %s440 = smul.addr %s439, 8
        %s441 = scalar_lea.vmem %s6, %s440
      $region44: #{metastress_forward.4} parent=15 // pred_fallthru
        _
      // Predicated region
      $region45: #{metastress_forward.4} parent=15 // pred_check
        %p442 = pneg %p232
      $region46: #{metastress_forward.4} parent=15 // pred_check_branch
        %444 = sbr.rel (%p442) target = $region48
      $region47: #{metastress_forward.4} parent=15 // pred_region
        %p445 = scmp.lt.s32.totalorder %s25, 1
        %s446 = scalar_select %p445, %s25, 1
        %s447 = smul.addr %s446, 8
        %s448 = smul.addr %s447, 8
        %s449 = scalar_lea.vmem %s7, %s448
      $region48: #{metastress_forward.4} parent=15 // pred_fallthru
        _
      // Predicated region
      $region49: #{metastress_forward.4} parent=15 // pred_check
        %p450 = pneg %p258
      $region50: #{metastress_forward.4} parent=15 // pred_check_branch
        %452 = sbr.rel (%p450) target = $region52
      $region51: #{metastress_forward.4} parent=15 // pred_region
        %p453 = scmp.lt.s32.totalorder %s25, 1
        %s454 = scalar_select %p453, %s25, 1
        %s455 = scalar_lea.vmem %s8, %s454
      $region52: #{metastress_forward.4} parent=15 // pred_fallthru
        _
      // Predicated region
      $region53: #{metastress_forward.4} parent=15 // pred_check
        %p456 = pneg %p284
      $region54: #{metastress_forward.4} parent=15 // pred_check_branch
        %458 = sbr.rel (%p456) target = $region56
      $region55: #{metastress_forward.4} parent=15 // pred_region
        %p459 = scmp.lt.s32.totalorder %s25, 1
        %s460 = scalar_select %p459, %s25, 1
        %s461 = smul.addr %s460, 16
        %s462 = smul.addr %s461, 8
        %s463 = scalar_lea.vmem %s9, %s462
      $region56: #{metastress_forward.4} parent=15 // pred_fallthru
        _
      // Predicated region
      $region57: #{metastress_forward.4} parent=15 // pred_check
        %p464 = pneg %p310
      $region58: #{metastress_forward.4} parent=15 // pred_check_branch
        %466 = sbr.rel (%p464) target = $region60
      $region59: #{metastress_forward.4} parent=15 // pred_region
        %p467 = scmp.lt.s32.totalorder %s25, 1
        %s468 = scalar_select %p467, %s25, 1
        %s469 = smul.addr %s468, 32
        %s470 = smul.addr %s469, 8
        %s471 = scalar_lea.vmem %s10, %s470
      $region60: #{metastress_forward.4} parent=15 // pred_fallthru
        _
      // Predicated region
      $region61: #{metastress_forward.4} parent=15 // pred_check
        %p472 = pneg %p336
      $region62: #{metastress_forward.4} parent=15 // pred_check_branch
        %474 = sbr.rel (%p472) target = $region64
      $region63: #{metastress_forward.4} parent=15 // pred_region
        %p475 = scmp.lt.s32.totalorder %s25, 1
        %s476 = scalar_select %p475, %s25, 1
        %s477 = smul.addr %s476, 2
        %s478 = scalar_lea.vmem %s11, %s477
      $region64: #{metastress_forward.4} parent=15 // pred_fallthru
        _
    $region16: #{metastress_forward.4} parent=5 // pred_fallthru
      _
    %p479 = scmp.le.s32.totalorder 1, %s18
    %p480 = scmp.lt.s32.totalorder %s18, 5
    %p481 = pnand %p479, %p480
    %p482 = pneg %p481
    // Predicated region
    $region65: #{metastress_forward.4} parent=5 // pred_check
      _
    $region66: #{metastress_forward.4} parent=5 // pred_check_branch
      %484 = sbr.rel (%p481) target = $region68
    $region67: #{metastress_forward.4} parent=5 // pred_region
      %s485 = ssub.s32 %s18, 1
      %p486 = scmp.lt.s32.totalorder %s28, 1
      %s487 = scalar_select %p486, %s28, 1
      %s488 = smul.addr %s487, 7
      %s489 = smul.addr %s488, 8
      %s490 = scalar_lea.vmem %s0, %s489
      %p491 = pneg %p56
      %p492 = pneg %p53
      %p493 = scmp.lt.s32.totalorder %s28, 1
      %s494 = scalar_select %p493, %s28, 1
      %s495 = smul.addr %s494, 2
      %s496 = smul.addr %s495, 8
      %s497 = scalar_lea.vmem %s1, %s496
      %p498 = pneg %p82
      %p499 = pneg %p79
      %p500 = scmp.lt.s32.totalorder %s28, 1
      %s501 = scalar_select %p500, %s28, 1
      %s502 = smul.addr %s501, 2
      %s503 = scalar_lea.vmem %s2, %s502
      %p504 = pneg %p108
      %p505 = pneg %p105
      %p506 = scmp.lt.s32.totalorder %s27, 1
      %s507 = scalar_select %p506, %s27, 1
      %s508 = smul.addr %s507, 4
      %s509 = smul.addr %s508, 8
      %s510 = scalar_lea.vmem %s3, %s509
      %p511 = pneg %p134
      %p512 = pneg %p131
      %p513 = scmp.lt.s32.totalorder %s27, 1
      %s514 = scalar_select %p513, %s27, 1
      %s515 = smul.addr %s514, 4
      %s516 = smul.addr %s515, 8
      %s517 = scalar_lea.vmem %s4, %s516
      %p518 = pneg %p160
      %p519 = pneg %p157
      %p520 = scmp.lt.s32.totalorder %s27, 1
      %s521 = scalar_select %p520, %s27, 1
      %s522 = scalar_lea.vmem %s5, %s521
      %p523 = pneg %p186
      %p524 = pneg %p183
      %p525 = scmp.lt.s32.totalorder %s27, 1
      %s526 = scalar_select %p525, %s27, 1
      %s527 = smul.addr %s526, 8
      %s528 = smul.addr %s527, 8
      %s529 = scalar_lea.vmem %s6, %s528
      %p530 = pneg %p212
      %p531 = pneg %p209
      %p532 = scmp.lt.s32.totalorder %s27, 1
      %s533 = scalar_select %p532, %s27, 1
      %s534 = smul.addr %s533, 8
      %s535 = smul.addr %s534, 8
      %s536 = scalar_lea.vmem %s7, %s535
      %p537 = pneg %p238
      %p538 = pneg %p235
      %p539 = scmp.lt.s32.totalorder %s27, 1
      %s540 = scalar_select %p539, %s27, 1
      %s541 = scalar_lea.vmem %s8, %s540
      %p542 = pneg %p264
      %p543 = pneg %p261
      %p544 = scmp.lt.s32.totalorder %s27, 1
      %s545 = scalar_select %p544, %s27, 1
      %s546 = smul.addr %s545, 16
      %s547 = smul.addr %s546, 8
      %s548 = scalar_lea.vmem %s9, %s547
      %p549 = pneg %p290
      %p550 = pneg %p287
      %p551 = scmp.lt.s32.totalorder %s27, 1
      %s552 = scalar_select %p551, %s27, 1
      %s553 = smul.addr %s552, 32
      %s554 = smul.addr %s553, 8
      %s555 = scalar_lea.vmem %s10, %s554
      %p556 = pneg %p316
      %p557 = pneg %p313
      %p558 = scmp.lt.s32.totalorder %s27, 1
      %s559 = scalar_select %p558, %s27, 1
      %s560 = smul.addr %s559, 2
      %s561 = scalar_lea.vmem %s11, %s560
      %p562 = pneg %p342
      %p563 = pneg %p339
      %p564 = pneg %p370
      %p565 = pneg %p367
      %p566 = scmp.lt.s32.totalorder %s27, 1
      %s567 = scalar_select %p566, %s27, 1
      %p568 = scmp.lt.s32.totalorder %s28, 1
      %s569 = scalar_select %p568, %s28, 1
      %s570 = smul.addr %s569, 2
      %s571 = smul.addr %s567, 4
      %s572 = sadd.s32 %s570, %s571
      %s573 = scalar_lea.vmem %s12, %s572
      %p574 = scmp.lt.s32.totalorder %s28, 1
      %s575 = scalar_select %p574, %s28, 1
      %s576 = smul.addr %s575, 7
      %s577 = smul.addr %s576, 8
      %s578 = scalar_lea.vmem %s0, %s577
      %p579 = scmp.lt.s32.totalorder %s28, 1
      %s580 = scalar_select %p579, %s28, 1
      %s581 = smul.addr %s580, 2
      %s582 = smul.addr %s581, 8
      %s583 = scalar_lea.vmem %s1, %s582
      %p584 = scmp.lt.s32.totalorder %s28, 1
      %s585 = scalar_select %p584, %s28, 1
      %s586 = smul.addr %s585, 2
      %s587 = scalar_lea.vmem %s2, %s586
      %p588 = scmp.lt.s32.totalorder %s27, 1
      %s589 = scalar_select %p588, %s27, 1
      %s590 = smul.addr %s589, 4
      %s591 = smul.addr %s590, 8
      %s592 = scalar_lea.vmem %s3, %s591
      %p593 = scmp.lt.s32.totalorder %s27, 1
      %s594 = scalar_select %p593, %s27, 1
      %s595 = smul.addr %s594, 4
      %s596 = smul.addr %s595, 8
      %s597 = scalar_lea.vmem %s4, %s596
      %p598 = scmp.lt.s32.totalorder %s27, 1
      %s599 = scalar_select %p598, %s27, 1
      %s600 = scalar_lea.vmem %s5, %s599
      %p601 = scmp.lt.s32.totalorder %s27, 1
      %s602 = scalar_select %p601, %s27, 1
      %s603 = smul.addr %s602, 8
      %s604 = smul.addr %s603, 8
      %s605 = scalar_lea.vmem %s6, %s604
      %p606 = scmp.lt.s32.totalorder %s27, 1
      %s607 = scalar_select %p606, %s27, 1
      %s608 = smul.addr %s607, 8
      %s609 = smul.addr %s608, 8
      %s610 = scalar_lea.vmem %s7, %s609
      %p611 = scmp.lt.s32.totalorder %s27, 1
      %s612 = scalar_select %p611, %s27, 1
      %s613 = scalar_lea.vmem %s8, %s612
      %p614 = scmp.lt.s32.totalorder %s27, 1
      %s615 = scalar_select %p614, %s27, 1
      %s616 = smul.addr %s615, 16
      %s617 = smul.addr %s616, 8
      %s618 = scalar_lea.vmem %s9, %s617
      %p619 = scmp.lt.s32.totalorder %s27, 1
      %s620 = scalar_select %p619, %s27, 1
      %s621 = smul.addr %s620, 32
      %s622 = smul.addr %s621, 8
      %s623 = scalar_lea.vmem %s10, %s622
      %p624 = scmp.lt.s32.totalorder %s27, 1
      %s625 = scalar_select %p624, %s27, 1
      %s626 = smul.addr %s625, 2
      %s627 = scalar_lea.vmem %s11, %s626
      %p628 = scmp.lt.s32.totalorder %s27, 1
      %s629 = scalar_select %p628, %s27, 1
      %p630 = scmp.lt.s32.totalorder %s28, 1
      %s631 = scalar_select %p630, %s28, 1
      %s632 = smul.addr %s631, 2
      %s633 = smul.addr %s629, 4
      %s634 = sadd.s32 %s632, %s633
      %s635 = scalar_lea.vmem %s12, %s634
      %v636 = vld [vmem:[%s578] sm:$0xff]
      %v637 = vld [vmem:[%s578 + $0x8] sm:$0xff]
      %v638 = vld [vmem:[%s578 + $0x10] sm:$0xff]
      %v639 = vld [vmem:[%s578 + $0x18] sm:$0xff]
      %v640 = vld [vmem:[%s578 + $0x20] sm:$0xff]
      %v641 = vld [vmem:[%s578 + $0x28] sm:$0xff]
      %v642 = vld [vmem:[%s578 + $0x30] sm:$0x3]
      %vm643 = vcmask 261120
      %v644 = vsel %vm643, %v636, 0.0
      %v645 = vsel %vm643, %v637, 0.0
      %v646 = vadd.f32 %v644, %v645
      %v647 = vsel %vm643, %v638, 0.0
      %v648 = vadd.f32 %v646, %v647
      %v649 = vsel %vm643, %v639, 0.0
      %v650 = vadd.f32 %v648, %v649
      %v651 = vsel %vm643, %v640, 0.0
      %v652 = vadd.f32 %v650, %v651
      %v653 = vsel %vm643, %v641, 0.0
      %v654 = vadd.f32 %v652, %v653
      %vm655 = vcmask 254976
      %v656 = vsel %vm655, %v642, 0.0
      %v657 = vadd.f32 %v654, %v656
      %v658 = vrot.slane %v657, 4
      %v659 = vadd.f32 %v657, %v658
      %v660 = vrot.slane %v659, 2
      %v661 = vadd.f32 %v659, %v660
      %v662 = vrot.slane %v661, 1
      %v663 = vadd.f32 %v661, %v662
      %v664 = vrcp.pop 50.0
      %v665 = vmul.f32 %v663, %v664
      %v666 = vld [vmem:[%s592] sm:$0xff]
      %v667 = vld [vmem:[%s592 + $0x8] sm:$0xff]
      %v668 = vld [vmem:[%s592 + $0x10] sm:$0xff]
      %v669 = vld [vmem:[%s592 + $0x18] sm:$0xff]
      %v671 = vsel %vm643, %v665, 0
      %673 = vmatprep.subr.mxu0 0.0
      %674 = vmatpush1.msra.mxu0 0.0
      %675 = vmatprep.subr.mxu0 0.0
      %676 = vmatpush1.msra.mxu0 0.0
      %677 = vmatprep.subr.mxu0 0.0
      %678 = vmatpush1.msra.mxu0 0.0
      %679 = vmatprep.subr.mxu0 0.0
      %680 = vmatpush1.msra.mxu0 0.0
      %681 = vmatprep.subr.mxu0 0.0
      %682 = vmatpush1.msra.mxu0 0.0
      %683 = vmatprep.subr.mxu0 0.0
      %684 = vmatpush1.msra.mxu0 0.0
      %685 = vmatprep.subr.mxu0 0.0
      %686 = vmatpush1.msra.mxu0 0.0
      %687 = vmatprep.subr.mxu0 0.0
      %688 = vmatpush1.msra.mxu0 0.0
      %689 = vmatprep.subr.mxu0 0.0
      %690 = vmatpush1.msra.mxu0 0.0
      %691 = vmatprep.subr.mxu0 0.0
      %692 = vmatpush1.msra.mxu0 0.0
      %693 = vmatprep.subr.mxu0 0.0
      %694 = vmatpush1.msra.mxu0 0.0
      %695 = vmatprep.subr.mxu0 0.0
      %696 = vmatpush1.msra.mxu0 0.0
      %697 = vmatprep.subr.mxu0 0.0
      %698 = vmatpush1.msra.mxu0 %v669
      %699 = vmatprep.subr.mxu0 0.0
      %700 = vmatpush1.msra.mxu0 %v668
      %701 = vmatprep.subr.mxu0 0.0
      %702 = vmatpush1.msra.mxu0 %v667
      %703 = vmatprep.subr.mxu0 0.0
      %704 = vmatpush1.msra.mxu0 %v666
      %705 = vmatprep.subr.mxu0 0.0
      %706 = vmatpush2.msra.mxu0 0.0
      %707 = vmatprep.subr.mxu0 0.0
      %708 = vmatpush2.msra.mxu0 0.0
      %709 = vmatprep.subr.mxu0 0.0
      %710 = vmatpush2.msra.mxu0 0.0
      %711 = vmatprep.subr.mxu0 0.0
      %712 = vmatpush2.msra.mxu0 0.0
      %713 = vmatprep.subr.mxu0 0.0
      %714 = vmatpush2.msra.mxu0 0.0
      %715 = vmatprep.subr.mxu0 0.0
      %716 = vmatpush2.msra.mxu0 0.0
      %717 = vmatprep.subr.mxu0 0.0
      %718 = vmatpush2.msra.mxu0 0.0
      %719 = vmatprep.subr.mxu0 0.0
      %720 = vmatpush2.msra.mxu0 0.0
      %721 = vmatprep.subr.mxu0 0.0
      %722 = vmatpush2.msra.mxu0 0.0
      %723 = vmatprep.subr.mxu0 0.0
      %724 = vmatpush2.msra.mxu0 0.0
      %725 = vmatprep.subr.mxu0 0.0
      %726 = vmatpush2.msra.mxu0 0.0
      %727 = vmatprep.subr.mxu0 0.0
      %728 = vmatpush2.msra.mxu0 0.0
      %729 = vmatprep.subr.mxu0 0.0
      %730 = vmatpush2.msra.mxu0 0.0
      %731 = vmatprep.subr.mxu0 0.0
      %732 = vmatpush2.msra.mxu0 0.0
      %733 = vmatprep.subr.mxu0 0.0
      %734 = vmatpush2.msra.mxu0 0.0
      %735 = vmatprep.subr.mxu0 0.0
      %736 = vmatpush2.msra.mxu0 0.0
      %737 = vmatprep.mubr.f32.mxu0 0.0
      %738 = vmatmul.mubr.f32.gmra.mxu0 %v671
      %v739 = vpop.f32.mrf.mxu0
      %v740 = vadd.f32 0.0, %v739
      %v741 = vpop.f32.mrf.mxu0
      %742 = vdwg.mxu0
      %v743 = vxor.u32 %v740, 2147483648
      %v744 = vmul.f32 %v743, 1.442695
      %v745 = vpow.pop %v744
      %v746 = vadd.f32 %v745, 1.0
      %v747 = vrcp.pop %v746
      %v748 = vmul.f32 1.0, %v747
      %v749 = vlaneseq
      %v750 = vshrl.u32 %v749, 7
      %v751 = vsub.s32 0, %v750
      %v752 = vrot.slane %v748, %v751
      %v753 = vmul.f32 %v636, %v752
      %v754 = vmul.f32 %v637, %v752
      %v755 = vmul.f32 %v638, %v752
      %v756 = vmul.f32 %v639, %v752
      %v757 = vmul.f32 %v640, %v752
      %v758 = vmul.f32 %v641, %v752
      %v759 = vmul.f32 %v642, %v752
      %v760 = vadd.f32 %v753, %v636
      %v761 = vadd.f32 %v754, %v637
      %v762 = vadd.f32 %v755, %v638
      %v763 = vadd.f32 %v756, %v639
      %v764 = vadd.f32 %v757, %v640
      %v765 = vadd.f32 %v758, %v641
      %v766 = vadd.f32 %v759, %v642
      %v767 = vld [vmem:[%s597] sm:$0xff]
      %v768 = vld [vmem:[%s597 + $0x8] sm:$0xff]
      %v769 = vld [vmem:[%s597 + $0x10] sm:$0xff]
      %v770 = vld [vmem:[%s597 + $0x18] sm:$0xff]
      %v771 = vld [vmem:[%s600] sm:$0x1]
      %v773 = vlaneseq
      %v774 = vshrl.u32 %v773, 7
      %v775 = vsub.s32 0, %v774
      %v776 = vrot.slane %v771, %v775
      %v779 = vsel %vm643, %v760, 0
      %v782 = vsel %vm643, %v761, 0
      %v785 = vsel %vm643, %v762, 0
      %v788 = vsel %vm643, %v763, 0
      %v791 = vsel %vm643, %v764, 0
      %v794 = vsel %vm643, %v765, 0
      %v797 = vsel %vm643, %v766, 0
      %799 = vmatprep.subr.mxu0 0.0
      %800 = vmatpush1.msra.mxu0 0.0
      %801 = vmatprep.subr.mxu0 0.0
      %802 = vmatpush1.msra.mxu0 0.0
      %803 = vmatprep.subr.mxu0 0.0
      %804 = vmatpush1.msra.mxu0 0.0
      %805 = vmatprep.subr.mxu0 0.0
      %806 = vmatpush1.msra.mxu0 0.0
      %807 = vmatprep.subr.mxu0 0.0
      %808 = vmatpush1.msra.mxu0 0.0
      %809 = vmatprep.subr.mxu0 0.0
      %810 = vmatpush1.msra.mxu0 0.0
      %811 = vmatprep.subr.mxu0 0.0
      %812 = vmatpush1.msra.mxu0 0.0
      %813 = vmatprep.subr.mxu0 0.0
      %814 = vmatpush1.msra.mxu0 0.0
      %815 = vmatprep.subr.mxu0 0.0
      %816 = vmatpush1.msra.mxu0 0.0
      %817 = vmatprep.subr.mxu0 0.0
      %818 = vmatpush1.msra.mxu0 0.0
      %819 = vmatprep.subr.mxu0 0.0
      %820 = vmatpush1.msra.mxu0 0.0
      %821 = vmatprep.subr.mxu0 0.0
      %822 = vmatpush1.msra.mxu0 0.0
      %823 = vmatprep.subr.mxu0 0.0
      %824 = vmatpush1.msra.mxu0 %v770
      %825 = vmatprep.subr.mxu0 0.0
      %826 = vmatpush1.msra.mxu0 %v769
      %827 = vmatprep.subr.mxu0 0.0
      %828 = vmatpush1.msra.mxu0 %v768
      %829 = vmatprep.subr.mxu0 0.0
      %830 = vmatpush1.msra.mxu0 %v767
      %831 = vmatprep.subr.mxu0 0.0
      %832 = vmatpush2.msra.mxu0 0.0
      %833 = vmatprep.subr.mxu0 0.0
      %834 = vmatpush2.msra.mxu0 0.0
      %835 = vmatprep.subr.mxu0 0.0
      %836 = vmatpush2.msra.mxu0 0.0
      %837 = vmatprep.subr.mxu0 0.0
      %838 = vmatpush2.msra.mxu0 0.0
      %839 = vmatprep.subr.mxu0 0.0
      %840 = vmatpush2.msra.mxu0 0.0
      %841 = vmatprep.subr.mxu0 0.0
      %842 = vmatpush2.msra.mxu0 0.0
      %843 = vmatprep.subr.mxu0 0.0
      %844 = vmatpush2.msra.mxu0 0.0
      %845 = vmatprep.subr.mxu0 0.0
      %846 = vmatpush2.msra.mxu0 0.0
      %847 = vmatprep.subr.mxu0 0.0
      %848 = vmatpush2.msra.mxu0 0.0
      %849 = vmatprep.subr.mxu0 0.0
      %850 = vmatpush2.msra.mxu0 0.0
      %851 = vmatprep.subr.mxu0 0.0
      %852 = vmatpush2.msra.mxu0 0.0
      %853 = vmatprep.subr.mxu0 0.0
      %854 = vmatpush2.msra.mxu0 0.0
      %855 = vmatprep.subr.mxu0 0.0
      %856 = vmatpush2.msra.mxu0 0.0
      %857 = vmatprep.subr.mxu0 0.0
      %858 = vmatpush2.msra.mxu0 0.0
      %859 = vmatprep.subr.mxu0 0.0
      %860 = vmatpush2.msra.mxu0 0.0
      %861 = vmatprep.subr.mxu0 0.0
      %862 = vmatpush2.msra.mxu0 0.0
      %863 = vmatprep.mubr.f32.mxu0 0.0
      %864 = vmatmul.mubr.f32.gmra.mxu0 %v779
      %v865 = vpop.f32.mrf.mxu0
      %v866 = vadd.f32 %v776, %v865
      %v867 = vpop.f32.mrf.mxu0
      %868 = vmatprep.mubr.f32.mxu0 0.0
      %869 = vmatmul.mubr.f32.gmra.mxu0 %v782
      %v870 = vpop.f32.mrf.mxu0
      %v871 = vadd.f32 %v776, %v870
      %v872 = vpop.f32.mrf.mxu0
      %873 = vmatprep.mubr.f32.mxu0 0.0
      %874 = vmatmul.mubr.f32.gmra.mxu0 %v785
      %v875 = vpop.f32.mrf.mxu0
      %v876 = vadd.f32 %v776, %v875
      %v877 = vpop.f32.mrf.mxu0
      %878 = vmatprep.mubr.f32.mxu0 0.0
      %879 = vmatmul.mubr.f32.gmra.mxu0 %v788
      %v880 = vpop.f32.mrf.mxu0
      %v881 = vadd.f32 %v776, %v880
      %v882 = vpop.f32.mrf.mxu0
      %883 = vmatprep.mubr.f32.mxu0 0.0
      %884 = vmatmul.mubr.f32.gmra.mxu0 %v791
      %v885 = vpop.f32.mrf.mxu0
      %v886 = vadd.f32 %v776, %v885
      %v887 = vpop.f32.mrf.mxu0
      %888 = vmatprep.mubr.f32.mxu0 0.0
      %889 = vmatmul.mubr.f32.gmra.mxu0 %v794
      %v890 = vpop.f32.mrf.mxu0
      %v891 = vadd.f32 %v776, %v890
      %v892 = vpop.f32.mrf.mxu0
      %893 = vmatprep.mubr.f32.mxu0 0.0
      %894 = vmatmul.mubr.f32.gmra.mxu0 %v797
      %v895 = vpop.f32.mrf.mxu0
      %v896 = vadd.f32 %v776, %v895
      %v897 = vpop.f32.mrf.mxu0
      %898 = vdwg.mxu0
      %vm899 = vcmask 520192
      %v900 = vsel %vm899, %v866, -inf
      %v901 = vrot.slane %v900, 4
      %v902 = vmax.f32 %v900, %v901
      %v903 = vrot.slane %v902, 2
      %v904 = vmax.f32 %v902, %v903
      %v905 = vrot.slane %v904, 1
      %v906 = vmax.f32 %v904, %v905
      %vm907 = vcmask 523269
      %v908 = vsel %vm907, %v866, -inf
      %vm909 = vcmask 517120
      %v910 = vsel %vm909, %v871, -inf
      %v911 = vmax.f32 %v908, %v910
      %v912 = vrot.slane %v911, 4
      %v913 = vmax.f32 %v911, %v912
      %v914 = vrot.slane %v913, 2
      %v915 = vmax.f32 %v913, %v914
      %v916 = vrot.slane %v915, 1
      %v917 = vmax.f32 %v915, %v916
      %vm918 = vcmask 522242
      %v919 = vsel %vm918, %v871, -inf
      %v920 = vrot.slane %v919, 4
      %v921 = vmax.f32 %v919, %v920
      %v922 = vrot.slane %v921, 2
      %v923 = vmax.f32 %v921, %v922
      %v924 = vrot.slane %v923, 1
      %v925 = vmax.f32 %v923, %v924
      %vm926 = vcmask 523271
      %v927 = vsel %vm926, %v871, -inf
      %vm928 = vcmask 519168
      %v929 = vsel %vm928, %v876, -inf
      %v930 = vmax.f32 %v927, %v929
      %v931 = vrot.slane %v930, 4
      %v932 = vmax.f32 %v930, %v931
      %v933 = vrot.slane %v932, 2
      %v934 = vmax.f32 %v932, %v933
      %v935 = vrot.slane %v934, 1
      %v936 = vmax.f32 %v934, %v935
      %vm937 = vcmask 523268
      %v938 = vsel %vm937, %v876, -inf
      %vm939 = vcmask 516096
      %v940 = vsel %vm939, %v881, -inf
      %v941 = vmax.f32 %v938, %v940
      %v942 = vrot.slane %v941, 4
      %v943 = vmax.f32 %v941, %v942
      %v944 = vrot.slane %v943, 2
      %v945 = vmax.f32 %v943, %v944
      %v946 = vrot.slane %v945, 1
      %v947 = vmax.f32 %v945, %v946
      %vm948 = vcmask 521217
      %v949 = vsel %vm948, %v881, -inf
      %v950 = vrot.slane %v949, 4
      %v951 = vmax.f32 %v949, %v950
      %v952 = vrot.slane %v951, 2
      %v953 = vmax.f32 %v951, %v952
      %v954 = vrot.slane %v953, 1
      %v955 = vmax.f32 %v953, %v954
      %vm956 = vcmask 523270
      %v957 = vsel %vm956, %v881, -inf
      %vm958 = vcmask 518144
      %v959 = vsel %vm958, %v886, -inf
      %v960 = vmax.f32 %v957, %v959
      %v961 = vrot.slane %v960, 4
      %v962 = vmax.f32 %v960, %v961
      %v963 = vrot.slane %v962, 2
      %v964 = vmax.f32 %v962, %v963
      %v965 = vrot.slane %v964, 1
      %v966 = vmax.f32 %v964, %v965
      %vm967 = vcmask 523267
      %v968 = vsel %vm967, %v886, -inf
      %v969 = vrot.slane %v968, 4
      %v970 = vmax.f32 %v968, %v969
      %v971 = vrot.slane %v970, 2
      %v972 = vmax.f32 %v970, %v971
      %v973 = vrot.slane %v972, 1
      %v974 = vmax.f32 %v972, %v973
      %v975 = vsel %vm899, %v891, -inf
      %v976 = vrot.slane %v975, 4
      %v977 = vmax.f32 %v975, %v976
      %v978 = vrot.slane %v977, 2
      %v979 = vmax.f32 %v977, %v978
      %v980 = vrot.slane %v979, 1
      %v981 = vmax.f32 %v979, %v980
      %v982 = vsel %vm907, %v891, -inf
      %v983 = vsel %vm909, %v896, -inf
      %v984 = vmax.f32 %v982, %v983
      %v985 = vrot.slane %v984, 4
      %v986 = vmax.f32 %v984, %v985
      %v987 = vrot.slane %v986, 2
      %v988 = vmax.f32 %v986, %v987
      %v989 = vrot.slane %v988, 1
      %v990 = vmax.f32 %v988, %v989
      %vm991 = vcmask 1040384
      %v992 = vsel %vm991, %v906, %v917
      %vm993 = vcmask 1041408
      %v994 = vsel %vm993, %v992, %v925
      %vm995 = vcmask 1042432
      %v996 = vsel %vm995, %v994, %v936
      %vm997 = vcmask 1043456
      %v998 = vsel %vm997, %v996, %v947
      %vm999 = vcmask 1044480
      %v1000 = vsel %vm999, %v998, %v955
      %vm1001 = vcmask 1045504
      %v1002 = vsel %vm1001, %v1000, %v966
      %vm1003 = vcmask 1046528
      %v1004 = vsel %vm1003, %v1002, %v974
      %v1005 = vsel %vm991, %v981, %v990
      %v1006 = vld [vmem:[%s583] sm:$0xff]
      %v1007 = vld [vmem:[%s583 + $0x8] sm:$0x3]
      %v1008 = vadd.f32 %v1004, %v1006
      %v1009 = vadd.f32 %v1005, %v1007
      %vm1010 = vcmask 523264
      %v1011 = vsel %vm1010, %v1008, 0.0
      %v1012 = vsel %vm909, %v1009, 0.0
      %v1013 = vadd.f32 %v1011, %v1012
      %v1014 = vrot.slane %v1013, 4
      %v1015 = vadd.f32 %v1013, %v1014
      %v1016 = vrot.slane %v1015, 2
      %v1017 = vadd.f32 %v1015, %v1016
      %v1018 = vrot.slane %v1017, 1
      %v1019 = vadd.f32 %v1017, %v1018
      %v1020 = vrcp.pop 10.0
      %v1021 = vmul.f32 %v1019, %v1020
      %v1022 = vld [vmem:[%s605] sm:$0xff]
      %v1023 = vld [vmem:[%s605 + $0x8] sm:$0xff]
      %v1024 = vld [vmem:[%s605 + $0x10] sm:$0xff]
      %v1025 = vld [vmem:[%s605 + $0x18] sm:$0xff]
      %v1026 = vld [vmem:[%s605 + $0x20] sm:$0xff]
      %v1027 = vld [vmem:[%s605 + $0x28] sm:$0xff]
      %v1028 = vld [vmem:[%s605 + $0x30] sm:$0xff]
      %v1029 = vld [vmem:[%s605 + $0x38] sm:$0xff]
      %v1031 = vsel %vm1010, %v1021, 0
      %1033 = vmatprep.subr.mxu0 0.0
      %1034 = vmatpush1.msra.mxu0 0.0
      %1035 = vmatprep.subr.mxu0 0.0
      %1036 = vmatpush1.msra.mxu0 0.0
      %1037 = vmatprep.subr.mxu0 0.0
      %1038 = vmatpush1.msra.mxu0 0.0
      %1039 = vmatprep.subr.mxu0 0.0
      %1040 = vmatpush1.msra.mxu0 0.0
      %1041 = vmatprep.subr.mxu0 0.0
      %1042 = vmatpush1.msra.mxu0 0.0
      %1043 = vmatprep.subr.mxu0 0.0
      %1044 = vmatpush1.msra.mxu0 0.0
      %1045 = vmatprep.subr.mxu0 0.0
      %1046 = vmatpush1.msra.mxu0 0.0
      %1047 = vmatprep.subr.mxu0 0.0
      %1048 = vmatpush1.msra.mxu0 0.0
      %1049 = vmatprep.subr.mxu0 0.0
      %1050 = vmatpush1.msra.mxu0 %v1029
      %1051 = vmatprep.subr.mxu0 0.0
      %1052 = vmatpush1.msra.mxu0 %v1028
      %1053 = vmatprep.subr.mxu0 0.0
      %1054 = vmatpush1.msra.mxu0 %v1027
      %1055 = vmatprep.subr.mxu0 0.0
      %1056 = vmatpush1.msra.mxu0 %v1026
      %1057 = vmatprep.subr.mxu0 0.0
      %1058 = vmatpush1.msra.mxu0 %v1025
      %1059 = vmatprep.subr.mxu0 0.0
      %1060 = vmatpush1.msra.mxu0 %v1024
      %1061 = vmatprep.subr.mxu0 0.0
      %1062 = vmatpush1.msra.mxu0 %v1023
      %1063 = vmatprep.subr.mxu0 0.0
      %1064 = vmatpush1.msra.mxu0 %v1022
      %1065 = vmatprep.subr.mxu0 0.0
      %1066 = vmatpush2.msra.mxu0 0.0
      %1067 = vmatprep.subr.mxu0 0.0
      %1068 = vmatpush2.msra.mxu0 0.0
      %1069 = vmatprep.subr.mxu0 0.0
      %1070 = vmatpush2.msra.mxu0 0.0
      %1071 = vmatprep.subr.mxu0 0.0
      %1072 = vmatpush2.msra.mxu0 0.0
      %1073 = vmatprep.subr.mxu0 0.0
      %1074 = vmatpush2.msra.mxu0 0.0
      %1075 = vmatprep.subr.mxu0 0.0
      %1076 = vmatpush2.msra.mxu0 0.0
      %1077 = vmatprep.subr.mxu0 0.0
      %1078 = vmatpush2.msra.mxu0 0.0
      %1079 = vmatprep.subr.mxu0 0.0
      %1080 = vmatpush2.msra.mxu0 0.0
      %1081 = vmatprep.subr.mxu0 0.0
      %1082 = vmatpush2.msra.mxu0 0.0
      %1083 = vmatprep.subr.mxu0 0.0
      %1084 = vmatpush2.msra.mxu0 0.0
      %1085 = vmatprep.subr.mxu0 0.0
      %1086 = vmatpush2.msra.mxu0 0.0
      %1087 = vmatprep.subr.mxu0 0.0
      %1088 = vmatpush2.msra.mxu0 0.0
      %1089 = vmatprep.subr.mxu0 0.0
      %1090 = vmatpush2.msra.mxu0 0.0
      %1091 = vmatprep.subr.mxu0 0.0
      %1092 = vmatpush2.msra.mxu0 0.0
      %1093 = vmatprep.subr.mxu0 0.0
      %1094 = vmatpush2.msra.mxu0 0.0
      %1095 = vmatprep.subr.mxu0 0.0
      %1096 = vmatpush2.msra.mxu0 0.0
      %1097 = vmatprep.mubr.f32.mxu0 0.0
      %1098 = vmatmul.mubr.f32.gmra.mxu0 %v1031
      %v1099 = vpop.f32.mrf.mxu0
      %v1100 = vadd.f32 0.0, %v1099
      %v1101 = vpop.f32.mrf.mxu0
      %1102 = vdwg.mxu0
      %v1103 = vxor.u32 %v1100, 2147483648
      %v1104 = vmul.f32 %v1103, 1.442695
      %v1105 = vpow.pop %v1104
      %v1106 = vadd.f32 %v1105, 1.0
      %v1107 = vrcp.pop %v1106
      %v1108 = vmul.f32 1.0, %v1107
      %v1109 = vlaneseq
      %v1110 = vshrl.u32 %v1109, 7
      %v1111 = vsub.s32 0, %v1110
      %v1112 = vrot.slane %v1108, %v1111
      %v1113 = vmul.f32 %v1008, %v1112
      %v1114 = vmul.f32 %v1009, %v1112
      %v1115 = vadd.f32 %v1113, %v1008
      %v1116 = vadd.f32 %v1114, %v1009
      %v1117 = vld [vmem:[%s610] sm:$0xff]
      %v1118 = vld [vmem:[%s610 + $0x8] sm:$0xff]
      %v1119 = vld [vmem:[%s610 + $0x10] sm:$0xff]
      %v1120 = vld [vmem:[%s610 + $0x18] sm:$0xff]
      %v1121 = vld [vmem:[%s610 + $0x20] sm:$0xff]
      %v1122 = vld [vmem:[%s610 + $0x28] sm:$0xff]
      %v1123 = vld [vmem:[%s610 + $0x30] sm:$0xff]
      %v1124 = vld [vmem:[%s610 + $0x38] sm:$0xff]
      %v1125 = vld [vmem:[%s613] sm:$0x1]
      %v1127 = vlaneseq
      %v1128 = vshrl.u32 %v1127, 7
      %v1129 = vsub.s32 0, %v1128
      %v1130 = vrot.slane %v1125, %v1129
      %v1133 = vsel %vm1010, %v1115, 0
      %v1136 = vsel %vm1010, %v1116, 0
      %1138 = vmatprep.subr.mxu0 0.0
      %1139 = vmatpush1.msra.mxu0 0.0
      %1140 = vmatprep.subr.mxu0 0.0
      %1141 = vmatpush1.msra.mxu0 0.0
      %1142 = vmatprep.subr.mxu0 0.0
      %1143 = vmatpush1.msra.mxu0 0.0
      %1144 = vmatprep.subr.mxu0 0.0
      %1145 = vmatpush1.msra.mxu0 0.0
      %1146 = vmatprep.subr.mxu0 0.0
      %1147 = vmatpush1.msra.mxu0 0.0
      %1148 = vmatprep.subr.mxu0 0.0
      %1149 = vmatpush1.msra.mxu0 0.0
      %1150 = vmatprep.subr.mxu0 0.0
      %1151 = vmatpush1.msra.mxu0 0.0
      %1152 = vmatprep.subr.mxu0 0.0
      %1153 = vmatpush1.msra.mxu0 0.0
      %1154 = vmatprep.subr.mxu0 0.0
      %1155 = vmatpush1.msra.mxu0 %v1124
      %1156 = vmatprep.subr.mxu0 0.0
      %1157 = vmatpush1.msra.mxu0 %v1123
      %1158 = vmatprep.subr.mxu0 0.0
      %1159 = vmatpush1.msra.mxu0 %v1122
      %1160 = vmatprep.subr.mxu0 0.0
      %1161 = vmatpush1.msra.mxu0 %v1121
      %1162 = vmatprep.subr.mxu0 0.0
      %1163 = vmatpush1.msra.mxu0 %v1120
      %1164 = vmatprep.subr.mxu0 0.0
      %1165 = vmatpush1.msra.mxu0 %v1119
      %1166 = vmatprep.subr.mxu0 0.0
      %1167 = vmatpush1.msra.mxu0 %v1118
      %1168 = vmatprep.subr.mxu0 0.0
      %1169 = vmatpush1.msra.mxu0 %v1117
      %1170 = vmatprep.subr.mxu0 0.0
      %1171 = vmatpush2.msra.mxu0 0.0
      %1172 = vmatprep.subr.mxu0 0.0
      %1173 = vmatpush2.msra.mxu0 0.0
      %1174 = vmatprep.subr.mxu0 0.0
      %1175 = vmatpush2.msra.mxu0 0.0
      %1176 = vmatprep.subr.mxu0 0.0
      %1177 = vmatpush2.msra.mxu0 0.0
      %1178 = vmatprep.subr.mxu0 0.0
      %1179 = vmatpush2.msra.mxu0 0.0
      %1180 = vmatprep.subr.mxu0 0.0
      %1181 = vmatpush2.msra.mxu0 0.0
      %1182 = vmatprep.subr.mxu0 0.0
      %1183 = vmatpush2.msra.mxu0 0.0
      %1184 = vmatprep.subr.mxu0 0.0
      %1185 = vmatpush2.msra.mxu0 0.0
      %1186 = vmatprep.subr.mxu0 0.0
      %1187 = vmatpush2.msra.mxu0 0.0
      %1188 = vmatprep.subr.mxu0 0.0
      %1189 = vmatpush2.msra.mxu0 0.0
      %1190 = vmatprep.subr.mxu0 0.0
      %1191 = vmatpush2.msra.mxu0 0.0
      %1192 = vmatprep.subr.mxu0 0.0
      %1193 = vmatpush2.msra.mxu0 0.0
      %1194 = vmatprep.subr.mxu0 0.0
      %1195 = vmatpush2.msra.mxu0 0.0
      %1196 = vmatprep.subr.mxu0 0.0
      %1197 = vmatpush2.msra.mxu0 0.0
      %1198 = vmatprep.subr.mxu0 0.0
      %1199 = vmatpush2.msra.mxu0 0.0
      %1200 = vmatprep.subr.mxu0 0.0
      %1201 = vmatpush2.msra.mxu0 0.0
      %1202 = vmatprep.mubr.f32.mxu0 0.0
      %1203 = vmatmul.mubr.f32.gmra.mxu0 %v1133
      %v1204 = vpop.f32.mrf.mxu0
      %v1205 = vadd.f32 %v1130, %v1204
      %v1206 = vpop.f32.mrf.mxu0
      %1207 = vmatprep.mubr.f32.mxu0 0.0
      %1208 = vmatmul.mubr.f32.gmra.mxu0 %v1136
      %v1209 = vpop.f32.mrf.mxu0
      %v1210 = vadd.f32 %v1130, %v1209
      %v1211 = vpop.f32.mrf.mxu0
      %1212 = vdwg.mxu0
      %v1213 = vsel %vm999, %v1205, -inf
      %v1214 = vrot.slane %v1213, 4
      %v1215 = vmax.f32 %v1213, %v1214
      %v1216 = vrot.slane %v1215, 2
      %v1217 = vmax.f32 %v1215, %v1216
      %v1218 = vrot.slane %v1217, 1
      %v1219 = vmax.f32 %v1217, %v1218
      %vm1220 = vcmask 1047557
      %v1221 = vsel %vm1220, %v1205, -inf
      %v1222 = vsel %vm993, %v1210, -inf
      %v1223 = vmax.f32 %v1221, %v1222
      %v1224 = vrot.slane %v1223, 4
      %v1225 = vmax.f32 %v1223, %v1224
      %v1226 = vrot.slane %v1225, 2
      %v1227 = vmax.f32 %v1225, %v1226
      %v1228 = vrot.slane %v1227, 1
      %v1229 = vmax.f32 %v1227, %v1228
      %v1230 = vsel %vm991, %v1219, %v1229
      %v1231 = vld [vmem:[%s587] sm:$0x3]
      %v1232 = vadd.f32 %v1230, %v1231
      %v1233 = vsel %vm993, %v1232, 0.0
      %v1234 = vrot.slane %v1233, 4
      %v1235 = vadd.f32 %v1233, %v1234
      %v1236 = vrot.slane %v1235, 2
      %v1237 = vadd.f32 %v1235, %v1236
      %v1238 = vrot.slane %v1237, 1
      %v1239 = vadd.f32 %v1237, %v1238
      %v1240 = vrcp.pop 2.0
      %v1241 = vmul.f32 %v1239, %v1240
      %v1242 = vld [vmem:[%s618] sm:$0xff]
      %v1243 = vld [vmem:[%s618 + $0x8] sm:$0xff]
      %v1244 = vld [vmem:[%s618 + $0x10] sm:$0xff]
      %v1245 = vld [vmem:[%s618 + $0x18] sm:$0xff]
      %v1246 = vld [vmem:[%s618 + $0x20] sm:$0xff]
      %v1247 = vld [vmem:[%s618 + $0x28] sm:$0xff]
      %v1248 = vld [vmem:[%s618 + $0x30] sm:$0xff]
      %v1249 = vld [vmem:[%s618 + $0x38] sm:$0xff]
      %v1250 = vld [vmem:[%s618 + $0x40] sm:$0xff]
      %v1251 = vld [vmem:[%s618 + $0x48] sm:$0xff]
      %v1252 = vld [vmem:[%s618 + $0x50] sm:$0xff]
      %v1253 = vld [vmem:[%s618 + $0x58] sm:$0xff]
      %v1254 = vld [vmem:[%s618 + $0x60] sm:$0xff]
      %v1255 = vld [vmem:[%s618 + $0x68] sm:$0xff]
      %v1256 = vld [vmem:[%s618 + $0x70] sm:$0xff]
      %v1257 = vld [vmem:[%s618 + $0x78] sm:$0xff]
      %1258 = vmatprep.subr.mxu0 0.0
      %1259 = vmatpush1.msra.mxu0 %v1257
      %1260 = vmatprep.subr.mxu0 0.0
      %1261 = vmatpush1.msra.mxu0 %v1256
      %1262 = vmatprep.subr.mxu0 0.0
      %1263 = vmatpush1.msra.mxu0 %v1255
      %1264 = vmatprep.subr.mxu0 0.0
      %1265 = vmatpush1.msra.mxu0 %v1254
      %1266 = vmatprep.subr.mxu0 0.0
      %1267 = vmatpush1.msra.mxu0 %v1253
      %1268 = vmatprep.subr.mxu0 0.0
      %1269 = vmatpush1.msra.mxu0 %v1252
      %1270 = vmatprep.subr.mxu0 0.0
      %1271 = vmatpush1.msra.mxu0 %v1251
      %1272 = vmatprep.subr.mxu0 0.0
      %1273 = vmatpush1.msra.mxu0 %v1250
      %1274 = vmatprep.subr.mxu0 0.0
      %1275 = vmatpush1.msra.mxu0 %v1249
      %1276 = vmatprep.subr.mxu0 0.0
      %1277 = vmatpush1.msra.mxu0 %v1248
      %1278 = vmatprep.subr.mxu0 0.0
      %1279 = vmatpush1.msra.mxu0 %v1247
      %1280 = vmatprep.subr.mxu0 0.0
      %1281 = vmatpush1.msra.mxu0 %v1246
      %1282 = vmatprep.subr.mxu0 0.0
      %1283 = vmatpush1.msra.mxu0 %v1245
      %1284 = vmatprep.subr.mxu0 0.0
      %1285 = vmatpush1.msra.mxu0 %v1244
      %1286 = vmatprep.subr.mxu0 0.0
      %1287 = vmatpush1.msra.mxu0 %v1243
      %1288 = vmatprep.subr.mxu0 0.0
      %1289 = vmatpush1.msra.mxu0 %v1242
      %1290 = vmatprep.subr.mxu0 0.0
      %1291 = vmatpush2.msra.mxu0 0.0
      %1292 = vmatprep.subr.mxu0 0.0
      %1293 = vmatpush2.msra.mxu0 0.0
      %1294 = vmatprep.subr.mxu0 0.0
      %1295 = vmatpush2.msra.mxu0 0.0
      %1296 = vmatprep.subr.mxu0 0.0
      %1297 = vmatpush2.msra.mxu0 0.0
      %1298 = vmatprep.subr.mxu0 0.0
      %1299 = vmatpush2.msra.mxu0 0.0
      %1300 = vmatprep.subr.mxu0 0.0
      %1301 = vmatpush2.msra.mxu0 0.0
      %1302 = vmatprep.subr.mxu0 0.0
      %1303 = vmatpush2.msra.mxu0 0.0
      %1304 = vmatprep.subr.mxu0 0.0
      %1305 = vmatpush2.msra.mxu0 0.0
      %1306 = vmatprep.subr.mxu0 0.0
      %1307 = vmatpush2.msra.mxu0 0.0
      %1308 = vmatprep.subr.mxu0 0.0
      %1309 = vmatpush2.msra.mxu0 0.0
      %1310 = vmatprep.subr.mxu0 0.0
      %1311 = vmatpush2.msra.mxu0 0.0
      %1312 = vmatprep.subr.mxu0 0.0
      %1313 = vmatpush2.msra.mxu0 0.0
      %1314 = vmatprep.subr.mxu0 0.0
      %1315 = vmatpush2.msra.mxu0 0.0
      %1316 = vmatprep.subr.mxu0 0.0
      %1317 = vmatpush2.msra.mxu0 0.0
      %1318 = vmatprep.subr.mxu0 0.0
      %1319 = vmatpush2.msra.mxu0 0.0
      %1320 = vmatprep.subr.mxu0 0.0
      %1321 = vmatpush2.msra.mxu0 0.0
      %1322 = vmatprep.mubr.f32.mxu0 0.0
      %1323 = vmatmul.mubr.f32.gmra.mxu0 %v1241
      %v1324 = vpop.f32.mrf.mxu0
      %v1325 = vadd.f32 0.0, %v1324
      %v1326 = vpop.f32.mrf.mxu0
      %1327 = vdwg.mxu0
      %v1328 = vxor.u32 %v1325, 2147483648
      %v1329 = vmul.f32 %v1328, 1.442695
      %v1330 = vpow.pop %v1329
      %v1331 = vadd.f32 %v1330, 1.0
      %v1332 = vrcp.pop %v1331
      %v1333 = vmul.f32 1.0, %v1332
      %v1334 = vlaneseq
      %v1335 = vshrl.u32 %v1334, 7
      %v1336 = vsub.s32 0, %v1335
      %v1337 = vrot.slane %v1333, %v1336
      %v1338 = vmul.f32 %v1232, %v1337
      %v1339 = vadd.f32 %v1338, %v1232
      %v1340 = vld [vmem:[%s623] sm:$0xff]
      %v1341 = vld [vmem:[%s623 + $0x8] sm:$0xff]
      %v1342 = vld [vmem:[%s623 + $0x10] sm:$0xff]
      %v1343 = vld [vmem:[%s623 + $0x18] sm:$0xff]
      %v1344 = vld [vmem:[%s623 + $0x20] sm:$0xff]
      %v1345 = vld [vmem:[%s623 + $0x28] sm:$0xff]
      %v1346 = vld [vmem:[%s623 + $0x30] sm:$0xff]
      %v1347 = vld [vmem:[%s623 + $0x38] sm:$0xff]
      %v1348 = vld [vmem:[%s623 + $0x40] sm:$0xff]
      %v1349 = vld [vmem:[%s623 + $0x48] sm:$0xff]
      %v1350 = vld [vmem:[%s623 + $0x50] sm:$0xff]
      %v1351 = vld [vmem:[%s623 + $0x58] sm:$0xff]
      %v1352 = vld [vmem:[%s623 + $0x60] sm:$0xff]
      %v1353 = vld [vmem:[%s623 + $0x68] sm:$0xff]
      %v1354 = vld [vmem:[%s623 + $0x70] sm:$0xff]
      %v1355 = vld [vmem:[%s623 + $0x78] sm:$0xff]
      %v1356 = vld [vmem:[%s623 + $0x80] sm:$0xff]
      %v1357 = vld [vmem:[%s623 + $0x88] sm:$0xff]
      %v1358 = vld [vmem:[%s623 + $0x90] sm:$0xff]
      %v1359 = vld [vmem:[%s623 + $0x98] sm:$0xff]
      %v1360 = vld [vmem:[%s623 + $0xa0] sm:$0xff]
      %v1361 = vld [vmem:[%s623 + $0xa8] sm:$0xff]
      %v1362 = vld [vmem:[%s623 + $0xb0] sm:$0xff]
      %v1363 = vld [vmem:[%s623 + $0xb8] sm:$0xff]
      %v1364 = vld [vmem:[%s623 + $0xc0] sm:$0xff]
      %v1365 = vld [vmem:[%s623 + $0xc8] sm:$0xff]
      %v1366 = vld [vmem:[%s623 + $0xd0] sm:$0xff]
      %v1367 = vld [vmem:[%s623 + $0xd8] sm:$0xff]
      %v1368 = vld [vmem:[%s623 + $0xe0] sm:$0xff]
      %v1369 = vld [vmem:[%s623 + $0xe8] sm:$0xff]
      %v1370 = vld [vmem:[%s623 + $0xf0] sm:$0xff]
      %v1371 = vld [vmem:[%s623 + $0xf8] sm:$0xff]
      %v1372 = vld [vmem:[%s627] sm:$0x3]
      %v1374 = vlaneseq
      %v1375 = vshrl.u32 %v1374, 7
      %v1376 = vsub.s32 0, %v1375
      %v1377 = vrot.slane %v1372, %v1376
      %v1378 = vlaneseq
      %v1379 = vshrl.u32 %v1378, 7
      %v1380 = vsub.s32 1, %v1379
      %v1381 = vrot.slane %v1372, %v1380
      %1384 = vmatprep.subr.mxu0 %v1371
      %1385 = vmatpush1.msra.mxu0 %v1370
      %1386 = vmatprep.subr.mxu0 %v1369
      %1387 = vmatpush1.msra.mxu0 %v1368
      %1388 = vmatprep.subr.mxu0 %v1367
      %1389 = vmatpush1.msra.mxu0 %v1366
      %1390 = vmatprep.subr.mxu0 %v1365
      %1391 = vmatpush1.msra.mxu0 %v1364
      %1392 = vmatprep.subr.mxu0 %v1363
      %1393 = vmatpush1.msra.mxu0 %v1362
      %1394 = vmatprep.subr.mxu0 %v1361
      %1395 = vmatpush1.msra.mxu0 %v1360
      %1396 = vmatprep.subr.mxu0 %v1359
      %1397 = vmatpush1.msra.mxu0 %v1358
      %1398 = vmatprep.subr.mxu0 %v1357
      %1399 = vmatpush1.msra.mxu0 %v1356
      %1400 = vmatprep.subr.mxu0 %v1355
      %1401 = vmatpush1.msra.mxu0 %v1354
      %1402 = vmatprep.subr.mxu0 %v1353
      %1403 = vmatpush1.msra.mxu0 %v1352
      %1404 = vmatprep.subr.mxu0 %v1351
      %1405 = vmatpush1.msra.mxu0 %v1350
      %1406 = vmatprep.subr.mxu0 %v1349
      %1407 = vmatpush1.msra.mxu0 %v1348
      %1408 = vmatprep.subr.mxu0 %v1347
      %1409 = vmatpush1.msra.mxu0 %v1346
      %1410 = vmatprep.subr.mxu0 %v1345
      %1411 = vmatpush1.msra.mxu0 %v1344
      %1412 = vmatprep.subr.mxu0 %v1343
      %1413 = vmatpush1.msra.mxu0 %v1342
      %1414 = vmatprep.subr.mxu0 %v1341
      %1415 = vmatpush1.msra.mxu0 %v1340
      %1416 = vmatprep.subr.mxu0 0.0
      %1417 = vmatpush2.msra.mxu0 0.0
      %1418 = vmatprep.subr.mxu0 0.0
      %1419 = vmatpush2.msra.mxu0 0.0
      %1420 = vmatprep.subr.mxu0 0.0
      %1421 = vmatpush2.msra.mxu0 0.0
      %1422 = vmatprep.subr.mxu0 0.0
      %1423 = vmatpush2.msra.mxu0 0.0
      %1424 = vmatprep.subr.mxu0 0.0
      %1425 = vmatpush2.msra.mxu0 0.0
      %1426 = vmatprep.subr.mxu0 0.0
      %1427 = vmatpush2.msra.mxu0 0.0
      %1428 = vmatprep.subr.mxu0 0.0
      %1429 = vmatpush2.msra.mxu0 0.0
      %1430 = vmatprep.subr.mxu0 0.0
      %1431 = vmatpush2.msra.mxu0 0.0
      %1432 = vmatprep.subr.mxu0 0.0
      %1433 = vmatpush2.msra.mxu0 0.0
      %1434 = vmatprep.subr.mxu0 0.0
      %1435 = vmatpush2.msra.mxu0 0.0
      %1436 = vmatprep.subr.mxu0 0.0
      %1437 = vmatpush2.msra.mxu0 0.0
      %1438 = vmatprep.subr.mxu0 0.0
      %1439 = vmatpush2.msra.mxu0 0.0
      %1440 = vmatprep.subr.mxu0 0.0
      %1441 = vmatpush2.msra.mxu0 0.0
      %1442 = vmatprep.subr.mxu0 0.0
      %1443 = vmatpush2.msra.mxu0 0.0
      %1444 = vmatprep.subr.mxu0 0.0
      %1445 = vmatpush2.msra.mxu0 0.0
      %1446 = vmatprep.subr.mxu0 0.0
      %1447 = vmatpush2.msra.mxu0 0.0
      %1448 = vmatprep.mubr.f32.mxu0 0.0
      %1449 = vmatmul.mubr.f32.gmra.mxu0 %v1339
      %v1450 = vpop.f32.mrf.mxu0
      %v1451 = vadd.f32 %v1377, %v1450
      %v1452 = vpop.f32.mrf.mxu0
      %v1453 = vadd.f32 %v1381, %v1452
      %1454 = vdwg.mxu0
      %v1455 = vsel %vm993, %v1451, -inf
      %v1456 = vrot.slane %v1455, 4
      %v1457 = vmax.f32 %v1455, %v1456
      %v1458 = vrot.slane %v1457, 2
      %v1459 = vmax.f32 %v1457, %v1458
      %v1460 = vrot.slane %v1459, 1
      %v1461 = vmax.f32 %v1459, %v1460
      %v1462 = vsel %vm993, %v1453, -inf
      %v1463 = vrot.slane %v1462, 4
      %v1464 = vmax.f32 %v1462, %v1463
      %v1465 = vrot.slane %v1464, 2
      %v1466 = vmax.f32 %v1464, %v1465
      %v1467 = vrot.slane %v1466, 1
      %v1468 = vmax.f32 %v1466, %v1467
      %v1471 = vcombine.low %v1461, %v1468
      %v1473 = vunpack.c.l.s4 1966171168
      %v1474 = vunpack.c.0.s8 %v1473
      %v1475 = vlaneseq
      %v1476 = vshrl.u32 %v1475, 7
      %v1477 = vsub.s32 %v1474, %v1476
      %v1478 = vrot.slane %v1471, %v1477
      %v1480 = vunpack.c.l.s4 1966171168
      %v1481 = vunpack.c.0.s8 %v1480
      %v1482 = vlaneseq
      %v1483 = vshrl.u32 %v1482, 7
      %v1484 = vsub.s32 %v1481, %v1483
      %v1485 = vrot.slane %v1478, %v1484
      %v1487 = vlaneseq
      %vm1488 = vcmp.ge.s32.totalorder %v1487, 0
      %vm1489 = vcmp.lt.s32.totalorder %v1487, 256
      %vm1490 = vmand %vm1488, %vm1489
      %1491 = vst.msk [vmem:[%s635] sm:$0x3] %vm1490, %v1485
      %p1492 = scmp.lt.s32.totalorder %s27, 1
      %s1493 = scalar_select %p1492, %s27, 1
      %p1494 = scmp.lt.s32.totalorder %s28, 1
      %s1495 = scalar_select %p1494, %s28, 1
      %s1496 = smul.addr %s1495, 2
      %s1497 = smul.addr %s1493, 4
      %s1498 = sadd.s32 %s1496, %s1497
      %s1499 = scalar_lea.vmem %s12, %s1498
      // Predicated region
      $region69: #{metastress_forward.4} parent=67 // pred_check
        %p1500 = pneg %p367
      $region70: #{metastress_forward.4} parent=67 // pred_check_branch
        %1502 = sbr.rel (%p1500) target = $region72
      $region71: #{metastress_forward.4} parent=67 // pred_region
        _
      $region72: #{metastress_forward.4} parent=67 // pred_fallthru
        _
    $region68: #{metastress_forward.4} parent=5 // pred_fallthru
      _
    %p1503 = scmp.le.s32.totalorder 2, %s18
    // Predicated region
    $region73: #{metastress_forward.4} parent=5 // pred_check
      %p1504 = pneg %p1503
    $region74: #{metastress_forward.4} parent=5 // pred_check_branch
      %1506 = sbr.rel (%p1504) target = $region76
    $region75: #{metastress_forward.4} parent=5 // pred_region
      %s1507 = ssub.s32 %s18, 2
      // Predicated region
      $region77: #{metastress_forward.4} parent=75 // pred_check
        %p1508 = pneg %p373
      $region78: #{metastress_forward.4} parent=75 // pred_check_branch
        %1510 = sbr.rel (%p1508) target = $region80
      $region79: #{metastress_forward.4} parent=75 // pred_region
        %p1511 = scmp.lt.s32.totalorder %s29, 1
        %s1512 = scalar_select %p1511, %s29, 1
        %p1513 = scmp.lt.s32.totalorder %s30, 1
        %s1514 = scalar_select %p1513, %s30, 1
        %s1515 = smul.addr %s1514, 2
        %s1516 = smul.addr %s1512, 4
        %s1517 = sadd.s32 %s1515, %s1516
        %s1518 = scalar_lea.vmem %s12, %s1517
      $region80: #{metastress_forward.4} parent=75 // pred_fallthru
        _
    $region76: #{metastress_forward.4} parent=5 // pred_fallthru
      _
  $region6: #{metastress_forward.4} parent=0 // loop_footer
    %s22 = sadd.s32 1, %s18
  $region7: #{metastress_forward.4} parent=0 // loop_footer_branch
    %17 = sbr.rel target = $region3
  $region8: #{metastress_forward.4} parent=0 // loop_exit
    _

// kernel: metastress_forward.3
$region0: #{metastress_forward.3}
  #allocation0 [shape = 'u32[]', space=smem, size = 0x4, offset = 0x4, fixed_abs, tag = 'smem constant byte address 0x4 - core index']
  #allocation1 [shape = 'u32[144,128]{1,0:T(1,128)}', space=vmem, size = 0x12000, scoped, tag = 'internal scratch']
  %s0 = inlined_call_operand.vmem [shape: f32[2,50,1], index: 0, kind: input, shape index: {}]
  %s1 = inlined_call_operand.vmem [shape: f32[3,16], index: 1, kind: input, shape index: {}]
  %s2 = inlined_call_operand.vmem [shape: f32[2,16], index: 2, kind: input, shape index: {}]
  %s3 = inlined_call_operand.vmem [shape: f32[48,8], index: 3, kind: input, shape index: {}]
  %s4 = inlined_call_operand.vmem [shape: f32[2,8], index: 4, kind: input, shape index: {}]
  %s5 = inlined_call_operand.vmem [shape: f32[24,4], index: 5, kind: input, shape index: {}]
  %s6 = inlined_call_operand.vmem [shape: f32[2,4], index: 6, kind: input, shape index: {}]
  %s7 = inlined_call_operand.vmem [shape: f32[48,4], index: 7, kind: input, shape index: {}]
  %s8 = inlined_call_operand.vmem [shape: f32[2,4], index: 8, kind: input, shape index: {}]
  %s9 = inlined_call_operand.vmem [shape: f32[12,1], index: 9, kind: input, shape index: {}]
  %s10 = inlined_call_operand.vmem [shape: f32[2,1], index: 10, kind: input, shape index: {}]
  %s11 = inlined_call_operand.vmem [shape: f32[48,1], index: 11, kind: input, shape index: {}]
  %s12 = inlined_call_operand.vmem [shape: f32[2,1], index: 12, kind: input, shape index: {}]
  %s13 = inlined_call_operand.vmem [shape: f32[144,32], index: 13, kind: input, shape index: {}]
  %s14 = inlined_call_operand.vmem [shape: f32[2,32], index: 14, kind: input, shape index: {}]
  %s15 = inlined_call_operand.vmem [shape: f32[288,32], index: 15, kind: input, shape index: {}]
  %s16 = inlined_call_operand.vmem [shape: f32[2,32], index: 16, kind: input, shape index: {}]
  %s17 = inlined_call_operand.vmem [shape: f32[224,64], index: 17, kind: input, shape index: {}]
  %s18 = inlined_call_operand.vmem [shape: f32[2,64], index: 18, kind: input, shape index: {}]
  %s19 = inlined_call_operand.vmem [shape: f32[448,64], index: 19, kind: input, shape index: {}]
  %s20 = inlined_call_operand.vmem [shape: f32[2,64], index: 20, kind: input, shape index: {}]
  %s21 = inlined_call_operand.vmem [shape: f32[192,128], index: 21, kind: input, shape index: {}]
  %s22 = inlined_call_operand.vmem [shape: f32[2,128], index: 22, kind: input, shape index: {}]
  %s23 = inlined_call_operand.vmem [shape: f32[384,128], index: 23, kind: input, shape index: {}]
  %s24 = inlined_call_operand.vmem [shape: f32[2,128], index: 24, kind: input, shape index: {}]
  %s25 = inlined_call_operand.vmem [shape: f32[2,50,32], index: 25, kind: output, shape index: {0}]
  %s26 = inlined_call_operand.vmem [shape: f32[2,10,64], index: 26, kind: output, shape index: {1}]
  %s27 = inlined_call_operand.vmem [shape: f32[2,2,128], index: 27, kind: output, shape index: {2}]
  %s28 = inlined_call_operand.vmem [shape: f32[2,50,1], index: 28, kind: output, shape index: {3}]
  %29 = xla_tuple %s25, %s26, %s27, %s28
  %s30 = sld [smem:[#allocation0]]
  $region157: #{metastress_forward.3} parent=0
    _
  %s32 = ssub.s32 1, %s30
  %s33 = scalar_select 0, %s32, %s30
  loop: start=0, step=1, limit=4
  $region2: #{metastress_forward.3} parent=0 // loop_pre_header
    _
  $region3: #{metastress_forward.3} parent=0 // loop_header
    %s35 = sphi 0, %s39
    %p36 = scmp.ge.s32.totalorder %s35, 4
    %s45 = sphi 0, %s47
    %s48 = sphi 0, %s45
    %s49 = sphi 0, %s48
    %s65 = sphi 0, %s49
    %s69 = sphi 0, %s69
    %s71 = sphi 0, %s69
    %s72 = sphi 0, %s71
    %s86 = sphi 0, %s72
    %s90 = sphi 0, %s90
    %s92 = sphi 0, %s90
    %s93 = sphi 0, %s92
    %s107 = sphi 0, %s93
    %s111 = sphi 0, %s111
    %s113 = sphi 0, %s111
    %s114 = sphi 0, %s113
    %s128 = sphi 0, %s114
    %s132 = sphi 0, %s132
    %s134 = sphi 0, %s132
    %s135 = sphi 0, %s134
    %s149 = sphi 0, %s135
    %s153 = sphi 0, %s153
    %s155 = sphi 0, %s153
    %s156 = sphi 0, %s155
    %s170 = sphi 0, %s156
    %s174 = sphi 0, %s174
    %s176 = sphi 0, %s174
    %s177 = sphi 0, %s176
    %s191 = sphi 0, %s177
    %s195 = sphi 0, %s195
    %s197 = sphi 0, %s195
    %s198 = sphi 0, %s197
    %s212 = sphi 0, %s198
    %s216 = sphi 0, %s216
    %s218 = sphi 0, %s216
    %s219 = sphi 0, %s218
    %s233 = sphi 0, %s219
    %s237 = sphi 0, %s237
    %s239 = sphi 0, %s237
    %s240 = sphi 0, %s239
    %s254 = sphi 0, %s240
    %s258 = sphi 0, %s258
    %s260 = sphi 0, %s258
    %s261 = sphi 0, %s260
    %s275 = sphi 0, %s261
    %s279 = sphi 0, %s279
    %s281 = sphi 0, %s279
    %s282 = sphi 0, %s281
    %s296 = sphi 0, %s282
    %s300 = sphi 0, %s300
    %s302 = sphi 0, %s300
    %s303 = sphi 0, %s302
    %s317 = sphi 0, %s303
    %s321 = sphi 0, %s321
    %s323 = sphi 0, %s321
    %s324 = sphi 0, %s323
    %s338 = sphi 0, %s324
    %s342 = sphi 0, %s342
    %s344 = sphi 0, %s342
    %s345 = sphi 0, %s344
    %s359 = sphi 0, %s345
    %s363 = sphi 0, %s363
    %s365 = sphi 0, %s363
    %s366 = sphi 0, %s365
    %s380 = sphi 0, %s366
    %s384 = sphi 0, %s384
    %s386 = sphi 0, %s384
    %s387 = sphi 0, %s386
    %s401 = sphi 0, %s387
    %s405 = sphi 0, %s405
    %s407 = sphi 0, %s405
    %s408 = sphi 0, %s407
    %s422 = sphi 0, %s408
    %s426 = sphi 0, %s426
    %s428 = sphi 0, %s426
    %s429 = sphi 0, %s428
    %s443 = sphi 0, %s429
    %s447 = sphi 0, %s447
    %s449 = sphi 0, %s447
    %s450 = sphi 0, %s449
    %s464 = sphi 0, %s450
    %s468 = sphi 0, %s468
    %s470 = sphi 0, %s468
    %s471 = sphi 0, %s470
    %s485 = sphi 0, %s471
    %s489 = sphi 0, %s489
    %s491 = sphi 0, %s489
    %s492 = sphi 0, %s491
    %s506 = sphi 0, %s492
    %s510 = sphi 0, %s510
    %s512 = sphi 0, %s510
    %s513 = sphi 0, %s512
    %s527 = sphi 0, %s513
    %s531 = sphi 0, %s531
    %s533 = sphi 0, %s531
    %s534 = sphi 0, %s533
    %s548 = sphi 0, %s534
    %s552 = sphi 0, %s552
    %s554 = sphi 0, %s552
    %s555 = sphi 0, %s554
    %s569 = sphi 0, %s555
    %s575 = sphi 0, %s577
    %s578 = sphi 0, %s575
    %s579 = sphi 0, %s578
    %s595 = sphi 0, %s579
    %s601 = sphi 0, %s603
    %s604 = sphi 0, %s601
    %s605 = sphi 0, %s604
    %s621 = sphi 0, %s605
    %s627 = sphi 0, %s629
    %s630 = sphi 0, %s627
    %s631 = sphi 0, %s630
    %s647 = sphi 0, %s631
    %s653 = sphi 0, %s655
    %s656 = sphi 0, %s653
    %s657 = sphi 0, %s656
    %s673 = sphi 0, %s657
  $region4: #{metastress_forward.3} parent=0 // loop_header_branch
    %38 = sbr.rel (%p36) target = $region8
  $region5: #{metastress_forward.3} parent=0 // loop_body
    %s40 = ssub.s32 %s35, 1
    %s41 = ssub.s32 %s35, 2
    %s42 = sadd.s32 %s35, 1
    %s43 = ssub.s32 %s35, %s42
    %p44 = scmp.eq.s32.totalorder %s43, 0
    %s46 = sadd.s32 %s45, 1
    %s47 = scalar_select %p44, %s45, %s46
    %p50 = pneg %p44
    %p51 = scmp.eq.s32.totalorder %s35, 1
    %p52 = por %p50, %p51
    %p53 = scmp.ne.s32.totalorder %s45, %s48
    %p54 = scmp.eq.s32.totalorder %s35, 0
    %p55 = por %p53, %p54
    %p56 = scmp.ne.s32.totalorder %s45, %s48
    %p57 = scmp.eq.s32.totalorder %s40, 1
    %p58 = por %p56, %p57
    %p59 = scmp.ne.s32.totalorder %s48, %s49
    %p60 = scmp.eq.s32.totalorder %s40, 0
    %p61 = por %p59, %p60
    %p62 = scmp.ne.s32.totalorder %s48, %s49
    %p63 = scmp.eq.s32.totalorder %s41, 1
    %p64 = por %p62, %p63
    %p66 = scmp.ne.s32.totalorder %s49, %s65
    %p67 = scmp.eq.s32.totalorder %s41, 0
    %p68 = por %p66, %p67
    %s70 = sadd.s32 %s69, 1
    %p73 = scmp.eq.s32.totalorder %s35, 1
    %p74 = scmp.ne.s32.totalorder %s69, %s71
    %p75 = scmp.eq.s32.totalorder %s35, 0
    %p76 = por %p74, %p75
    %p77 = scmp.ne.s32.totalorder %s69, %s71
    %p78 = scmp.eq.s32.totalorder %s40, 1
    %p79 = por %p77, %p78
    %p80 = scmp.ne.s32.totalorder %s71, %s72
    %p81 = scmp.eq.s32.totalorder %s40, 0
    %p82 = por %p80, %p81
    %p83 = scmp.ne.s32.totalorder %s71, %s72
    %p84 = scmp.eq.s32.totalorder %s41, 1
    %p85 = por %p83, %p84
    %p87 = scmp.ne.s32.totalorder %s72, %s86
    %p88 = scmp.eq.s32.totalorder %s41, 0
    %p89 = por %p87, %p88
    %s91 = sadd.s32 %s90, 1
    %p94 = scmp.eq.s32.totalorder %s35, 1
    %p95 = scmp.ne.s32.totalorder %s90, %s92
    %p96 = scmp.eq.s32.totalorder %s35, 0
    %p97 = por %p95, %p96
    %p98 = scmp.ne.s32.totalorder %s90, %s92
    %p99 = scmp.eq.s32.totalorder %s40, 1
    %p100 = por %p98, %p99
    %p101 = scmp.ne.s32.totalorder %s92, %s93
    %p102 = scmp.eq.s32.totalorder %s40, 0
    %p103 = por %p101, %p102
    %p104 = scmp.ne.s32.totalorder %s92, %s93
    %p105 = scmp.eq.s32.totalorder %s41, 1
    %p106 = por %p104, %p105
    %p108 = scmp.ne.s32.totalorder %s93, %s107
    %p109 = scmp.eq.s32.totalorder %s41, 0
    %p110 = por %p108, %p109
    %s112 = sadd.s32 %s111, 1
    %p115 = scmp.eq.s32.totalorder %s35, 1
    %p116 = scmp.ne.s32.totalorder %s111, %s113
    %p117 = scmp.eq.s32.totalorder %s35, 0
    %p118 = por %p116, %p117
    %p119 = scmp.ne.s32.totalorder %s111, %s113
    %p120 = scmp.eq.s32.totalorder %s40, 1
    %p121 = por %p119, %p120
    %p122 = scmp.ne.s32.totalorder %s113, %s114
    %p123 = scmp.eq.s32.totalorder %s40, 0
    %p124 = por %p122, %p123
    %p125 = scmp.ne.s32.totalorder %s113, %s114
    %p126 = scmp.eq.s32.totalorder %s41, 1
    %p127 = por %p125, %p126
    %p129 = scmp.ne.s32.totalorder %s114, %s128
    %p130 = scmp.eq.s32.totalorder %s41, 0
    %p131 = por %p129, %p130
    %s133 = sadd.s32 %s132, 1
    %p136 = scmp.eq.s32.totalorder %s35, 1
    %p137 = scmp.ne.s32.totalorder %s132, %s134
    %p138 = scmp.eq.s32.totalorder %s35, 0
    %p139 = por %p137, %p138
    %p140 = scmp.ne.s32.totalorder %s132, %s134
    %p141 = scmp.eq.s32.totalorder %s40, 1
    %p142 = por %p140, %p141
    %p143 = scmp.ne.s32.totalorder %s134, %s135
    %p144 = scmp.eq.s32.totalorder %s40, 0
    %p145 = por %p143, %p144
    %p146 = scmp.ne.s32.totalorder %s134, %s135
    %p147 = scmp.eq.s32.totalorder %s41, 1
    %p148 = por %p146, %p147
    %p150 = scmp.ne.s32.totalorder %s135, %s149
    %p151 = scmp.eq.s32.totalorder %s41, 0
    %p152 = por %p150, %p151
    %s154 = sadd.s32 %s153, 1
    %p157 = scmp.eq.s32.totalorder %s35, 1
    %p158 = scmp.ne.s32.totalorder %s153, %s155
    %p159 = scmp.eq.s32.totalorder %s35, 0
    %p160 = por %p158, %p159
    %p161 = scmp.ne.s32.totalorder %s153, %s155
    %p162 = scmp.eq.s32.totalorder %s40, 1
    %p163 = por %p161, %p162
    %p164 = scmp.ne.s32.totalorder %s155, %s156
    %p165 = scmp.eq.s32.totalorder %s40, 0
    %p166 = por %p164, %p165
    %p167 = scmp.ne.s32.totalorder %s155, %s156
    %p168 = scmp.eq.s32.totalorder %s41, 1
    %p169 = por %p167, %p168
    %p171 = scmp.ne.s32.totalorder %s156, %s170
    %p172 = scmp.eq.s32.totalorder %s41, 0
    %p173 = por %p171, %p172
    %s175 = sadd.s32 %s174, 1
    %p178 = scmp.eq.s32.totalorder %s35, 1
    %p179 = scmp.ne.s32.totalorder %s174, %s176
    %p180 = scmp.eq.s32.totalorder %s35, 0
    %p181 = por %p179, %p180
    %p182 = scmp.ne.s32.totalorder %s174, %s176
    %p183 = scmp.eq.s32.totalorder %s40, 1
    %p184 = por %p182, %p183
    %p185 = scmp.ne.s32.totalorder %s176, %s177
    %p186 = scmp.eq.s32.totalorder %s40, 0
    %p187 = por %p185, %p186
    %p188 = scmp.ne.s32.totalorder %s176, %s177
    %p189 = scmp.eq.s32.totalorder %s41, 1
    %p190 = por %p188, %p189
    %p192 = scmp.ne.s32.totalorder %s177, %s191
    %p193 = scmp.eq.s32.totalorder %s41, 0
    %p194 = por %p192, %p193
    %s196 = sadd.s32 %s195, 1
    %p199 = scmp.eq.s32.totalorder %s35, 1
    %p200 = scmp.ne.s32.totalorder %s195, %s197
    %p201 = scmp.eq.s32.totalorder %s35, 0
    %p202 = por %p200, %p201
    %p203 = scmp.ne.s32.totalorder %s195, %s197
    %p204 = scmp.eq.s32.totalorder %s40, 1
    %p205 = por %p203, %p204
    %p206 = scmp.ne.s32.totalorder %s197, %s198
    %p207 = scmp.eq.s32.totalorder %s40, 0
    %p208 = por %p206, %p207
    %p209 = scmp.ne.s32.totalorder %s197, %s198
    %p210 = scmp.eq.s32.totalorder %s41, 1
    %p211 = por %p209, %p210
    %p213 = scmp.ne.s32.totalorder %s198, %s212
    %p214 = scmp.eq.s32.totalorder %s41, 0
    %p215 = por %p213, %p214
    %s217 = sadd.s32 %s216, 1
    %p220 = scmp.eq.s32.totalorder %s35, 1
    %p221 = scmp.ne.s32.totalorder %s216, %s218
    %p222 = scmp.eq.s32.totalorder %s35, 0
    %p223 = por %p221, %p222
    %p224 = scmp.ne.s32.totalorder %s216, %s218
    %p225 = scmp.eq.s32.totalorder %s40, 1
    %p226 = por %p224, %p225
    %p227 = scmp.ne.s32.totalorder %s218, %s219
    %p228 = scmp.eq.s32.totalorder %s40, 0
    %p229 = por %p227, %p228
    %p230 = scmp.ne.s32.totalorder %s218, %s219
    %p231 = scmp.eq.s32.totalorder %s41, 1
    %p232 = por %p230, %p231
    %p234 = scmp.ne.s32.totalorder %s219, %s233
    %p235 = scmp.eq.s32.totalorder %s41, 0
    %p236 = por %p234, %p235
    %s238 = sadd.s32 %s237, 1
    %p241 = scmp.eq.s32.totalorder %s35, 1
    %p242 = scmp.ne.s32.totalorder %s237, %s239
    %p243 = scmp.eq.s32.totalorder %s35, 0
    %p244 = por %p242, %p243
    %p245 = scmp.ne.s32.totalorder %s237, %s239
    %p246 = scmp.eq.s32.totalorder %s40, 1
    %p247 = por %p245, %p246
    %p248 = scmp.ne.s32.totalorder %s239, %s240
    %p249 = scmp.eq.s32.totalorder %s40, 0
    %p250 = por %p248, %p249
    %p251 = scmp.ne.s32.totalorder %s239, %s240
    %p252 = scmp.eq.s32.totalorder %s41, 1
    %p253 = por %p251, %p252
    %p255 = scmp.ne.s32.totalorder %s240, %s254
    %p256 = scmp.eq.s32.totalorder %s41, 0
    %p257 = por %p255, %p256
    %s259 = sadd.s32 %s258, 1
    %p262 = scmp.eq.s32.totalorder %s35, 1
    %p263 = scmp.ne.s32.totalorder %s258, %s260
    %p264 = scmp.eq.s32.totalorder %s35, 0
    %p265 = por %p263, %p264
    %p266 = scmp.ne.s32.totalorder %s258, %s260
    %p267 = scmp.eq.s32.totalorder %s40, 1
    %p268 = por %p266, %p267
    %p269 = scmp.ne.s32.totalorder %s260, %s261
    %p270 = scmp.eq.s32.totalorder %s40, 0
    %p271 = por %p269, %p270
    %p272 = scmp.ne.s32.totalorder %s260, %s261
    %p273 = scmp.eq.s32.totalorder %s41, 1
    %p274 = por %p272, %p273
    %p276 = scmp.ne.s32.totalorder %s261, %s275
    %p277 = scmp.eq.s32.totalorder %s41, 0
    %p278 = por %p276, %p277
    %s280 = sadd.s32 %s279, 1
    %p283 = scmp.eq.s32.totalorder %s35, 1
    %p284 = scmp.ne.s32.totalorder %s279, %s281
    %p285 = scmp.eq.s32.totalorder %s35, 0
    %p286 = por %p284, %p285
    %p287 = scmp.ne.s32.totalorder %s279, %s281
    %p288 = scmp.eq.s32.totalorder %s40, 1
    %p289 = por %p287, %p288
    %p290 = scmp.ne.s32.totalorder %s281, %s282
    %p291 = scmp.eq.s32.totalorder %s40, 0
    %p292 = por %p290, %p291
    %p293 = scmp.ne.s32.totalorder %s281, %s282
    %p294 = scmp.eq.s32.totalorder %s41, 1
    %p295 = por %p293, %p294
    %p297 = scmp.ne.s32.totalorder %s282, %s296
    %p298 = scmp.eq.s32.totalorder %s41, 0
    %p299 = por %p297, %p298
    %s301 = sadd.s32 %s300, 1
    %p304 = scmp.eq.s32.totalorder %s35, 1
    %p305 = scmp.ne.s32.totalorder %s300, %s302
    %p306 = scmp.eq.s32.totalorder %s35, 0
    %p307 = por %p305, %p306
    %p308 = scmp.ne.s32.totalorder %s300, %s302
    %p309 = scmp.eq.s32.totalorder %s40, 1
    %p310 = por %p308, %p309
    %p311 = scmp.ne.s32.totalorder %s302, %s303
    %p312 = scmp.eq.s32.totalorder %s40, 0
    %p313 = por %p311, %p312
    %p314 = scmp.ne.s32.totalorder %s302, %s303
    %p315 = scmp.eq.s32.totalorder %s41, 1
    %p316 = por %p314, %p315
    %p318 = scmp.ne.s32.totalorder %s303, %s317
    %p319 = scmp.eq.s32.totalorder %s41, 0
    %p320 = por %p318, %p319
    %s322 = sadd.s32 %s321, 1
    %p325 = scmp.eq.s32.totalorder %s35, 1
    %p326 = scmp.ne.s32.totalorder %s321, %s323
    %p327 = scmp.eq.s32.totalorder %s35, 0
    %p328 = por %p326, %p327
    %p329 = scmp.ne.s32.totalorder %s321, %s323
    %p330 = scmp.eq.s32.totalorder %s40, 1
    %p331 = por %p329, %p330
    %p332 = scmp.ne.s32.totalorder %s323, %s324
    %p333 = scmp.eq.s32.totalorder %s40, 0
    %p334 = por %p332, %p333
    %p335 = scmp.ne.s32.totalorder %s323, %s324
    %p336 = scmp.eq.s32.totalorder %s41, 1
    %p337 = por %p335, %p336
    %p339 = scmp.ne.s32.totalorder %s324, %s338
    %p340 = scmp.eq.s32.totalorder %s41, 0
    %p341 = por %p339, %p340
    %s343 = sadd.s32 %s342, 1
    %p346 = scmp.eq.s32.totalorder %s35, 1
    %p347 = scmp.ne.s32.totalorder %s342, %s344
    %p348 = scmp.eq.s32.totalorder %s35, 0
    %p349 = por %p347, %p348
    %p350 = scmp.ne.s32.totalorder %s342, %s344
    %p351 = scmp.eq.s32.totalorder %s40, 1
    %p352 = por %p350, %p351
    %p353 = scmp.ne.s32.totalorder %s344, %s345
    %p354 = scmp.eq.s32.totalorder %s40, 0
    %p355 = por %p353, %p354
    %p356 = scmp.ne.s32.totalorder %s344, %s345
    %p357 = scmp.eq.s32.totalorder %s41, 1
    %p358 = por %p356, %p357
    %p360 = scmp.ne.s32.totalorder %s345, %s359
    %p361 = scmp.eq.s32.totalorder %s41, 0
    %p362 = por %p360, %p361
    %s364 = sadd.s32 %s363, 1
    %p367 = scmp.eq.s32.totalorder %s35, 1
    %p368 = scmp.ne.s32.totalorder %s363, %s365
    %p369 = scmp.eq.s32.totalorder %s35, 0
    %p370 = por %p368, %p369
    %p371 = scmp.ne.s32.totalorder %s363, %s365
    %p372 = scmp.eq.s32.totalorder %s40, 1
    %p373 = por %p371, %p372
    %p374 = scmp.ne.s32.totalorder %s365, %s366
    %p375 = scmp.eq.s32.totalorder %s40, 0
    %p376 = por %p374, %p375
    %p377 = scmp.ne.s32.totalorder %s365, %s366
    %p378 = scmp.eq.s32.totalorder %s41, 1
    %p379 = por %p377, %p378
    %p381 = scmp.ne.s32.totalorder %s366, %s380
    %p382 = scmp.eq.s32.totalorder %s41, 0
    %p383 = por %p381, %p382
    %s385 = sadd.s32 %s384, 1
    %p388 = scmp.eq.s32.totalorder %s35, 1
    %p389 = scmp.ne.s32.totalorder %s384, %s386
    %p390 = scmp.eq.s32.totalorder %s35, 0
    %p391 = por %p389, %p390
    %p392 = scmp.ne.s32.totalorder %s384, %s386
    %p393 = scmp.eq.s32.totalorder %s40, 1
    %p394 = por %p392, %p393
    %p395 = scmp.ne.s32.totalorder %s386, %s387
    %p396 = scmp.eq.s32.totalorder %s40, 0
    %p397 = por %p395, %p396
    %p398 = scmp.ne.s32.totalorder %s386, %s387
    %p399 = scmp.eq.s32.totalorder %s41, 1
    %p400 = por %p398, %p399
    %p402 = scmp.ne.s32.totalorder %s387, %s401
    %p403 = scmp.eq.s32.totalorder %s41, 0
    %p404 = por %p402, %p403
    %s406 = sadd.s32 %s405, 1
    %p409 = scmp.eq.s32.totalorder %s35, 1
    %p410 = scmp.ne.s32.totalorder %s405, %s407
    %p411 = scmp.eq.s32.totalorder %s35, 0
    %p412 = por %p410, %p411
    %p413 = scmp.ne.s32.totalorder %s405, %s407
    %p414 = scmp.eq.s32.totalorder %s40, 1
    %p415 = por %p413, %p414
    %p416 = scmp.ne.s32.totalorder %s407, %s408
    %p417 = scmp.eq.s32.totalorder %s40, 0
    %p418 = por %p416, %p417
    %p419 = scmp.ne.s32.totalorder %s407, %s408
    %p420 = scmp.eq.s32.totalorder %s41, 1
    %p421 = por %p419, %p420
    %p423 = scmp.ne.s32.totalorder %s408, %s422
    %p424 = scmp.eq.s32.totalorder %s41, 0
    %p425 = por %p423, %p424
    %s427 = sadd.s32 %s426, 1
    %p430 = scmp.eq.s32.totalorder %s35, 1
    %p431 = scmp.ne.s32.totalorder %s426, %s428
    %p432 = scmp.eq.s32.totalorder %s35, 0
    %p433 = por %p431, %p432
    %p434 = scmp.ne.s32.totalorder %s426, %s428
    %p435 = scmp.eq.s32.totalorder %s40, 1
    %p436 = por %p434, %p435
    %p437 = scmp.ne.s32.totalorder %s428, %s429
    %p438 = scmp.eq.s32.totalorder %s40, 0
    %p439 = por %p437, %p438
    %p440 = scmp.ne.s32.totalorder %s428, %s429
    %p441 = scmp.eq.s32.totalorder %s41, 1
    %p442 = por %p440, %p441
    %p444 = scmp.ne.s32.totalorder %s429, %s443
    %p445 = scmp.eq.s32.totalorder %s41, 0
    %p446 = por %p444, %p445
    %s448 = sadd.s32 %s447, 1
    %p451 = scmp.eq.s32.totalorder %s35, 1
    %p452 = scmp.ne.s32.totalorder %s447, %s449
    %p453 = scmp.eq.s32.totalorder %s35, 0
    %p454 = por %p452, %p453
    %p455 = scmp.ne.s32.totalorder %s447, %s449
    %p456 = scmp.eq.s32.totalorder %s40, 1
    %p457 = por %p455, %p456
    %p458 = scmp.ne.s32.totalorder %s449, %s450
    %p459 = scmp.eq.s32.totalorder %s40, 0
    %p460 = por %p458, %p459
    %p461 = scmp.ne.s32.totalorder %s449, %s450
    %p462 = scmp.eq.s32.totalorder %s41, 1
    %p463 = por %p461, %p462
    %p465 = scmp.ne.s32.totalorder %s450, %s464
    %p466 = scmp.eq.s32.totalorder %s41, 0
    %p467 = por %p465, %p466
    %s469 = sadd.s32 %s468, 1
    %p472 = scmp.eq.s32.totalorder %s35, 1
    %p473 = scmp.ne.s32.totalorder %s468, %s470
    %p474 = scmp.eq.s32.totalorder %s35, 0
    %p475 = por %p473, %p474
    %p476 = scmp.ne.s32.totalorder %s468, %s470
    %p477 = scmp.eq.s32.totalorder %s40, 1
    %p478 = por %p476, %p477
    %p479 = scmp.ne.s32.totalorder %s470, %s471
    %p480 = scmp.eq.s32.totalorder %s40, 0
    %p481 = por %p479, %p480
    %p482 = scmp.ne.s32.totalorder %s470, %s471
    %p483 = scmp.eq.s32.totalorder %s41, 1
    %p484 = por %p482, %p483
    %p486 = scmp.ne.s32.totalorder %s471, %s485
    %p487 = scmp.eq.s32.totalorder %s41, 0
    %p488 = por %p486, %p487
    %s490 = sadd.s32 %s489, 1
    %p493 = scmp.eq.s32.totalorder %s35, 1
    %p494 = scmp.ne.s32.totalorder %s489, %s491
    %p495 = scmp.eq.s32.totalorder %s35, 0
    %p496 = por %p494, %p495
    %p497 = scmp.ne.s32.totalorder %s489, %s491
    %p498 = scmp.eq.s32.totalorder %s40, 1
    %p499 = por %p497, %p498
    %p500 = scmp.ne.s32.totalorder %s491, %s492
    %p501 = scmp.eq.s32.totalorder %s40, 0
    %p502 = por %p500, %p501
    %p503 = scmp.ne.s32.totalorder %s491, %s492
    %p504 = scmp.eq.s32.totalorder %s41, 1
    %p505 = por %p503, %p504
    %p507 = scmp.ne.s32.totalorder %s492, %s506
    %p508 = scmp.eq.s32.totalorder %s41, 0
    %p509 = por %p507, %p508
    %s511 = sadd.s32 %s510, 1
    %p514 = scmp.eq.s32.totalorder %s35, 1
    %p515 = scmp.ne.s32.totalorder %s510, %s512
    %p516 = scmp.eq.s32.totalorder %s35, 0
    %p517 = por %p515, %p516
    %p518 = scmp.ne.s32.totalorder %s510, %s512
    %p519 = scmp.eq.s32.totalorder %s40, 1
    %p520 = por %p518, %p519
    %p521 = scmp.ne.s32.totalorder %s512, %s513
    %p522 = scmp.eq.s32.totalorder %s40, 0
    %p523 = por %p521, %p522
    %p524 = scmp.ne.s32.totalorder %s512, %s513
    %p525 = scmp.eq.s32.totalorder %s41, 1
    %p526 = por %p524, %p525
    %p528 = scmp.ne.s32.totalorder %s513, %s527
    %p529 = scmp.eq.s32.totalorder %s41, 0
    %p530 = por %p528, %p529
    %s532 = sadd.s32 %s531, 1
    %p535 = scmp.eq.s32.totalorder %s35, 1
    %p536 = scmp.ne.s32.totalorder %s531, %s533
    %p537 = scmp.eq.s32.totalorder %s35, 0
    %p538 = por %p536, %p537
    %p539 = scmp.ne.s32.totalorder %s531, %s533
    %p540 = scmp.eq.s32.totalorder %s40, 1
    %p541 = por %p539, %p540
    %p542 = scmp.ne.s32.totalorder %s533, %s534
    %p543 = scmp.eq.s32.totalorder %s40, 0
    %p544 = por %p542, %p543
    %p545 = scmp.ne.s32.totalorder %s533, %s534
    %p546 = scmp.eq.s32.totalorder %s41, 1
    %p547 = por %p545, %p546
    %p549 = scmp.ne.s32.totalorder %s534, %s548
    %p550 = scmp.eq.s32.totalorder %s41, 0
    %p551 = por %p549, %p550
    %s553 = sadd.s32 %s552, 1
    %p556 = scmp.eq.s32.totalorder %s35, 1
    %p557 = scmp.ne.s32.totalorder %s552, %s554
    %p558 = scmp.eq.s32.totalorder %s35, 0
    %p559 = por %p557, %p558
    %p560 = scmp.ne.s32.totalorder %s552, %s554
    %p561 = scmp.eq.s32.totalorder %s40, 1
    %p562 = por %p560, %p561
    %p563 = scmp.ne.s32.totalorder %s554, %s555
    %p564 = scmp.eq.s32.totalorder %s40, 0
    %p565 = por %p563, %p564
    %p566 = scmp.ne.s32.totalorder %s554, %s555
    %p567 = scmp.eq.s32.totalorder %s41, 1
    %p568 = por %p566, %p567
    %p570 = scmp.ne.s32.totalorder %s555, %s569
    %p571 = scmp.eq.s32.totalorder %s41, 0
    %p572 = por %p570, %p571
    %s573 = ssub.s32 %s35, %s42
    %p574 = scmp.eq.s32.totalorder %s573, 0
    %s576 = sadd.s32 %s575, 1
    %s577 = scalar_select %p574, %s575, %s576
    %p580 = pneg %p574
    %p581 = scmp.eq.s32.totalorder %s35, 1
    %p582 = por %p580, %p581
    %p583 = scmp.ne.s32.totalorder %s575, %s578
    %p584 = scmp.eq.s32.totalorder %s35, 0
    %p585 = por %p583, %p584
    %p586 = scmp.ne.s32.totalorder %s575, %s578
    %p587 = scmp.eq.s32.totalorder %s40, 1
    %p588 = por %p586, %p587
    %p589 = scmp.ne.s32.totalorder %s578, %s579
    %p590 = scmp.eq.s32.totalorder %s40, 0
    %p591 = por %p589, %p590
    %p592 = scmp.ne.s32.totalorder %s578, %s579
    %p593 = scmp.eq.s32.totalorder %s41, 1
    %p594 = por %p592, %p593
    %p596 = scmp.ne.s32.totalorder %s579, %s595
    %p597 = scmp.eq.s32.totalorder %s41, 0
    %p598 = por %p596, %p597
    %s599 = ssub.s32 %s35, %s42
    %p600 = scmp.eq.s32.totalorder %s599, 0
    %s602 = sadd.s32 %s601, 1
    %s603 = scalar_select %p600, %s601, %s602
    %p606 = pneg %p600
    %p607 = scmp.eq.s32.totalorder %s35, 1
    %p608 = por %p606, %p607
    %p609 = scmp.ne.s32.totalorder %s601, %s604
    %p610 = scmp.eq.s32.totalorder %s35, 0
    %p611 = por %p609, %p610
    %p612 = scmp.ne.s32.totalorder %s601, %s604
    %p613 = scmp.eq.s32.totalorder %s40, 1
    %p614 = por %p612, %p613
    %p615 = scmp.ne.s32.totalorder %s604, %s605
    %p616 = scmp.eq.s32.totalorder %s40, 0
    %p617 = por %p615, %p616
    %p618 = scmp.ne.s32.totalorder %s604, %s605
    %p619 = scmp.eq.s32.totalorder %s41, 1
    %p620 = por %p618, %p619
    %p622 = scmp.ne.s32.totalorder %s605, %s621
    %p623 = scmp.eq.s32.totalorder %s41, 0
    %p624 = por %p622, %p623
    %s625 = ssub.s32 %s35, %s42
    %p626 = scmp.eq.s32.totalorder %s625, 0
    %s628 = sadd.s32 %s627, 1
    %s629 = scalar_select %p626, %s627, %s628
    %p632 = pneg %p626
    %p633 = scmp.eq.s32.totalorder %s35, 1
    %p634 = por %p632, %p633
    %p635 = scmp.ne.s32.totalorder %s627, %s630
    %p636 = scmp.eq.s32.totalorder %s35, 0
    %p637 = por %p635, %p636
    %p638 = scmp.ne.s32.totalorder %s627, %s630
    %p639 = scmp.eq.s32.totalorder %s40, 1
    %p640 = por %p638, %p639
    %p641 = scmp.ne.s32.totalorder %s630, %s631
    %p642 = scmp.eq.s32.totalorder %s40, 0
    %p643 = por %p641, %p642
    %p644 = scmp.ne.s32.totalorder %s630, %s631
    %p645 = scmp.eq.s32.totalorder %s41, 1
    %p646 = por %p644, %p645
    %p648 = scmp.ne.s32.totalorder %s631, %s647
    %p649 = scmp.eq.s32.totalorder %s41, 0
    %p650 = por %p648, %p649
    %s651 = ssub.s32 %s35, %s42
    %p652 = scmp.eq.s32.totalorder %s651, 0
    %s654 = sadd.s32 %s653, 1
    %s655 = scalar_select %p652, %s653, %s654
    %p658 = pneg %p652
    %p659 = scmp.eq.s32.totalorder %s35, 1
    %p660 = por %p658, %p659
    %p661 = scmp.ne.s32.totalorder %s653, %s656
    %p662 = scmp.eq.s32.totalorder %s35, 0
    %p663 = por %p661, %p662
    %p664 = scmp.ne.s32.totalorder %s653, %s656
    %p665 = scmp.eq.s32.totalorder %s40, 1
    %p666 = por %p664, %p665
    %p667 = scmp.ne.s32.totalorder %s656, %s657
    %p668 = scmp.eq.s32.totalorder %s40, 0
    %p669 = por %p667, %p668
    %p670 = scmp.ne.s32.totalorder %s656, %s657
    %p671 = scmp.eq.s32.totalorder %s41, 1
    %p672 = por %p670, %p671
    %p674 = scmp.ne.s32.totalorder %s657, %s673
    %p675 = scmp.eq.s32.totalorder %s41, 0
    %p676 = por %p674, %p675
    %p677 = scmp.le.s32.totalorder 1, %s35
    %p678 = scmp.lt.s32.totalorder %s35, 3
    %p679 = pnand %p677, %p678
    %p680 = pneg %p679
    // Predicated region
    $region9: #{metastress_forward.3} parent=5 // pred_check
      _
    $region10: #{metastress_forward.3} parent=5 // pred_check_branch
      %682 = sbr.rel (%p679) target = $region12
    $region11: #{metastress_forward.3} parent=5 // pred_region
      %s683 = ssub.s32 %s35, 1
      // Predicated region
      $region13: #{metastress_forward.3} parent=11 // pred_check
        %p684 = pneg %p82
      $region14: #{metastress_forward.3} parent=11 // pred_check_branch
        %686 = sbr.rel (%p684) target = $region16
      $region15: #{metastress_forward.3} parent=11 // pred_region
        _
      $region16: #{metastress_forward.3} parent=11 // pred_fallthru
        _
      // Predicated region
      $region17: #{metastress_forward.3} parent=11 // pred_check
        %p687 = pneg %p103
      $region18: #{metastress_forward.3} parent=11 // pred_check_branch
        %689 = sbr.rel (%p687) target = $region20
      $region19: #{metastress_forward.3} parent=11 // pred_region
        _
      $region20: #{metastress_forward.3} parent=11 // pred_fallthru
        _
      // Predicated region
      $region21: #{metastress_forward.3} parent=11 // pred_check
        %p690 = pneg %p124
      $region22: #{metastress_forward.3} parent=11 // pred_check_branch
        %692 = sbr.rel (%p690) target = $region24
      $region23: #{metastress_forward.3} parent=11 // pred_region
        _
      $region24: #{metastress_forward.3} parent=11 // pred_fallthru
        _
      // Predicated region
      $region25: #{metastress_forward.3} parent=11 // pred_check
        %p693 = pneg %p145
      $region26: #{metastress_forward.3} parent=11 // pred_check_branch
        %695 = sbr.rel (%p693) target = $region28
      $region27: #{metastress_forward.3} parent=11 // pred_region
        _
      $region28: #{metastress_forward.3} parent=11 // pred_fallthru
        _
      // Predicated region
      $region29: #{metastress_forward.3} parent=11 // pred_check
        %p696 = pneg %p166
      $region30: #{metastress_forward.3} parent=11 // pred_check_branch
        %698 = sbr.rel (%p696) target = $region32
      $region31: #{metastress_forward.3} parent=11 // pred_region
        _
      $region32: #{metastress_forward.3} parent=11 // pred_fallthru
        _
      // Predicated region
      $region33: #{metastress_forward.3} parent=11 // pred_check
        %p699 = pneg %p187
      $region34: #{metastress_forward.3} parent=11 // pred_check_branch
        %701 = sbr.rel (%p699) target = $region36
      $region35: #{metastress_forward.3} parent=11 // pred_region
        _
      $region36: #{metastress_forward.3} parent=11 // pred_fallthru
        _
      // Predicated region
      $region37: #{metastress_forward.3} parent=11 // pred_check
        %p702 = pneg %p208
      $region38: #{metastress_forward.3} parent=11 // pred_check_branch
        %704 = sbr.rel (%p702) target = $region40
      $region39: #{metastress_forward.3} parent=11 // pred_region
        _
      $region40: #{metastress_forward.3} parent=11 // pred_fallthru
        _
      // Predicated region
      $region41: #{metastress_forward.3} parent=11 // pred_check
        %p705 = pneg %p229
      $region42: #{metastress_forward.3} parent=11 // pred_check_branch
        %707 = sbr.rel (%p705) target = $region44
      $region43: #{metastress_forward.3} parent=11 // pred_region
        _
      $region44: #{metastress_forward.3} parent=11 // pred_fallthru
        _
      // Predicated region
      $region45: #{metastress_forward.3} parent=11 // pred_check
        %p708 = pneg %p250
      $region46: #{metastress_forward.3} parent=11 // pred_check_branch
        %710 = sbr.rel (%p708) target = $region48
      $region47: #{metastress_forward.3} parent=11 // pred_region
        _
      $region48: #{metastress_forward.3} parent=11 // pred_fallthru
        _
      // Predicated region
      $region49: #{metastress_forward.3} parent=11 // pred_check
        %p711 = pneg %p271
      $region50: #{metastress_forward.3} parent=11 // pred_check_branch
        %713 = sbr.rel (%p711) target = $region52
      $region51: #{metastress_forward.3} parent=11 // pred_region
        _
      $region52: #{metastress_forward.3} parent=11 // pred_fallthru
        _
      // Predicated region
      $region53: #{metastress_forward.3} parent=11 // pred_check
        %p714 = pneg %p292
      $region54: #{metastress_forward.3} parent=11 // pred_check_branch
        %716 = sbr.rel (%p714) target = $region56
      $region55: #{metastress_forward.3} parent=11 // pred_region
        _
      $region56: #{metastress_forward.3} parent=11 // pred_fallthru
        _
      // Predicated region
      $region57: #{metastress_forward.3} parent=11 // pred_check
        %p717 = pneg %p313
      $region58: #{metastress_forward.3} parent=11 // pred_check_branch
        %719 = sbr.rel (%p717) target = $region60
      $region59: #{metastress_forward.3} parent=11 // pred_region
        _
      $region60: #{metastress_forward.3} parent=11 // pred_fallthru
        _
      // Predicated region
      $region61: #{metastress_forward.3} parent=11 // pred_check
        %p720 = pneg %p334
      $region62: #{metastress_forward.3} parent=11 // pred_check_branch
        %722 = sbr.rel (%p720) target = $region64
      $region63: #{metastress_forward.3} parent=11 // pred_region
        _
      $region64: #{metastress_forward.3} parent=11 // pred_fallthru
        _
      // Predicated region
      $region65: #{metastress_forward.3} parent=11 // pred_check
        %p723 = pneg %p355
      $region66: #{metastress_forward.3} parent=11 // pred_check_branch
        %725 = sbr.rel (%p723) target = $region68
      $region67: #{metastress_forward.3} parent=11 // pred_region
        _
      $region68: #{metastress_forward.3} parent=11 // pred_fallthru
        _
      // Predicated region
      $region69: #{metastress_forward.3} parent=11 // pred_check
        %p726 = pneg %p376
      $region70: #{metastress_forward.3} parent=11 // pred_check_branch
        %728 = sbr.rel (%p726) target = $region72
      $region71: #{metastress_forward.3} parent=11 // pred_region
        _
      $region72: #{metastress_forward.3} parent=11 // pred_fallthru
        _
      // Predicated region
      $region73: #{metastress_forward.3} parent=11 // pred_check
        %p729 = pneg %p397
      $region74: #{metastress_forward.3} parent=11 // pred_check_branch
        %731 = sbr.rel (%p729) target = $region76
      $region75: #{metastress_forward.3} parent=11 // pred_region
        _
      $region76: #{metastress_forward.3} parent=11 // pred_fallthru
        _
      // Predicated region
      $region77: #{metastress_forward.3} parent=11 // pred_check
        %p732 = pneg %p418
      $region78: #{metastress_forward.3} parent=11 // pred_check_branch
        %734 = sbr.rel (%p732) target = $region80
      $region79: #{metastress_forward.3} parent=11 // pred_region
        _
      $region80: #{metastress_forward.3} parent=11 // pred_fallthru
        _
      // Predicated region
      $region81: #{metastress_forward.3} parent=11 // pred_check
        %p735 = pneg %p439
      $region82: #{metastress_forward.3} parent=11 // pred_check_branch
        %737 = sbr.rel (%p735) target = $region84
      $region83: #{metastress_forward.3} parent=11 // pred_region
        _
      $region84: #{metastress_forward.3} parent=11 // pred_fallthru
        _
      // Predicated region
      $region85: #{metastress_forward.3} parent=11 // pred_check
        %p738 = pneg %p460
      $region86: #{metastress_forward.3} parent=11 // pred_check_branch
        %740 = sbr.rel (%p738) target = $region88
      $region87: #{metastress_forward.3} parent=11 // pred_region
        _
      $region88: #{metastress_forward.3} parent=11 // pred_fallthru
        _
      // Predicated region
      $region89: #{metastress_forward.3} parent=11 // pred_check
        %p741 = pneg %p481
      $region90: #{metastress_forward.3} parent=11 // pred_check_branch
        %743 = sbr.rel (%p741) target = $region92
      $region91: #{metastress_forward.3} parent=11 // pred_region
        _
      $region92: #{metastress_forward.3} parent=11 // pred_fallthru
        _
      // Predicated region
      $region93: #{metastress_forward.3} parent=11 // pred_check
        %p744 = pneg %p502
      $region94: #{metastress_forward.3} parent=11 // pred_check_branch
        %746 = sbr.rel (%p744) target = $region96
      $region95: #{metastress_forward.3} parent=11 // pred_region
        _
      $region96: #{metastress_forward.3} parent=11 // pred_fallthru
        _
      // Predicated region
      $region97: #{metastress_forward.3} parent=11 // pred_check
        %p747 = pneg %p523
      $region98: #{metastress_forward.3} parent=11 // pred_check_branch
        %749 = sbr.rel (%p747) target = $region100
      $region99: #{metastress_forward.3} parent=11 // pred_region
        _
      $region100: #{metastress_forward.3} parent=11 // pred_fallthru
        _
      // Predicated region
      $region101: #{metastress_forward.3} parent=11 // pred_check
        %p750 = pneg %p544
      $region102: #{metastress_forward.3} parent=11 // pred_check_branch
        %752 = sbr.rel (%p750) target = $region104
      $region103: #{metastress_forward.3} parent=11 // pred_region
        _
      $region104: #{metastress_forward.3} parent=11 // pred_fallthru
        _
      // Predicated region
      $region105: #{metastress_forward.3} parent=11 // pred_check
        %p753 = pneg %p565
      $region106: #{metastress_forward.3} parent=11 // pred_check_branch
        %755 = sbr.rel (%p753) target = $region108
      $region107: #{metastress_forward.3} parent=11 // pred_region
        _
      $region108: #{metastress_forward.3} parent=11 // pred_fallthru
        _
    $region12: #{metastress_forward.3} parent=5 // pred_fallthru
      _
    %p756 = scmp.lt.s32.totalorder %s35, 2
    // Predicated region
    $region109: #{metastress_forward.3} parent=5 // pred_check
      %p757 = pneg %p756
    $region110: #{metastress_forward.3} parent=5 // pred_check_branch
      %759 = sbr.rel (%p757) target = $region112
    $region111: #{metastress_forward.3} parent=5 // pred_region
      // Predicated region
      $region113: #{metastress_forward.3} parent=111 // pred_check
        %p760 = pneg %p55
      $region114: #{metastress_forward.3} parent=111 // pred_check_branch
        %762 = sbr.rel (%p760) target = $region116
      $region115: #{metastress_forward.3} parent=111 // pred_region
        %p763 = scmp.lt.s32.totalorder %s35, 1
        %s764 = scalar_select %p763, %s35, 1
        %s765 = smul.addr %s764, 7
        %s766 = smul.addr %s765, 8
        %s767 = scalar_lea.vmem %s0, %s766
      $region116: #{metastress_forward.3} parent=111 // pred_fallthru
        _
    $region112: #{metastress_forward.3} parent=5 // pred_fallthru
      _
    %p768 = scmp.le.s32.totalorder 1, %s35
    %p769 = scmp.lt.s32.totalorder %s35, 3
    %p770 = pnand %p768, %p769
    %p771 = pneg %p770
    // Predicated region
    $region117: #{metastress_forward.3} parent=5 // pred_check
      _
    $region118: #{metastress_forward.3} parent=5 // pred_check_branch
      %773 = sbr.rel (%p770) target = $region120
    $region119: #{metastress_forward.3} parent=5 // pred_region
      %s774 = ssub.s32 %s35, 1
      %p775 = scmp.lt.s32.totalorder %s40, 1
      %s776 = scalar_select %p775, %s40, 1
      %s777 = smul.addr %s776, 7
      %s778 = smul.addr %s777, 8
      %s779 = scalar_lea.vmem %s0, %s778
      %p780 = pneg %p61
      %p781 = pneg %p58
      %p782 = pneg %p82
      %p783 = pneg %p79
      %p784 = pneg %p103
      %p785 = pneg %p100
      %p786 = pneg %p124
      %p787 = pneg %p121
      %p788 = pneg %p145
      %p789 = pneg %p142
      %p790 = pneg %p166
      %p791 = pneg %p163
      %p792 = pneg %p187
      %p793 = pneg %p184
      %p794 = pneg %p208
      %p795 = pneg %p205
      %p796 = pneg %p229
      %p797 = pneg %p226
      %p798 = pneg %p250
      %p799 = pneg %p247
      %p800 = pneg %p271
      %p801 = pneg %p268
      %p802 = pneg %p292
      %p803 = pneg %p289
      %p804 = pneg %p313
      %p805 = pneg %p310
      %p806 = pneg %p334
      %p807 = pneg %p331
      %p808 = pneg %p355
      %p809 = pneg %p352
      %p810 = pneg %p376
      %p811 = pneg %p373
      %p812 = pneg %p397
      %p813 = pneg %p394
      %p814 = pneg %p418
      %p815 = pneg %p415
      %p816 = pneg %p439
      %p817 = pneg %p436
      %p818 = pneg %p460
      %p819 = pneg %p457
      %p820 = pneg %p481
      %p821 = pneg %p478
      %p822 = pneg %p502
      %p823 = pneg %p499
      %p824 = pneg %p523
      %p825 = pneg %p520
      %p826 = pneg %p544
      %p827 = pneg %p541
      %p828 = pneg %p565
      %p829 = pneg %p562
      %p830 = pneg %p591
      %p831 = pneg %p588
      %p832 = scmp.lt.s32.totalorder %s40, 1
      %s833 = scalar_select %p832, %s40, 1
      %s834 = smul.addr %s833, 7
      %s835 = smul.addr %s834, 8
      %s836 = scalar_lea.vmem %s25, %s835
      %p837 = pneg %p617
      %p838 = pneg %p614
      %p839 = scmp.lt.s32.totalorder %s40, 1
      %s840 = scalar_select %p839, %s40, 1
      %s841 = smul.addr %s840, 2
      %s842 = smul.addr %s841, 8
      %s843 = scalar_lea.vmem %s26, %s842
      %p844 = pneg %p643
      %p845 = pneg %p640
      %p846 = scmp.lt.s32.totalorder %s40, 1
      %s847 = scalar_select %p846, %s40, 1
      %s848 = smul.addr %s847, 2
      %s849 = scalar_lea.vmem %s27, %s848
      %p850 = pneg %p669
      %p851 = pneg %p666
      %p852 = scmp.lt.s32.totalorder %s40, 1
      %s853 = scalar_select %p852, %s40, 1
      %s854 = smul.addr %s853, 7
      %s855 = smul.addr %s854, 8
      %s856 = scalar_lea.vmem %s28, %s855
      %p857 = scmp.lt.s32.totalorder %s40, 1
      %s858 = scalar_select %p857, %s40, 1
      %s859 = smul.addr %s858, 7
      %s860 = smul.addr %s859, 8
      %s861 = scalar_lea.vmem %s0, %s860
      %p862 = scmp.lt.s32.totalorder %s40, 1
      %s863 = scalar_select %p862, %s40, 1
      %s864 = smul.addr %s863, 7
      %s865 = smul.addr %s864, 8
      %s866 = scalar_lea.vmem %s25, %s865
      %p867 = scmp.lt.s32.totalorder %s40, 1
      %s868 = scalar_select %p867, %s40, 1
      %s869 = smul.addr %s868, 2
      %s870 = smul.addr %s869, 8
      %s871 = scalar_lea.vmem %s26, %s870
      %p872 = scmp.lt.s32.totalorder %s40, 1
      %s873 = scalar_select %p872, %s40, 1
      %s874 = smul.addr %s873, 2
      %s875 = scalar_lea.vmem %s27, %s874
      %p876 = scmp.lt.s32.totalorder %s40, 1
      %s877 = scalar_select %p876, %s40, 1
      %s878 = smul.addr %s877, 7
      %s879 = smul.addr %s878, 8
      %s880 = scalar_lea.vmem %s28, %s879
      %v881 = vld [vmem:[%s861] sm:$0xff]
      %v882 = vld [vmem:[%s861 + $0x8] sm:$0xff]
      %v883 = vld [vmem:[%s861 + $0x10] sm:$0xff]
      %v884 = vld [vmem:[%s861 + $0x18] sm:$0xff]
      %v885 = vld [vmem:[%s861 + $0x20] sm:$0xff]
      %v886 = vld [vmem:[%s861 + $0x28] sm:$0xff]
      %v887 = vld [vmem:[%s861 + $0x30] sm:$0x3]
      %v888 = vld [vmem:[%s1] sm:$0x7]
      %v889 = vld [vmem:[%s2] sm:$0x3]
      %vm897 = vcmask 1040384
      %v898 = vrot.slane %v881, 7
      %v899 = vrot.slane %v882, 7
      %v900 = vsel %vm897, %v898, %v899
      %v901 = vrot.slane %v883, 7
      %v902 = vsel %vm897, %v899, %v901
      %v903 = vrot.slane %v884, 7
      %v904 = vsel %vm897, %v901, %v903
      %v905 = vrot.slane %v885, 7
      %v906 = vsel %vm897, %v903, %v905
      %v907 = vrot.slane %v886, 7
      %v908 = vsel %vm897, %v905, %v907
      %v909 = vrot.slane %v887, 7
      %v910 = vsel %vm897, %v907, %v909
      %v918 = vsel %vm897, 0.0, %v898
      %vm919 = vcmask 1042432
      %v920 = vsel %vm919, %v910, 0.0
      %vm923 = vcmask 1046528
      %v924 = vrot.slane %v918, 1
      %v925 = vrot.slane %v900, 1
      %v926 = vsel %vm923, %v924, %v925
      %v927 = vrot.slane %v902, 1
      %v928 = vsel %vm923, %v925, %v927
      %v929 = vrot.slane %v904, 1
      %v930 = vsel %vm923, %v927, %v929
      %v931 = vrot.slane %v906, 1
      %v932 = vsel %vm923, %v929, %v931
      %v933 = vrot.slane %v908, 1
      %v934 = vsel %vm923, %v931, %v933
      %v935 = vrot.slane %v920, 1
      %v936 = vsel %vm923, %v933, %v935
      %937 = vrot.lane.b32.xlu0 %v926, 1
      %v938 = vpop.permute.xlu0 %937
      %939 = vrot.lane.b32.xlu0 %v928, 1
      %v940 = vpop.permute.xlu0 %939
      %941 = vrot.lane.b32.xlu0 %v930, 1
      %v942 = vpop.permute.xlu0 %941
      %943 = vrot.lane.b32.xlu0 %v932, 1
      %v944 = vpop.permute.xlu0 %943
      %945 = vrot.lane.b32.xlu0 %v934, 1
      %v946 = vpop.permute.xlu0 %945
      %947 = vrot.lane.b32.xlu0 %v936, 1
      %v948 = vpop.permute.xlu0 %947
      %949 = vrot.lane.b32.xlu0 %v935, 1
      %v950 = vpop.permute.xlu0 %949
      %vm958 = vcmask 1045504
      %v959 = vrot.slane %v918, 2
      %v960 = vrot.slane %v900, 2
      %v961 = vsel %vm958, %v959, %v960
      %v962 = vrot.slane %v902, 2
      %v963 = vsel %vm958, %v960, %v962
      %v964 = vrot.slane %v904, 2
      %v965 = vsel %vm958, %v962, %v964
      %v966 = vrot.slane %v906, 2
      %v967 = vsel %vm958, %v964, %v966
      %v968 = vrot.slane %v908, 2
      %v969 = vsel %vm958, %v966, %v968
      %v970 = vrot.slane %v920, 2
      %v971 = vsel %vm958, %v968, %v970
      %972 = vrot.lane.b32.xlu0 %v961, 2
      %v973 = vpop.permute.xlu0 %972
      %974 = vrot.lane.b32.xlu0 %v963, 2
      %v975 = vpop.permute.xlu0 %974
      %976 = vrot.lane.b32.xlu0 %v965, 2
      %v977 = vpop.permute.xlu0 %976
      %978 = vrot.lane.b32.xlu0 %v967, 2
      %v979 = vpop.permute.xlu0 %978
      %980 = vrot.lane.b32.xlu0 %v969, 2
      %v981 = vpop.permute.xlu0 %980
      %982 = vrot.lane.b32.xlu0 %v971, 2
      %v983 = vpop.permute.xlu0 %982
      %984 = vrot.lane.b32.xlu0 %v970, 2
      %v985 = vpop.permute.xlu0 %984
      %vm993 = vcmask 7168
      %v994 = vsel %vm993, %v918, %v938
      %v995 = vsel %vm993, %v900, %v940
      %v996 = vsel %vm993, %v902, %v942
      %v997 = vsel %vm993, %v904, %v944
      %v998 = vsel %vm993, %v906, %v946
      %v999 = vsel %vm993, %v908, %v948
      %v1000 = vsel %vm993, %v920, %v950
      %vm1001 = vcmask 15360
      %v1002 = vsel %vm1001, %v994, %v973
      %v1003 = vsel %vm1001, %v995, %v975
      %v1004 = vsel %vm1001, %v996, %v977
      %v1005 = vsel %vm1001, %v997, %v979
      %v1006 = vsel %vm1001, %v998, %v981
      %v1007 = vsel %vm1001, %v999, %v983
      %v1008 = vsel %vm1001, %v1000, %v985
      %vm1009 = vcmask 23552
      %v1011 = vsel %vm1009, %v1002, 0
      %v1014 = vsel %vm1009, %v1003, 0
      %v1017 = vsel %vm1009, %v1004, 0
      %v1020 = vsel %vm1009, %v1005, 0
      %v1023 = vsel %vm1009, %v1006, 0
      %v1026 = vsel %vm1009, %v1007, 0
      %v1029 = vsel %vm1009, %v1008, 0
      %v1032 = vsel %vm919, %v888, 0
      %1034 = vmatprep.subr.mxu0 0.0
      %1035 = vmatpush1.msra.mxu0 0.0
      %1036 = vmatprep.subr.mxu0 0.0
      %1037 = vmatpush1.msra.mxu0 0.0
      %1038 = vmatprep.subr.mxu0 0.0
      %1039 = vmatpush1.msra.mxu0 0.0
      %1040 = vmatprep.subr.mxu0 0.0
      %1041 = vmatpush1.msra.mxu0 0.0
      %1042 = vmatprep.subr.mxu0 0.0
      %1043 = vmatpush1.msra.mxu0 0.0
      %1044 = vmatprep.subr.mxu0 0.0
      %1045 = vmatpush1.msra.mxu0 0.0
      %1046 = vmatprep.subr.mxu0 0.0
      %1047 = vmatpush1.msra.mxu0 0.0
      %1048 = vmatprep.subr.mxu0 0.0
      %1049 = vmatpush1.msra.mxu0 0.0
      %1050 = vmatprep.subr.mxu0 0.0
      %1051 = vmatpush1.msra.mxu0 0.0
      %1052 = vmatprep.subr.mxu0 0.0
      %1053 = vmatpush1.msra.mxu0 0.0
      %1054 = vmatprep.subr.mxu0 0.0
      %1055 = vmatpush1.msra.mxu0 0.0
      %1056 = vmatprep.subr.mxu0 0.0
      %1057 = vmatpush1.msra.mxu0 0.0
      %1058 = vmatprep.subr.mxu0 0.0
      %1059 = vmatpush1.msra.mxu0 0.0
      %1060 = vmatprep.subr.mxu0 0.0
      %1061 = vmatpush1.msra.mxu0 0.0
      %1062 = vmatprep.subr.mxu0 0.0
      %1063 = vmatpush1.msra.mxu0 0.0
      %1064 = vmatprep.subr.mxu0 0.0
      %1065 = vmatpush1.msra.mxu0 %v1032
      %1066 = vmatprep.subr.mxu0 0.0
      %1067 = vmatpush2.msra.mxu0 0.0
      %1068 = vmatprep.subr.mxu0 0.0
      %1069 = vmatpush2.msra.mxu0 0.0
      %1070 = vmatprep.subr.mxu0 0.0
      %1071 = vmatpush2.msra.mxu0 0.0
      %1072 = vmatprep.subr.mxu0 0.0
      %1073 = vmatpush2.msra.mxu0 0.0
      %1074 = vmatprep.subr.mxu0 0.0
      %1075 = vmatpush2.msra.mxu0 0.0
      %1076 = vmatprep.subr.mxu0 0.0
      %1077 = vmatpush2.msra.mxu0 0.0
      %1078 = vmatprep.subr.mxu0 0.0
      %1079 = vmatpush2.msra.mxu0 0.0
      %1080 = vmatprep.subr.mxu0 0.0
      %1081 = vmatpush2.msra.mxu0 0.0
      %1082 = vmatprep.subr.mxu0 0.0
      %1083 = vmatpush2.msra.mxu0 0.0
      %1084 = vmatprep.subr.mxu0 0.0
      %1085 = vmatpush2.msra.mxu0 0.0
      %1086 = vmatprep.subr.mxu0 0.0
      %1087 = vmatpush2.msra.mxu0 0.0
      %1088 = vmatprep.subr.mxu0 0.0
      %1089 = vmatpush2.msra.mxu0 0.0
      %1090 = vmatprep.subr.mxu0 0.0
      %1091 = vmatpush2.msra.mxu0 0.0
      %1092 = vmatprep.subr.mxu0 0.0
      %1093 = vmatpush2.msra.mxu0 0.0
      %1094 = vmatprep.subr.mxu0 0.0
      %1095 = vmatpush2.msra.mxu0 0.0
      %1096 = vmatprep.subr.mxu0 0.0
      %1097 = vmatpush2.msra.mxu0 0.0
      %1098 = vmatprep.mubr.f32.mxu0 0.0
      %1099 = vmatmul.mubr.f32.gmra.mxu0 %v1011
      %v1100 = vpop.f32.mrf.mxu0
      %v1101 = vadd.f32 0.0, %v1100
      %v1102 = vpop.f32.mrf.mxu0
      %1103 = vmatprep.mubr.f32.mxu0 0.0
      %1104 = vmatmul.mubr.f32.gmra.mxu0 %v1014
      %v1105 = vpop.f32.mrf.mxu0
      %v1106 = vadd.f32 0.0, %v1105
      %v1107 = vpop.f32.mrf.mxu0
      %1108 = vmatprep.mubr.f32.mxu0 0.0
      %1109 = vmatmul.mubr.f32.gmra.mxu0 %v1017
      %v1110 = vpop.f32.mrf.mxu0
      %v1111 = vadd.f32 0.0, %v1110
      %v1112 = vpop.f32.mrf.mxu0
      %1113 = vmatprep.mubr.f32.mxu0 0.0
      %1114 = vmatmul.mubr.f32.gmra.mxu0 %v1020
      %v1115 = vpop.f32.mrf.mxu0
      %v1116 = vadd.f32 0.0, %v1115
      %v1117 = vpop.f32.mrf.mxu0
      %1118 = vmatprep.mubr.f32.mxu0 0.0
      %1119 = vmatmul.mubr.f32.gmra.mxu0 %v1023
      %v1120 = vpop.f32.mrf.mxu0
      %v1121 = vadd.f32 0.0, %v1120
      %v1122 = vpop.f32.mrf.mxu0
      %1123 = vmatprep.mubr.f32.mxu0 0.0
      %1124 = vmatmul.mubr.f32.gmra.mxu0 %v1026
      %v1125 = vpop.f32.mrf.mxu0
      %v1126 = vadd.f32 0.0, %v1125
      %v1127 = vpop.f32.mrf.mxu0
      %1128 = vmatprep.mubr.f32.mxu0 0.0
      %1129 = vmatmul.mubr.f32.gmra.mxu0 %v1029
      %v1130 = vpop.f32.mrf.mxu0
      %v1131 = vadd.f32 0.0, %v1130
      %v1132 = vpop.f32.mrf.mxu0
      %1133 = vdwg.mxu0
      %v1134 = vlaneseq
      %v1135 = vshrl.u32 %v1134, 7
      %v1136 = vsub.s32 0, %v1135
      %v1137 = vrot.slane %v889, %v1136
      %v1138 = vmul.f32 %v1101, %v1137
      %v1139 = vmul.f32 %v1106, %v1137
      %v1140 = vmul.f32 %v1111, %v1137
      %v1141 = vmul.f32 %v1116, %v1137
      %v1142 = vmul.f32 %v1121, %v1137
      %v1143 = vmul.f32 %v1126, %v1137
      %v1144 = vmul.f32 %v1131, %v1137
      %v1145 = vlaneseq
      %v1146 = vshrl.u32 %v1145, 7
      %v1147 = vsub.s32 1, %v1146
      %v1148 = vrot.slane %v889, %v1147
      %v1149 = vadd.f32 %v1138, %v1148
      %v1150 = vadd.f32 %v1139, %v1148
      %v1151 = vadd.f32 %v1140, %v1148
      %v1152 = vadd.f32 %v1141, %v1148
      %v1153 = vadd.f32 %v1142, %v1148
      %v1154 = vadd.f32 %v1143, %v1148
      %v1155 = vadd.f32 %v1144, %v1148
      %vm1156 = vcmp.ge.f32.partialorder %v1149, 0.0
      %vm1157 = vcmp.ge.f32.partialorder %v1150, 0.0
      %vm1158 = vcmp.ge.f32.partialorder %v1151, 0.0
      %vm1159 = vcmp.ge.f32.partialorder %v1152, 0.0
      %vm1160 = vcmp.ge.f32.partialorder %v1153, 0.0
      %vm1161 = vcmp.ge.f32.partialorder %v1154, 0.0
      %vm1162 = vcmp.ge.f32.partialorder %v1155, 0.0
      %v1163 = vmul.f32 %v1149, 0.01
      %v1164 = vmul.f32 %v1150, 0.01
      %v1165 = vmul.f32 %v1151, 0.01
      %v1166 = vmul.f32 %v1152, 0.01
      %v1167 = vmul.f32 %v1153, 0.01
      %v1168 = vmul.f32 %v1154, 0.01
      %v1169 = vmul.f32 %v1155, 0.01
      %v1170 = vsel %vm1156, %v1149, %v1163
      %v1171 = vsel %vm1157, %v1150, %v1164
      %v1172 = vsel %vm1158, %v1151, %v1165
      %v1173 = vsel %vm1159, %v1152, %v1166
      %v1174 = vsel %vm1160, %v1153, %v1167
      %v1175 = vsel %vm1161, %v1154, %v1168
      %v1176 = vsel %vm1162, %v1155, %v1169
      %v1177 = vld [vmem:[%s3] sm:$0xff]
      %v1178 = vld [vmem:[%s3 + $0x8] sm:$0xff]
      %v1179 = vld [vmem:[%s3 + $0x10] sm:$0xff]
      %v1180 = vld [vmem:[%s3 + $0x18] sm:$0xff]
      %v1181 = vld [vmem:[%s3 + $0x20] sm:$0xff]
      %v1182 = vld [vmem:[%s3 + $0x28] sm:$0xff]
      %v1183 = vld [vmem:[%s4] sm:$0x3]
      %v1191 = vrot.slane %v1170, 7
      %v1192 = vrot.slane %v1171, 7
      %v1193 = vsel %vm897, %v1191, %v1192
      %v1194 = vrot.slane %v1172, 7
      %v1195 = vsel %vm897, %v1192, %v1194
      %v1196 = vrot.slane %v1173, 7
      %v1197 = vsel %vm897, %v1194, %v1196
      %v1198 = vrot.slane %v1174, 7
      %v1199 = vsel %vm897, %v1196, %v1198
      %v1200 = vrot.slane %v1175, 7
      %v1201 = vsel %vm897, %v1198, %v1200
      %v1202 = vrot.slane %v1176, 7
      %v1203 = vsel %vm897, %v1200, %v1202
      %v1211 = vsel %vm897, 0.0, %v1191
      %v1212 = vsel %vm919, %v1203, 0.0
      %v1215 = vrot.slane %v1211, 1
      %v1216 = vrot.slane %v1193, 1
      %v1217 = vsel %vm923, %v1215, %v1216
      %v1218 = vrot.slane %v1195, 1
      %v1219 = vsel %vm923, %v1216, %v1218
      %v1220 = vrot.slane %v1197, 1
      %v1221 = vsel %vm923, %v1218, %v1220
      %v1222 = vrot.slane %v1199, 1
      %v1223 = vsel %vm923, %v1220, %v1222
      %v1224 = vrot.slane %v1201, 1
      %v1225 = vsel %vm923, %v1222, %v1224
      %v1226 = vrot.slane %v1212, 1
      %v1227 = vsel %vm923, %v1224, %v1226
      %1228 = vrot.lane.b32.xlu0 %v1217, 16
      %v1229 = vpop.permute.xlu0 %1228
      %1230 = vrot.lane.b32.xlu0 %v1219, 16
      %v1231 = vpop.permute.xlu0 %1230
      %1232 = vrot.lane.b32.xlu0 %v1221, 16
      %v1233 = vpop.permute.xlu0 %1232
      %1234 = vrot.lane.b32.xlu0 %v1223, 16
      %v1235 = vpop.permute.xlu0 %1234
      %1236 = vrot.lane.b32.xlu0 %v1225, 16
      %v1237 = vpop.permute.xlu0 %1236
      %1238 = vrot.lane.b32.xlu0 %v1227, 16
      %v1239 = vpop.permute.xlu0 %1238
      %1240 = vrot.lane.b32.xlu0 %v1226, 16
      %v1241 = vpop.permute.xlu0 %1240
      %v1249 = vrot.slane %v1211, 2
      %v1250 = vrot.slane %v1193, 2
      %v1251 = vsel %vm958, %v1249, %v1250
      %v1252 = vrot.slane %v1195, 2
      %v1253 = vsel %vm958, %v1250, %v1252
      %v1254 = vrot.slane %v1197, 2
      %v1255 = vsel %vm958, %v1252, %v1254
      %v1256 = vrot.slane %v1199, 2
      %v1257 = vsel %vm958, %v1254, %v1256
      %v1258 = vrot.slane %v1201, 2
      %v1259 = vsel %vm958, %v1256, %v1258
      %v1260 = vrot.slane %v1212, 2
      %v1261 = vsel %vm958, %v1258, %v1260
      %1262 = vrot.lane.b32.xlu0 %v1251, 32
      %v1263 = vpop.permute.xlu0 %1262
      %1264 = vrot.lane.b32.xlu0 %v1253, 32
      %v1265 = vpop.permute.xlu0 %1264
      %1266 = vrot.lane.b32.xlu0 %v1255, 32
      %v1267 = vpop.permute.xlu0 %1266
      %1268 = vrot.lane.b32.xlu0 %v1257, 32
      %v1269 = vpop.permute.xlu0 %1268
      %1270 = vrot.lane.b32.xlu0 %v1259, 32
      %v1271 = vpop.permute.xlu0 %1270
      %1272 = vrot.lane.b32.xlu0 %v1261, 32
      %v1273 = vpop.permute.xlu0 %1272
      %1274 = vrot.lane.b32.xlu0 %v1260, 32
      %v1275 = vpop.permute.xlu0 %1274
      %vm1283 = vcmask 130048
      %v1284 = vsel %vm1283, %v1211, %v1229
      %v1285 = vsel %vm1283, %v1193, %v1231
      %v1286 = vsel %vm1283, %v1195, %v1233
      %v1287 = vsel %vm1283, %v1197, %v1235
      %v1288 = vsel %vm1283, %v1199, %v1237
      %v1289 = vsel %vm1283, %v1201, %v1239
      %v1290 = vsel %vm1283, %v1212, %v1241
      %vm1291 = vcmask 261120
      %v1292 = vsel %vm1291, %v1284, %v1263
      %v1293 = vsel %vm1291, %v1285, %v1265
      %v1294 = vsel %vm1291, %v1286, %v1267
      %v1295 = vsel %vm1291, %v1287, %v1269
      %v1296 = vsel %vm1291, %v1288, %v1271
      %v1297 = vsel %vm1291, %v1289, %v1273
      %v1298 = vsel %vm1291, %v1290, %v1275
      %vm1299 = vcmask 392192
      %v1301 = vsel %vm1299, %v1292, 0
      %v1304 = vsel %vm1299, %v1293, 0
      %v1307 = vsel %vm1299, %v1294, 0
      %v1310 = vsel %vm1299, %v1295, 0
      %v1313 = vsel %vm1299, %v1296, 0
      %v1316 = vsel %vm1299, %v1297, 0
      %v1319 = vsel %vm1299, %v1298, 0
      %1321 = vmatprep.subr.mxu0 0.0
      %1322 = vmatpush1.msra.mxu0 0.0
      %1323 = vmatprep.subr.mxu0 0.0
      %1324 = vmatpush1.msra.mxu0 0.0
      %1325 = vmatprep.subr.mxu0 0.0
      %1326 = vmatpush1.msra.mxu0 0.0
      %1327 = vmatprep.subr.mxu0 0.0
      %1328 = vmatpush1.msra.mxu0 0.0
      %1329 = vmatprep.subr.mxu0 0.0
      %1330 = vmatpush1.msra.mxu0 0.0
      %1331 = vmatprep.subr.mxu0 0.0
      %1332 = vmatpush1.msra.mxu0 0.0
      %1333 = vmatprep.subr.mxu0 0.0
      %1334 = vmatpush1.msra.mxu0 0.0
      %1335 = vmatprep.subr.mxu0 0.0
      %1336 = vmatpush1.msra.mxu0 0.0
      %1337 = vmatprep.subr.mxu0 0.0
      %1338 = vmatpush1.msra.mxu0 0.0
      %1339 = vmatprep.subr.mxu0 0.0
      %1340 = vmatpush1.msra.mxu0 0.0
      %1341 = vmatprep.subr.mxu0 0.0
      %1342 = vmatpush1.msra.mxu0 %v1182
      %1343 = vmatprep.subr.mxu0 0.0
      %1344 = vmatpush1.msra.mxu0 %v1181
      %1345 = vmatprep.subr.mxu0 0.0
      %1346 = vmatpush1.msra.mxu0 %v1180
      %1347 = vmatprep.subr.mxu0 0.0
      %1348 = vmatpush1.msra.mxu0 %v1179
      %1349 = vmatprep.subr.mxu0 0.0
      %1350 = vmatpush1.msra.mxu0 %v1178
      %1351 = vmatprep.subr.mxu0 0.0
      %1352 = vmatpush1.msra.mxu0 %v1177
      %1353 = vmatprep.subr.mxu0 0.0
      %1354 = vmatpush2.msra.mxu0 0.0
      %1355 = vmatprep.subr.mxu0 0.0
      %1356 = vmatpush2.msra.mxu0 0.0
      %1357 = vmatprep.subr.mxu0 0.0
      %1358 = vmatpush2.msra.mxu0 0.0
      %1359 = vmatprep.subr.mxu0 0.0
      %1360 = vmatpush2.msra.mxu0 0.0
      %1361 = vmatprep.subr.mxu0 0.0
      %1362 = vmatpush2.msra.mxu0 0.0
      %1363 = vmatprep.subr.mxu0 0.0
      %1364 = vmatpush2.msra.mxu0 0.0
      %1365 = vmatprep.subr.mxu0 0.0
      %1366 = vmatpush2.msra.mxu0 0.0
      %1367 = vmatprep.subr.mxu0 0.0
      %1368 = vmatpush2.msra.mxu0 0.0
      %1369 = vmatprep.subr.mxu0 0.0
      %1370 = vmatpush2.msra.mxu0 0.0
      %1371 = vmatprep.subr.mxu0 0.0
      %1372 = vmatpush2.msra.mxu0 0.0
      %1373 = vmatprep.subr.mxu0 0.0
      %1374 = vmatpush2.msra.mxu0 0.0
      %1375 = vmatprep.subr.mxu0 0.0
      %1376 = vmatpush2.msra.mxu0 0.0
      %1377 = vmatprep.subr.mxu0 0.0
      %1378 = vmatpush2.msra.mxu0 0.0
      %1379 = vmatprep.subr.mxu0 0.0
      %1380 = vmatpush2.msra.mxu0 0.0
      %1381 = vmatprep.subr.mxu0 0.0
      %1382 = vmatpush2.msra.mxu0 0.0
      %1383 = vmatprep.subr.mxu0 0.0
      %1384 = vmatpush2.msra.mxu0 0.0
      %1385 = vmatprep.mubr.f32.mxu0 0.0
      %1386 = vmatmul.mubr.f32.gmra.mxu0 %v1301
      %v1387 = vpop.f32.mrf.mxu0
      %v1388 = vadd.f32 0.0, %v1387
      %v1389 = vpop.f32.mrf.mxu0
      %1390 = vmatprep.mubr.f32.mxu0 0.0
      %1391 = vmatmul.mubr.f32.gmra.mxu0 %v1304
      %v1392 = vpop.f32.mrf.mxu0
      %v1393 = vadd.f32 0.0, %v1392
      %v1394 = vpop.f32.mrf.mxu0
      %1395 = vmatprep.mubr.f32.mxu0 0.0
      %1396 = vmatmul.mubr.f32.gmra.mxu0 %v1307
      %v1397 = vpop.f32.mrf.mxu0
      %v1398 = vadd.f32 0.0, %v1397
      %v1399 = vpop.f32.mrf.mxu0
      %1400 = vmatprep.mubr.f32.mxu0 0.0
      %1401 = vmatmul.mubr.f32.gmra.mxu0 %v1310
      %v1402 = vpop.f32.mrf.mxu0
      %v1403 = vadd.f32 0.0, %v1402
      %v1404 = vpop.f32.mrf.mxu0
      %1405 = vmatprep.mubr.f32.mxu0 0.0
      %1406 = vmatmul.mubr.f32.gmra.mxu0 %v1313
      %v1407 = vpop.f32.mrf.mxu0
      %v1408 = vadd.f32 0.0, %v1407
      %v1409 = vpop.f32.mrf.mxu0
      %1410 = vmatprep.mubr.f32.mxu0 0.0
      %1411 = vmatmul.mubr.f32.gmra.mxu0 %v1316
      %v1412 = vpop.f32.mrf.mxu0
      %v1413 = vadd.f32 0.0, %v1412
      %v1414 = vpop.f32.mrf.mxu0
      %1415 = vmatprep.mubr.f32.mxu0 0.0
      %1416 = vmatmul.mubr.f32.gmra.mxu0 %v1319
      %v1417 = vpop.f32.mrf.mxu0
      %v1418 = vadd.f32 0.0, %v1417
      %v1419 = vpop.f32.mrf.mxu0
      %1420 = vdwg.mxu0
      %v1421 = vlaneseq
      %v1422 = vshrl.u32 %v1421, 7
      %v1423 = vsub.s32 0, %v1422
      %v1424 = vrot.slane %v1183, %v1423
      %v1425 = vmul.f32 %v1388, %v1424
      %v1426 = vmul.f32 %v1393, %v1424
      %v1427 = vmul.f32 %v1398, %v1424
      %v1428 = vmul.f32 %v1403, %v1424
      %v1429 = vmul.f32 %v1408, %v1424
      %v1430 = vmul.f32 %v1413, %v1424
      %v1431 = vmul.f32 %v1418, %v1424
      %v1432 = vlaneseq
      %v1433 = vshrl.u32 %v1432, 7
      %v1434 = vsub.s32 1, %v1433
      %v1435 = vrot.slane %v1183, %v1434
      %v1436 = vadd.f32 %v1425, %v1435
      %v1437 = vadd.f32 %v1426, %v1435
      %v1438 = vadd.f32 %v1427, %v1435
      %v1439 = vadd.f32 %v1428, %v1435
      %v1440 = vadd.f32 %v1429, %v1435
      %v1441 = vadd.f32 %v1430, %v1435
      %v1442 = vadd.f32 %v1431, %v1435
      %vm1443 = vcmp.ge.f32.partialorder %v1436, 0.0
      %vm1444 = vcmp.ge.f32.partialorder %v1437, 0.0
      %vm1445 = vcmp.ge.f32.partialorder %v1438, 0.0
      %vm1446 = vcmp.ge.f32.partialorder %v1439, 0.0
      %vm1447 = vcmp.ge.f32.partialorder %v1440, 0.0
      %vm1448 = vcmp.ge.f32.partialorder %v1441, 0.0
      %vm1449 = vcmp.ge.f32.partialorder %v1442, 0.0
      %v1450 = vmul.f32 %v1436, 0.01
      %v1451 = vmul.f32 %v1437, 0.01
      %v1452 = vmul.f32 %v1438, 0.01
      %v1453 = vmul.f32 %v1439, 0.01
      %v1454 = vmul.f32 %v1440, 0.01
      %v1455 = vmul.f32 %v1441, 0.01
      %v1456 = vmul.f32 %v1442, 0.01
      %v1457 = vsel %vm1443, %v1436, %v1450
      %v1458 = vsel %vm1444, %v1437, %v1451
      %v1459 = vsel %vm1445, %v1438, %v1452
      %v1460 = vsel %vm1446, %v1439, %v1453
      %v1461 = vsel %vm1447, %v1440, %v1454
      %v1462 = vsel %vm1448, %v1441, %v1455
      %v1463 = vsel %vm1449, %v1442, %v1456
      %v1464 = vld [vmem:[%s5] sm:$0xff]
      %v1465 = vld [vmem:[%s5 + $0x8] sm:$0xff]
      %v1466 = vld [vmem:[%s5 + $0x10] sm:$0xff]
      %v1467 = vld [vmem:[%s6] sm:$0x3]
      %v1475 = vrot.slane %v1457, 7
      %v1476 = vrot.slane %v1458, 7
      %v1477 = vsel %vm897, %v1475, %v1476
      %v1478 = vrot.slane %v1459, 7
      %v1479 = vsel %vm897, %v1476, %v1478
      %v1480 = vrot.slane %v1460, 7
      %v1481 = vsel %vm897, %v1478, %v1480
      %v1482 = vrot.slane %v1461, 7
      %v1483 = vsel %vm897, %v1480, %v1482
      %v1484 = vrot.slane %v1462, 7
      %v1485 = vsel %vm897, %v1482, %v1484
      %v1486 = vrot.slane %v1463, 7
      %v1487 = vsel %vm897, %v1484, %v1486
      %v1495 = vsel %vm897, 0.0, %v1475
      %v1496 = vsel %vm919, %v1487, 0.0
      %v1499 = vrot.slane %v1495, 1
      %v1500 = vrot.slane %v1477, 1
      %v1501 = vsel %vm923, %v1499, %v1500
      %v1502 = vrot.slane %v1479, 1
      %v1503 = vsel %vm923, %v1500, %v1502
      %v1504 = vrot.slane %v1481, 1
      %v1505 = vsel %vm923, %v1502, %v1504
      %v1506 = vrot.slane %v1483, 1
      %v1507 = vsel %vm923, %v1504, %v1506
      %v1508 = vrot.slane %v1485, 1
      %v1509 = vsel %vm923, %v1506, %v1508
      %v1510 = vrot.slane %v1496, 1
      %v1511 = vsel %vm923, %v1508, %v1510
      %1512 = vrot.lane.b32.xlu0 %v1501, 8
      %v1513 = vpop.permute.xlu0 %1512
      %1514 = vrot.lane.b32.xlu0 %v1503, 8
      %v1515 = vpop.permute.xlu0 %1514
      %1516 = vrot.lane.b32.xlu0 %v1505, 8
      %v1517 = vpop.permute.xlu0 %1516
      %1518 = vrot.lane.b32.xlu0 %v1507, 8
      %v1519 = vpop.permute.xlu0 %1518
      %1520 = vrot.lane.b32.xlu0 %v1509, 8
      %v1521 = vpop.permute.xlu0 %1520
      %1522 = vrot.lane.b32.xlu0 %v1511, 8
      %v1523 = vpop.permute.xlu0 %1522
      %1524 = vrot.lane.b32.xlu0 %v1510, 8
      %v1525 = vpop.permute.xlu0 %1524
      %v1533 = vrot.slane %v1495, 2
      %v1534 = vrot.slane %v1477, 2
      %v1535 = vsel %vm958, %v1533, %v1534
      %v1536 = vrot.slane %v1479, 2
      %v1537 = vsel %vm958, %v1534, %v1536
      %v1538 = vrot.slane %v1481, 2
      %v1539 = vsel %vm958, %v1536, %v1538
      %v1540 = vrot.slane %v1483, 2
      %v1541 = vsel %vm958, %v1538, %v1540
      %v1542 = vrot.slane %v1485, 2
      %v1543 = vsel %vm958, %v1540, %v1542
      %v1544 = vrot.slane %v1496, 2
      %v1545 = vsel %vm958, %v1542, %v1544
      %1546 = vrot.lane.b32.xlu0 %v1535, 16
      %v1547 = vpop.permute.xlu0 %1546
      %1548 = vrot.lane.b32.xlu0 %v1537, 16
      %v1549 = vpop.permute.xlu0 %1548
      %1550 = vrot.lane.b32.xlu0 %v1539, 16
      %v1551 = vpop.permute.xlu0 %1550
      %1552 = vrot.lane.b32.xlu0 %v1541, 16
      %v1553 = vpop.permute.xlu0 %1552
      %1554 = vrot.lane.b32.xlu0 %v1543, 16
      %v1555 = vpop.permute.xlu0 %1554
      %1556 = vrot.lane.b32.xlu0 %v1545, 16
      %v1557 = vpop.permute.xlu0 %1556
      %1558 = vrot.lane.b32.xlu0 %v1544, 16
      %v1559 = vpop.permute.xlu0 %1558
      %vm1567 = vcmask 64512
      %v1568 = vsel %vm1567, %v1495, %v1513
      %v1569 = vsel %vm1567, %v1477, %v1515
      %v1570 = vsel %vm1567, %v1479, %v1517
      %v1571 = vsel %vm1567, %v1481, %v1519
      %v1572 = vsel %vm1567, %v1483, %v1521
      %v1573 = vsel %vm1567, %v1485, %v1523
      %v1574 = vsel %vm1567, %v1496, %v1525
      %v1575 = vsel %vm1283, %v1568, %v1547
      %v1576 = vsel %vm1283, %v1569, %v1549
      %v1577 = vsel %vm1283, %v1570, %v1551
      %v1578 = vsel %vm1283, %v1571, %v1553
      %v1579 = vsel %vm1283, %v1572, %v1555
      %v1580 = vsel %vm1283, %v1573, %v1557
      %v1581 = vsel %vm1283, %v1574, %v1559
      %vm1582 = vcmask 195584
      %v1584 = vsel %vm1582, %v1575, 0
      %v1587 = vsel %vm1582, %v1576, 0
      %v1590 = vsel %vm1582, %v1577, 0
      %v1593 = vsel %vm1582, %v1578, 0
      %v1596 = vsel %vm1582, %v1579, 0
      %v1599 = vsel %vm1582, %v1580, 0
      %v1602 = vsel %vm1582, %v1581, 0
      %1604 = vmatprep.subr.mxu0 0.0
      %1605 = vmatpush1.msra.mxu0 0.0
      %1606 = vmatprep.subr.mxu0 0.0
      %1607 = vmatpush1.msra.mxu0 0.0
      %1608 = vmatprep.subr.mxu0 0.0
      %1609 = vmatpush1.msra.mxu0 0.0
      %1610 = vmatprep.subr.mxu0 0.0
      %1611 = vmatpush1.msra.mxu0 0.0
      %1612 = vmatprep.subr.mxu0 0.0
      %1613 = vmatpush1.msra.mxu0 0.0
      %1614 = vmatprep.subr.mxu0 0.0
      %1615 = vmatpush1.msra.mxu0 0.0
      %1616 = vmatprep.subr.mxu0 0.0
      %1617 = vmatpush1.msra.mxu0 0.0
      %1618 = vmatprep.subr.mxu0 0.0
      %1619 = vmatpush1.msra.mxu0 0.0
      %1620 = vmatprep.subr.mxu0 0.0
      %1621 = vmatpush1.msra.mxu0 0.0
      %1622 = vmatprep.subr.mxu0 0.0
      %1623 = vmatpush1.msra.mxu0 0.0
      %1624 = vmatprep.subr.mxu0 0.0
      %1625 = vmatpush1.msra.mxu0 0.0
      %1626 = vmatprep.subr.mxu0 0.0
      %1627 = vmatpush1.msra.mxu0 0.0
      %1628 = vmatprep.subr.mxu0 0.0
      %1629 = vmatpush1.msra.mxu0 0.0
      %1630 = vmatprep.subr.mxu0 0.0
      %1631 = vmatpush1.msra.mxu0 %v1466
      %1632 = vmatprep.subr.mxu0 0.0
      %1633 = vmatpush1.msra.mxu0 %v1465
      %1634 = vmatprep.subr.mxu0 0.0
      %1635 = vmatpush1.msra.mxu0 %v1464
      %1636 = vmatprep.subr.mxu0 0.0
      %1637 = vmatpush2.msra.mxu0 0.0
      %1638 = vmatprep.subr.mxu0 0.0
      %1639 = vmatpush2.msra.mxu0 0.0
      %1640 = vmatprep.subr.mxu0 0.0
      %1641 = vmatpush2.msra.mxu0 0.0
      %1642 = vmatprep.subr.mxu0 0.0
      %1643 = vmatpush2.msra.mxu0 0.0
      %1644 = vmatprep.subr.mxu0 0.0
      %1645 = vmatpush2.msra.mxu0 0.0
      %1646 = vmatprep.subr.mxu0 0.0
      %1647 = vmatpush2.msra.mxu0 0.0
      %1648 = vmatprep.subr.mxu0 0.0
      %1649 = vmatpush2.msra.mxu0 0.0
      %1650 = vmatprep.subr.mxu0 0.0
      %1651 = vmatpush2.msra.mxu0 0.0
      %1652 = vmatprep.subr.mxu0 0.0
      %1653 = vmatpush2.msra.mxu0 0.0
      %1654 = vmatprep.subr.mxu0 0.0
      %1655 = vmatpush2.msra.mxu0 0.0
      %1656 = vmatprep.subr.mxu0 0.0
      %1657 = vmatpush2.msra.mxu0 0.0
      %1658 = vmatprep.subr.mxu0 0.0
      %1659 = vmatpush2.msra.mxu0 0.0
      %1660 = vmatprep.subr.mxu0 0.0
      %1661 = vmatpush2.msra.mxu0 0.0
      %1662 = vmatprep.subr.mxu0 0.0
      %1663 = vmatpush2.msra.mxu0 0.0
      %1664 = vmatprep.subr.mxu0 0.0
      %1665 = vmatpush2.msra.mxu0 0.0
      %1666 = vmatprep.subr.mxu0 0.0
      %1667 = vmatpush2.msra.mxu0 0.0
      %1668 = vmatprep.mubr.f32.mxu0 0.0
      %1669 = vmatmul.mubr.f32.gmra.mxu0 %v1584
      %v1670 = vpop.f32.mrf.mxu0
      %v1671 = vadd.f32 0.0, %v1670
      %v1672 = vpop.f32.mrf.mxu0
      %1673 = vmatprep.mubr.f32.mxu0 0.0
      %1674 = vmatmul.mubr.f32.gmra.mxu0 %v1587
      %v1675 = vpop.f32.mrf.mxu0
      %v1676 = vadd.f32 0.0, %v1675
      %v1677 = vpop.f32.mrf.mxu0
      %1678 = vmatprep.mubr.f32.mxu0 0.0
      %1679 = vmatmul.mubr.f32.gmra.mxu0 %v1590
      %v1680 = vpop.f32.mrf.mxu0
      %v1681 = vadd.f32 0.0, %v1680
      %v1682 = vpop.f32.mrf.mxu0
      %1683 = vmatprep.mubr.f32.mxu0 0.0
      %1684 = vmatmul.mubr.f32.gmra.mxu0 %v1593
      %v1685 = vpop.f32.mrf.mxu0
      %v1686 = vadd.f32 0.0, %v1685
      %v1687 = vpop.f32.mrf.mxu0
      %1688 = vmatprep.mubr.f32.mxu0 0.0
      %1689 = vmatmul.mubr.f32.gmra.mxu0 %v1596
      %v1690 = vpop.f32.mrf.mxu0
      %v1691 = vadd.f32 0.0, %v1690
      %v1692 = vpop.f32.mrf.mxu0
      %1693 = vmatprep.mubr.f32.mxu0 0.0
      %1694 = vmatmul.mubr.f32.gmra.mxu0 %v1599
      %v1695 = vpop.f32.mrf.mxu0
      %v1696 = vadd.f32 0.0, %v1695
      %v1697 = vpop.f32.mrf.mxu0
      %1698 = vmatprep.mubr.f32.mxu0 0.0
      %1699 = vmatmul.mubr.f32.gmra.mxu0 %v1602
      %v1700 = vpop.f32.mrf.mxu0
      %v1701 = vadd.f32 0.0, %v1700
      %v1702 = vpop.f32.mrf.mxu0
      %1703 = vdwg.mxu0
      %v1704 = vlaneseq
      %v1705 = vshrl.u32 %v1704, 7
      %v1706 = vsub.s32 0, %v1705
      %v1707 = vrot.slane %v1467, %v1706
      %v1708 = vmul.f32 %v1671, %v1707
      %v1709 = vmul.f32 %v1676, %v1707
      %v1710 = vmul.f32 %v1681, %v1707
      %v1711 = vmul.f32 %v1686, %v1707
      %v1712 = vmul.f32 %v1691, %v1707
      %v1713 = vmul.f32 %v1696, %v1707
      %v1714 = vmul.f32 %v1701, %v1707
      %v1715 = vlaneseq
      %v1716 = vshrl.u32 %v1715, 7
      %v1717 = vsub.s32 1, %v1716
      %v1718 = vrot.slane %v1467, %v1717
      %v1719 = vadd.f32 %v1708, %v1718
      %v1720 = vadd.f32 %v1709, %v1718
      %v1721 = vadd.f32 %v1710, %v1718
      %v1722 = vadd.f32 %v1711, %v1718
      %v1723 = vadd.f32 %v1712, %v1718
      %v1724 = vadd.f32 %v1713, %v1718
      %v1725 = vadd.f32 %v1714, %v1718
      %vm1726 = vcmp.ge.f32.partialorder %v1719, 0.0
      %vm1727 = vcmp.ge.f32.partialorder %v1720, 0.0
      %vm1728 = vcmp.ge.f32.partialorder %v1721, 0.0
      %vm1729 = vcmp.ge.f32.partialorder %v1722, 0.0
      %vm1730 = vcmp.ge.f32.partialorder %v1723, 0.0
      %vm1731 = vcmp.ge.f32.partialorder %v1724, 0.0
      %vm1732 = vcmp.ge.f32.partialorder %v1725, 0.0
      %v1733 = vmul.f32 %v1719, 0.01
      %v1734 = vmul.f32 %v1720, 0.01
      %v1735 = vmul.f32 %v1721, 0.01
      %v1736 = vmul.f32 %v1722, 0.01
      %v1737 = vmul.f32 %v1723, 0.01
      %v1738 = vmul.f32 %v1724, 0.01
      %v1739 = vmul.f32 %v1725, 0.01
      %v1740 = vsel %vm1726, %v1719, %v1733
      %v1741 = vsel %vm1727, %v1720, %v1734
      %v1742 = vsel %vm1728, %v1721, %v1735
      %v1743 = vsel %vm1729, %v1722, %v1736
      %v1744 = vsel %vm1730, %v1723, %v1737
      %v1745 = vsel %vm1731, %v1724, %v1738
      %v1746 = vsel %vm1732, %v1725, %v1739
      %v1747 = vld [vmem:[%s7] sm:$0xff]
      %v1748 = vld [vmem:[%s7 + $0x8] sm:$0xff]
      %v1749 = vld [vmem:[%s7 + $0x10] sm:$0xff]
      %v1750 = vld [vmem:[%s7 + $0x18] sm:$0xff]
      %v1751 = vld [vmem:[%s7 + $0x20] sm:$0xff]
      %v1752 = vld [vmem:[%s7 + $0x28] sm:$0xff]
      %v1753 = vld [vmem:[%s8] sm:$0x3]
      %1754 = vmatprep.subr.mxu0 0.0
      %1755 = vmatpush1.msra.mxu0 0.0
      %1756 = vmatprep.subr.mxu0 0.0
      %1757 = vmatpush1.msra.mxu0 0.0
      %1758 = vmatprep.subr.mxu0 0.0
      %1759 = vmatpush1.msra.mxu0 0.0
      %1760 = vmatprep.subr.mxu0 0.0
      %1761 = vmatpush1.msra.mxu0 0.0
      %1762 = vmatprep.subr.mxu0 0.0
      %1763 = vmatpush1.msra.mxu0 0.0
      %1764 = vmatprep.subr.mxu0 0.0
      %1765 = vmatpush1.msra.mxu0 0.0
      %1766 = vmatprep.subr.mxu0 0.0
      %1767 = vmatpush1.msra.mxu0 0.0
      %1768 = vmatprep.subr.mxu0 0.0
      %1769 = vmatpush1.msra.mxu0 0.0
      %1770 = vmatprep.subr.mxu0 0.0
      %1771 = vmatpush1.msra.mxu0 0.0
      %1772 = vmatprep.subr.mxu0 0.0
      %1773 = vmatpush1.msra.mxu0 0.0
      %1774 = vmatprep.subr.mxu0 0.0
      %1775 = vmatpush1.msra.mxu0 %v1752
      %1776 = vmatprep.subr.mxu0 0.0
      %1777 = vmatpush1.msra.mxu0 %v1751
      %1778 = vmatprep.subr.mxu0 0.0
      %1779 = vmatpush1.msra.mxu0 %v1750
      %1780 = vmatprep.subr.mxu0 0.0
      %1781 = vmatpush1.msra.mxu0 %v1749
      %1782 = vmatprep.subr.mxu0 0.0
      %1783 = vmatpush1.msra.mxu0 %v1748
      %1784 = vmatprep.subr.mxu0 0.0
      %1785 = vmatpush1.msra.mxu0 %v1747
      %1786 = vmatprep.subr.mxu0 0.0
      %1787 = vmatpush2.msra.mxu0 0.0
      %1788 = vmatprep.subr.mxu0 0.0
      %1789 = vmatpush2.msra.mxu0 0.0
      %1790 = vmatprep.subr.mxu0 0.0
      %1791 = vmatpush2.msra.mxu0 0.0
      %1792 = vmatprep.subr.mxu0 0.0
      %1793 = vmatpush2.msra.mxu0 0.0
      %1794 = vmatprep.subr.mxu0 0.0
      %1795 = vmatpush2.msra.mxu0 0.0
      %1796 = vmatprep.subr.mxu0 0.0
      %1797 = vmatpush2.msra.mxu0 0.0
      %1798 = vmatprep.subr.mxu0 0.0
      %1799 = vmatpush2.msra.mxu0 0.0
      %1800 = vmatprep.subr.mxu0 0.0
      %1801 = vmatpush2.msra.mxu0 0.0
      %1802 = vmatprep.subr.mxu0 0.0
      %1803 = vmatpush2.msra.mxu0 0.0
      %1804 = vmatprep.subr.mxu0 0.0
      %1805 = vmatpush2.msra.mxu0 0.0
      %1806 = vmatprep.subr.mxu0 0.0
      %1807 = vmatpush2.msra.mxu0 0.0
      %1808 = vmatprep.subr.mxu0 0.0
      %1809 = vmatpush2.msra.mxu0 0.0
      %1810 = vmatprep.subr.mxu0 0.0
      %1811 = vmatpush2.msra.mxu0 0.0
      %1812 = vmatprep.subr.mxu0 0.0
      %1813 = vmatpush2.msra.mxu0 0.0
      %1814 = vmatprep.subr.mxu0 0.0
      %1815 = vmatpush2.msra.mxu0 0.0
      %1816 = vmatprep.subr.mxu0 0.0
      %1817 = vmatpush2.msra.mxu0 0.0
      %1818 = vmatprep.mubr.f32.mxu0 0.0
      %1819 = vmatmul.mubr.f32.gmra.mxu0 %v1301
      %v1820 = vpop.f32.mrf.mxu0
      %v1821 = vadd.f32 0.0, %v1820
      %v1822 = vpop.f32.mrf.mxu0
      %1823 = vmatprep.mubr.f32.mxu0 0.0
      %1824 = vmatmul.mubr.f32.gmra.mxu0 %v1304
      %v1825 = vpop.f32.mrf.mxu0
      %v1826 = vadd.f32 0.0, %v1825
      %v1827 = vpop.f32.mrf.mxu0
      %1828 = vmatprep.mubr.f32.mxu0 0.0
      %1829 = vmatmul.mubr.f32.gmra.mxu0 %v1307
      %v1830 = vpop.f32.mrf.mxu0
      %v1831 = vadd.f32 0.0, %v1830
      %v1832 = vpop.f32.mrf.mxu0
      %1833 = vmatprep.mubr.f32.mxu0 0.0
      %1834 = vmatmul.mubr.f32.gmra.mxu0 %v1310
      %v1835 = vpop.f32.mrf.mxu0
      %v1836 = vadd.f32 0.0, %v1835
      %v1837 = vpop.f32.mrf.mxu0
      %1838 = vmatprep.mubr.f32.mxu0 0.0
      %1839 = vmatmul.mubr.f32.gmra.mxu0 %v1313
      %v1840 = vpop.f32.mrf.mxu0
      %v1841 = vadd.f32 0.0, %v1840
      %v1842 = vpop.f32.mrf.mxu0
      %1843 = vmatprep.mubr.f32.mxu0 0.0
      %1844 = vmatmul.mubr.f32.gmra.mxu0 %v1316
      %v1845 = vpop.f32.mrf.mxu0
      %v1846 = vadd.f32 0.0, %v1845
      %v1847 = vpop.f32.mrf.mxu0
      %1848 = vmatprep.mubr.f32.mxu0 0.0
      %1849 = vmatmul.mubr.f32.gmra.mxu0 %v1319
      %v1850 = vpop.f32.mrf.mxu0
      %v1851 = vadd.f32 0.0, %v1850
      %v1852 = vpop.f32.mrf.mxu0
      %1853 = vdwg.mxu0
      %v1854 = vlaneseq
      %v1855 = vshrl.u32 %v1854, 7
      %v1856 = vsub.s32 0, %v1855
      %v1857 = vrot.slane %v1753, %v1856
      %v1858 = vmul.f32 %v1821, %v1857
      %v1859 = vmul.f32 %v1826, %v1857
      %v1860 = vmul.f32 %v1831, %v1857
      %v1861 = vmul.f32 %v1836, %v1857
      %v1862 = vmul.f32 %v1841, %v1857
      %v1863 = vmul.f32 %v1846, %v1857
      %v1864 = vmul.f32 %v1851, %v1857
      %v1865 = vlaneseq
      %v1866 = vshrl.u32 %v1865, 7
      %v1867 = vsub.s32 1, %v1866
      %v1868 = vrot.slane %v1753, %v1867
      %v1869 = vadd.f32 %v1858, %v1868
      %v1870 = vadd.f32 %v1859, %v1868
      %v1871 = vadd.f32 %v1860, %v1868
      %v1872 = vadd.f32 %v1861, %v1868
      %v1873 = vadd.f32 %v1862, %v1868
      %v1874 = vadd.f32 %v1863, %v1868
      %v1875 = vadd.f32 %v1864, %v1868
      %vm1876 = vcmp.ge.f32.partialorder %v1869, 0.0
      %vm1877 = vcmp.ge.f32.partialorder %v1870, 0.0
      %vm1878 = vcmp.ge.f32.partialorder %v1871, 0.0
      %vm1879 = vcmp.ge.f32.partialorder %v1872, 0.0
      %vm1880 = vcmp.ge.f32.partialorder %v1873, 0.0
      %vm1881 = vcmp.ge.f32.partialorder %v1874, 0.0
      %vm1882 = vcmp.ge.f32.partialorder %v1875, 0.0
      %v1883 = vmul.f32 %v1869, 0.01
      %v1884 = vmul.f32 %v1870, 0.01
      %v1885 = vmul.f32 %v1871, 0.01
      %v1886 = vmul.f32 %v1872, 0.01
      %v1887 = vmul.f32 %v1873, 0.01
      %v1888 = vmul.f32 %v1874, 0.01
      %v1889 = vmul.f32 %v1875, 0.01
      %v1890 = vsel %vm1876, %v1869, %v1883
      %v1891 = vsel %vm1877, %v1870, %v1884
      %v1892 = vsel %vm1878, %v1871, %v1885
      %v1893 = vsel %vm1879, %v1872, %v1886
      %v1894 = vsel %vm1880, %v1873, %v1887
      %v1895 = vsel %vm1881, %v1874, %v1888
      %v1896 = vsel %vm1882, %v1875, %v1889
      %v1897 = vadd.f32 %v1740, %v1890
      %v1898 = vadd.f32 %v1741, %v1891
      %v1899 = vadd.f32 %v1742, %v1892
      %v1900 = vadd.f32 %v1743, %v1893
      %v1901 = vadd.f32 %v1744, %v1894
      %v1902 = vadd.f32 %v1745, %v1895
      %v1903 = vadd.f32 %v1746, %v1896
      %v1904 = vld [vmem:[%s9] sm:$0xff]
      %v1905 = vld [vmem:[%s9 + $0x8] sm:$0xf]
      %v1906 = vld [vmem:[%s10] sm:$0x3]
      %v1914 = vrot.slane %v1897, 7
      %v1915 = vrot.slane %v1898, 7
      %v1916 = vsel %vm897, %v1914, %v1915
      %v1917 = vrot.slane %v1899, 7
      %v1918 = vsel %vm897, %v1915, %v1917
      %v1919 = vrot.slane %v1900, 7
      %v1920 = vsel %vm897, %v1917, %v1919
      %v1921 = vrot.slane %v1901, 7
      %v1922 = vsel %vm897, %v1919, %v1921
      %v1923 = vrot.slane %v1902, 7
      %v1924 = vsel %vm897, %v1921, %v1923
      %v1925 = vrot.slane %v1903, 7
      %v1926 = vsel %vm897, %v1923, %v1925
      %v1934 = vsel %vm897, 0.0, %v1914
      %v1935 = vsel %vm919, %v1926, 0.0
      %v1938 = vrot.slane %v1934, 1
      %v1939 = vrot.slane %v1916, 1
      %v1940 = vsel %vm923, %v1938, %v1939
      %v1941 = vrot.slane %v1918, 1
      %v1942 = vsel %vm923, %v1939, %v1941
      %v1943 = vrot.slane %v1920, 1
      %v1944 = vsel %vm923, %v1941, %v1943
      %v1945 = vrot.slane %v1922, 1
      %v1946 = vsel %vm923, %v1943, %v1945
      %v1947 = vrot.slane %v1924, 1
      %v1948 = vsel %vm923, %v1945, %v1947
      %v1949 = vrot.slane %v1935, 1
      %v1950 = vsel %vm923, %v1947, %v1949
      %1951 = vrot.lane.b32.xlu0 %v1940, 4
      %v1952 = vpop.permute.xlu0 %1951
      %1953 = vrot.lane.b32.xlu0 %v1942, 4
      %v1954 = vpop.permute.xlu0 %1953
      %1955 = vrot.lane.b32.xlu0 %v1944, 4
      %v1956 = vpop.permute.xlu0 %1955
      %1957 = vrot.lane.b32.xlu0 %v1946, 4
      %v1958 = vpop.permute.xlu0 %1957
      %1959 = vrot.lane.b32.xlu0 %v1948, 4
      %v1960 = vpop.permute.xlu0 %1959
      %1961 = vrot.lane.b32.xlu0 %v1950, 4
      %v1962 = vpop.permute.xlu0 %1961
      %1963 = vrot.lane.b32.xlu0 %v1949, 4
      %v1964 = vpop.permute.xlu0 %1963
      %v1972 = vrot.slane %v1934, 2
      %v1973 = vrot.slane %v1916, 2
      %v1974 = vsel %vm958, %v1972, %v1973
      %v1975 = vrot.slane %v1918, 2
      %v1976 = vsel %vm958, %v1973, %v1975
      %v1977 = vrot.slane %v1920, 2
      %v1978 = vsel %vm958, %v1975, %v1977
      %v1979 = vrot.slane %v1922, 2
      %v1980 = vsel %vm958, %v1977, %v1979
      %v1981 = vrot.slane %v1924, 2
      %v1982 = vsel %vm958, %v1979, %v1981
      %v1983 = vrot.slane %v1935, 2
      %v1984 = vsel %vm958, %v1981, %v1983
      %1985 = vrot.lane.b32.xlu0 %v1974, 8
      %v1986 = vpop.permute.xlu0 %1985
      %1987 = vrot.lane.b32.xlu0 %v1976, 8
      %v1988 = vpop.permute.xlu0 %1987
      %1989 = vrot.lane.b32.xlu0 %v1978, 8
      %v1990 = vpop.permute.xlu0 %1989
      %1991 = vrot.lane.b32.xlu0 %v1980, 8
      %v1992 = vpop.permute.xlu0 %1991
      %1993 = vrot.lane.b32.xlu0 %v1982, 8
      %v1994 = vpop.permute.xlu0 %1993
      %1995 = vrot.lane.b32.xlu0 %v1984, 8
      %v1996 = vpop.permute.xlu0 %1995
      %1997 = vrot.lane.b32.xlu0 %v1983, 8
      %v1998 = vpop.permute.xlu0 %1997
      %vm2006 = vcmask 31744
      %v2007 = vsel %vm2006, %v1934, %v1952
      %v2008 = vsel %vm2006, %v1916, %v1954
      %v2009 = vsel %vm2006, %v1918, %v1956
      %v2010 = vsel %vm2006, %v1920, %v1958
      %v2011 = vsel %vm2006, %v1922, %v1960
      %v2012 = vsel %vm2006, %v1924, %v1962
      %v2013 = vsel %vm2006, %v1935, %v1964
      %v2014 = vsel %vm1567, %v2007, %v1986
      %v2015 = vsel %vm1567, %v2008, %v1988
      %v2016 = vsel %vm1567, %v2009, %v1990
      %v2017 = vsel %vm1567, %v2010, %v1992
      %v2018 = vsel %vm1567, %v2011, %v1994
      %v2019 = vsel %vm1567, %v2012, %v1996
      %v2020 = vsel %vm1567, %v2013, %v1998
      %vm2021 = vcmask 97280
      %v2023 = vsel %vm2021, %v2014, 0
      %v2026 = vsel %vm2021, %v2015, 0
      %v2029 = vsel %vm2021, %v2016, 0
      %v2032 = vsel %vm2021, %v2017, 0
      %v2035 = vsel %vm2021, %v2018, 0
      %v2038 = vsel %vm2021, %v2019, 0
      %v2041 = vsel %vm2021, %v2020, 0
      %vm2043 = vcmask 1043456
      %v2045 = vsel %vm2043, %v1905, 0
      %2047 = vmatprep.subr.mxu0 0.0
      %2048 = vmatpush1.msra.mxu0 0.0
      %2049 = vmatprep.subr.mxu0 0.0
      %2050 = vmatpush1.msra.mxu0 0.0
      %2051 = vmatprep.subr.mxu0 0.0
      %2052 = vmatpush1.msra.mxu0 0.0
      %2053 = vmatprep.subr.mxu0 0.0
      %2054 = vmatpush1.msra.mxu0 0.0
      %2055 = vmatprep.subr.mxu0 0.0
      %2056 = vmatpush1.msra.mxu0 0.0
      %2057 = vmatprep.subr.mxu0 0.0
      %2058 = vmatpush1.msra.mxu0 0.0
      %2059 = vmatprep.subr.mxu0 0.0
      %2060 = vmatpush1.msra.mxu0 0.0
      %2061 = vmatprep.subr.mxu0 0.0
      %2062 = vmatpush1.msra.mxu0 0.0
      %2063 = vmatprep.subr.mxu0 0.0
      %2064 = vmatpush1.msra.mxu0 0.0
      %2065 = vmatprep.subr.mxu0 0.0
      %2066 = vmatpush1.msra.mxu0 0.0
      %2067 = vmatprep.subr.mxu0 0.0
      %2068 = vmatpush1.msra.mxu0 0.0
      %2069 = vmatprep.subr.mxu0 0.0
      %2070 = vmatpush1.msra.mxu0 0.0
      %2071 = vmatprep.subr.mxu0 0.0
      %2072 = vmatpush1.msra.mxu0 0.0
      %2073 = vmatprep.subr.mxu0 0.0
      %2074 = vmatpush1.msra.mxu0 0.0
      %2075 = vmatprep.subr.mxu0 0.0
      %2076 = vmatpush1.msra.mxu0 %v2045
      %2077 = vmatprep.subr.mxu0 0.0
      %2078 = vmatpush1.msra.mxu0 %v1904
      %2079 = vmatprep.subr.mxu0 0.0
      %2080 = vmatpush2.msra.mxu0 0.0
      %2081 = vmatprep.subr.mxu0 0.0
      %2082 = vmatpush2.msra.mxu0 0.0
      %2083 = vmatprep.subr.mxu0 0.0
      %2084 = vmatpush2.msra.mxu0 0.0
      %2085 = vmatprep.subr.mxu0 0.0
      %2086 = vmatpush2.msra.mxu0 0.0
      %2087 = vmatprep.subr.mxu0 0.0
      %2088 = vmatpush2.msra.mxu0 0.0
      %2089 = vmatprep.subr.mxu0 0.0
      %2090 = vmatpush2.msra.mxu0 0.0
      %2091 = vmatprep.subr.mxu0 0.0
      %2092 = vmatpush2.msra.mxu0 0.0
      %2093 = vmatprep.subr.mxu0 0.0
      %2094 = vmatpush2.msra.mxu0 0.0
      %2095 = vmatprep.subr.mxu0 0.0
      %2096 = vmatpush2.msra.mxu0 0.0
      %2097 = vmatprep.subr.mxu0 0.0
      %2098 = vmatpush2.msra.mxu0 0.0
      %2099 = vmatprep.subr.mxu0 0.0
      %2100 = vmatpush2.msra.mxu0 0.0
      %2101 = vmatprep.subr.mxu0 0.0
      %2102 = vmatpush2.msra.mxu0 0.0
      %2103 = vmatprep.subr.mxu0 0.0
      %2104 = vmatpush2.msra.mxu0 0.0
      %2105 = vmatprep.subr.mxu0 0.0
      %2106 = vmatpush2.msra.mxu0 0.0
      %2107 = vmatprep.subr.mxu0 0.0
      %2108 = vmatpush2.msra.mxu0 0.0
      %2109 = vmatprep.subr.mxu0 0.0
      %2110 = vmatpush2.msra.mxu0 0.0
      %2111 = vmatprep.mubr.f32.mxu0 0.0
      %2112 = vmatmul.mubr.f32.gmra.mxu0 %v2023
      %v2113 = vpop.f32.mrf.mxu0
      %v2114 = vadd.f32 0.0, %v2113
      %v2115 = vpop.f32.mrf.mxu0
      %2116 = vmatprep.mubr.f32.mxu0 0.0
      %2117 = vmatmul.mubr.f32.gmra.mxu0 %v2026
      %v2118 = vpop.f32.mrf.mxu0
      %v2119 = vadd.f32 0.0, %v2118
      %v2120 = vpop.f32.mrf.mxu0
      %2121 = vmatprep.mubr.f32.mxu0 0.0
      %2122 = vmatmul.mubr.f32.gmra.mxu0 %v2029
      %v2123 = vpop.f32.mrf.mxu0
      %v2124 = vadd.f32 0.0, %v2123
      %v2125 = vpop.f32.mrf.mxu0
      %2126 = vmatprep.mubr.f32.mxu0 0.0
      %2127 = vmatmul.mubr.f32.gmra.mxu0 %v2032
      %v2128 = vpop.f32.mrf.mxu0
      %v2129 = vadd.f32 0.0, %v2128
      %v2130 = vpop.f32.mrf.mxu0
      %2131 = vmatprep.mubr.f32.mxu0 0.0
      %2132 = vmatmul.mubr.f32.gmra.mxu0 %v2035
      %v2133 = vpop.f32.mrf.mxu0
      %v2134 = vadd.f32 0.0, %v2133
      %v2135 = vpop.f32.mrf.mxu0
      %2136 = vmatprep.mubr.f32.mxu0 0.0
      %2137 = vmatmul.mubr.f32.gmra.mxu0 %v2038
      %v2138 = vpop.f32.mrf.mxu0
      %v2139 = vadd.f32 0.0, %v2138
      %v2140 = vpop.f32.mrf.mxu0
      %2141 = vmatprep.mubr.f32.mxu0 0.0
      %2142 = vmatmul.mubr.f32.gmra.mxu0 %v2041
      %v2143 = vpop.f32.mrf.mxu0
      %v2144 = vadd.f32 0.0, %v2143
      %v2145 = vpop.f32.mrf.mxu0
      %2146 = vdwg.mxu0
      %v2147 = vlaneseq
      %v2148 = vshrl.u32 %v2147, 7
      %v2149 = vsub.s32 0, %v2148
      %v2150 = vrot.slane %v1906, %v2149
      %v2151 = vmul.f32 %v2114, %v2150
      %v2152 = vmul.f32 %v2119, %v2150
      %v2153 = vmul.f32 %v2124, %v2150
      %v2154 = vmul.f32 %v2129, %v2150
      %v2155 = vmul.f32 %v2134, %v2150
      %v2156 = vmul.f32 %v2139, %v2150
      %v2157 = vmul.f32 %v2144, %v2150
      %v2158 = vlaneseq
      %v2159 = vshrl.u32 %v2158, 7
      %v2160 = vsub.s32 1, %v2159
      %v2161 = vrot.slane %v1906, %v2160
      %v2162 = vadd.f32 %v2151, %v2161
      %v2163 = vadd.f32 %v2152, %v2161
      %v2164 = vadd.f32 %v2153, %v2161
      %v2165 = vadd.f32 %v2154, %v2161
      %v2166 = vadd.f32 %v2155, %v2161
      %v2167 = vadd.f32 %v2156, %v2161
      %v2168 = vadd.f32 %v2157, %v2161
      %v2169 = vxor.u32 %v2162, 2147483648
      %v2170 = vxor.u32 %v2163, 2147483648
      %v2171 = vxor.u32 %v2164, 2147483648
      %v2172 = vxor.u32 %v2165, 2147483648
      %v2173 = vxor.u32 %v2166, 2147483648
      %v2174 = vxor.u32 %v2167, 2147483648
      %v2175 = vxor.u32 %v2168, 2147483648
      %v2176 = vmul.f32 %v2169, 1.442695
      %v2177 = vpow.pop %v2176
      %v2178 = vmul.f32 %v2170, 1.442695
      %v2179 = vpow.pop %v2178
      %v2180 = vmul.f32 %v2171, 1.442695
      %v2181 = vpow.pop %v2180
      %v2182 = vmul.f32 %v2172, 1.442695
      %v2183 = vpow.pop %v2182
      %v2184 = vmul.f32 %v2173, 1.442695
      %v2185 = vpow.pop %v2184
      %v2186 = vmul.f32 %v2174, 1.442695
      %v2187 = vpow.pop %v2186
      %v2188 = vmul.f32 %v2175, 1.442695
      %v2189 = vpow.pop %v2188
      %v2190 = vadd.f32 %v2177, 1.0
      %v2191 = vadd.f32 %v2179, 1.0
      %v2192 = vadd.f32 %v2181, 1.0
      %v2193 = vadd.f32 %v2183, 1.0
      %v2194 = vadd.f32 %v2185, 1.0
      %v2195 = vadd.f32 %v2187, 1.0
      %v2196 = vadd.f32 %v2189, 1.0
      %v2197 = vrcp.pop %v2190
      %v2198 = vmul.f32 1.0, %v2197
      %v2199 = vrcp.pop %v2191
      %v2200 = vmul.f32 1.0, %v2199
      %v2201 = vrcp.pop %v2192
      %v2202 = vmul.f32 1.0, %v2201
      %v2203 = vrcp.pop %v2193
      %v2204 = vmul.f32 1.0, %v2203
      %v2205 = vrcp.pop %v2194
      %v2206 = vmul.f32 1.0, %v2205
      %v2207 = vrcp.pop %v2195
      %v2208 = vmul.f32 1.0, %v2207
      %v2209 = vrcp.pop %v2196
      %v2210 = vmul.f32 1.0, %v2209
      %v2211 = vld [vmem:[%s11] sm:$0xff]
      %v2212 = vld [vmem:[%s11 + $0x8] sm:$0xff]
      %v2213 = vld [vmem:[%s11 + $0x10] sm:$0xff]
      %v2214 = vld [vmem:[%s11 + $0x18] sm:$0xff]
      %v2215 = vld [vmem:[%s11 + $0x20] sm:$0xff]
      %v2216 = vld [vmem:[%s11 + $0x28] sm:$0xff]
      %v2217 = vld [vmem:[%s12] sm:$0x3]
      %2218 = vmatprep.subr.mxu0 0.0
      %2219 = vmatpush1.msra.mxu0 0.0
      %2220 = vmatprep.subr.mxu0 0.0
      %2221 = vmatpush1.msra.mxu0 0.0
      %2222 = vmatprep.subr.mxu0 0.0
      %2223 = vmatpush1.msra.mxu0 0.0
      %2224 = vmatprep.subr.mxu0 0.0
      %2225 = vmatpush1.msra.mxu0 0.0
      %2226 = vmatprep.subr.mxu0 0.0
      %2227 = vmatpush1.msra.mxu0 0.0
      %2228 = vmatprep.subr.mxu0 0.0
      %2229 = vmatpush1.msra.mxu0 0.0
      %2230 = vmatprep.subr.mxu0 0.0
      %2231 = vmatpush1.msra.mxu0 0.0
      %2232 = vmatprep.subr.mxu0 0.0
      %2233 = vmatpush1.msra.mxu0 0.0
      %2234 = vmatprep.subr.mxu0 0.0
      %2235 = vmatpush1.msra.mxu0 0.0
      %2236 = vmatprep.subr.mxu0 0.0
      %2237 = vmatpush1.msra.mxu0 0.0
      %2238 = vmatprep.subr.mxu0 0.0
      %2239 = vmatpush1.msra.mxu0 %v2216
      %2240 = vmatprep.subr.mxu0 0.0
      %2241 = vmatpush1.msra.mxu0 %v2215
      %2242 = vmatprep.subr.mxu0 0.0
      %2243 = vmatpush1.msra.mxu0 %v2214
      %2244 = vmatprep.subr.mxu0 0.0
      %2245 = vmatpush1.msra.mxu0 %v2213
      %2246 = vmatprep.subr.mxu0 0.0
      %2247 = vmatpush1.msra.mxu0 %v2212
      %2248 = vmatprep.subr.mxu0 0.0
      %2249 = vmatpush1.msra.mxu0 %v2211
      %2250 = vmatprep.subr.mxu0 0.0
      %2251 = vmatpush2.msra.mxu0 0.0
      %2252 = vmatprep.subr.mxu0 0.0
      %2253 = vmatpush2.msra.mxu0 0.0
      %2254 = vmatprep.subr.mxu0 0.0
      %2255 = vmatpush2.msra.mxu0 0.0
      %2256 = vmatprep.subr.mxu0 0.0
      %2257 = vmatpush2.msra.mxu0 0.0
      %2258 = vmatprep.subr.mxu0 0.0
      %2259 = vmatpush2.msra.mxu0 0.0
      %2260 = vmatprep.subr.mxu0 0.0
      %2261 = vmatpush2.msra.mxu0 0.0
      %2262 = vmatprep.subr.mxu0 0.0
      %2263 = vmatpush2.msra.mxu0 0.0
      %2264 = vmatprep.subr.mxu0 0.0
      %2265 = vmatpush2.msra.mxu0 0.0
      %2266 = vmatprep.subr.mxu0 0.0
      %2267 = vmatpush2.msra.mxu0 0.0
      %2268 = vmatprep.subr.mxu0 0.0
      %2269 = vmatpush2.msra.mxu0 0.0
      %2270 = vmatprep.subr.mxu0 0.0
      %2271 = vmatpush2.msra.mxu0 0.0
      %2272 = vmatprep.subr.mxu0 0.0
      %2273 = vmatpush2.msra.mxu0 0.0
      %2274 = vmatprep.subr.mxu0 0.0
      %2275 = vmatpush2.msra.mxu0 0.0
      %2276 = vmatprep.subr.mxu0 0.0
      %2277 = vmatpush2.msra.mxu0 0.0
      %2278 = vmatprep.subr.mxu0 0.0
      %2279 = vmatpush2.msra.mxu0 0.0
      %2280 = vmatprep.subr.mxu0 0.0
      %2281 = vmatpush2.msra.mxu0 0.0
      %2282 = vmatprep.mubr.f32.mxu0 0.0
      %2283 = vmatmul.mubr.f32.gmra.mxu0 %v1301
      %v2284 = vpop.f32.mrf.mxu0
      %v2285 = vadd.f32 0.0, %v2284
      %v2286 = vpop.f32.mrf.mxu0
      %2287 = vmatprep.mubr.f32.mxu0 0.0
      %2288 = vmatmul.mubr.f32.gmra.mxu0 %v1304
      %v2289 = vpop.f32.mrf.mxu0
      %v2290 = vadd.f32 0.0, %v2289
      %v2291 = vpop.f32.mrf.mxu0
      %2292 = vmatprep.mubr.f32.mxu0 0.0
      %2293 = vmatmul.mubr.f32.gmra.mxu0 %v1307
      %v2294 = vpop.f32.mrf.mxu0
      %v2295 = vadd.f32 0.0, %v2294
      %v2296 = vpop.f32.mrf.mxu0
      %2297 = vmatprep.mubr.f32.mxu0 0.0
      %2298 = vmatmul.mubr.f32.gmra.mxu0 %v1310
      %v2299 = vpop.f32.mrf.mxu0
      %v2300 = vadd.f32 0.0, %v2299
      %v2301 = vpop.f32.mrf.mxu0
      %2302 = vmatprep.mubr.f32.mxu0 0.0
      %2303 = vmatmul.mubr.f32.gmra.mxu0 %v1313
      %v2304 = vpop.f32.mrf.mxu0
      %v2305 = vadd.f32 0.0, %v2304
      %v2306 = vpop.f32.mrf.mxu0
      %2307 = vmatprep.mubr.f32.mxu0 0.0
      %2308 = vmatmul.mubr.f32.gmra.mxu0 %v1316
      %v2309 = vpop.f32.mrf.mxu0
      %v2310 = vadd.f32 0.0, %v2309
      %v2311 = vpop.f32.mrf.mxu0
      %2312 = vmatprep.mubr.f32.mxu0 0.0
      %2313 = vmatmul.mubr.f32.gmra.mxu0 %v1319
      %v2314 = vpop.f32.mrf.mxu0
      %v2315 = vadd.f32 0.0, %v2314
      %v2316 = vpop.f32.mrf.mxu0
      %2317 = vdwg.mxu0
      %v2318 = vlaneseq
      %v2319 = vshrl.u32 %v2318, 7
      %v2320 = vsub.s32 0, %v2319
      %v2321 = vrot.slane %v2217, %v2320
      %v2322 = vmul.f32 %v2285, %v2321
      %v2323 = vmul.f32 %v2290, %v2321
      %v2324 = vmul.f32 %v2295, %v2321
      %v2325 = vmul.f32 %v2300, %v2321
      %v2326 = vmul.f32 %v2305, %v2321
      %v2327 = vmul.f32 %v2310, %v2321
      %v2328 = vmul.f32 %v2315, %v2321
      %v2329 = vlaneseq
      %v2330 = vshrl.u32 %v2329, 7
      %v2331 = vsub.s32 1, %v2330
      %v2332 = vrot.slane %v2217, %v2331
      %v2333 = vadd.f32 %v2322, %v2332
      %v2334 = vadd.f32 %v2323, %v2332
      %v2335 = vadd.f32 %v2324, %v2332
      %v2336 = vadd.f32 %v2325, %v2332
      %v2337 = vadd.f32 %v2326, %v2332
      %v2338 = vadd.f32 %v2327, %v2332
      %v2339 = vadd.f32 %v2328, %v2332
      %v2340 = vxor.u32 %v2333, 2147483648
      %v2341 = vxor.u32 %v2334, 2147483648
      %v2342 = vxor.u32 %v2335, 2147483648
      %v2343 = vxor.u32 %v2336, 2147483648
      %v2344 = vxor.u32 %v2337, 2147483648
      %v2345 = vxor.u32 %v2338, 2147483648
      %v2346 = vxor.u32 %v2339, 2147483648
      %v2347 = vmul.f32 %v2340, 1.442695
      %v2348 = vpow.pop %v2347
      %v2349 = vmul.f32 %v2341, 1.442695
      %v2350 = vpow.pop %v2349
      %v2351 = vmul.f32 %v2342, 1.442695
      %v2352 = vpow.pop %v2351
      %v2353 = vmul.f32 %v2343, 1.442695
      %v2354 = vpow.pop %v2353
      %v2355 = vmul.f32 %v2344, 1.442695
      %v2356 = vpow.pop %v2355
      %v2357 = vmul.f32 %v2345, 1.442695
      %v2358 = vpow.pop %v2357
      %v2359 = vmul.f32 %v2346, 1.442695
      %v2360 = vpow.pop %v2359
      %v2361 = vadd.f32 %v2348, 1.0
      %v2362 = vadd.f32 %v2350, 1.0
      %v2363 = vadd.f32 %v2352, 1.0
      %v2364 = vadd.f32 %v2354, 1.0
      %v2365 = vadd.f32 %v2356, 1.0
      %v2366 = vadd.f32 %v2358, 1.0
      %v2367 = vadd.f32 %v2360, 1.0
      %v2368 = vrcp.pop %v2361
      %v2369 = vmul.f32 1.0, %v2368
      %v2370 = vrcp.pop %v2362
      %v2371 = vmul.f32 1.0, %v2370
      %v2372 = vrcp.pop %v2363
      %v2373 = vmul.f32 1.0, %v2372
      %v2374 = vrcp.pop %v2364
      %v2375 = vmul.f32 1.0, %v2374
      %v2376 = vrcp.pop %v2365
      %v2377 = vmul.f32 1.0, %v2376
      %v2378 = vrcp.pop %v2366
      %v2379 = vmul.f32 1.0, %v2378
      %v2380 = vrcp.pop %v2367
      %v2381 = vmul.f32 1.0, %v2380
      %v2382 = vadd.f32 %v2369, %v2198
      %v2383 = vadd.f32 %v2371, %v2200
      %v2384 = vadd.f32 %v2373, %v2202
      %v2385 = vadd.f32 %v2375, %v2204
      %v2386 = vadd.f32 %v2377, %v2206
      %v2387 = vadd.f32 %v2379, %v2208
      %v2388 = vadd.f32 %v2381, %v2210
      %v2389 = vsel %vm993, %v2382, -inf
      %v2390 = vsel %vm993, %v2383, -inf
      %v2391 = vsel %vm993, %v2384, -inf
      %v2392 = vsel %vm993, %v2385, -inf
      %v2393 = vsel %vm993, %v2386, -inf
      %v2394 = vmax.f32 %v2389, %v2393
      %v2395 = vsel %vm993, %v2387, -inf
      %v2396 = vmax.f32 %v2390, %v2395
      %vm2397 = vcmask 1024
      %v2398 = vsel %vm2397, %v2388, -inf
      %v2399 = vmax.f32 %v2391, %v2398
      %v2400 = vmax.f32 %v2394, %v2396
      %v2401 = vmax.f32 %v2399, %v2392
      %v2402 = vmax.f32 %v2400, %v2401
      %v2403 = vrot.slane %v2402, 4
      %v2404 = vmax.f32 %v2402, %v2403
      %v2405 = vrot.slane %v2404, 2
      %v2406 = vmax.f32 %v2404, %v2405
      %v2407 = vrot.slane %v2406, 1
      %v2408 = vmax.f32 %v2406, %v2407
      %v2409 = vsub.f32 %v2382, %v2408
      %v2410 = vsub.f32 %v2383, %v2408
      %v2411 = vsub.f32 %v2384, %v2408
      %v2412 = vsub.f32 %v2385, %v2408
      %v2413 = vsub.f32 %v2386, %v2408
      %v2414 = vsub.f32 %v2387, %v2408
      %v2415 = vsub.f32 %v2388, %v2408
      %v2416 = vmul.f32 %v2409, 1.442695
      %v2417 = vpow.pop %v2416
      %v2418 = vmul.f32 %v2410, 1.442695
      %v2419 = vpow.pop %v2418
      %v2420 = vmul.f32 %v2411, 1.442695
      %v2421 = vpow.pop %v2420
      %v2422 = vmul.f32 %v2412, 1.442695
      %v2423 = vpow.pop %v2422
      %v2424 = vmul.f32 %v2413, 1.442695
      %v2425 = vpow.pop %v2424
      %v2426 = vmul.f32 %v2414, 1.442695
      %v2427 = vpow.pop %v2426
      %v2428 = vmul.f32 %v2415, 1.442695
      %v2429 = vpow.pop %v2428
      %v2430 = vsel %vm993, %v2417, 0.0
      %v2431 = vsel %vm993, %v2419, 0.0
      %v2432 = vadd.f32 %v2430, %v2431
      %v2433 = vsel %vm993, %v2421, 0.0
      %v2434 = vadd.f32 %v2432, %v2433
      %v2435 = vsel %vm993, %v2423, 0.0
      %v2436 = vadd.f32 %v2434, %v2435
      %v2437 = vsel %vm993, %v2425, 0.0
      %v2438 = vadd.f32 %v2436, %v2437
      %v2439 = vsel %vm993, %v2427, 0.0
      %v2440 = vadd.f32 %v2438, %v2439
      %v2441 = vsel %vm2397, %v2429, 0.0
      %v2442 = vadd.f32 %v2440, %v2441
      %v2443 = vrot.slane %v2442, 4
      %v2444 = vadd.f32 %v2442, %v2443
      %v2445 = vrot.slane %v2444, 2
      %v2446 = vadd.f32 %v2444, %v2445
      %v2447 = vrot.slane %v2446, 1
      %v2448 = vadd.f32 %v2446, %v2447
      %v2449 = vrcp.pop %v2448
      %v2450 = vmul.f32 %v2417, %v2449
      %v2451 = vmul.f32 %v2419, %v2449
      %v2452 = vmul.f32 %v2421, %v2449
      %v2453 = vmul.f32 %v2423, %v2449
      %v2454 = vmul.f32 %v2425, %v2449
      %v2455 = vmul.f32 %v2427, %v2449
      %v2456 = vmul.f32 %v2429, %v2449
      %2458 = vset.pattern.permute.xlu0 0
      %2459 = vperm.xlu0 %2458, %v2450
      %v2460 = vpop.permute.xlu0 %2459
      %2463 = vset.pattern.permute.xlu0 0
      %2464 = vperm.xlu0 %2463, %v2451
      %v2465 = vpop.permute.xlu0 %2464
      %2468 = vset.pattern.permute.xlu0 0
      %2469 = vperm.xlu0 %2468, %v2452
      %v2470 = vpop.permute.xlu0 %2469
      %2473 = vset.pattern.permute.xlu0 0
      %2474 = vperm.xlu0 %2473, %v2453
      %v2475 = vpop.permute.xlu0 %2474
      %2478 = vset.pattern.permute.xlu0 0
      %2479 = vperm.xlu0 %2478, %v2454
      %v2480 = vpop.permute.xlu0 %2479
      %2483 = vset.pattern.permute.xlu0 0
      %2484 = vperm.xlu0 %2483, %v2455
      %v2485 = vpop.permute.xlu0 %2484
      %2488 = vset.pattern.permute.xlu0 0
      %2489 = vperm.xlu0 %2488, %v2456
      %v2490 = vpop.permute.xlu0 %2489
      %v2492 = vmul.f32 %v1170, %v2460
      %v2493 = vmul.f32 %v1171, %v2465
      %v2494 = vmul.f32 %v1172, %v2470
      %v2495 = vmul.f32 %v1173, %v2475
      %v2496 = vmul.f32 %v1174, %v2480
      %v2497 = vmul.f32 %v1175, %v2485
      %v2498 = vmul.f32 %v1176, %v2490
      %v2499 = vadd.f32 %v2492, %v1170
      %v2500 = vadd.f32 %v2493, %v1171
      %v2501 = vadd.f32 %v2494, %v1172
      %v2502 = vadd.f32 %v2495, %v1173
      %v2503 = vadd.f32 %v2496, %v1174
      %v2504 = vadd.f32 %v2497, %v1175
      %v2505 = vadd.f32 %v2498, %v1176
      %v2506 = vld [vmem:[%s13] sm:$0xff]
      %v2507 = vld [vmem:[%s13 + $0x8] sm:$0xff]
      %v2508 = vld [vmem:[%s13 + $0x10] sm:$0xff]
      %v2509 = vld [vmem:[%s13 + $0x18] sm:$0xff]
      %v2510 = vld [vmem:[%s13 + $0x20] sm:$0xff]
      %v2511 = vld [vmem:[%s13 + $0x28] sm:$0xff]
      %v2512 = vld [vmem:[%s13 + $0x30] sm:$0xff]
      %v2513 = vld [vmem:[%s13 + $0x38] sm:$0xff]
      %v2514 = vld [vmem:[%s13 + $0x40] sm:$0xff]
      %v2515 = vld [vmem:[%s13 + $0x48] sm:$0xff]
      %v2516 = vld [vmem:[%s13 + $0x50] sm:$0xff]
      %v2517 = vld [vmem:[%s13 + $0x58] sm:$0xff]
      %v2518 = vld [vmem:[%s13 + $0x60] sm:$0xff]
      %v2519 = vld [vmem:[%s13 + $0x68] sm:$0xff]
      %v2520 = vld [vmem:[%s13 + $0x70] sm:$0xff]
      %v2521 = vld [vmem:[%s13 + $0x78] sm:$0xff]
      %v2522 = vld [vmem:[%s13 + $0x80] sm:$0xff]
      %v2523 = vld [vmem:[%s13 + $0x88] sm:$0xff]
      %v2524 = vld [vmem:[%s14] sm:$0x3]
      %v2532 = vrot.slane %v2499, 4
      %v2533 = vrot.slane %v2500, 4
      %v2534 = vsel %vm2043, %v2532, %v2533
      %v2535 = vrot.slane %v2501, 4
      %v2536 = vsel %vm2043, %v2533, %v2535
      %v2537 = vrot.slane %v2502, 4
      %v2538 = vsel %vm2043, %v2535, %v2537
      %v2539 = vrot.slane %v2503, 4
      %v2540 = vsel %vm2043, %v2537, %v2539
      %v2541 = vrot.slane %v2504, 4
      %v2542 = vsel %vm2043, %v2539, %v2541
      %v2543 = vrot.slane %v2505, 4
      %v2544 = vsel %vm2043, %v2541, %v2543
      %v2552 = vsel %vm2043, 0.0, %v2532
      %v2553 = vsel %vm958, %v2544, 0.0
      %v2556 = vrot.slane %v2552, 1
      %v2557 = vrot.slane %v2534, 1
      %v2558 = vsel %vm923, %v2556, %v2557
      %v2559 = vrot.slane %v2536, 1
      %v2560 = vsel %vm923, %v2557, %v2559
      %v2561 = vrot.slane %v2538, 1
      %v2562 = vsel %vm923, %v2559, %v2561
      %v2563 = vrot.slane %v2540, 1
      %v2564 = vsel %vm923, %v2561, %v2563
      %v2565 = vrot.slane %v2542, 1
      %v2566 = vsel %vm923, %v2563, %v2565
      %v2567 = vrot.slane %v2553, 1
      %v2568 = vsel %vm923, %v2565, %v2567
      %2569 = vrot.lane.b32.xlu0 %v2558, 16
      %v2570 = vpop.permute.xlu0 %2569
      %2571 = vrot.lane.b32.xlu0 %v2560, 16
      %v2572 = vpop.permute.xlu0 %2571
      %2573 = vrot.lane.b32.xlu0 %v2562, 16
      %v2574 = vpop.permute.xlu0 %2573
      %2575 = vrot.lane.b32.xlu0 %v2564, 16
      %v2576 = vpop.permute.xlu0 %2575
      %2577 = vrot.lane.b32.xlu0 %v2566, 16
      %v2578 = vpop.permute.xlu0 %2577
      %2579 = vrot.lane.b32.xlu0 %v2568, 16
      %v2580 = vpop.permute.xlu0 %2579
      %2581 = vrot.lane.b32.xlu0 %v2567, 16
      %v2582 = vpop.permute.xlu0 %2581
      %v2590 = vrot.slane %v2552, 2
      %v2591 = vrot.slane %v2534, 2
      %v2592 = vsel %vm958, %v2590, %v2591
      %v2593 = vrot.slane %v2536, 2
      %v2594 = vsel %vm958, %v2591, %v2593
      %v2595 = vrot.slane %v2538, 2
      %v2596 = vsel %vm958, %v2593, %v2595
      %v2597 = vrot.slane %v2540, 2
      %v2598 = vsel %vm958, %v2595, %v2597
      %v2599 = vrot.slane %v2542, 2
      %v2600 = vsel %vm958, %v2597, %v2599
      %v2601 = vrot.slane %v2553, 2
      %v2602 = vsel %vm958, %v2599, %v2601
      %2603 = vrot.lane.b32.xlu0 %v2592, 32
      %v2604 = vpop.permute.xlu0 %2603
      %2605 = vrot.lane.b32.xlu0 %v2594, 32
      %v2606 = vpop.permute.xlu0 %2605
      %2607 = vrot.lane.b32.xlu0 %v2596, 32
      %v2608 = vpop.permute.xlu0 %2607
      %2609 = vrot.lane.b32.xlu0 %v2598, 32
      %v2610 = vpop.permute.xlu0 %2609
      %2611 = vrot.lane.b32.xlu0 %v2600, 32
      %v2612 = vpop.permute.xlu0 %2611
      %2613 = vrot.lane.b32.xlu0 %v2602, 32
      %v2614 = vpop.permute.xlu0 %2613
      %2615 = vrot.lane.b32.xlu0 %v2601, 32
      %v2616 = vpop.permute.xlu0 %2615
      %vm2624 = vcmask 1044480
      %v2625 = vrot.slane %v2552, 3
      %v2626 = vrot.slane %v2534, 3
      %v2627 = vsel %vm2624, %v2625, %v2626
      %v2628 = vrot.slane %v2536, 3
      %v2629 = vsel %vm2624, %v2626, %v2628
      %v2630 = vrot.slane %v2538, 3
      %v2631 = vsel %vm2624, %v2628, %v2630
      %v2632 = vrot.slane %v2540, 3
      %v2633 = vsel %vm2624, %v2630, %v2632
      %v2634 = vrot.slane %v2542, 3
      %v2635 = vsel %vm2624, %v2632, %v2634
      %v2636 = vrot.slane %v2553, 3
      %v2637 = vsel %vm2624, %v2634, %v2636
      %2638 = vrot.lane.b32.xlu0 %v2627, 48
      %v2639 = vpop.permute.xlu0 %2638
      %2640 = vrot.lane.b32.xlu0 %v2629, 48
      %v2641 = vpop.permute.xlu0 %2640
      %2642 = vrot.lane.b32.xlu0 %v2631, 48
      %v2643 = vpop.permute.xlu0 %2642
      %2644 = vrot.lane.b32.xlu0 %v2633, 48
      %v2645 = vpop.permute.xlu0 %2644
      %2646 = vrot.lane.b32.xlu0 %v2635, 48
      %v2647 = vpop.permute.xlu0 %2646
      %2648 = vrot.lane.b32.xlu0 %v2637, 48
      %v2649 = vpop.permute.xlu0 %2648
      %2650 = vrot.lane.b32.xlu0 %v2636, 48
      %v2651 = vpop.permute.xlu0 %2650
      %v2659 = vrot.slane %v2552, 4
      %v2660 = vrot.slane %v2534, 4
      %v2661 = vsel %vm2043, %v2659, %v2660
      %v2662 = vrot.slane %v2536, 4
      %v2663 = vsel %vm2043, %v2660, %v2662
      %v2664 = vrot.slane %v2538, 4
      %v2665 = vsel %vm2043, %v2662, %v2664
      %v2666 = vrot.slane %v2540, 4
      %v2667 = vsel %vm2043, %v2664, %v2666
      %v2668 = vrot.slane %v2542, 4
      %v2669 = vsel %vm2043, %v2666, %v2668
      %v2670 = vrot.slane %v2553, 4
      %v2671 = vsel %vm2043, %v2668, %v2670
      %2672 = vrot.lane.b32.xlu0 %v2661, 64
      %v2673 = vpop.permute.xlu0 %2672
      %2674 = vrot.lane.b32.xlu0 %v2663, 64
      %v2675 = vpop.permute.xlu0 %2674
      %2676 = vrot.lane.b32.xlu0 %v2665, 64
      %v2677 = vpop.permute.xlu0 %2676
      %2678 = vrot.lane.b32.xlu0 %v2667, 64
      %v2679 = vpop.permute.xlu0 %2678
      %2680 = vrot.lane.b32.xlu0 %v2669, 64
      %v2681 = vpop.permute.xlu0 %2680
      %2682 = vrot.lane.b32.xlu0 %v2671, 64
      %v2683 = vpop.permute.xlu0 %2682
      %2684 = vrot.lane.b32.xlu0 %v2670, 64
      %v2685 = vpop.permute.xlu0 %2684
      %v2693 = vrot.slane %v2552, 5
      %v2694 = vrot.slane %v2534, 5
      %v2695 = vsel %vm919, %v2693, %v2694
      %v2696 = vrot.slane %v2536, 5
      %v2697 = vsel %vm919, %v2694, %v2696
      %v2698 = vrot.slane %v2538, 5
      %v2699 = vsel %vm919, %v2696, %v2698
      %v2700 = vrot.slane %v2540, 5
      %v2701 = vsel %vm919, %v2698, %v2700
      %v2702 = vrot.slane %v2542, 5
      %v2703 = vsel %vm919, %v2700, %v2702
      %v2704 = vrot.slane %v2553, 5
      %v2705 = vsel %vm919, %v2702, %v2704
      %2706 = vrot.lane.b32.xlu0 %v2695, 80
      %v2707 = vpop.permute.xlu0 %2706
      %2708 = vrot.lane.b32.xlu0 %v2697, 80
      %v2709 = vpop.permute.xlu0 %2708
      %2710 = vrot.lane.b32.xlu0 %v2699, 80
      %v2711 = vpop.permute.xlu0 %2710
      %2712 = vrot.lane.b32.xlu0 %v2701, 80
      %v2713 = vpop.permute.xlu0 %2712
      %2714 = vrot.lane.b32.xlu0 %v2703, 80
      %v2715 = vpop.permute.xlu0 %2714
      %2716 = vrot.lane.b32.xlu0 %v2705, 80
      %v2717 = vpop.permute.xlu0 %2716
      %2718 = vrot.lane.b32.xlu0 %v2704, 80
      %v2719 = vpop.permute.xlu0 %2718
      %vm2727 = vcmask 1041408
      %v2728 = vrot.slane %v2552, 6
      %v2729 = vrot.slane %v2534, 6
      %v2730 = vsel %vm2727, %v2728, %v2729
      %v2731 = vrot.slane %v2536, 6
      %v2732 = vsel %vm2727, %v2729, %v2731
      %v2733 = vrot.slane %v2538, 6
      %v2734 = vsel %vm2727, %v2731, %v2733
      %v2735 = vrot.slane %v2540, 6
      %v2736 = vsel %vm2727, %v2733, %v2735
      %v2737 = vrot.slane %v2542, 6
      %v2738 = vsel %vm2727, %v2735, %v2737
      %v2739 = vrot.slane %v2553, 6
      %v2740 = vsel %vm2727, %v2737, %v2739
      %2741 = vrot.lane.b32.xlu0 %v2730, 96
      %v2742 = vpop.permute.xlu0 %2741
      %2743 = vrot.lane.b32.xlu0 %v2732, 96
      %v2744 = vpop.permute.xlu0 %2743
      %2745 = vrot.lane.b32.xlu0 %v2734, 96
      %v2746 = vpop.permute.xlu0 %2745
      %2747 = vrot.lane.b32.xlu0 %v2736, 96
      %v2748 = vpop.permute.xlu0 %2747
      %2749 = vrot.lane.b32.xlu0 %v2738, 96
      %v2750 = vpop.permute.xlu0 %2749
      %2751 = vrot.lane.b32.xlu0 %v2740, 96
      %v2752 = vpop.permute.xlu0 %2751
      %2753 = vrot.lane.b32.xlu0 %v2739, 96
      %v2754 = vpop.permute.xlu0 %2753
      %v2763 = vrot.slane %v2552, 7
      %v2764 = vrot.slane %v2534, 7
      %v2765 = vsel %vm897, %v2763, %v2764
      %v2766 = vrot.slane %v2536, 7
      %v2767 = vsel %vm897, %v2764, %v2766
      %v2768 = vrot.slane %v2538, 7
      %v2769 = vsel %vm897, %v2766, %v2768
      %v2770 = vrot.slane %v2540, 7
      %v2771 = vsel %vm897, %v2768, %v2770
      %v2772 = vrot.slane %v2542, 7
      %v2773 = vsel %vm897, %v2770, %v2772
      %v2774 = vrot.slane %v2553, 7
      %v2775 = vsel %vm897, %v2772, %v2774
      %v2776 = vrot.slane 0.0, 7
      %v2777 = vsel %vm897, %v2774, %v2776
      %2778 = vrot.lane.b32.xlu0 %v2765, 112
      %v2779 = vpop.permute.xlu0 %2778
      %2780 = vrot.lane.b32.xlu0 %v2767, 112
      %v2781 = vpop.permute.xlu0 %2780
      %2782 = vrot.lane.b32.xlu0 %v2769, 112
      %v2783 = vpop.permute.xlu0 %2782
      %2784 = vrot.lane.b32.xlu0 %v2771, 112
      %v2785 = vpop.permute.xlu0 %2784
      %2786 = vrot.lane.b32.xlu0 %v2773, 112
      %v2787 = vpop.permute.xlu0 %2786
      %2788 = vrot.lane.b32.xlu0 %v2775, 112
      %v2789 = vpop.permute.xlu0 %2788
      %2790 = vrot.lane.b32.xlu0 %v2777, 112
      %v2791 = vpop.permute.xlu0 %2790
      %v2799 = vsel %vm1283, %v2552, %v2570
      %v2800 = vsel %vm1283, %v2534, %v2572
      %v2801 = vsel %vm1283, %v2536, %v2574
      %v2802 = vsel %vm1283, %v2538, %v2576
      %v2803 = vsel %vm1283, %v2540, %v2578
      %v2804 = vsel %vm1283, %v2542, %v2580
      %v2805 = vsel %vm1283, %v2553, %v2582
      %v2806 = vsel %vm1291, %v2799, %v2604
      %v2807 = vsel %vm1291, %v2800, %v2606
      %v2808 = vsel %vm1291, %v2801, %v2608
      %v2809 = vsel %vm1291, %v2802, %v2610
      %v2810 = vsel %vm1291, %v2803, %v2612
      %v2811 = vsel %vm1291, %v2804, %v2614
      %v2812 = vsel %vm1291, %v2805, %v2616
      %v2813 = vsel %vm1299, %v2806, %v2639
      %v2814 = vsel %vm1299, %v2807, %v2641
      %v2815 = vsel %vm1299, %v2808, %v2643
      %v2816 = vsel %vm1299, %v2809, %v2645
      %v2817 = vsel %vm1299, %v2810, %v2647
      %v2818 = vsel %vm1299, %v2811, %v2649
      %v2819 = vsel %vm1299, %v2812, %v2651
      %vm2820 = vcmask 523264
      %v2821 = vsel %vm2820, %v2813, %v2673
      %v2822 = vsel %vm2820, %v2814, %v2675
      %v2823 = vsel %vm2820, %v2815, %v2677
      %v2824 = vsel %vm2820, %v2816, %v2679
      %v2825 = vsel %vm2820, %v2817, %v2681
      %v2826 = vsel %vm2820, %v2818, %v2683
      %v2827 = vsel %vm2820, %v2819, %v2685
      %vm2828 = vcmask 654336
      %v2829 = vsel %vm2828, %v2821, %v2707
      %v2830 = vsel %vm2828, %v2822, %v2709
      %v2831 = vsel %vm2828, %v2823, %v2711
      %v2832 = vsel %vm2828, %v2824, %v2713
      %v2833 = vsel %vm2828, %v2825, %v2715
      %v2834 = vsel %vm2828, %v2826, %v2717
      %v2835 = vsel %vm2828, %v2827, %v2719
      %vm2836 = vcmask 785408
      %v2837 = vsel %vm2836, %v2829, %v2742
      %v2838 = vsel %vm2836, %v2830, %v2744
      %v2839 = vsel %vm2836, %v2831, %v2746
      %v2840 = vsel %vm2836, %v2832, %v2748
      %v2841 = vsel %vm2836, %v2833, %v2750
      %v2842 = vsel %vm2836, %v2834, %v2752
      %v2843 = vsel %vm2836, %v2835, %v2754
      %vm2844 = vcmask 916480
      %v2845 = vsel %vm2844, %v2837, %v2779
      %v2846 = vsel %vm2844, %v2838, %v2781
      %v2847 = vsel %vm2844, %v2839, %v2783
      %v2848 = vsel %vm2844, %v2840, %v2785
      %v2849 = vsel %vm2844, %v2841, %v2787
      %v2850 = vsel %vm2844, %v2842, %v2789
      %v2851 = vsel %vm2844, %v2843, %v2791
      %v2852 = vsel %vm1283, %v2534, 0
      %v2854 = vsel %vm1283, %v2536, 0
      %v2856 = vsel %vm1283, %v2538, 0
      %v2858 = vsel %vm1283, %v2540, 0
      %v2860 = vsel %vm1283, %v2542, 0
      %v2862 = vsel %vm1283, %v2553, 0
      %v2864 = vsel %vm1283, 0.0, 0
      %2866 = vmatprep.subr.mxu0 0.0
      %2867 = vmatpush1.msra.mxu0 %v2521
      %2868 = vmatprep.subr.mxu0 0.0
      %2869 = vmatpush1.msra.mxu0 %v2520
      %2870 = vmatprep.subr.mxu0 0.0
      %2871 = vmatpush1.msra.mxu0 %v2519
      %2872 = vmatprep.subr.mxu0 0.0
      %2873 = vmatpush1.msra.mxu0 %v2518
      %2874 = vmatprep.subr.mxu0 0.0
      %2875 = vmatpush1.msra.mxu0 %v2517
      %2876 = vmatprep.subr.mxu0 0.0
      %2877 = vmatpush1.msra.mxu0 %v2516
      %2878 = vmatprep.subr.mxu0 0.0
      %2879 = vmatpush1.msra.mxu0 %v2515
      %2880 = vmatprep.subr.mxu0 0.0
      %2881 = vmatpush1.msra.mxu0 %v2514
      %2882 = vmatprep.subr.mxu0 0.0
      %2883 = vmatpush1.msra.mxu0 %v2513
      %2884 = vmatprep.subr.mxu0 0.0
      %2885 = vmatpush1.msra.mxu0 %v2512
      %2886 = vmatprep.subr.mxu0 0.0
      %2887 = vmatpush1.msra.mxu0 %v2511
      %2888 = vmatprep.subr.mxu0 0.0
      %2889 = vmatpush1.msra.mxu0 %v2510
      %2890 = vmatprep.subr.mxu0 0.0
      %2891 = vmatpush1.msra.mxu0 %v2509
      %2892 = vmatprep.subr.mxu0 0.0
      %2893 = vmatpush1.msra.mxu0 %v2508
      %2894 = vmatprep.subr.mxu0 0.0
      %2895 = vmatpush1.msra.mxu0 %v2507
      %2896 = vmatprep.subr.mxu0 0.0
      %2897 = vmatpush1.msra.mxu0 %v2506
      %2898 = vmatprep.subr.mxu0 0.0
      %2899 = vmatpush2.msra.mxu0 0.0
      %2900 = vmatprep.subr.mxu0 0.0
      %2901 = vmatpush2.msra.mxu0 0.0
      %2902 = vmatprep.subr.mxu0 0.0
      %2903 = vmatpush2.msra.mxu0 0.0
      %2904 = vmatprep.subr.mxu0 0.0
      %2905 = vmatpush2.msra.mxu0 0.0
      %2906 = vmatprep.subr.mxu0 0.0
      %2907 = vmatpush2.msra.mxu0 0.0
      %2908 = vmatprep.subr.mxu0 0.0
      %2909 = vmatpush2.msra.mxu0 0.0
      %2910 = vmatprep.subr.mxu0 0.0
      %2911 = vmatpush2.msra.mxu0 0.0
      %2912 = vmatprep.subr.mxu0 0.0
      %2913 = vmatpush2.msra.mxu0 0.0
      %2914 = vmatprep.subr.mxu0 0.0
      %2915 = vmatpush2.msra.mxu0 0.0
      %2916 = vmatprep.subr.mxu0 0.0
      %2917 = vmatpush2.msra.mxu0 0.0
      %2918 = vmatprep.subr.mxu0 0.0
      %2919 = vmatpush2.msra.mxu0 0.0
      %2920 = vmatprep.subr.mxu0 0.0
      %2921 = vmatpush2.msra.mxu0 0.0
      %2922 = vmatprep.subr.mxu0 0.0
      %2923 = vmatpush2.msra.mxu0 0.0
      %2924 = vmatprep.subr.mxu0 0.0
      %2925 = vmatpush2.msra.mxu0 0.0
      %2926 = vmatprep.subr.mxu0 0.0
      %2927 = vmatpush2.msra.mxu0 %v2523
      %2928 = vmatprep.subr.mxu0 0.0
      %2929 = vmatpush2.msra.mxu0 %v2522
      %2930 = vmatprep.mubr.f32.mxu0 %v2852
      %2931 = vmatmul.mubr.f32.gmra.mxu0 %v2845
      %v2932 = vpop.f32.mrf.mxu0
      %v2933 = vadd.f32 0.0, %v2932
      %v2934 = vpop.f32.mrf.mxu0
      %2935 = vmatprep.mubr.f32.mxu0 %v2854
      %2936 = vmatmul.mubr.f32.gmra.mxu0 %v2846
      %v2937 = vpop.f32.mrf.mxu0
      %v2938 = vadd.f32 0.0, %v2937
      %v2939 = vpop.f32.mrf.mxu0
      %2940 = vmatprep.mubr.f32.mxu0 %v2856
      %2941 = vmatmul.mubr.f32.gmra.mxu0 %v2847
      %v2942 = vpop.f32.mrf.mxu0
      %v2943 = vadd.f32 0.0, %v2942
      %v2944 = vpop.f32.mrf.mxu0
      %2945 = vmatprep.mubr.f32.mxu0 %v2858
      %2946 = vmatmul.mubr.f32.gmra.mxu0 %v2848
      %v2947 = vpop.f32.mrf.mxu0
      %v2948 = vadd.f32 0.0, %v2947
      %v2949 = vpop.f32.mrf.mxu0
      %2950 = vmatprep.mubr.f32.mxu0 %v2860
      %2951 = vmatmul.mubr.f32.gmra.mxu0 %v2849
      %v2952 = vpop.f32.mrf.mxu0
      %v2953 = vadd.f32 0.0, %v2952
      %v2954 = vpop.f32.mrf.mxu0
      %2955 = vmatprep.mubr.f32.mxu0 %v2862
      %2956 = vmatmul.mubr.f32.gmra.mxu0 %v2850
      %v2957 = vpop.f32.mrf.mxu0
      %v2958 = vadd.f32 0.0, %v2957
      %v2959 = vpop.f32.mrf.mxu0
      %2960 = vmatprep.mubr.f32.mxu0 %v2864
      %2961 = vmatmul.mubr.f32.gmra.mxu0 %v2851
      %v2962 = vpop.f32.mrf.mxu0
      %v2963 = vadd.f32 0.0, %v2962
      %v2964 = vpop.f32.mrf.mxu0
      %2965 = vdwg.mxu0
      %v2966 = vlaneseq
      %v2967 = vshrl.u32 %v2966, 7
      %v2968 = vsub.s32 0, %v2967
      %v2969 = vrot.slane %v2524, %v2968
      %v2970 = vmul.f32 %v2933, %v2969
      %v2971 = vmul.f32 %v2938, %v2969
      %v2972 = vmul.f32 %v2943, %v2969
      %v2973 = vmul.f32 %v2948, %v2969
      %v2974 = vmul.f32 %v2953, %v2969
      %v2975 = vmul.f32 %v2958, %v2969
      %v2976 = vmul.f32 %v2963, %v2969
      %v2977 = vlaneseq
      %v2978 = vshrl.u32 %v2977, 7
      %v2979 = vsub.s32 1, %v2978
      %v2980 = vrot.slane %v2524, %v2979
      %v2981 = vadd.f32 %v2970, %v2980
      %v2982 = vadd.f32 %v2971, %v2980
      %v2983 = vadd.f32 %v2972, %v2980
      %v2984 = vadd.f32 %v2973, %v2980
      %v2985 = vadd.f32 %v2974, %v2980
      %v2986 = vadd.f32 %v2975, %v2980
      %v2987 = vadd.f32 %v2976, %v2980
      %vm2988 = vcmp.ge.f32.partialorder %v2981, 0.0
      %vm2989 = vcmp.ge.f32.partialorder %v2982, 0.0
      %vm2990 = vcmp.ge.f32.partialorder %v2983, 0.0
      %vm2991 = vcmp.ge.f32.partialorder %v2984, 0.0
      %vm2992 = vcmp.ge.f32.partialorder %v2985, 0.0
      %vm2993 = vcmp.ge.f32.partialorder %v2986, 0.0
      %vm2994 = vcmp.ge.f32.partialorder %v2987, 0.0
      %v2995 = vmul.f32 %v2981, 0.01
      %v2996 = vmul.f32 %v2982, 0.01
      %v2997 = vmul.f32 %v2983, 0.01
      %v2998 = vmul.f32 %v2984, 0.01
      %v2999 = vmul.f32 %v2985, 0.01
      %v3000 = vmul.f32 %v2986, 0.01
      %v3001 = vmul.f32 %v2987, 0.01
      %v3002 = vsel %vm2988, %v2981, %v2995
      %v3003 = vsel %vm2989, %v2982, %v2996
      %v3004 = vsel %vm2990, %v2983, %v2997
      %v3005 = vsel %vm2991, %v2984, %v2998
      %v3006 = vsel %vm2992, %v2985, %v2999
      %v3007 = vsel %vm2993, %v2986, %v3000
      %v3008 = vsel %vm2994, %v2987, %v3001
      %v3009 = vld [vmem:[%s15] sm:$0xff]
      %v3010 = vld [vmem:[%s15 + $0x8] sm:$0xff]
      %v3011 = vld [vmem:[%s15 + $0x10] sm:$0xff]
      %v3012 = vld [vmem:[%s15 + $0x18] sm:$0xff]
      %v3013 = vld [vmem:[%s15 + $0x20] sm:$0xff]
      %v3014 = vld [vmem:[%s15 + $0x28] sm:$0xff]
      %v3015 = vld [vmem:[%s15 + $0x30] sm:$0xff]
      %v3016 = vld [vmem:[%s15 + $0x38] sm:$0xff]
      %v3017 = vld [vmem:[%s15 + $0x40] sm:$0xff]
      %v3018 = vld [vmem:[%s15 + $0x48] sm:$0xff]
      %v3019 = vld [vmem:[%s15 + $0x50] sm:$0xff]
      %v3020 = vld [vmem:[%s15 + $0x58] sm:$0xff]
      %v3021 = vld [vmem:[%s15 + $0x60] sm:$0xff]
      %v3022 = vld [vmem:[%s15 + $0x68] sm:$0xff]
      %v3023 = vld [vmem:[%s15 + $0x70] sm:$0xff]
      %v3024 = vld [vmem:[%s15 + $0x78] sm:$0xff]
      %v3025 = vld [vmem:[%s15 + $0x80] sm:$0xff]
      %v3026 = vld [vmem:[%s15 + $0x88] sm:$0xff]
      %v3027 = vld [vmem:[%s15 + $0x90] sm:$0xff]
      %v3028 = vld [vmem:[%s15 + $0x98] sm:$0xff]
      %v3029 = vld [vmem:[%s15 + $0xa0] sm:$0xff]
      %v3030 = vld [vmem:[%s15 + $0xa8] sm:$0xff]
      %v3031 = vld [vmem:[%s15 + $0xb0] sm:$0xff]
      %v3032 = vld [vmem:[%s15 + $0xb8] sm:$0xff]
      %v3033 = vld [vmem:[%s15 + $0xc0] sm:$0xff]
      %v3034 = vld [vmem:[%s15 + $0xc8] sm:$0xff]
      %v3035 = vld [vmem:[%s15 + $0xd0] sm:$0xff]
      %v3036 = vld [vmem:[%s15 + $0xd8] sm:$0xff]
      %v3037 = vld [vmem:[%s15 + $0xe0] sm:$0xff]
      %v3038 = vld [vmem:[%s15 + $0xe8] sm:$0xff]
      %v3039 = vld [vmem:[%s15 + $0xf0] sm:$0xff]
      %v3040 = vld [vmem:[%s15 + $0xf8] sm:$0xff]
      %v3041 = vld [vmem:[%s15 + $0x100] sm:$0xff]
      %v3042 = vld [vmem:[%s15 + $0x108] sm:$0xff]
      %v3043 = vld [vmem:[%s15 + $0x110] sm:$0xff]
      %v3044 = vld [vmem:[%s15 + $0x118] sm:$0xff]
      %v3045 = vld [vmem:[%s16] sm:$0x3]
      %v3053 = vrot.slane %v3002, 4
      %v3054 = vrot.slane %v3003, 4
      %v3055 = vsel %vm2043, %v3053, %v3054
      %v3056 = vrot.slane %v3004, 4
      %v3057 = vsel %vm2043, %v3054, %v3056
      %v3058 = vrot.slane %v3005, 4
      %v3059 = vsel %vm2043, %v3056, %v3058
      %v3060 = vrot.slane %v3006, 4
      %v3061 = vsel %vm2043, %v3058, %v3060
      %v3062 = vrot.slane %v3007, 4
      %v3063 = vsel %vm2043, %v3060, %v3062
      %v3064 = vrot.slane %v3008, 4
      %v3065 = vsel %vm2043, %v3062, %v3064
      %v3073 = vsel %vm2043, 0.0, %v3053
      %v3074 = vsel %vm958, %v3065, 0.0
      %v3077 = vrot.slane %v3073, 1
      %v3078 = vrot.slane %v3055, 1
      %v3079 = vsel %vm923, %v3077, %v3078
      %v3080 = vrot.slane %v3057, 1
      %v3081 = vsel %vm923, %v3078, %v3080
      %v3082 = vrot.slane %v3059, 1
      %v3083 = vsel %vm923, %v3080, %v3082
      %v3084 = vrot.slane %v3061, 1
      %v3085 = vsel %vm923, %v3082, %v3084
      %v3086 = vrot.slane %v3063, 1
      %v3087 = vsel %vm923, %v3084, %v3086
      %v3088 = vrot.slane %v3074, 1
      %v3089 = vsel %vm923, %v3086, %v3088
      %3090 = vrot.lane.b32.xlu0 %v3079, 32
      %v3091 = vpop.permute.xlu0 %3090
      %3092 = vrot.lane.b32.xlu0 %v3081, 32
      %v3093 = vpop.permute.xlu0 %3092
      %3094 = vrot.lane.b32.xlu0 %v3083, 32
      %v3095 = vpop.permute.xlu0 %3094
      %3096 = vrot.lane.b32.xlu0 %v3085, 32
      %v3097 = vpop.permute.xlu0 %3096
      %3098 = vrot.lane.b32.xlu0 %v3087, 32
      %v3099 = vpop.permute.xlu0 %3098
      %3100 = vrot.lane.b32.xlu0 %v3089, 32
      %v3101 = vpop.permute.xlu0 %3100
      %3102 = vrot.lane.b32.xlu0 %v3088, 32
      %v3103 = vpop.permute.xlu0 %3102
      %v3111 = vrot.slane %v3073, 2
      %v3112 = vrot.slane %v3055, 2
      %v3113 = vsel %vm958, %v3111, %v3112
      %v3114 = vrot.slane %v3057, 2
      %v3115 = vsel %vm958, %v3112, %v3114
      %v3116 = vrot.slane %v3059, 2
      %v3117 = vsel %vm958, %v3114, %v3116
      %v3118 = vrot.slane %v3061, 2
      %v3119 = vsel %vm958, %v3116, %v3118
      %v3120 = vrot.slane %v3063, 2
      %v3121 = vsel %vm958, %v3118, %v3120
      %v3122 = vrot.slane %v3074, 2
      %v3123 = vsel %vm958, %v3120, %v3122
      %3124 = vrot.lane.b32.xlu0 %v3113, 64
      %v3125 = vpop.permute.xlu0 %3124
      %3126 = vrot.lane.b32.xlu0 %v3115, 64
      %v3127 = vpop.permute.xlu0 %3126
      %3128 = vrot.lane.b32.xlu0 %v3117, 64
      %v3129 = vpop.permute.xlu0 %3128
      %3130 = vrot.lane.b32.xlu0 %v3119, 64
      %v3131 = vpop.permute.xlu0 %3130
      %3132 = vrot.lane.b32.xlu0 %v3121, 64
      %v3133 = vpop.permute.xlu0 %3132
      %3134 = vrot.lane.b32.xlu0 %v3123, 64
      %v3135 = vpop.permute.xlu0 %3134
      %3136 = vrot.lane.b32.xlu0 %v3122, 64
      %v3137 = vpop.permute.xlu0 %3136
      %v3145 = vrot.slane %v3073, 3
      %v3146 = vrot.slane %v3055, 3
      %v3147 = vsel %vm2624, %v3145, %v3146
      %v3148 = vrot.slane %v3057, 3
      %v3149 = vsel %vm2624, %v3146, %v3148
      %v3150 = vrot.slane %v3059, 3
      %v3151 = vsel %vm2624, %v3148, %v3150
      %v3152 = vrot.slane %v3061, 3
      %v3153 = vsel %vm2624, %v3150, %v3152
      %v3154 = vrot.slane %v3063, 3
      %v3155 = vsel %vm2624, %v3152, %v3154
      %v3156 = vrot.slane %v3074, 3
      %v3157 = vsel %vm2624, %v3154, %v3156
      %3158 = vrot.lane.b32.xlu0 %v3147, 96
      %v3159 = vpop.permute.xlu0 %3158
      %3160 = vrot.lane.b32.xlu0 %v3149, 96
      %v3161 = vpop.permute.xlu0 %3160
      %3162 = vrot.lane.b32.xlu0 %v3151, 96
      %v3163 = vpop.permute.xlu0 %3162
      %3164 = vrot.lane.b32.xlu0 %v3153, 96
      %v3165 = vpop.permute.xlu0 %3164
      %3166 = vrot.lane.b32.xlu0 %v3155, 96
      %v3167 = vpop.permute.xlu0 %3166
      %3168 = vrot.lane.b32.xlu0 %v3157, 96
      %v3169 = vpop.permute.xlu0 %3168
      %3170 = vrot.lane.b32.xlu0 %v3156, 96
      %v3171 = vpop.permute.xlu0 %3170
      %v3179 = vrot.slane %v3073, 4
      %v3180 = vrot.slane %v3055, 4
      %v3181 = vsel %vm2043, %v3179, %v3180
      %v3182 = vrot.slane %v3057, 4
      %v3183 = vsel %vm2043, %v3180, %v3182
      %v3184 = vrot.slane %v3059, 4
      %v3185 = vsel %vm2043, %v3182, %v3184
      %v3186 = vrot.slane %v3061, 4
      %v3187 = vsel %vm2043, %v3184, %v3186
      %v3188 = vrot.slane %v3063, 4
      %v3189 = vsel %vm2043, %v3186, %v3188
      %v3190 = vrot.slane %v3074, 4
      %v3191 = vsel %vm2043, %v3188, %v3190
      %v3199 = vrot.slane %v3073, 5
      %v3200 = vrot.slane %v3055, 5
      %v3201 = vsel %vm919, %v3199, %v3200
      %v3202 = vrot.slane %v3057, 5
      %v3203 = vsel %vm919, %v3200, %v3202
      %v3204 = vrot.slane %v3059, 5
      %v3205 = vsel %vm919, %v3202, %v3204
      %v3206 = vrot.slane %v3061, 5
      %v3207 = vsel %vm919, %v3204, %v3206
      %v3208 = vrot.slane %v3063, 5
      %v3209 = vsel %vm919, %v3206, %v3208
      %v3210 = vrot.slane %v3074, 5
      %v3211 = vsel %vm919, %v3208, %v3210
      %3212 = vrot.lane.b32.xlu0 %v3201, 32
      %v3213 = vpop.permute.xlu0 %3212
      %3214 = vrot.lane.b32.xlu0 %v3203, 32
      %v3215 = vpop.permute.xlu0 %3214
      %3216 = vrot.lane.b32.xlu0 %v3205, 32
      %v3217 = vpop.permute.xlu0 %3216
      %3218 = vrot.lane.b32.xlu0 %v3207, 32
      %v3219 = vpop.permute.xlu0 %3218
      %3220 = vrot.lane.b32.xlu0 %v3209, 32
      %v3221 = vpop.permute.xlu0 %3220
      %3222 = vrot.lane.b32.xlu0 %v3211, 32
      %v3223 = vpop.permute.xlu0 %3222
      %3224 = vrot.lane.b32.xlu0 %v3210, 32
      %v3225 = vpop.permute.xlu0 %3224
      %v3233 = vrot.slane %v3073, 6
      %v3234 = vrot.slane %v3055, 6
      %v3235 = vsel %vm2727, %v3233, %v3234
      %v3236 = vrot.slane %v3057, 6
      %v3237 = vsel %vm2727, %v3234, %v3236
      %v3238 = vrot.slane %v3059, 6
      %v3239 = vsel %vm2727, %v3236, %v3238
      %v3240 = vrot.slane %v3061, 6
      %v3241 = vsel %vm2727, %v3238, %v3240
      %v3242 = vrot.slane %v3063, 6
      %v3243 = vsel %vm2727, %v3240, %v3242
      %v3244 = vrot.slane %v3074, 6
      %v3245 = vsel %vm2727, %v3242, %v3244
      %3246 = vrot.lane.b32.xlu0 %v3235, 64
      %v3247 = vpop.permute.xlu0 %3246
      %3248 = vrot.lane.b32.xlu0 %v3237, 64
      %v3249 = vpop.permute.xlu0 %3248
      %3250 = vrot.lane.b32.xlu0 %v3239, 64
      %v3251 = vpop.permute.xlu0 %3250
      %3252 = vrot.lane.b32.xlu0 %v3241, 64
      %v3253 = vpop.permute.xlu0 %3252
      %3254 = vrot.lane.b32.xlu0 %v3243, 64
      %v3255 = vpop.permute.xlu0 %3254
      %3256 = vrot.lane.b32.xlu0 %v3245, 64
      %v3257 = vpop.permute.xlu0 %3256
      %3258 = vrot.lane.b32.xlu0 %v3244, 64
      %v3259 = vpop.permute.xlu0 %3258
      %v3267 = vrot.slane %v3073, 7
      %v3268 = vrot.slane %v3055, 7
      %v3269 = vsel %vm897, %v3267, %v3268
      %v3270 = vrot.slane %v3057, 7
      %v3271 = vsel %vm897, %v3268, %v3270
      %v3272 = vrot.slane %v3059, 7
      %v3273 = vsel %vm897, %v3270, %v3272
      %v3274 = vrot.slane %v3061, 7
      %v3275 = vsel %vm897, %v3272, %v3274
      %v3276 = vrot.slane %v3063, 7
      %v3277 = vsel %vm897, %v3274, %v3276
      %v3278 = vrot.slane %v3074, 7
      %v3279 = vsel %vm897, %v3276, %v3278
      %v3280 = vsel %vm897, %v3278, %v2776
      %3281 = vrot.lane.b32.xlu0 %v3269, 96
      %v3282 = vpop.permute.xlu0 %3281
      %3283 = vrot.lane.b32.xlu0 %v3271, 96
      %v3284 = vpop.permute.xlu0 %3283
      %3285 = vrot.lane.b32.xlu0 %v3273, 96
      %v3286 = vpop.permute.xlu0 %3285
      %3287 = vrot.lane.b32.xlu0 %v3275, 96
      %v3288 = vpop.permute.xlu0 %3287
      %3289 = vrot.lane.b32.xlu0 %v3277, 96
      %v3290 = vpop.permute.xlu0 %3289
      %3291 = vrot.lane.b32.xlu0 %v3279, 96
      %v3292 = vpop.permute.xlu0 %3291
      %3293 = vrot.lane.b32.xlu0 %v3280, 96
      %v3294 = vpop.permute.xlu0 %3293
      %v3302 = vsel %vm1291, %v3073, %v3091
      %v3303 = vsel %vm1291, %v3055, %v3093
      %v3304 = vsel %vm1291, %v3057, %v3095
      %v3305 = vsel %vm1291, %v3059, %v3097
      %v3306 = vsel %vm1291, %v3061, %v3099
      %v3307 = vsel %vm1291, %v3063, %v3101
      %v3308 = vsel %vm1291, %v3074, %v3103
      %v3309 = vsel %vm2820, %v3302, %v3125
      %v3310 = vsel %vm2820, %v3303, %v3127
      %v3311 = vsel %vm2820, %v3304, %v3129
      %v3312 = vsel %vm2820, %v3305, %v3131
      %v3313 = vsel %vm2820, %v3306, %v3133
      %v3314 = vsel %vm2820, %v3307, %v3135
      %v3315 = vsel %vm2820, %v3308, %v3137
      %v3316 = vsel %vm2836, %v3309, %v3159
      %v3317 = vsel %vm2836, %v3310, %v3161
      %v3318 = vsel %vm2836, %v3311, %v3163
      %v3319 = vsel %vm2836, %v3312, %v3165
      %v3320 = vsel %vm2836, %v3313, %v3167
      %v3321 = vsel %vm2836, %v3314, %v3169
      %v3322 = vsel %vm2836, %v3315, %v3171
      %v3323 = vsel %vm1291, %v3181, %v3213
      %v3324 = vsel %vm1291, %v3183, %v3215
      %v3325 = vsel %vm1291, %v3185, %v3217
      %v3326 = vsel %vm1291, %v3187, %v3219
      %v3327 = vsel %vm1291, %v3189, %v3221
      %v3328 = vsel %vm1291, %v3191, %v3223
      %v3329 = vsel %vm1291, %v3190, %v3225
      %v3330 = vsel %vm2820, %v3323, %v3247
      %v3331 = vsel %vm2820, %v3324, %v3249
      %v3332 = vsel %vm2820, %v3325, %v3251
      %v3333 = vsel %vm2820, %v3326, %v3253
      %v3334 = vsel %vm2820, %v3327, %v3255
      %v3335 = vsel %vm2820, %v3328, %v3257
      %v3336 = vsel %vm2820, %v3329, %v3259
      %v3337 = vsel %vm2836, %v3330, %v3282
      %v3338 = vsel %vm2836, %v3331, %v3284
      %v3339 = vsel %vm2836, %v3332, %v3286
      %v3340 = vsel %vm2836, %v3333, %v3288
      %v3341 = vsel %vm2836, %v3334, %v3290
      %v3342 = vsel %vm2836, %v3335, %v3292
      %v3343 = vsel %vm2836, %v3336, %v3294
      %v3344 = vsel %vm1291, %v3055, 0
      %v3346 = vsel %vm1291, %v3057, 0
      %v3348 = vsel %vm1291, %v3059, 0
      %v3350 = vsel %vm1291, %v3061, 0
      %v3352 = vsel %vm1291, %v3063, 0
      %v3354 = vsel %vm1291, %v3074, 0
      %v3356 = vsel %vm1291, 0.0, 0
      %3358 = vmatprep.subr.mxu0 0.0
      %3359 = vmatpush1.msra.mxu0 %v3024
      %3360 = vmatprep.subr.mxu0 0.0
      %3361 = vmatpush1.msra.mxu0 %v3023
      %3362 = vmatprep.subr.mxu0 0.0
      %3363 = vmatpush1.msra.mxu0 %v3022
      %3364 = vmatprep.subr.mxu0 0.0
      %3365 = vmatpush1.msra.mxu0 %v3021
      %3366 = vmatprep.subr.mxu0 0.0
      %3367 = vmatpush1.msra.mxu0 %v3020
      %3368 = vmatprep.subr.mxu0 0.0
      %3369 = vmatpush1.msra.mxu0 %v3019
      %3370 = vmatprep.subr.mxu0 0.0
      %3371 = vmatpush1.msra.mxu0 %v3018
      %3372 = vmatprep.subr.mxu0 0.0
      %3373 = vmatpush1.msra.mxu0 %v3017
      %3374 = vmatprep.subr.mxu0 0.0
      %3375 = vmatpush1.msra.mxu0 %v3016
      %3376 = vmatprep.subr.mxu0 0.0
      %3377 = vmatpush1.msra.mxu0 %v3015
      %3378 = vmatprep.subr.mxu0 0.0
      %3379 = vmatpush1.msra.mxu0 %v3014
      %3380 = vmatprep.subr.mxu0 0.0
      %3381 = vmatpush1.msra.mxu0 %v3013
      %3382 = vmatprep.subr.mxu0 0.0
      %3383 = vmatpush1.msra.mxu0 %v3012
      %3384 = vmatprep.subr.mxu0 0.0
      %3385 = vmatpush1.msra.mxu0 %v3011
      %3386 = vmatprep.subr.mxu0 0.0
      %3387 = vmatpush1.msra.mxu0 %v3010
      %3388 = vmatprep.subr.mxu0 0.0
      %3389 = vmatpush1.msra.mxu0 %v3009
      %3390 = vmatprep.subr.mxu0 0.0
      %3391 = vmatpush2.msra.mxu0 %v3040
      %3392 = vmatprep.subr.mxu0 0.0
      %3393 = vmatpush2.msra.mxu0 %v3039
      %3394 = vmatprep.subr.mxu0 0.0
      %3395 = vmatpush2.msra.mxu0 %v3038
      %3396 = vmatprep.subr.mxu0 0.0
      %3397 = vmatpush2.msra.mxu0 %v3037
      %3398 = vmatprep.subr.mxu0 0.0
      %3399 = vmatpush2.msra.mxu0 %v3036
      %3400 = vmatprep.subr.mxu0 0.0
      %3401 = vmatpush2.msra.mxu0 %v3035
      %3402 = vmatprep.subr.mxu0 0.0
      %3403 = vmatpush2.msra.mxu0 %v3034
      %3404 = vmatprep.subr.mxu0 0.0
      %3405 = vmatpush2.msra.mxu0 %v3033
      %3406 = vmatprep.subr.mxu0 0.0
      %3407 = vmatpush2.msra.mxu0 %v3032
      %3408 = vmatprep.subr.mxu0 0.0
      %3409 = vmatpush2.msra.mxu0 %v3031
      %3410 = vmatprep.subr.mxu0 0.0
      %3411 = vmatpush2.msra.mxu0 %v3030
      %3412 = vmatprep.subr.mxu0 0.0
      %3413 = vmatpush2.msra.mxu0 %v3029
      %3414 = vmatprep.subr.mxu0 0.0
      %3415 = vmatpush2.msra.mxu0 %v3028
      %3416 = vmatprep.subr.mxu0 0.0
      %3417 = vmatpush2.msra.mxu0 %v3027
      %3418 = vmatprep.subr.mxu0 0.0
      %3419 = vmatpush2.msra.mxu0 %v3026
      %3420 = vmatprep.subr.mxu0 0.0
      %3421 = vmatpush2.msra.mxu0 %v3025
      %3422 = vmatprep.mubr.f32.mxu0 %v3337
      %3423 = vmatmul.mubr.f32.gmra.mxu0 %v3316
      %v3424 = vpop.f32.mrf.mxu0
      %v3425 = vadd.f32 0.0, %v3424
      %v3426 = vpop.f32.mrf.mxu0
      %3427 = vmatprep.mubr.f32.mxu0 %v3338
      %3428 = vmatmul.mubr.f32.gmra.mxu0 %v3317
      %v3429 = vpop.f32.mrf.mxu0
      %v3430 = vadd.f32 0.0, %v3429
      %v3431 = vpop.f32.mrf.mxu0
      %3432 = vmatprep.mubr.f32.mxu0 %v3339
      %3433 = vmatmul.mubr.f32.gmra.mxu0 %v3318
      %v3434 = vpop.f32.mrf.mxu0
      %v3435 = vadd.f32 0.0, %v3434
      %v3436 = vpop.f32.mrf.mxu0
      %3437 = vmatprep.mubr.f32.mxu0 %v3340
      %3438 = vmatmul.mubr.f32.gmra.mxu0 %v3319
      %v3439 = vpop.f32.mrf.mxu0
      %v3440 = vadd.f32 0.0, %v3439
      %v3441 = vpop.f32.mrf.mxu0
      %3442 = vmatprep.mubr.f32.mxu0 %v3341
      %3443 = vmatmul.mubr.f32.gmra.mxu0 %v3320
      %v3444 = vpop.f32.mrf.mxu0
      %v3445 = vadd.f32 0.0, %v3444
      %v3446 = vpop.f32.mrf.mxu0
      %3447 = vmatprep.mubr.f32.mxu0 %v3342
      %3448 = vmatmul.mubr.f32.gmra.mxu0 %v3321
      %v3449 = vpop.f32.mrf.mxu0
      %v3450 = vadd.f32 0.0, %v3449
      %v3451 = vpop.f32.mrf.mxu0
      %3452 = vmatprep.mubr.f32.mxu0 %v3343
      %3453 = vmatmul.mubr.f32.gmra.mxu0 %v3322
      %v3454 = vpop.f32.mrf.mxu0
      %v3455 = vadd.f32 0.0, %v3454
      %v3456 = vpop.f32.mrf.mxu0
      %3457 = vdwg.mxu0
      %3458 = vmatprep.subr.mxu0 0.0
      %3459 = vmatpush1.msra.mxu0 0.0
      %3460 = vmatprep.subr.mxu0 0.0
      %3461 = vmatpush1.msra.mxu0 0.0
      %3462 = vmatprep.subr.mxu0 0.0
      %3463 = vmatpush1.msra.mxu0 0.0
      %3464 = vmatprep.subr.mxu0 0.0
      %3465 = vmatpush1.msra.mxu0 0.0
      %3466 = vmatprep.subr.mxu0 0.0
      %3467 = vmatpush1.msra.mxu0 0.0
      %3468 = vmatprep.subr.mxu0 0.0
      %3469 = vmatpush1.msra.mxu0 0.0
      %3470 = vmatprep.subr.mxu0 0.0
      %3471 = vmatpush1.msra.mxu0 0.0
      %3472 = vmatprep.subr.mxu0 0.0
      %3473 = vmatpush1.msra.mxu0 0.0
      %3474 = vmatprep.subr.mxu0 0.0
      %3475 = vmatpush1.msra.mxu0 0.0
      %3476 = vmatprep.subr.mxu0 0.0
      %3477 = vmatpush1.msra.mxu0 0.0
      %3478 = vmatprep.subr.mxu0 0.0
      %3479 = vmatpush1.msra.mxu0 0.0
      %3480 = vmatprep.subr.mxu0 0.0
      %3481 = vmatpush1.msra.mxu0 0.0
      %3482 = vmatprep.subr.mxu0 0.0
      %3483 = vmatpush1.msra.mxu0 %v3044
      %3484 = vmatprep.subr.mxu0 0.0
      %3485 = vmatpush1.msra.mxu0 %v3043
      %3486 = vmatprep.subr.mxu0 0.0
      %3487 = vmatpush1.msra.mxu0 %v3042
      %3488 = vmatprep.subr.mxu0 0.0
      %3489 = vmatpush1.msra.mxu0 %v3041
      %3490 = vmatprep.subr.mxu0 0.0
      %3491 = vmatpush2.msra.mxu0 0.0
      %3492 = vmatprep.subr.mxu0 0.0
      %3493 = vmatpush2.msra.mxu0 0.0
      %3494 = vmatprep.subr.mxu0 0.0
      %3495 = vmatpush2.msra.mxu0 0.0
      %3496 = vmatprep.subr.mxu0 0.0
      %3497 = vmatpush2.msra.mxu0 0.0
      %3498 = vmatprep.subr.mxu0 0.0
      %3499 = vmatpush2.msra.mxu0 0.0
      %3500 = vmatprep.subr.mxu0 0.0
      %3501 = vmatpush2.msra.mxu0 0.0
      %3502 = vmatprep.subr.mxu0 0.0
      %3503 = vmatpush2.msra.mxu0 0.0
      %3504 = vmatprep.subr.mxu0 0.0
      %3505 = vmatpush2.msra.mxu0 0.0
      %3506 = vmatprep.subr.mxu0 0.0
      %3507 = vmatpush2.msra.mxu0 0.0
      %3508 = vmatprep.subr.mxu0 0.0
      %3509 = vmatpush2.msra.mxu0 0.0
      %3510 = vmatprep.subr.mxu0 0.0
      %3511 = vmatpush2.msra.mxu0 0.0
      %3512 = vmatprep.subr.mxu0 0.0
      %3513 = vmatpush2.msra.mxu0 0.0
      %3514 = vmatprep.subr.mxu0 0.0
      %3515 = vmatpush2.msra.mxu0 0.0
      %3516 = vmatprep.subr.mxu0 0.0
      %3517 = vmatpush2.msra.mxu0 0.0
      %3518 = vmatprep.subr.mxu0 0.0
      %3519 = vmatpush2.msra.mxu0 0.0
      %3520 = vmatprep.subr.mxu0 0.0
      %3521 = vmatpush2.msra.mxu0 0.0
      %3522 = vmatprep.mubr.f32.mxu0 0.0
      %3523 = vmatmul.mubr.f32.gmra.mxu0 %v3344
      %v3524 = vpop.f32.mrf.mxu0
      %v3525 = vadd.f32 %v3425, %v3524
      %v3526 = vpop.f32.mrf.mxu0
      %3527 = vmatprep.mubr.f32.mxu0 0.0
      %3528 = vmatmul.mubr.f32.gmra.mxu0 %v3346
      %v3529 = vpop.f32.mrf.mxu0
      %v3530 = vadd.f32 %v3430, %v3529
      %v3531 = vpop.f32.mrf.mxu0
      %3532 = vmatprep.mubr.f32.mxu0 0.0
      %3533 = vmatmul.mubr.f32.gmra.mxu0 %v3348
      %v3534 = vpop.f32.mrf.mxu0
      %v3535 = vadd.f32 %v3435, %v3534
      %v3536 = vpop.f32.mrf.mxu0
      %3537 = vmatprep.mubr.f32.mxu0 0.0
      %3538 = vmatmul.mubr.f32.gmra.mxu0 %v3350
      %v3539 = vpop.f32.mrf.mxu0
      %v3540 = vadd.f32 %v3440, %v3539
      %v3541 = vpop.f32.mrf.mxu0
      %3542 = vmatprep.mubr.f32.mxu0 0.0
      %3543 = vmatmul.mubr.f32.gmra.mxu0 %v3352
      %v3544 = vpop.f32.mrf.mxu0
      %v3545 = vadd.f32 %v3445, %v3544
      %v3546 = vpop.f32.mrf.mxu0
      %3547 = vmatprep.mubr.f32.mxu0 0.0
      %3548 = vmatmul.mubr.f32.gmra.mxu0 %v3354
      %v3549 = vpop.f32.mrf.mxu0
      %v3550 = vadd.f32 %v3450, %v3549
      %v3551 = vpop.f32.mrf.mxu0
      %3552 = vmatprep.mubr.f32.mxu0 0.0
      %3553 = vmatmul.mubr.f32.gmra.mxu0 %v3356
      %v3554 = vpop.f32.mrf.mxu0
      %v3555 = vadd.f32 %v3455, %v3554
      %v3556 = vpop.f32.mrf.mxu0
      %3557 = vdwg.mxu0
      %v3558 = vlaneseq
      %v3559 = vshrl.u32 %v3558, 7
      %v3560 = vsub.s32 0, %v3559
      %v3561 = vrot.slane %v3045, %v3560
      %v3562 = vmul.f32 %v3525, %v3561
      %v3563 = vmul.f32 %v3530, %v3561
      %v3564 = vmul.f32 %v3535, %v3561
      %v3565 = vmul.f32 %v3540, %v3561
      %v3566 = vmul.f32 %v3545, %v3561
      %v3567 = vmul.f32 %v3550, %v3561
      %v3568 = vmul.f32 %v3555, %v3561
      %v3569 = vlaneseq
      %v3570 = vshrl.u32 %v3569, 7
      %v3571 = vsub.s32 1, %v3570
      %v3572 = vrot.slane %v3045, %v3571
      %v3573 = vadd.f32 %v3562, %v3572
      %v3574 = vadd.f32 %v3563, %v3572
      %v3575 = vadd.f32 %v3564, %v3572
      %v3576 = vadd.f32 %v3565, %v3572
      %v3577 = vadd.f32 %v3566, %v3572
      %v3578 = vadd.f32 %v3567, %v3572
      %v3579 = vadd.f32 %v3568, %v3572
      %vm3580 = vcmp.ge.f32.partialorder %v3573, 0.0
      %vm3581 = vcmp.ge.f32.partialorder %v3574, 0.0
      %vm3582 = vcmp.ge.f32.partialorder %v3575, 0.0
      %vm3583 = vcmp.ge.f32.partialorder %v3576, 0.0
      %vm3584 = vcmp.ge.f32.partialorder %v3577, 0.0
      %vm3585 = vcmp.ge.f32.partialorder %v3578, 0.0
      %vm3586 = vcmp.ge.f32.partialorder %v3579, 0.0
      %v3587 = vmul.f32 %v3573, 0.01
      %v3588 = vmul.f32 %v3574, 0.01
      %v3589 = vmul.f32 %v3575, 0.01
      %v3590 = vmul.f32 %v3576, 0.01
      %v3591 = vmul.f32 %v3577, 0.01
      %v3592 = vmul.f32 %v3578, 0.01
      %v3593 = vmul.f32 %v3579, 0.01
      %v3594 = vsel %vm3580, %v3573, %v3587
      %v3595 = vsel %vm3581, %v3574, %v3588
      %v3596 = vsel %vm3582, %v3575, %v3589
      %v3597 = vsel %vm3583, %v3576, %v3590
      %v3598 = vsel %vm3584, %v3577, %v3591
      %v3599 = vsel %vm3585, %v3578, %v3592
      %v3600 = vsel %vm3586, %v3579, %v3593
      %vm3601 = vcmask 258048
      %v3602 = vsel %vm3601, %v3594, -inf
      %v3603 = vrot.slane %v3602, 4
      %v3604 = vmax.f32 %v3602, %v3603
      %v3605 = vrot.slane %v3604, 2
      %v3606 = vmax.f32 %v3604, %v3605
      %v3607 = vrot.slane %v3606, 1
      %v3608 = vmax.f32 %v3606, %v3607
      %vm3609 = vcmask 261125
      %v3610 = vsel %vm3609, %v3594, -inf
      %vm3611 = vcmask 254976
      %v3612 = vsel %vm3611, %v3595, -inf
      %v3613 = vmax.f32 %v3610, %v3612
      %v3614 = vrot.slane %v3613, 4
      %v3615 = vmax.f32 %v3613, %v3614
      %v3616 = vrot.slane %v3615, 2
      %v3617 = vmax.f32 %v3615, %v3616
      %v3618 = vrot.slane %v3617, 1
      %v3619 = vmax.f32 %v3617, %v3618
      %vm3620 = vcmask 260098
      %v3621 = vsel %vm3620, %v3595, -inf
      %v3622 = vrot.slane %v3621, 4
      %v3623 = vmax.f32 %v3621, %v3622
      %v3624 = vrot.slane %v3623, 2
      %v3625 = vmax.f32 %v3623, %v3624
      %v3626 = vrot.slane %v3625, 1
      %v3627 = vmax.f32 %v3625, %v3626
      %vm3628 = vcmask 261127
      %v3629 = vsel %vm3628, %v3595, -inf
      %vm3630 = vcmask 257024
      %v3631 = vsel %vm3630, %v3596, -inf
      %v3632 = vmax.f32 %v3629, %v3631
      %v3633 = vrot.slane %v3632, 4
      %v3634 = vmax.f32 %v3632, %v3633
      %v3635 = vrot.slane %v3634, 2
      %v3636 = vmax.f32 %v3634, %v3635
      %v3637 = vrot.slane %v3636, 1
      %v3638 = vmax.f32 %v3636, %v3637
      %vm3639 = vcmask 261124
      %v3640 = vsel %vm3639, %v3596, -inf
      %vm3641 = vcmask 253952
      %v3642 = vsel %vm3641, %v3597, -inf
      %v3643 = vmax.f32 %v3640, %v3642
      %v3644 = vrot.slane %v3643, 4
      %v3645 = vmax.f32 %v3643, %v3644
      %v3646 = vrot.slane %v3645, 2
      %v3647 = vmax.f32 %v3645, %v3646
      %v3648 = vrot.slane %v3647, 1
      %v3649 = vmax.f32 %v3647, %v3648
      %vm3650 = vcmask 259073
      %v3651 = vsel %vm3650, %v3597, -inf
      %v3652 = vrot.slane %v3651, 4
      %v3653 = vmax.f32 %v3651, %v3652
      %v3654 = vrot.slane %v3653, 2
      %v3655 = vmax.f32 %v3653, %v3654
      %v3656 = vrot.slane %v3655, 1
      %v3657 = vmax.f32 %v3655, %v3656
      %vm3658 = vcmask 261126
      %v3659 = vsel %vm3658, %v3597, -inf
      %vm3660 = vcmask 256000
      %v3661 = vsel %vm3660, %v3598, -inf
      %v3662 = vmax.f32 %v3659, %v3661
      %v3663 = vrot.slane %v3662, 4
      %v3664 = vmax.f32 %v3662, %v3663
      %v3665 = vrot.slane %v3664, 2
      %v3666 = vmax.f32 %v3664, %v3665
      %v3667 = vrot.slane %v3666, 1
      %v3668 = vmax.f32 %v3666, %v3667
      %vm3669 = vcmask 261123
      %v3670 = vsel %vm3669, %v3598, -inf
      %v3671 = vrot.slane %v3670, 4
      %v3672 = vmax.f32 %v3670, %v3671
      %v3673 = vrot.slane %v3672, 2
      %v3674 = vmax.f32 %v3672, %v3673
      %v3675 = vrot.slane %v3674, 1
      %v3676 = vmax.f32 %v3674, %v3675
      %v3677 = vsel %vm3601, %v3599, -inf
      %v3678 = vrot.slane %v3677, 4
      %v3679 = vmax.f32 %v3677, %v3678
      %v3680 = vrot.slane %v3679, 2
      %v3681 = vmax.f32 %v3679, %v3680
      %v3682 = vrot.slane %v3681, 1
      %v3683 = vmax.f32 %v3681, %v3682
      %v3684 = vsel %vm3609, %v3599, -inf
      %v3685 = vsel %vm3611, %v3600, -inf
      %v3686 = vmax.f32 %v3684, %v3685
      %v3687 = vrot.slane %v3686, 4
      %v3688 = vmax.f32 %v3686, %v3687
      %v3689 = vrot.slane %v3688, 2
      %v3690 = vmax.f32 %v3688, %v3689
      %v3691 = vrot.slane %v3690, 1
      %v3692 = vmax.f32 %v3690, %v3691
      %v3693 = vsel %vm897, %v3608, %v3619
      %v3694 = vsel %vm2727, %v3693, %v3627
      %v3695 = vsel %vm919, %v3694, %v3638
      %v3696 = vsel %vm2043, %v3695, %v3649
      %v3697 = vsel %vm2624, %v3696, %v3657
      %v3698 = vsel %vm958, %v3697, %v3668
      %v3699 = vsel %vm923, %v3698, %v3676
      %v3700 = vsel %vm897, %v3683, %v3692
      %v3701 = vld [vmem:[%s17] sm:$0xff]
      %v3702 = vld [vmem:[%s17 + $0x8] sm:$0xff]
      %v3703 = vld [vmem:[%s17 + $0x10] sm:$0xff]
      %v3704 = vld [vmem:[%s17 + $0x18] sm:$0xff]
      %v3705 = vld [vmem:[%s17 + $0x20] sm:$0xff]
      %v3706 = vld [vmem:[%s17 + $0x28] sm:$0xff]
      %v3707 = vld [vmem:[%s17 + $0x30] sm:$0xff]
      %v3708 = vld [vmem:[%s17 + $0x38] sm:$0xff]
      %v3709 = vld [vmem:[%s17 + $0x40] sm:$0xff]
      %v3710 = vld [vmem:[%s17 + $0x48] sm:$0xff]
      %v3711 = vld [vmem:[%s17 + $0x50] sm:$0xff]
      %v3712 = vld [vmem:[%s17 + $0x58] sm:$0xff]
      %v3713 = vld [vmem:[%s17 + $0x60] sm:$0xff]
      %v3714 = vld [vmem:[%s17 + $0x68] sm:$0xff]
      %v3715 = vld [vmem:[%s17 + $0x70] sm:$0xff]
      %v3716 = vld [vmem:[%s17 + $0x78] sm:$0xff]
      %v3717 = vld [vmem:[%s17 + $0x80] sm:$0xff]
      %v3718 = vld [vmem:[%s17 + $0x88] sm:$0xff]
      %v3719 = vld [vmem:[%s17 + $0x90] sm:$0xff]
      %v3720 = vld [vmem:[%s17 + $0x98] sm:$0xff]
      %v3721 = vld [vmem:[%s17 + $0xa0] sm:$0xff]
      %v3722 = vld [vmem:[%s17 + $0xa8] sm:$0xff]
      %v3723 = vld [vmem:[%s17 + $0xb0] sm:$0xff]
      %v3724 = vld [vmem:[%s17 + $0xb8] sm:$0xff]
      %v3725 = vld [vmem:[%s17 + $0xc0] sm:$0xff]
      %v3726 = vld [vmem:[%s17 + $0xc8] sm:$0xff]
      %v3727 = vld [vmem:[%s17 + $0xd0] sm:$0xff]
      %v3728 = vld [vmem:[%s17 + $0xd8] sm:$0xff]
      %v3729 = vld [vmem:[%s18] sm:$0x3]
      %v3732 = vrot.slane %v3699, 5
      %v3733 = vrot.slane %v3700, 5
      %v3734 = vsel %vm919, %v3732, %v3733
      %v3737 = vsel %vm919, 0.0, %v3732
      %v3738 = vsel %vm2624, %v3734, 0.0
      %v3741 = vrot.slane %v3737, 1
      %v3742 = vrot.slane %v3738, 1
      %v3743 = vsel %vm923, %v3741, %v3742
      %3744 = vrot.lane.b32.xlu0 %v3743, 32
      %v3745 = vpop.permute.xlu0 %3744
      %3746 = vrot.lane.b32.xlu0 %v3742, 32
      %v3747 = vpop.permute.xlu0 %3746
      %v3750 = vrot.slane %v3737, 2
      %v3751 = vrot.slane %v3738, 2
      %v3752 = vsel %vm958, %v3750, %v3751
      %3753 = vrot.lane.b32.xlu0 %v3752, 64
      %v3754 = vpop.permute.xlu0 %3753
      %3755 = vrot.lane.b32.xlu0 %v3751, 64
      %v3756 = vpop.permute.xlu0 %3755
      %v3759 = vrot.slane %v3737, 3
      %v3760 = vrot.slane %v3738, 3
      %v3761 = vsel %vm2624, %v3759, %v3760
      %3762 = vrot.lane.b32.xlu0 %v3761, 96
      %v3763 = vpop.permute.xlu0 %3762
      %3764 = vrot.lane.b32.xlu0 %v3760, 96
      %v3765 = vpop.permute.xlu0 %3764
      %v3768 = vrot.slane %v3737, 4
      %v3769 = vrot.slane %v3738, 4
      %v3770 = vsel %vm2043, %v3768, %v3769
      %v3773 = vrot.slane %v3737, 5
      %v3774 = vrot.slane %v3738, 5
      %v3775 = vsel %vm919, %v3773, %v3774
      %3776 = vrot.lane.b32.xlu0 %v3775, 32
      %v3777 = vpop.permute.xlu0 %3776
      %3778 = vrot.lane.b32.xlu0 %v3774, 32
      %v3779 = vpop.permute.xlu0 %3778
      %v3782 = vrot.slane %v3737, 6
      %v3783 = vrot.slane %v3738, 6
      %v3784 = vsel %vm2727, %v3782, %v3783
      %3785 = vrot.lane.b32.xlu0 %v3784, 64
      %v3786 = vpop.permute.xlu0 %3785
      %3787 = vrot.lane.b32.xlu0 %v3783, 64
      %v3788 = vpop.permute.xlu0 %3787
      %v3791 = vsel %vm1291, %v3737, %v3745
      %v3792 = vsel %vm1291, %v3738, %v3747
      %v3793 = vsel %vm2820, %v3791, %v3754
      %v3794 = vsel %vm2820, %v3792, %v3756
      %v3795 = vsel %vm2836, %v3793, %v3763
      %v3796 = vsel %vm2836, %v3794, %v3765
      %v3797 = vsel %vm1291, %v3770, %v3777
      %v3798 = vsel %vm1291, %v3769, %v3779
      %v3799 = vsel %vm2820, %v3797, %v3786
      %v3800 = vsel %vm2820, %v3798, %v3788
      %v3802 = vsel %vm2836, %v3799, 0
      %v3805 = vsel %vm2836, %v3800, 0
      %3807 = vmatprep.subr.mxu0 0.0
      %3808 = vmatpush1.msra.mxu0 %v3716
      %3809 = vmatprep.subr.mxu0 0.0
      %3810 = vmatpush1.msra.mxu0 %v3715
      %3811 = vmatprep.subr.mxu0 0.0
      %3812 = vmatpush1.msra.mxu0 %v3714
      %3813 = vmatprep.subr.mxu0 0.0
      %3814 = vmatpush1.msra.mxu0 %v3713
      %3815 = vmatprep.subr.mxu0 0.0
      %3816 = vmatpush1.msra.mxu0 %v3712
      %3817 = vmatprep.subr.mxu0 0.0
      %3818 = vmatpush1.msra.mxu0 %v3711
      %3819 = vmatprep.subr.mxu0 0.0
      %3820 = vmatpush1.msra.mxu0 %v3710
      %3821 = vmatprep.subr.mxu0 0.0
      %3822 = vmatpush1.msra.mxu0 %v3709
      %3823 = vmatprep.subr.mxu0 0.0
      %3824 = vmatpush1.msra.mxu0 %v3708
      %3825 = vmatprep.subr.mxu0 0.0
      %3826 = vmatpush1.msra.mxu0 %v3707
      %3827 = vmatprep.subr.mxu0 0.0
      %3828 = vmatpush1.msra.mxu0 %v3706
      %3829 = vmatprep.subr.mxu0 0.0
      %3830 = vmatpush1.msra.mxu0 %v3705
      %3831 = vmatprep.subr.mxu0 0.0
      %3832 = vmatpush1.msra.mxu0 %v3704
      %3833 = vmatprep.subr.mxu0 0.0
      %3834 = vmatpush1.msra.mxu0 %v3703
      %3835 = vmatprep.subr.mxu0 0.0
      %3836 = vmatpush1.msra.mxu0 %v3702
      %3837 = vmatprep.subr.mxu0 0.0
      %3838 = vmatpush1.msra.mxu0 %v3701
      %3839 = vmatprep.subr.mxu0 0.0
      %3840 = vmatpush2.msra.mxu0 0.0
      %3841 = vmatprep.subr.mxu0 0.0
      %3842 = vmatpush2.msra.mxu0 0.0
      %3843 = vmatprep.subr.mxu0 0.0
      %3844 = vmatpush2.msra.mxu0 0.0
      %3845 = vmatprep.subr.mxu0 0.0
      %3846 = vmatpush2.msra.mxu0 0.0
      %3847 = vmatprep.subr.mxu0 0.0
      %3848 = vmatpush2.msra.mxu0 %v3728
      %3849 = vmatprep.subr.mxu0 0.0
      %3850 = vmatpush2.msra.mxu0 %v3727
      %3851 = vmatprep.subr.mxu0 0.0
      %3852 = vmatpush2.msra.mxu0 %v3726
      %3853 = vmatprep.subr.mxu0 0.0
      %3854 = vmatpush2.msra.mxu0 %v3725
      %3855 = vmatprep.subr.mxu0 0.0
      %3856 = vmatpush2.msra.mxu0 %v3724
      %3857 = vmatprep.subr.mxu0 0.0
      %3858 = vmatpush2.msra.mxu0 %v3723
      %3859 = vmatprep.subr.mxu0 0.0
      %3860 = vmatpush2.msra.mxu0 %v3722
      %3861 = vmatprep.subr.mxu0 0.0
      %3862 = vmatpush2.msra.mxu0 %v3721
      %3863 = vmatprep.subr.mxu0 0.0
      %3864 = vmatpush2.msra.mxu0 %v3720
      %3865 = vmatprep.subr.mxu0 0.0
      %3866 = vmatpush2.msra.mxu0 %v3719
      %3867 = vmatprep.subr.mxu0 0.0
      %3868 = vmatpush2.msra.mxu0 %v3718
      %3869 = vmatprep.subr.mxu0 0.0
      %3870 = vmatpush2.msra.mxu0 %v3717
      %3871 = vmatprep.mubr.f32.mxu0 %v3802
      %3872 = vmatmul.mubr.f32.gmra.mxu0 %v3795
      %v3873 = vpop.f32.mrf.mxu0
      %v3874 = vadd.f32 0.0, %v3873
      %v3875 = vpop.f32.mrf.mxu0
      %3876 = vmatprep.mubr.f32.mxu0 %v3805
      %3877 = vmatmul.mubr.f32.gmra.mxu0 %v3796
      %v3878 = vpop.f32.mrf.mxu0
      %v3879 = vadd.f32 0.0, %v3878
      %v3880 = vpop.f32.mrf.mxu0
      %3881 = vdwg.mxu0
      %v3882 = vlaneseq
      %v3883 = vshrl.u32 %v3882, 7
      %v3884 = vsub.s32 0, %v3883
      %v3885 = vrot.slane %v3729, %v3884
      %v3886 = vmul.f32 %v3874, %v3885
      %v3887 = vmul.f32 %v3879, %v3885
      %v3888 = vlaneseq
      %v3889 = vshrl.u32 %v3888, 7
      %v3890 = vsub.s32 1, %v3889
      %v3891 = vrot.slane %v3729, %v3890
      %v3892 = vadd.f32 %v3886, %v3891
      %v3893 = vadd.f32 %v3887, %v3891
      %vm3894 = vcmp.ge.f32.partialorder %v3892, 0.0
      %vm3895 = vcmp.ge.f32.partialorder %v3893, 0.0
      %v3896 = vmul.f32 %v3892, 0.01
      %v3897 = vmul.f32 %v3893, 0.01
      %v3898 = vsel %vm3894, %v3892, %v3896
      %v3899 = vsel %vm3895, %v3893, %v3897
      %v3900 = vld [vmem:[%s19] sm:$0xff]
      %v3901 = vld [vmem:[%s19 + $0x8] sm:$0xff]
      %v3902 = vld [vmem:[%s19 + $0x10] sm:$0xff]
      %v3903 = vld [vmem:[%s19 + $0x18] sm:$0xff]
      %v3904 = vld [vmem:[%s19 + $0x20] sm:$0xff]
      %v3905 = vld [vmem:[%s19 + $0x28] sm:$0xff]
      %v3906 = vld [vmem:[%s19 + $0x30] sm:$0xff]
      %v3907 = vld [vmem:[%s19 + $0x38] sm:$0xff]
      %v3908 = vld [vmem:[%s19 + $0x40] sm:$0xff]
      %v3909 = vld [vmem:[%s19 + $0x48] sm:$0xff]
      %v3910 = vld [vmem:[%s19 + $0x50] sm:$0xff]
      %v3911 = vld [vmem:[%s19 + $0x58] sm:$0xff]
      %v3912 = vld [vmem:[%s19 + $0x60] sm:$0xff]
      %v3913 = vld [vmem:[%s19 + $0x68] sm:$0xff]
      %v3914 = vld [vmem:[%s19 + $0x70] sm:$0xff]
      %v3915 = vld [vmem:[%s19 + $0x78] sm:$0xff]
      %v3916 = vld [vmem:[%s19 + $0x80] sm:$0xff]
      %v3917 = vld [vmem:[%s19 + $0x88] sm:$0xff]
      %v3918 = vld [vmem:[%s19 + $0x90] sm:$0xff]
      %v3919 = vld [vmem:[%s19 + $0x98] sm:$0xff]
      %v3920 = vld [vmem:[%s19 + $0xa0] sm:$0xff]
      %v3921 = vld [vmem:[%s19 + $0xa8] sm:$0xff]
      %v3922 = vld [vmem:[%s19 + $0xb0] sm:$0xff]
      %v3923 = vld [vmem:[%s19 + $0xb8] sm:$0xff]
      %v3924 = vld [vmem:[%s19 + $0xc0] sm:$0xff]
      %v3925 = vld [vmem:[%s19 + $0xc8] sm:$0xff]
      %v3926 = vld [vmem:[%s19 + $0xd0] sm:$0xff]
      %v3927 = vld [vmem:[%s19 + $0xd8] sm:$0xff]
      %v3928 = vld [vmem:[%s19 + $0xe0] sm:$0xff]
      %v3929 = vld [vmem:[%s19 + $0xe8] sm:$0xff]
      %v3930 = vld [vmem:[%s19 + $0xf0] sm:$0xff]
      %v3931 = vld [vmem:[%s19 + $0xf8] sm:$0xff]
      %v3932 = vld [vmem:[%s19 + $0x100] sm:$0xff]
      %v3933 = vld [vmem:[%s19 + $0x108] sm:$0xff]
      %v3934 = vld [vmem:[%s19 + $0x110] sm:$0xff]
      %v3935 = vld [vmem:[%s19 + $0x118] sm:$0xff]
      %v3936 = vld [vmem:[%s19 + $0x120] sm:$0xff]
      %v3937 = vld [vmem:[%s19 + $0x128] sm:$0xff]
      %v3938 = vld [vmem:[%s19 + $0x130] sm:$0xff]
      %v3939 = vld [vmem:[%s19 + $0x138] sm:$0xff]
      %v3940 = vld [vmem:[%s19 + $0x140] sm:$0xff]
      %v3941 = vld [vmem:[%s19 + $0x148] sm:$0xff]
      %v3942 = vld [vmem:[%s19 + $0x150] sm:$0xff]
      %v3943 = vld [vmem:[%s19 + $0x158] sm:$0xff]
      %v3944 = vld [vmem:[%s19 + $0x160] sm:$0xff]
      %v3945 = vld [vmem:[%s19 + $0x168] sm:$0xff]
      %v3946 = vld [vmem:[%s19 + $0x170] sm:$0xff]
      %v3947 = vld [vmem:[%s19 + $0x178] sm:$0xff]
      %v3948 = vld [vmem:[%s19 + $0x180] sm:$0xff]
      %v3949 = vld [vmem:[%s19 + $0x188] sm:$0xff]
      %v3950 = vld [vmem:[%s19 + $0x190] sm:$0xff]
      %v3951 = vld [vmem:[%s19 + $0x198] sm:$0xff]
      %v3952 = vld [vmem:[%s19 + $0x1a0] sm:$0xff]
      %v3953 = vld [vmem:[%s19 + $0x1a8] sm:$0xff]
      %v3954 = vld [vmem:[%s19 + $0x1b0] sm:$0xff]
      %v3955 = vld [vmem:[%s19 + $0x1b8] sm:$0xff]
      %v3956 = vld [vmem:[%s20] sm:$0x3]
      %v3959 = vrot.slane %v3898, 5
      %v3960 = vrot.slane %v3899, 5
      %v3961 = vsel %vm919, %v3959, %v3960
      %v3964 = vsel %vm919, 0.0, %v3959
      %v3965 = vsel %vm2624, %v3961, 0.0
      %v3968 = vrot.slane %v3964, 1
      %v3969 = vrot.slane %v3965, 1
      %v3970 = vsel %vm923, %v3968, %v3969
      %3971 = vrot.lane.b32.xlu0 %v3970, 64
      %v3972 = vpop.permute.xlu0 %3971
      %3973 = vrot.lane.b32.xlu0 %v3969, 64
      %v3974 = vpop.permute.xlu0 %3973
      %v3977 = vrot.slane %v3964, 2
      %v3978 = vrot.slane %v3965, 2
      %v3979 = vsel %vm958, %v3977, %v3978
      %v3982 = vrot.slane %v3964, 3
      %v3983 = vrot.slane %v3965, 3
      %v3984 = vsel %vm2624, %v3982, %v3983
      %3985 = vrot.lane.b32.xlu0 %v3984, 64
      %v3986 = vpop.permute.xlu0 %3985
      %3987 = vrot.lane.b32.xlu0 %v3983, 64
      %v3988 = vpop.permute.xlu0 %3987
      %v3991 = vrot.slane %v3964, 4
      %v3992 = vrot.slane %v3965, 4
      %v3993 = vsel %vm2043, %v3991, %v3992
      %v3996 = vrot.slane %v3964, 5
      %v3997 = vrot.slane %v3965, 5
      %v3998 = vsel %vm919, %v3996, %v3997
      %3999 = vrot.lane.b32.xlu0 %v3998, 64
      %v4000 = vpop.permute.xlu0 %3999
      %4001 = vrot.lane.b32.xlu0 %v3997, 64
      %v4002 = vpop.permute.xlu0 %4001
      %v4005 = vrot.slane %v3964, 6
      %v4006 = vrot.slane %v3965, 6
      %v4007 = vsel %vm2727, %v4005, %v4006
      %v4008 = vsel %vm2820, %v3964, %v3972
      %v4009 = vsel %vm2820, %v3965, %v3974
      %v4010 = vsel %vm2820, %v3979, %v3986
      %v4011 = vsel %vm2820, %v3978, %v3988
      %v4012 = vsel %vm2820, %v3993, %v4000
      %v4013 = vsel %vm2820, %v3992, %v4002
      %v4014 = vsel %vm2820, %v4007, 0
      %v4016 = vsel %vm2820, %v4006, 0
      %4018 = vmatprep.subr.mxu0 0.0
      %4019 = vmatpush1.msra.mxu0 %v3915
      %4020 = vmatprep.subr.mxu0 0.0
      %4021 = vmatpush1.msra.mxu0 %v3914
      %4022 = vmatprep.subr.mxu0 0.0
      %4023 = vmatpush1.msra.mxu0 %v3913
      %4024 = vmatprep.subr.mxu0 0.0
      %4025 = vmatpush1.msra.mxu0 %v3912
      %4026 = vmatprep.subr.mxu0 0.0
      %4027 = vmatpush1.msra.mxu0 %v3911
      %4028 = vmatprep.subr.mxu0 0.0
      %4029 = vmatpush1.msra.mxu0 %v3910
      %4030 = vmatprep.subr.mxu0 0.0
      %4031 = vmatpush1.msra.mxu0 %v3909
      %4032 = vmatprep.subr.mxu0 0.0
      %4033 = vmatpush1.msra.mxu0 %v3908
      %4034 = vmatprep.subr.mxu0 0.0
      %4035 = vmatpush1.msra.mxu0 %v3907
      %4036 = vmatprep.subr.mxu0 0.0
      %4037 = vmatpush1.msra.mxu0 %v3906
      %4038 = vmatprep.subr.mxu0 0.0
      %4039 = vmatpush1.msra.mxu0 %v3905
      %4040 = vmatprep.subr.mxu0 0.0
      %4041 = vmatpush1.msra.mxu0 %v3904
      %4042 = vmatprep.subr.mxu0 0.0
      %4043 = vmatpush1.msra.mxu0 %v3903
      %4044 = vmatprep.subr.mxu0 0.0
      %4045 = vmatpush1.msra.mxu0 %v3902
      %4046 = vmatprep.subr.mxu0 0.0
      %4047 = vmatpush1.msra.mxu0 %v3901
      %4048 = vmatprep.subr.mxu0 0.0
      %4049 = vmatpush1.msra.mxu0 %v3900
      %4050 = vmatprep.subr.mxu0 0.0
      %4051 = vmatpush2.msra.mxu0 %v3931
      %4052 = vmatprep.subr.mxu0 0.0
      %4053 = vmatpush2.msra.mxu0 %v3930
      %4054 = vmatprep.subr.mxu0 0.0
      %4055 = vmatpush2.msra.mxu0 %v3929
      %4056 = vmatprep.subr.mxu0 0.0
      %4057 = vmatpush2.msra.mxu0 %v3928
      %4058 = vmatprep.subr.mxu0 0.0
      %4059 = vmatpush2.msra.mxu0 %v3927
      %4060 = vmatprep.subr.mxu0 0.0
      %4061 = vmatpush2.msra.mxu0 %v3926
      %4062 = vmatprep.subr.mxu0 0.0
      %4063 = vmatpush2.msra.mxu0 %v3925
      %4064 = vmatprep.subr.mxu0 0.0
      %4065 = vmatpush2.msra.mxu0 %v3924
      %4066 = vmatprep.subr.mxu0 0.0
      %4067 = vmatpush2.msra.mxu0 %v3923
      %4068 = vmatprep.subr.mxu0 0.0
      %4069 = vmatpush2.msra.mxu0 %v3922
      %4070 = vmatprep.subr.mxu0 0.0
      %4071 = vmatpush2.msra.mxu0 %v3921
      %4072 = vmatprep.subr.mxu0 0.0
      %4073 = vmatpush2.msra.mxu0 %v3920
      %4074 = vmatprep.subr.mxu0 0.0
      %4075 = vmatpush2.msra.mxu0 %v3919
      %4076 = vmatprep.subr.mxu0 0.0
      %4077 = vmatpush2.msra.mxu0 %v3918
      %4078 = vmatprep.subr.mxu0 0.0
      %4079 = vmatpush2.msra.mxu0 %v3917
      %4080 = vmatprep.subr.mxu0 0.0
      %4081 = vmatpush2.msra.mxu0 %v3916
      %4082 = vmatprep.mubr.f32.mxu0 %v4010
      %4083 = vmatmul.mubr.f32.gmra.mxu0 %v4008
      %v4084 = vpop.f32.mrf.mxu0
      %v4085 = vadd.f32 0.0, %v4084
      %v4086 = vpop.f32.mrf.mxu0
      %4087 = vmatprep.mubr.f32.mxu0 %v4011
      %4088 = vmatmul.mubr.f32.gmra.mxu0 %v4009
      %v4089 = vpop.f32.mrf.mxu0
      %v4090 = vadd.f32 0.0, %v4089
      %v4091 = vpop.f32.mrf.mxu0
      %4092 = vdwg.mxu0
      %4093 = vmatprep.subr.mxu0 0.0
      %4094 = vmatpush1.msra.mxu0 %v3947
      %4095 = vmatprep.subr.mxu0 0.0
      %4096 = vmatpush1.msra.mxu0 %v3946
      %4097 = vmatprep.subr.mxu0 0.0
      %4098 = vmatpush1.msra.mxu0 %v3945
      %4099 = vmatprep.subr.mxu0 0.0
      %4100 = vmatpush1.msra.mxu0 %v3944
      %4101 = vmatprep.subr.mxu0 0.0
      %4102 = vmatpush1.msra.mxu0 %v3943
      %4103 = vmatprep.subr.mxu0 0.0
      %4104 = vmatpush1.msra.mxu0 %v3942
      %4105 = vmatprep.subr.mxu0 0.0
      %4106 = vmatpush1.msra.mxu0 %v3941
      %4107 = vmatprep.subr.mxu0 0.0
      %4108 = vmatpush1.msra.mxu0 %v3940
      %4109 = vmatprep.subr.mxu0 0.0
      %4110 = vmatpush1.msra.mxu0 %v3939
      %4111 = vmatprep.subr.mxu0 0.0
      %4112 = vmatpush1.msra.mxu0 %v3938
      %4113 = vmatprep.subr.mxu0 0.0
      %4114 = vmatpush1.msra.mxu0 %v3937
      %4115 = vmatprep.subr.mxu0 0.0
      %4116 = vmatpush1.msra.mxu0 %v3936
      %4117 = vmatprep.subr.mxu0 0.0
      %4118 = vmatpush1.msra.mxu0 %v3935
      %4119 = vmatprep.subr.mxu0 0.0
      %4120 = vmatpush1.msra.mxu0 %v3934
      %4121 = vmatprep.subr.mxu0 0.0
      %4122 = vmatpush1.msra.mxu0 %v3933
      %4123 = vmatprep.subr.mxu0 0.0
      %4124 = vmatpush1.msra.mxu0 %v3932
      %4125 = vmatprep.subr.mxu0 0.0
      %4126 = vmatpush2.msra.mxu0 0.0
      %4127 = vmatprep.subr.mxu0 0.0
      %4128 = vmatpush2.msra.mxu0 0.0
      %4129 = vmatprep.subr.mxu0 0.0
      %4130 = vmatpush2.msra.mxu0 0.0
      %4131 = vmatprep.subr.mxu0 0.0
      %4132 = vmatpush2.msra.mxu0 0.0
      %4133 = vmatprep.subr.mxu0 0.0
      %4134 = vmatpush2.msra.mxu0 0.0
      %4135 = vmatprep.subr.mxu0 0.0
      %4136 = vmatpush2.msra.mxu0 0.0
      %4137 = vmatprep.subr.mxu0 0.0
      %4138 = vmatpush2.msra.mxu0 0.0
      %4139 = vmatprep.subr.mxu0 0.0
      %4140 = vmatpush2.msra.mxu0 0.0
      %4141 = vmatprep.subr.mxu0 0.0
      %4142 = vmatpush2.msra.mxu0 %v3955
      %4143 = vmatprep.subr.mxu0 0.0
      %4144 = vmatpush2.msra.mxu0 %v3954
      %4145 = vmatprep.subr.mxu0 0.0
      %4146 = vmatpush2.msra.mxu0 %v3953
      %4147 = vmatprep.subr.mxu0 0.0
      %4148 = vmatpush2.msra.mxu0 %v3952
      %4149 = vmatprep.subr.mxu0 0.0
      %4150 = vmatpush2.msra.mxu0 %v3951
      %4151 = vmatprep.subr.mxu0 0.0
      %4152 = vmatpush2.msra.mxu0 %v3950
      %4153 = vmatprep.subr.mxu0 0.0
      %4154 = vmatpush2.msra.mxu0 %v3949
      %4155 = vmatprep.subr.mxu0 0.0
      %4156 = vmatpush2.msra.mxu0 %v3948
      %4157 = vmatprep.mubr.f32.mxu0 %v4014
      %4158 = vmatmul.mubr.f32.gmra.mxu0 %v4012
      %v4159 = vpop.f32.mrf.mxu0
      %v4160 = vadd.f32 %v4085, %v4159
      %v4161 = vpop.f32.mrf.mxu0
      %4162 = vmatprep.mubr.f32.mxu0 %v4016
      %4163 = vmatmul.mubr.f32.gmra.mxu0 %v4013
      %v4164 = vpop.f32.mrf.mxu0
      %v4165 = vadd.f32 %v4090, %v4164
      %v4166 = vpop.f32.mrf.mxu0
      %4167 = vdwg.mxu0
      %v4168 = vlaneseq
      %v4169 = vshrl.u32 %v4168, 7
      %v4170 = vsub.s32 0, %v4169
      %v4171 = vrot.slane %v3956, %v4170
      %v4172 = vmul.f32 %v4160, %v4171
      %v4173 = vmul.f32 %v4165, %v4171
      %v4174 = vlaneseq
      %v4175 = vshrl.u32 %v4174, 7
      %v4176 = vsub.s32 1, %v4175
      %v4177 = vrot.slane %v3956, %v4176
      %v4178 = vadd.f32 %v4172, %v4177
      %v4179 = vadd.f32 %v4173, %v4177
      %vm4180 = vcmp.ge.f32.partialorder %v4178, 0.0
      %vm4181 = vcmp.ge.f32.partialorder %v4179, 0.0
      %v4182 = vmul.f32 %v4178, 0.01
      %v4183 = vmul.f32 %v4179, 0.01
      %v4184 = vsel %vm4180, %v4178, %v4182
      %v4185 = vsel %vm4181, %v4179, %v4183
      %vm4186 = vcmask 520192
      %v4187 = vsel %vm4186, %v4184, -inf
      %v4188 = vrot.slane %v4187, 4
      %v4189 = vmax.f32 %v4187, %v4188
      %v4190 = vrot.slane %v4189, 2
      %v4191 = vmax.f32 %v4189, %v4190
      %v4192 = vrot.slane %v4191, 1
      %v4193 = vmax.f32 %v4191, %v4192
      %vm4194 = vcmask 523269
      %v4195 = vsel %vm4194, %v4184, -inf
      %vm4196 = vcmask 517120
      %v4197 = vsel %vm4196, %v4185, -inf
      %v4198 = vmax.f32 %v4195, %v4197
      %v4199 = vrot.slane %v4198, 4
      %v4200 = vmax.f32 %v4198, %v4199
      %v4201 = vrot.slane %v4200, 2
      %v4202 = vmax.f32 %v4200, %v4201
      %v4203 = vrot.slane %v4202, 1
      %v4204 = vmax.f32 %v4202, %v4203
      %v4205 = vsel %vm897, %v4193, %v4204
      %v4206 = vld [vmem:[%s21] sm:$0xff]
      %v4207 = vld [vmem:[%s21 + $0x8] sm:$0xff]
      %v4208 = vld [vmem:[%s21 + $0x10] sm:$0xff]
      %v4209 = vld [vmem:[%s21 + $0x18] sm:$0xff]
      %v4210 = vld [vmem:[%s21 + $0x20] sm:$0xff]
      %v4211 = vld [vmem:[%s21 + $0x28] sm:$0xff]
      %v4212 = vld [vmem:[%s21 + $0x30] sm:$0xff]
      %v4213 = vld [vmem:[%s21 + $0x38] sm:$0xff]
      %v4214 = vld [vmem:[%s21 + $0x40] sm:$0xff]
      %v4215 = vld [vmem:[%s21 + $0x48] sm:$0xff]
      %v4216 = vld [vmem:[%s21 + $0x50] sm:$0xff]
      %v4217 = vld [vmem:[%s21 + $0x58] sm:$0xff]
      %v4218 = vld [vmem:[%s21 + $0x60] sm:$0xff]
      %v4219 = vld [vmem:[%s21 + $0x68] sm:$0xff]
      %v4220 = vld [vmem:[%s21 + $0x70] sm:$0xff]
      %v4221 = vld [vmem:[%s21 + $0x78] sm:$0xff]
      %v4222 = vld [vmem:[%s21 + $0x80] sm:$0xff]
      %v4223 = vld [vmem:[%s21 + $0x88] sm:$0xff]
      %v4224 = vld [vmem:[%s21 + $0x90] sm:$0xff]
      %v4225 = vld [vmem:[%s21 + $0x98] sm:$0xff]
      %v4226 = vld [vmem:[%s21 + $0xa0] sm:$0xff]
      %v4227 = vld [vmem:[%s21 + $0xa8] sm:$0xff]
      %v4228 = vld [vmem:[%s21 + $0xb0] sm:$0xff]
      %v4229 = vld [vmem:[%s21 + $0xb8] sm:$0xff]
      %v4230 = vld [vmem:[%s22] sm:$0x3]
      %v4232 = vrot.slane %v4205, 7
      %v4234 = vsel %vm897, 0.0, %v4232
      %v4235 = vsel %vm919, %v4234, 0.0
      %v4237 = vrot.slane %v4235, 1
      %4238 = vrot.lane.b32.xlu0 %v4237, 64
      %v4239 = vpop.permute.xlu0 %4238
      %v4241 = vrot.slane %v4235, 2
      %v4242 = vsel %vm2820, %v4235, %v4239
      %v4243 = vsel %vm2820, %v4241, 0
      %4245 = vmatprep.subr.mxu0 0.0
      %4246 = vmatpush1.msra.mxu0 %v4221
      %4247 = vmatprep.subr.mxu0 0.0
      %4248 = vmatpush1.msra.mxu0 %v4220
      %4249 = vmatprep.subr.mxu0 0.0
      %4250 = vmatpush1.msra.mxu0 %v4219
      %4251 = vmatprep.subr.mxu0 0.0
      %4252 = vmatpush1.msra.mxu0 %v4218
      %4253 = vmatprep.subr.mxu0 0.0
      %4254 = vmatpush1.msra.mxu0 %v4217
      %4255 = vmatprep.subr.mxu0 0.0
      %4256 = vmatpush1.msra.mxu0 %v4216
      %4257 = vmatprep.subr.mxu0 0.0
      %4258 = vmatpush1.msra.mxu0 %v4215
      %4259 = vmatprep.subr.mxu0 0.0
      %4260 = vmatpush1.msra.mxu0 %v4214
      %4261 = vmatprep.subr.mxu0 0.0
      %4262 = vmatpush1.msra.mxu0 %v4213
      %4263 = vmatprep.subr.mxu0 0.0
      %4264 = vmatpush1.msra.mxu0 %v4212
      %4265 = vmatprep.subr.mxu0 0.0
      %4266 = vmatpush1.msra.mxu0 %v4211
      %4267 = vmatprep.subr.mxu0 0.0
      %4268 = vmatpush1.msra.mxu0 %v4210
      %4269 = vmatprep.subr.mxu0 0.0
      %4270 = vmatpush1.msra.mxu0 %v4209
      %4271 = vmatprep.subr.mxu0 0.0
      %4272 = vmatpush1.msra.mxu0 %v4208
      %4273 = vmatprep.subr.mxu0 0.0
      %4274 = vmatpush1.msra.mxu0 %v4207
      %4275 = vmatprep.subr.mxu0 0.0
      %4276 = vmatpush1.msra.mxu0 %v4206
      %4277 = vmatprep.subr.mxu0 0.0
      %4278 = vmatpush2.msra.mxu0 0.0
      %4279 = vmatprep.subr.mxu0 0.0
      %4280 = vmatpush2.msra.mxu0 0.0
      %4281 = vmatprep.subr.mxu0 0.0
      %4282 = vmatpush2.msra.mxu0 0.0
      %4283 = vmatprep.subr.mxu0 0.0
      %4284 = vmatpush2.msra.mxu0 0.0
      %4285 = vmatprep.subr.mxu0 0.0
      %4286 = vmatpush2.msra.mxu0 0.0
      %4287 = vmatprep.subr.mxu0 0.0
      %4288 = vmatpush2.msra.mxu0 0.0
      %4289 = vmatprep.subr.mxu0 0.0
      %4290 = vmatpush2.msra.mxu0 0.0
      %4291 = vmatprep.subr.mxu0 0.0
      %4292 = vmatpush2.msra.mxu0 0.0
      %4293 = vmatprep.subr.mxu0 0.0
      %4294 = vmatpush2.msra.mxu0 %v4229
      %4295 = vmatprep.subr.mxu0 0.0
      %4296 = vmatpush2.msra.mxu0 %v4228
      %4297 = vmatprep.subr.mxu0 0.0
      %4298 = vmatpush2.msra.mxu0 %v4227
      %4299 = vmatprep.subr.mxu0 0.0
      %4300 = vmatpush2.msra.mxu0 %v4226
      %4301 = vmatprep.subr.mxu0 0.0
      %4302 = vmatpush2.msra.mxu0 %v4225
      %4303 = vmatprep.subr.mxu0 0.0
      %4304 = vmatpush2.msra.mxu0 %v4224
      %4305 = vmatprep.subr.mxu0 0.0
      %4306 = vmatpush2.msra.mxu0 %v4223
      %4307 = vmatprep.subr.mxu0 0.0
      %4308 = vmatpush2.msra.mxu0 %v4222
      %4309 = vmatprep.mubr.f32.mxu0 %v4243
      %4310 = vmatmul.mubr.f32.gmra.mxu0 %v4242
      %v4311 = vpop.f32.mrf.mxu0
      %v4312 = vadd.f32 0.0, %v4311
      %v4313 = vpop.f32.mrf.mxu0
      %4314 = vdwg.mxu0
      %v4315 = vlaneseq
      %v4316 = vshrl.u32 %v4315, 7
      %v4317 = vsub.s32 0, %v4316
      %v4318 = vrot.slane %v4230, %v4317
      %v4319 = vmul.f32 %v4312, %v4318
      %v4320 = vlaneseq
      %v4321 = vshrl.u32 %v4320, 7
      %v4322 = vsub.s32 1, %v4321
      %v4323 = vrot.slane %v4230, %v4322
      %v4324 = vadd.f32 %v4319, %v4323
      %vm4325 = vcmp.ge.f32.partialorder %v4324, 0.0
      %v4326 = vmul.f32 %v4324, 0.01
      %v4327 = vsel %vm4325, %v4324, %v4326
      %v4328 = vld [vmem:[%s23] sm:$0xff]
      %v4329 = vld [vmem:[%s23 + $0x8] sm:$0xff]
      %v4330 = vld [vmem:[%s23 + $0x10] sm:$0xff]
      %v4331 = vld [vmem:[%s23 + $0x18] sm:$0xff]
      %v4332 = vld [vmem:[%s23 + $0x20] sm:$0xff]
      %v4333 = vld [vmem:[%s23 + $0x28] sm:$0xff]
      %v4334 = vld [vmem:[%s23 + $0x30] sm:$0xff]
      %v4335 = vld [vmem:[%s23 + $0x38] sm:$0xff]
      %v4336 = vld [vmem:[%s23 + $0x40] sm:$0xff]
      %v4337 = vld [vmem:[%s23 + $0x48] sm:$0xff]
      %v4338 = vld [vmem:[%s23 + $0x50] sm:$0xff]
      %v4339 = vld [vmem:[%s23 + $0x58] sm:$0xff]
      %v4340 = vld [vmem:[%s23 + $0x60] sm:$0xff]
      %v4341 = vld [vmem:[%s23 + $0x68] sm:$0xff]
      %v4342 = vld [vmem:[%s23 + $0x70] sm:$0xff]
      %v4343 = vld [vmem:[%s23 + $0x78] sm:$0xff]
      %v4344 = vld [vmem:[%s23 + $0x80] sm:$0xff]
      %v4345 = vld [vmem:[%s23 + $0x88] sm:$0xff]
      %v4346 = vld [vmem:[%s23 + $0x90] sm:$0xff]
      %v4347 = vld [vmem:[%s23 + $0x98] sm:$0xff]
      %v4348 = vld [vmem:[%s23 + $0xa0] sm:$0xff]
      %v4349 = vld [vmem:[%s23 + $0xa8] sm:$0xff]
      %v4350 = vld [vmem:[%s23 + $0xb0] sm:$0xff]
      %v4351 = vld [vmem:[%s23 + $0xb8] sm:$0xff]
      %v4352 = vld [vmem:[%s23 + $0xc0] sm:$0xff]
      %v4353 = vld [vmem:[%s23 + $0xc8] sm:$0xff]
      %v4354 = vld [vmem:[%s23 + $0xd0] sm:$0xff]
      %v4355 = vld [vmem:[%s23 + $0xd8] sm:$0xff]
      %v4356 = vld [vmem:[%s23 + $0xe0] sm:$0xff]
      %v4357 = vld [vmem:[%s23 + $0xe8] sm:$0xff]
      %v4358 = vld [vmem:[%s23 + $0xf0] sm:$0xff]
      %v4359 = vld [vmem:[%s23 + $0xf8] sm:$0xff]
      %v4360 = vld [vmem:[%s23 + $0x100] sm:$0xff]
      %v4361 = vld [vmem:[%s23 + $0x108] sm:$0xff]
      %v4362 = vld [vmem:[%s23 + $0x110] sm:$0xff]
      %v4363 = vld [vmem:[%s23 + $0x118] sm:$0xff]
      %v4364 = vld [vmem:[%s23 + $0x120] sm:$0xff]
      %v4365 = vld [vmem:[%s23 + $0x128] sm:$0xff]
      %v4366 = vld [vmem:[%s23 + $0x130] sm:$0xff]
      %v4367 = vld [vmem:[%s23 + $0x138] sm:$0xff]
      %v4368 = vld [vmem:[%s23 + $0x140] sm:$0xff]
      %v4369 = vld [vmem:[%s23 + $0x148] sm:$0xff]
      %v4370 = vld [vmem:[%s23 + $0x150] sm:$0xff]
      %v4371 = vld [vmem:[%s23 + $0x158] sm:$0xff]
      %v4372 = vld [vmem:[%s23 + $0x160] sm:$0xff]
      %v4373 = vld [vmem:[%s23 + $0x168] sm:$0xff]
      %v4374 = vld [vmem:[%s23 + $0x170] sm:$0xff]
      %v4375 = vld [vmem:[%s23 + $0x178] sm:$0xff]
      %v4376 = vld [vmem:[%s24] sm:$0x3]
      %v4378 = vrot.slane %v4327, 7
      %v4380 = vsel %vm897, 0.0, %v4378
      %v4381 = vsel %vm919, %v4380, 0.0
      %v4383 = vrot.slane %v4381, 1
      %v4385 = vrot.slane %v4381, 2
      %4387 = vmatprep.subr.mxu0 0.0
      %4388 = vmatpush1.msra.mxu0 %v4343
      %4389 = vmatprep.subr.mxu0 0.0
      %4390 = vmatpush1.msra.mxu0 %v4342
      %4391 = vmatprep.subr.mxu0 0.0
      %4392 = vmatpush1.msra.mxu0 %v4341
      %4393 = vmatprep.subr.mxu0 0.0
      %4394 = vmatpush1.msra.mxu0 %v4340
      %4395 = vmatprep.subr.mxu0 0.0
      %4396 = vmatpush1.msra.mxu0 %v4339
      %4397 = vmatprep.subr.mxu0 0.0
      %4398 = vmatpush1.msra.mxu0 %v4338
      %4399 = vmatprep.subr.mxu0 0.0
      %4400 = vmatpush1.msra.mxu0 %v4337
      %4401 = vmatprep.subr.mxu0 0.0
      %4402 = vmatpush1.msra.mxu0 %v4336
      %4403 = vmatprep.subr.mxu0 0.0
      %4404 = vmatpush1.msra.mxu0 %v4335
      %4405 = vmatprep.subr.mxu0 0.0
      %4406 = vmatpush1.msra.mxu0 %v4334
      %4407 = vmatprep.subr.mxu0 0.0
      %4408 = vmatpush1.msra.mxu0 %v4333
      %4409 = vmatprep.subr.mxu0 0.0
      %4410 = vmatpush1.msra.mxu0 %v4332
      %4411 = vmatprep.subr.mxu0 0.0
      %4412 = vmatpush1.msra.mxu0 %v4331
      %4413 = vmatprep.subr.mxu0 0.0
      %4414 = vmatpush1.msra.mxu0 %v4330
      %4415 = vmatprep.subr.mxu0 0.0
      %4416 = vmatpush1.msra.mxu0 %v4329
      %4417 = vmatprep.subr.mxu0 0.0
      %4418 = vmatpush1.msra.mxu0 %v4328
      %4419 = vmatprep.subr.mxu0 0.0
      %4420 = vmatpush2.msra.mxu0 %v4359
      %4421 = vmatprep.subr.mxu0 0.0
      %4422 = vmatpush2.msra.mxu0 %v4358
      %4423 = vmatprep.subr.mxu0 0.0
      %4424 = vmatpush2.msra.mxu0 %v4357
      %4425 = vmatprep.subr.mxu0 0.0
      %4426 = vmatpush2.msra.mxu0 %v4356
      %4427 = vmatprep.subr.mxu0 0.0
      %4428 = vmatpush2.msra.mxu0 %v4355
      %4429 = vmatprep.subr.mxu0 0.0
      %4430 = vmatpush2.msra.mxu0 %v4354
      %4431 = vmatprep.subr.mxu0 0.0
      %4432 = vmatpush2.msra.mxu0 %v4353
      %4433 = vmatprep.subr.mxu0 0.0
      %4434 = vmatpush2.msra.mxu0 %v4352
      %4435 = vmatprep.subr.mxu0 0.0
      %4436 = vmatpush2.msra.mxu0 %v4351
      %4437 = vmatprep.subr.mxu0 0.0
      %4438 = vmatpush2.msra.mxu0 %v4350
      %4439 = vmatprep.subr.mxu0 0.0
      %4440 = vmatpush2.msra.mxu0 %v4349
      %4441 = vmatprep.subr.mxu0 0.0
      %4442 = vmatpush2.msra.mxu0 %v4348
      %4443 = vmatprep.subr.mxu0 0.0
      %4444 = vmatpush2.msra.mxu0 %v4347
      %4445 = vmatprep.subr.mxu0 0.0
      %4446 = vmatpush2.msra.mxu0 %v4346
      %4447 = vmatprep.subr.mxu0 0.0
      %4448 = vmatpush2.msra.mxu0 %v4345
      %4449 = vmatprep.subr.mxu0 0.0
      %4450 = vmatpush2.msra.mxu0 %v4344
      %4451 = vmatprep.mubr.f32.mxu0 %v4383
      %4452 = vmatmul.mubr.f32.gmra.mxu0 %v4381
      %v4453 = vpop.f32.mrf.mxu0
      %v4454 = vadd.f32 0.0, %v4453
      %v4455 = vpop.f32.mrf.mxu0
      %4456 = vdwg.mxu0
      %4457 = vmatprep.subr.mxu0 0.0
      %4458 = vmatpush1.msra.mxu0 %v4375
      %4459 = vmatprep.subr.mxu0 0.0
      %4460 = vmatpush1.msra.mxu0 %v4374
      %4461 = vmatprep.subr.mxu0 0.0
      %4462 = vmatpush1.msra.mxu0 %v4373
      %4463 = vmatprep.subr.mxu0 0.0
      %4464 = vmatpush1.msra.mxu0 %v4372
      %4465 = vmatprep.subr.mxu0 0.0
      %4466 = vmatpush1.msra.mxu0 %v4371
      %4467 = vmatprep.subr.mxu0 0.0
      %4468 = vmatpush1.msra.mxu0 %v4370
      %4469 = vmatprep.subr.mxu0 0.0
      %4470 = vmatpush1.msra.mxu0 %v4369
      %4471 = vmatprep.subr.mxu0 0.0
      %4472 = vmatpush1.msra.mxu0 %v4368
      %4473 = vmatprep.subr.mxu0 0.0
      %4474 = vmatpush1.msra.mxu0 %v4367
      %4475 = vmatprep.subr.mxu0 0.0
      %4476 = vmatpush1.msra.mxu0 %v4366
      %4477 = vmatprep.subr.mxu0 0.0
      %4478 = vmatpush1.msra.mxu0 %v4365
      %4479 = vmatprep.subr.mxu0 0.0
      %4480 = vmatpush1.msra.mxu0 %v4364
      %4481 = vmatprep.subr.mxu0 0.0
      %4482 = vmatpush1.msra.mxu0 %v4363
      %4483 = vmatprep.subr.mxu0 0.0
      %4484 = vmatpush1.msra.mxu0 %v4362
      %4485 = vmatprep.subr.mxu0 0.0
      %4486 = vmatpush1.msra.mxu0 %v4361
      %4487 = vmatprep.subr.mxu0 0.0
      %4488 = vmatpush1.msra.mxu0 %v4360
      %4489 = vmatprep.subr.mxu0 0.0
      %4490 = vmatpush2.msra.mxu0 0.0
      %4491 = vmatprep.subr.mxu0 0.0
      %4492 = vmatpush2.msra.mxu0 0.0
      %4493 = vmatprep.subr.mxu0 0.0
      %4494 = vmatpush2.msra.mxu0 0.0
      %4495 = vmatprep.subr.mxu0 0.0
      %4496 = vmatpush2.msra.mxu0 0.0
      %4497 = vmatprep.subr.mxu0 0.0
      %4498 = vmatpush2.msra.mxu0 0.0
      %4499 = vmatprep.subr.mxu0 0.0
      %4500 = vmatpush2.msra.mxu0 0.0
      %4501 = vmatprep.subr.mxu0 0.0
      %4502 = vmatpush2.msra.mxu0 0.0
      %4503 = vmatprep.subr.mxu0 0.0
      %4504 = vmatpush2.msra.mxu0 0.0
      %4505 = vmatprep.subr.mxu0 0.0
      %4506 = vmatpush2.msra.mxu0 0.0
      %4507 = vmatprep.subr.mxu0 0.0
      %4508 = vmatpush2.msra.mxu0 0.0
      %4509 = vmatprep.subr.mxu0 0.0
      %4510 = vmatpush2.msra.mxu0 0.0
      %4511 = vmatprep.subr.mxu0 0.0
      %4512 = vmatpush2.msra.mxu0 0.0
      %4513 = vmatprep.subr.mxu0 0.0
      %4514 = vmatpush2.msra.mxu0 0.0
      %4515 = vmatprep.subr.mxu0 0.0
      %4516 = vmatpush2.msra.mxu0 0.0
      %4517 = vmatprep.subr.mxu0 0.0
      %4518 = vmatpush2.msra.mxu0 0.0
      %4519 = vmatprep.subr.mxu0 0.0
      %4520 = vmatpush2.msra.mxu0 0.0
      %4521 = vmatprep.mubr.f32.mxu0 0.0
      %4522 = vmatmul.mubr.f32.gmra.mxu0 %v4385
      %v4523 = vpop.f32.mrf.mxu0
      %v4524 = vadd.f32 %v4454, %v4523
      %v4525 = vpop.f32.mrf.mxu0
      %4526 = vdwg.mxu0
      %v4527 = vlaneseq
      %v4528 = vshrl.u32 %v4527, 7
      %v4529 = vsub.s32 0, %v4528
      %v4530 = vrot.slane %v4376, %v4529
      %v4531 = vmul.f32 %v4524, %v4530
      %v4532 = vlaneseq
      %v4533 = vshrl.u32 %v4532, 7
      %v4534 = vsub.s32 1, %v4533
      %v4535 = vrot.slane %v4376, %v4534
      %v4536 = vadd.f32 %v4531, %v4535
      %vm4537 = vcmp.ge.f32.partialorder %v4536, 0.0
      %v4538 = vmul.f32 %v4536, 0.01
      %v4539 = vsel %vm4537, %v4536, %v4538
      %4540 = vst.msk [vmem:[%s866] sm:$0xff] %vm1291, %v3594
      %4541 = vst.msk [vmem:[%s866 + $0x8] sm:$0xff] %vm1291, %v3595
      %4542 = vst.msk [vmem:[%s866 + $0x10] sm:$0xff] %vm1291, %v3596
      %4543 = vst.msk [vmem:[%s866 + $0x18] sm:$0xff] %vm1291, %v3597
      %4544 = vst.msk [vmem:[%s866 + $0x20] sm:$0xff] %vm1291, %v3598
      %4545 = vst.msk [vmem:[%s866 + $0x28] sm:$0xff] %vm1291, %v3599
      %4546 = vst.msk [vmem:[%s866 + $0x30] sm:$0x3] %vm3611, %v3600
      %4547 = vst.msk [vmem:[%s871] sm:$0xff] %vm2820, %v4184
      %4548 = vst.msk [vmem:[%s871 + $0x8] sm:$0x3] %vm4196, %v4185
      %4549 = vst [vmem:[%s875] sm:$0x3] %v4539
      %4550 = vst.msk [vmem:[%s880] sm:$0xff] %vm993, %v2198
      %4551 = vst.msk [vmem:[%s880 + $0x8] sm:$0xff] %vm993, %v2200
      %4552 = vst.msk [vmem:[%s880 + $0x10] sm:$0xff] %vm993, %v2202
      %4553 = vst.msk [vmem:[%s880 + $0x18] sm:$0xff] %vm993, %v2204
      %4554 = vst.msk [vmem:[%s880 + $0x20] sm:$0xff] %vm993, %v2206
      %4555 = vst.msk [vmem:[%s880 + $0x28] sm:$0xff] %vm993, %v2208
      %4556 = vst.msk [vmem:[%s880 + $0x30] sm:$0x3] %vm2397, %v2210
      %p4557 = scmp.lt.s32.totalorder %s40, 1
      %s4558 = scalar_select %p4557, %s40, 1
      %s4559 = smul.addr %s4558, 7
      %s4560 = smul.addr %s4559, 8
      %s4561 = scalar_lea.vmem %s25, %s4560
      %p4562 = scmp.lt.s32.totalorder %s40, 1
      %s4563 = scalar_select %p4562, %s40, 1
      %s4564 = smul.addr %s4563, 2
      %s4565 = smul.addr %s4564, 8
      %s4566 = scalar_lea.vmem %s26, %s4565
      %p4567 = scmp.lt.s32.totalorder %s40, 1
      %s4568 = scalar_select %p4567, %s40, 1
      %s4569 = smul.addr %s4568, 2
      %s4570 = scalar_lea.vmem %s27, %s4569
      %p4571 = scmp.lt.s32.totalorder %s40, 1
      %s4572 = scalar_select %p4571, %s40, 1
      %s4573 = smul.addr %s4572, 7
      %s4574 = smul.addr %s4573, 8
      %s4575 = scalar_lea.vmem %s28, %s4574
      // Predicated region
      $region121: #{metastress_forward.3} parent=119 // pred_check
        %p4576 = pneg %p588
      $region122: #{metastress_forward.3} parent=119 // pred_check_branch
        %4578 = sbr.rel (%p4576) target = $region124
      $region123: #{metastress_forward.3} parent=119 // pred_region
        _
      $region124: #{metastress_forward.3} parent=119 // pred_fallthru
        _
      // Predicated region
      $region125: #{metastress_forward.3} parent=119 // pred_check
        %p4579 = pneg %p614
      $region126: #{metastress_forward.3} parent=119 // pred_check_branch
        %4581 = sbr.rel (%p4579) target = $region128
      $region127: #{metastress_forward.3} parent=119 // pred_region
        _
      $region128: #{metastress_forward.3} parent=119 // pred_fallthru
        _
      // Predicated region
      $region129: #{metastress_forward.3} parent=119 // pred_check
        %p4582 = pneg %p640
      $region130: #{metastress_forward.3} parent=119 // pred_check_branch
        %4584 = sbr.rel (%p4582) target = $region132
      $region131: #{metastress_forward.3} parent=119 // pred_region
        _
      $region132: #{metastress_forward.3} parent=119 // pred_fallthru
        _
      // Predicated region
      $region133: #{metastress_forward.3} parent=119 // pred_check
        %p4585 = pneg %p666
      $region134: #{metastress_forward.3} parent=119 // pred_check_branch
        %4587 = sbr.rel (%p4585) target = $region136
      $region135: #{metastress_forward.3} parent=119 // pred_region
        _
      $region136: #{metastress_forward.3} parent=119 // pred_fallthru
        _
    $region120: #{metastress_forward.3} parent=5 // pred_fallthru
      _
    %p4588 = scmp.le.s32.totalorder 2, %s35
    // Predicated region
    $region137: #{metastress_forward.3} parent=5 // pred_check
      %p4589 = pneg %p4588
    $region138: #{metastress_forward.3} parent=5 // pred_check_branch
      %4591 = sbr.rel (%p4589) target = $region140
    $region139: #{metastress_forward.3} parent=5 // pred_region
      %s4592 = ssub.s32 %s35, 2
      // Predicated region
      $region141: #{metastress_forward.3} parent=139 // pred_check
        %p4593 = pneg %p594
      $region142: #{metastress_forward.3} parent=139 // pred_check_branch
        %4595 = sbr.rel (%p4593) target = $region144
      $region143: #{metastress_forward.3} parent=139 // pred_region
        %p4596 = scmp.lt.s32.totalorder %s41, 1
        %s4597 = scalar_select %p4596, %s41, 1
        %s4598 = smul.addr %s4597, 7
        %s4599 = smul.addr %s4598, 8
        %s4600 = scalar_lea.vmem %s25, %s4599
      $region144: #{metastress_forward.3} parent=139 // pred_fallthru
        _
      // Predicated region
      $region145: #{metastress_forward.3} parent=139 // pred_check
        %p4601 = pneg %p620
      $region146: #{metastress_forward.3} parent=139 // pred_check_branch
        %4603 = sbr.rel (%p4601) target = $region148
      $region147: #{metastress_forward.3} parent=139 // pred_region
        %p4604 = scmp.lt.s32.totalorder %s41, 1
        %s4605 = scalar_select %p4604, %s41, 1
        %s4606 = smul.addr %s4605, 2
        %s4607 = smul.addr %s4606, 8
        %s4608 = scalar_lea.vmem %s26, %s4607
      $region148: #{metastress_forward.3} parent=139 // pred_fallthru
        _
      // Predicated region
      $region149: #{metastress_forward.3} parent=139 // pred_check
        %p4609 = pneg %p646
      $region150: #{metastress_forward.3} parent=139 // pred_check_branch
        %4611 = sbr.rel (%p4609) target = $region152
      $region151: #{metastress_forward.3} parent=139 // pred_region
        %p4612 = scmp.lt.s32.totalorder %s41, 1
        %s4613 = scalar_select %p4612, %s41, 1
        %s4614 = smul.addr %s4613, 2
        %s4615 = scalar_lea.vmem %s27, %s4614
      $region152: #{metastress_forward.3} parent=139 // pred_fallthru
        _
      // Predicated region
      $region153: #{metastress_forward.3} parent=139 // pred_check
        %p4616 = pneg %p672
      $region154: #{metastress_forward.3} parent=139 // pred_check_branch
        %4618 = sbr.rel (%p4616) target = $region156
      $region155: #{metastress_forward.3} parent=139 // pred_region
        %p4619 = scmp.lt.s32.totalorder %s41, 1
        %s4620 = scalar_select %p4619, %s41, 1
        %s4621 = smul.addr %s4620, 7
        %s4622 = smul.addr %s4621, 8
        %s4623 = scalar_lea.vmem %s28, %s4622
      $region156: #{metastress_forward.3} parent=139 // pred_fallthru
        _
    $region140: #{metastress_forward.3} parent=5 // pred_fallthru
      _
  $region6: #{metastress_forward.3} parent=0 // loop_footer
    %s39 = sadd.s32 1, %s35
  $region7: #{metastress_forward.3} parent=0 // loop_footer_branch
    %34 = sbr.rel target = $region3
  $region8: #{metastress_forward.3} parent=0 // loop_exit
    _

</llo_original>
